<compile_context>
chip_gen: v5e
topology: v5e:2x2
jax: 0.10.0
libtpu: 0.0.40
codegen_flags: <defaults>
</compile_context>

<pallas_src>
import jax
import jax.numpy as jnp
from jax.experimental import pallas as pl
from jax.experimental.pallas import tpu as pltpu


# ----------------------------------------------------------------------------- params

def _init_conv_unit(key, cin, cout, k):
    k1, k2, k3, k4 = jax.random.split(key, 4)
    w = jax.random.normal(k1, (k, cin, cout), jnp.float32) / jnp.sqrt(float(cin * k))
    b = 0.01 * jax.random.normal(k2, (cout,), jnp.float32)
    gamma = 1.0 + 0.1 * jax.random.normal(k3, (cout,), jnp.float32)
    beta = 0.1 * jax.random.normal(k4, (cout,), jnp.float32)
    eps = 1e-5
    scale = gamma / jnp.sqrt(1.0 + eps)      # eval-mode BN fold (running_mean=0, running_var=1)
    shift = beta                             # beta - running_mean * scale
    return {"w": w.reshape(k * cin, cout).astype(jnp.bfloat16),   # (K*Cin, Cout) im2col matmul
            "b": b.reshape(1, cout),
            "g": scale.reshape(1, cout),
            "s": shift.reshape(1, cout)}


def _init_res2block(key, cin, cout, k, scale, se_hidden):
    assert cout % scale == 0
    sw = cout // scale
    keys = jax.random.split(key, scale + 5)
    u0 = _init_conv_unit(keys[0], cin, sw * scale, 1)
    scs = [_init_conv_unit(keys[1 + i], sw, sw, k) for i in range(scale - 1)]
    u1 = _init_conv_unit(keys[scale], sw * scale, cout, 1)
    k1, k2, k3, k4 = keys[scale + 1:scale + 5]
    return {
        "u0_w": u0["w"], "u0_b": u0["b"], "u0_g": u0["g"], "u0_s": u0["s"],
        "sc_w": jnp.stack([u["w"] for u in scs]),          # (scale-1, K*sw, sw) bf16
        "sc_b": jnp.stack([u["b"] for u in scs]),          # (scale-1, 1, sw)
        "sc_g": jnp.stack([u["g"] for u in scs]),
        "sc_s": jnp.stack([u["s"] for u in scs]),
        "u1_w": u1["w"], "u1_b": u1["b"], "u1_g": u1["g"], "u1_s": u1["s"],
        "se_w1": (jax.random.normal(k1, (cout, se_hidden), jnp.float32)
                  / jnp.sqrt(float(cout))).astype(jnp.bfloat16),
        "se_b1": 0.01 * jax.random.normal(k2, (1, se_hidden), jnp.float32),
        "se_w2": (jax.random.normal(k3, (se_hidden, cout), jnp.float32)
                  / jnp.sqrt(float(se_hidden))).astype(jnp.bfloat16),
        "se_b2": 0.01 * jax.random.normal(k4, (1, cout), jnp.float32),
    }


def init_model(key, cfg):
    filters, ks = cfg["filters"], cfg["kernel_sizes"]
    n_blocks = len(filters) - 2
    keys = jax.random.split(key, n_blocks + 2)
    return {
        "layer0": _init_conv_unit(keys[0], cfg["input_dim"], filters[0], ks[0]),
        "blocks": [
            _init_res2block(keys[1 + i], filters[i], filters[i + 1], ks[i + 1],
                            cfg["scale"], cfg["se_hidden"])
            for i in range(n_blocks)
        ],
        "last": _init_conv_unit(keys[-1], sum(filters[1:-1]), filters[-1], ks[-1]),
    }


# ----------------------------------------------------------------------------- fused kernel

def res2_frame_level_forward(x, params, cfg):
    """x: (N, T, input_dim) -> (N, T, filters[-1]); whole network in ONE pallas_call."""
    N, T, input_dim = x.shape
    filters = cfg["filters"]
    ks = cfg["kernel_sizes"]
    dils = cfg["dilations"]
    n_blocks = len(filters) - 2
    c_out = filters[-1]

    flat_params, treedef = jax.tree_util.tree_flatten(params)
    n_p = len(flat_params)

    # --- static scratch sizing (host side) ---
    block_sw = [int(b["sc_w"].shape[2]) for b in params["blocks"]]
    block_cmid = [int(b["sc_w"].shape[2] * (b["sc_w"].shape[0] + 1)) for b in params["blocks"]]
    block_cout = [int(b["u1_w"].shape[1]) for b in params["blocks"]]
    cat_width = sum(block_cout)
    max_cmid = max(block_cmid)

    padded = []                                    # (K, dil, cin) of every conv with K > 1
    if ks[0] > 1:
        padded.append((ks[0], dils[0], input_dim))
    for bi in range(n_blocks):
        if ks[bi + 1] > 1:
            padded.append((ks[bi + 1], dils[bi + 1], block_sw[bi]))
    if ks[-1] > 1:
        padded.append((ks[-1], dils[-1], cat_width))

    lefts = [(d * (k - 1)) // 2 for k, d, _ in padded]
    rights = [d * (k - 1) - (d * (k - 1)) // 2 for k, d, _ in padded]
    ROW0 = max(lefts + [0])                        # fixed live-row offset inside xpad
    MAXR = max(rights + [0])
    pad_rows = ROW0 + T + MAXR
    pad_cols = max([c for _, _, c in padded] + [8])
    patch_cols = max([k * c for k, _, c in padded] + [8])

    def kernel(x_ref, *rest):
        p = jax.tree_util.tree_unflatten(treedef, rest[:n_p])
        o_ref = rest[n_p]
        xpad_ref, patch_ref, y_ref, cat_s_ref, cat_b_ref = rest[n_p + 1:]

        # Every conv writes its input into the SAME live-row window [ROW0, ROW0+T), so the
        # two pad bands only need clearing once per grid step (done unconditionally so it
        # stays correct when the "parallel" batch axis is split across TensorCores).
        if ROW0 > 0:
            xpad_ref[0:ROW0, :] = jnp.zeros((ROW0, pad_cols), jnp.float32)
        if MAXR > 0:
            xpad_ref[ROW0 + T:pad_rows, :] = jnp.zeros((MAXR, pad_cols), jnp.float32)

        def conv_unit(xv, w, b, g, s, K, dil):
            """Dilated 'same' Conv1d as ONE im2col matmul + bias + ReLU + folded BN."""
            cin = xv.shape[1]
            if K == 1:
                patch = xv.astype(jnp.bfloat16)
            else:
                left = (dil * (K - 1)) // 2
                xpad_ref[ROW0:ROW0 + T, 0:cin] = xv.astype(jnp.float32)
                # im2col patch assembled directly in bf16 -> single deep matmul on the MXU
                for k in range(K):
                    r0 = ROW0 - left + k * dil
                    patch_ref[:, k * cin:(k + 1) * cin] = \
                        xpad_ref[r0:r0 + T, 0:cin].astype(jnp.bfloat16)
                patch = patch_ref[:, 0:K * cin]
            y = jnp.dot(patch, w, preferred_element_type=jnp.float32)   # bf16 in / f32 acc
            y = jnp.maximum(y + b, 0.0)                                 # Conv -> bias -> ReLU
            return y * g + s                                            # folded eval-mode BN

        def res2block(xv, bp, K, dil):
            n_sc, _, sw = bp["sc_w"].shape
            cmid = (n_sc + 1) * sw
            # unit0 (1x1); keep it in VMEM so the Res2 channel split is just windowed loads
            y_ref[:, 0:cmid] = conv_unit(xv, bp["u0_w"][...], bp["u0_b"][...],
                                         bp["u0_g"][...], bp["u0_s"][...], 1, 1)
            xs = conv_unit(y_ref[:, 0:sw], bp["sc_w"][0], bp["sc_b"][0],
                           bp["sc_g"][0], bp["sc_s"][0], K, dil)
            cat_s_ref[:, 0:sw] = xs.astype(jnp.bfloat16)
            for i in range(1, n_sc):
                xs = conv_unit(xs + y_ref[:, i * sw:(i + 1) * sw],
                               bp["sc_w"][i], bp["sc_b"][i], bp["sc_g"][i], bp["sc_s"][i],
                               K, dil)
                cat_s_ref[:, i * sw:(i + 1) * sw] = xs.astype(jnp.bfloat16)
            # last split is the identity pass-through (matches the torch reference)
            cat_s_ref[:, n_sc * sw:cmid] = y_ref[:, n_sc * sw:cmid].astype(jnp.bfloat16)
            z = conv_unit(cat_s_ref[:, 0:cmid], bp["u1_w"][...], bp["u1_b"][...],
                          bp["u1_g"][...], bp["u1_s"][...], 1, 1)
            # SE: mean over time -> FC -> ReLU -> FC -> sigmoid -> channel gate
            pooled = jnp.mean(z, axis=0, keepdims=True)
            h = jnp.dot(pooled.astype(jnp.bfloat16), bp["se_w1"][...],
                        preferred_element_type=jnp.float32) + bp["se_b1"][...]
            h = jnp.maximum(h, 0.0)
            gate = jax.nn.sigmoid(jnp.dot(h.astype(jnp.bfloat16), bp["se_w2"][...],
                                          preferred_element_type=jnp.float32)
                                  + bp["se_b2"][...])
            return xv + z * gate                                        # in-block residual

        xv = x_ref[0].astype(jnp.float32)                               # (T, input_dim)
        h = conv_unit(xv, p["layer0"]["w"][...], p["layer0"]["b"][...],
                      p["layer0"]["g"][...], p["layer0"]["s"][...], ks[0], dils[0])
        acc = h                                                         # x, then x+b0, x+b0+b1
        off = 0
        for bi in range(n_blocks):
            ob = res2block(acc, p["blocks"][bi], ks[bi + 1], dils[bi + 1])
            cb = ob.shape[1]
            cat_b_ref[:, off:off + cb] = ob.astype(jnp.bfloat16)        # final concat, in VMEM
            off += cb
            acc = acc + ob
        out = conv_unit(cat_b_ref[:, 0:off], p["last"]["w"][...], p["last"]["b"][...],
                        p["last"]["g"][...], p["last"]["s"][...], ks[-1], dils[-1])
        o_ref[0] = out.astype(o_ref.dtype)

    def _const_spec(a):
        return pl.BlockSpec(a.shape, lambda n, _nd=a.ndim: (0,) * _nd)

    return pl.pallas_call(
        kernel,
        out_shape=jax.ShapeDtypeStruct((N, T, c_out), x.dtype),
        grid=(N,),
        in_specs=[pl.BlockSpec((1, T, input_dim), lambda n: (n, 0, 0))]
                 + [_const_spec(a) for a in flat_params],
        out_specs=pl.BlockSpec((1, T, c_out), lambda n: (n, 0, 0)),
        scratch_shapes=[
            pltpu.VMEM((pad_rows, pad_cols), jnp.float32),     # shared zero-padded conv input
            pltpu.VMEM((T, patch_cols), jnp.bfloat16),         # im2col patch (MXU operand)
            pltpu.VMEM((T, max_cmid), jnp.float32),            # unit0 output (split source)
            pltpu.VMEM((T, max_cmid), jnp.bfloat16),           # scale-branch concat
            pltpu.VMEM((T, cat_width), jnp.bfloat16),          # [b0, b1, b2] concat
        ],
        compiler_params=pltpu.CompilerParams(dimension_semantics=("parallel",)),
    )(x, *flat_params)


# ----------------------------------------------------------------------------- pure-JAX reference

def _ref_conv_unit(x, w, b, g, s, K, dil):
    T, _ = x.shape
    if K == 1:
        patch = x
    else:
        total = dil * (K - 1)
        left = total // 2
        xp = jnp.pad(x, ((left, total - left), (0, 0)))
        patch = jnp.concatenate([xp[k * dil:k * dil + T, :] for k in range(K)], axis=-1)
    y = jnp.dot(patch.astype(jnp.bfloat16), w, preferred_element_type=jnp.float32)
    y = jnp.maximum(y + b, 0.0)
    return y * g + s


def _ref_res2block(x, bp, K, dil):
    n_sc, _, sw = bp["sc_w"].shape
    y = _ref_conv_unit(x, bp["u0_w"], bp["u0_b"], bp["u0_g"], bp["u0_s"], 1, 1)
    splits = [y[:, i * sw:(i + 1) * sw] for i in range(n_sc + 1)]
    xs = _ref_conv_unit(splits[0], bp["sc_w"][0], bp["sc_b"][0], bp["sc_g"][0], bp["sc_s"][0],
                        K, dil)
    outs = [xs]
    for i in range(1, n_sc):
        xs = _ref_conv_unit(xs + splits[i], bp["sc_w"][i], bp["sc_b"][i], bp["sc_g"][i],
                            bp["sc_s"][i], K, dil)
        outs.append(xs)
    outs.append(splits[-1])
    z = _ref_conv_unit(jnp.concatenate(outs, axis=-1),
                       bp["u1_w"], bp["u1_b"], bp["u1_g"], bp["u1_s"], 1, 1)
    pooled = jnp.mean(z, axis=0, keepdims=True)
    h = jnp.maximum(jnp.dot(pooled.astype(jnp.bfloat16), bp["se_w1"],
                            preferred_element_type=jnp.float32) + bp["se_b1"], 0.0)
    gate = jax.nn.sigmoid(jnp.dot(h.astype(jnp.bfloat16), bp["se_w2"],
                                  preferred_element_type=jnp.float32) + bp["se_b2"])
    return x + z * gate


def _ref_forward_single(x, params, cfg):
    ks, dils = cfg["kernel_sizes"], cfg["dilations"]
    h = _ref_conv_unit(x, params["layer0"]["w"], params["layer0"]["b"],
                       params["layer0"]["g"], params["layer0"]["s"], ks[0], dils[0])
    acc = h
    outs = []
    for bi, bp in enumerate(params["blocks"]):
        ob = _ref_res2block(acc, bp, ks[bi + 1], dils[bi + 1])
        outs.append(ob)
        acc = acc + ob
    cat = jnp.concatenate(outs, axis=-1)
    return _ref_conv_unit(cat, params["last"]["w"], params["last"]["b"],
                          params["last"]["g"], params["last"]["s"], ks[-1], dils[-1])


# ----------------------------------------------------------------------------- main

if __name__ == "__main__":
    key = jax.random.PRNGKey(0)
    k_param, k_x = jax.random.split(key)

    cfg = dict(
        input_dim=16,
        filters=[32, 32, 32, 32, 48],   # 5 entries -> 3 Res2Blocks, as the forward requires
        kernel_sizes=[5, 3, 3, 3, 1],
        dilations=[1, 2, 3, 4, 1],
        scale=8,
        se_hidden=16,
    )
    N, T = 2, 16

    params = init_model(k_param, cfg)

    # layout: (N, T, C) channels-last; the torch reference would take (N, C, T).
    x = jax.random.normal(k_x, (N, T, cfg["input_dim"]), jnp.float32)

    out = res2_frame_level_forward(x, params, cfg)
    out = jax.block_until_ready(out)

    assert out.shape == (N, T, cfg["filters"][-1]), out.shape
    assert jnp.all(jnp.isfinite(out))

    ref = jnp.stack([_ref_forward_single(x[i], params, cfg) for i in range(N)])
    assert bool(jnp.allclose(out, ref, rtol=1e-2, atol=1e-2)), \
        float(jnp.max(jnp.abs(out - ref)))

    print("KERNEL_OK")
</pallas_src>

<mosaic_0001>
module attributes {stable_mosaic.version = 11 : i64} {
  func.func @kernel(%arg0: i32, %arg1: memref<1x16x16xf32, #tpu.memory_space<vmem>>, %arg2: memref<7x1x4xf32, #tpu.memory_space<vmem>>, %arg3: memref<7x1x4xf32, #tpu.memory_space<vmem>>, %arg4: memref<7x1x4xf32, #tpu.memory_space<vmem>>, %arg5: memref<7x12x4xbf16, #tpu.memory_space<vmem>>, %arg6: memref<1x16xf32, #tpu.memory_space<vmem>>, %arg7: memref<1x32xf32, #tpu.memory_space<vmem>>, %arg8: memref<32x16xbf16, #tpu.memory_space<vmem>>, %arg9: memref<16x32xbf16, #tpu.memory_space<vmem>>, %arg10: memref<1x32xf32, #tpu.memory_space<vmem>>, %arg11: memref<1x32xf32, #tpu.memory_space<vmem>>, %arg12: memref<1x32xf32, #tpu.memory_space<vmem>>, %arg13: memref<32x32xbf16, #tpu.memory_space<vmem>>, %arg14: memref<1x32xf32, #tpu.memory_space<vmem>>, %arg15: memref<1x32xf32, #tpu.memory_space<vmem>>, %arg16: memref<1x32xf32, #tpu.memory_space<vmem>>, %arg17: memref<32x32xbf16, #tpu.memory_space<vmem>>, %arg18: memref<7x1x4xf32, #tpu.memory_space<vmem>>, %arg19: memref<7x1x4xf32, #tpu.memory_space<vmem>>, %arg20: memref<7x1x4xf32, #tpu.memory_space<vmem>>, %arg21: memref<7x12x4xbf16, #tpu.memory_space<vmem>>, %arg22: memref<1x16xf32, #tpu.memory_space<vmem>>, %arg23: memref<1x32xf32, #tpu.memory_space<vmem>>, %arg24: memref<32x16xbf16, #tpu.memory_space<vmem>>, %arg25: memref<16x32xbf16, #tpu.memory_space<vmem>>, %arg26: memref<1x32xf32, #tpu.memory_space<vmem>>, %arg27: memref<1x32xf32, #tpu.memory_space<vmem>>, %arg28: memref<1x32xf32, #tpu.memory_space<vmem>>, %arg29: memref<32x32xbf16, #tpu.memory_space<vmem>>, %arg30: memref<1x32xf32, #tpu.memory_space<vmem>>, %arg31: memref<1x32xf32, #tpu.memory_space<vmem>>, %arg32: memref<1x32xf32, #tpu.memory_space<vmem>>, %arg33: memref<32x32xbf16, #tpu.memory_space<vmem>>, %arg34: memref<7x1x4xf32, #tpu.memory_space<vmem>>, %arg35: memref<7x1x4xf32, #tpu.memory_space<vmem>>, %arg36: memref<7x1x4xf32, #tpu.memory_space<vmem>>, %arg37: memref<7x12x4xbf16, #tpu.memory_space<vmem>>, %arg38: memref<1x16xf32, #tpu.memory_space<vmem>>, %arg39: memref<1x32xf32, #tpu.memory_space<vmem>>, %arg40: memref<32x16xbf16, #tpu.memory_space<vmem>>, %arg41: memref<16x32xbf16, #tpu.memory_space<vmem>>, %arg42: memref<1x32xf32, #tpu.memory_space<vmem>>, %arg43: memref<1x32xf32, #tpu.memory_space<vmem>>, %arg44: memref<1x32xf32, #tpu.memory_space<vmem>>, %arg45: memref<32x32xbf16, #tpu.memory_space<vmem>>, %arg46: memref<1x32xf32, #tpu.memory_space<vmem>>, %arg47: memref<1x32xf32, #tpu.memory_space<vmem>>, %arg48: memref<1x32xf32, #tpu.memory_space<vmem>>, %arg49: memref<32x32xbf16, #tpu.memory_space<vmem>>, %arg50: memref<1x48xf32, #tpu.memory_space<vmem>>, %arg51: memref<1x48xf32, #tpu.memory_space<vmem>>, %arg52: memref<1x48xf32, #tpu.memory_space<vmem>>, %arg53: memref<96x48xbf16, #tpu.memory_space<vmem>>, %arg54: memref<1x32xf32, #tpu.memory_space<vmem>>, %arg55: memref<1x32xf32, #tpu.memory_space<vmem>>, %arg56: memref<1x32xf32, #tpu.memory_space<vmem>>, %arg57: memref<80x32xbf16, #tpu.memory_space<vmem>>, %arg58: memref<1x16x48xf32, #tpu.memory_space<vmem>>, %arg59: memref<24x16xf32, #tpu.memory_space<vmem>>, %arg60: memref<16x80xbf16, #tpu.memory_space<vmem>>, %arg61: memref<16x32xf32, #tpu.memory_space<vmem>>, %arg62: memref<16x32xbf16, #tpu.memory_space<vmem>>, %arg63: memref<16x96xbf16, #tpu.memory_space<vmem>>) attributes {dimension_semantics = [#tpu.dimension_semantics<parallel>], iteration_bounds = array<i64: 2>, scalar_prefetch = 0 : i64, scratch_operands = 5 : i64, tpu.core_type = #tpu.core_type<tc>, window_params = [{transform_indices = @transform_0, window_bounds = array<i64: 1, 16, 16>}, {pipeline_mode = #tpu.pipeline_mode<synchronous>, transform_indices = @transform_1, window_bounds = array<i64: 7, 1, 4>}, {pipeline_mode = #tpu.pipeline_mode<synchronous>, transform_indices = @transform_2, window_bounds = array<i64: 7, 1, 4>}, {pipeline_mode = #tpu.pipeline_mode<synchronous>, transform_indices = @transform_3, window_bounds = array<i64: 7, 1, 4>}, {pipeline_mode = #tpu.pipeline_mode<synchronous>, transform_indices = @transform_4, window_bounds = array<i64: 7, 12, 4>}, {pipeline_mode = #tpu.pipeline_mode<synchronous>, transform_indices = @transform_5, window_bounds = array<i64: 1, 16>}, {pipeline_mode = #tpu.pipeline_mode<synchronous>, transform_indices = @transform_6, window_bounds = array<i64: 1, 32>}, {pipeline_mode = #tpu.pipeline_mode<synchronous>, transform_indices = @transform_7, window_bounds = array<i64: 32, 16>}, {pipeline_mode = #tpu.pipeline_mode<synchronous>, transform_indices = @transform_8, window_bounds = array<i64: 16, 32>}, {pipeline_mode = #tpu.pipeline_mode<synchronous>, transform_indices = @transform_9, window_bounds = array<i64: 1, 32>}, {pipeline_mode = #tpu.pipeline_mode<synchronous>, transform_indices = @transform_10, window_bounds = array<i64: 1, 32>}, {pipeline_mode = #tpu.pipeline_mode<synchronous>, transform_indices = @transform_11, window_bounds = array<i64: 1, 32>}, {pipeline_mode = #tpu.pipeline_mode<synchronous>, transform_indices = @transform_12, window_bounds = array<i64: 32, 32>}, {pipeline_mode = #tpu.pipeline_mode<synchronous>, transform_indices = @transform_13, window_bounds = array<i64: 1, 32>}, {pipeline_mode = #tpu.pipeline_mode<synchronous>, transform_indices = @transform_14, window_bounds = array<i64: 1, 32>}, {pipeline_mode = #tpu.pipeline_mode<synchronous>, transform_indices = @transform_15, window_bounds = array<i64: 1, 32>}, {pipeline_mode = #tpu.pipeline_mode<synchronous>, transform_indices = @transform_16, window_bounds = array<i64: 32, 32>}, {pipeline_mode = #tpu.pipeline_mode<synchronous>, transform_indices = @transform_17, window_bounds = array<i64: 7, 1, 4>}, {pipeline_mode = #tpu.pipeline_mode<synchronous>, transform_indices = @transform_18, window_bounds = array<i64: 7, 1, 4>}, {pipeline_mode = #tpu.pipeline_mode<synchronous>, transform_indices = @transform_19, window_bounds = array<i64: 7, 1, 4>}, {pipeline_mode = #tpu.pipeline_mode<synchronous>, transform_indices = @transform_20, window_bounds = array<i64: 7, 12, 4>}, {pipeline_mode = #tpu.pipeline_mode<synchronous>, transform_indices = @transform_21, window_bounds = array<i64: 1, 16>}, {pipeline_mode = #tpu.pipeline_mode<synchronous>, transform_indices = @transform_22, window_bounds = array<i64: 1, 32>}, {pipeline_mode = #tpu.pipeline_mode<synchronous>, transform_indices = @transform_23, window_bounds = array<i64: 32, 16>}, {pipeline_mode = #tpu.pipeline_mode<synchronous>, transform_indices = @transform_24, window_bounds = array<i64: 16, 32>}, {pipeline_mode = #tpu.pipeline_mode<synchronous>, transform_indices = @transform_25, window_bounds = array<i64: 1, 32>}, {pipeline_mode = #tpu.pipeline_mode<synchronous>, transform_indices = @transform_26, window_bounds = array<i64: 1, 32>}, {pipeline_mode = #tpu.pipeline_mode<synchronous>, transform_indices = @transform_27, window_bounds = array<i64: 1, 32>}, {pipeline_mode = #tpu.pipeline_mode<synchronous>, transform_indices = @transform_28, window_bounds = array<i64: 32, 32>}, {pipeline_mode = #tpu.pipeline_mode<synchronous>, transform_indices = @transform_29, window_bounds = array<i64: 1, 32>}, {pipeline_mode = #tpu.pipeline_mode<synchronous>, transform_indices = @transform_30, window_bounds = array<i64: 1, 32>}, {pipeline_mode = #tpu.pipeline_mode<synchronous>, transform_indices = @transform_31, window_bounds = array<i64: 1, 32>}, {pipeline_mode = #tpu.pipeline_mode<synchronous>, transform_indices = @transform_32, window_bounds = array<i64: 32, 32>}, {pipeline_mode = #tpu.pipeline_mode<synchronous>, transform_indices = @transform_33, window_bounds = array<i64: 7, 1, 4>}, {pipeline_mode = #tpu.pipeline_mode<synchronous>, transform_indices = @transform_34, window_bounds = array<i64: 7, 1, 4>}, {pipeline_mode = #tpu.pipeline_mode<synchronous>, transform_indices = @transform_35, window_bounds = array<i64: 7, 1, 4>}, {pipeline_mode = #tpu.pipeline_mode<synchronous>, transform_indices = @transform_36, window_bounds = array<i64: 7, 12, 4>}, {pipeline_mode = #tpu.pipeline_mode<synchronous>, transform_indices = @transform_37, window_bounds = array<i64: 1, 16>}, {pipeline_mode = #tpu.pipeline_mode<synchronous>, transform_indices = @transform_38, window_bounds = array<i64: 1, 32>}, {pipeline_mode = #tpu.pipeline_mode<synchronous>, transform_indices = @transform_39, window_bounds = array<i64: 32, 16>}, {pipeline_mode = #tpu.pipeline_mode<synchronous>, transform_indices = @transform_40, window_bounds = array<i64: 16, 32>}, {pipeline_mode = #tpu.pipeline_mode<synchronous>, transform_indices = @transform_41, window_bounds = array<i64: 1, 32>}, {pipeline_mode = #tpu.pipeline_mode<synchronous>, transform_indices = @transform_42, window_bounds = array<i64: 1, 32>}, {pipeline_mode = #tpu.pipeline_mode<synchronous>, transform_indices = @transform_43, window_bounds = array<i64: 1, 32>}, {pipeline_mode = #tpu.pipeline_mode<synchronous>, transform_indices = @transform_44, window_bounds = array<i64: 32, 32>}, {pipeline_mode = #tpu.pipeline_mode<synchronous>, transform_indices = @transform_45, window_bounds = array<i64: 1, 32>}, {pipeline_mode = #tpu.pipeline_mode<synchronous>, transform_indices = @transform_46, window_bounds = array<i64: 1, 32>}, {pipeline_mode = #tpu.pipeline_mode<synchronous>, transform_indices = @transform_47, window_bounds = array<i64: 1, 32>}, {pipeline_mode = #tpu.pipeline_mode<synchronous>, transform_indices = @transform_48, window_bounds = array<i64: 32, 32>}, {pipeline_mode = #tpu.pipeline_mode<synchronous>, transform_indices = @transform_49, window_bounds = array<i64: 1, 48>}, {pipeline_mode = #tpu.pipeline_mode<synchronous>, transform_indices = @transform_50, window_bounds = array<i64: 1, 48>}, {pipeline_mode = #tpu.pipeline_mode<synchronous>, transform_indices = @transform_51, window_bounds = array<i64: 1, 48>}, {pipeline_mode = #tpu.pipeline_mode<synchronous>, transform_indices = @transform_52, window_bounds = array<i64: 96, 48>}, {pipeline_mode = #tpu.pipeline_mode<synchronous>, transform_indices = @transform_53, window_bounds = array<i64: 1, 32>}, {pipeline_mode = #tpu.pipeline_mode<synchronous>, transform_indices = @transform_54, window_bounds = array<i64: 1, 32>}, {pipeline_mode = #tpu.pipeline_mode<synchronous>, transform_indices = @transform_55, window_bounds = array<i64: 1, 32>}, {pipeline_mode = #tpu.pipeline_mode<synchronous>, transform_indices = @transform_56, window_bounds = array<i64: 80, 32>}, {transform_indices = @transform_57, window_bounds = array<i64: 1, 16, 48>}]} {
    %cst = arith.constant 0.000000e+00 : f32
    %0 = vector.broadcast %cst : f32 to vector<4x16xf32>
    %c0 = arith.constant 0 : index
    %c0_0 = arith.constant 0 : index
    %1 = vector.load %arg59[%c0, %c0_0] : memref<24x16xf32, #tpu.memory_space<vmem>>, vector<4x16xf32>
    tpu.vector_store %arg59[%c0, %c0_0], %0 {strides = array<i32>} : memref<24x16xf32, #tpu.memory_space<vmem>>, vector<4x16xf32>,
    %cst_1 = arith.constant 0.000000e+00 : f32
    %2 = vector.broadcast %cst_1 : f32 to vector<4x16xf32>
    %c20 = arith.constant 20 : index
    %c0_2 = arith.constant 0 : index
    %3 = vector.load %arg59[%c20, %c0_2] : memref<24x16xf32, #tpu.memory_space<vmem>>, vector<4x16xf32>
    tpu.vector_store %arg59[%c20, %c0_2], %2 {strides = array<i32>} : memref<24x16xf32, #tpu.memory_space<vmem>>, vector<4x16xf32>,
    %c0_3 = arith.constant 0 : index
    %c0_4 = arith.constant 0 : index
    %c0_5 = arith.constant 0 : index
    %4 = vector.load %arg1[%c0_3, %c0_4, %c0_5] : memref<1x16x16xf32, #tpu.memory_space<vmem>>, vector<1x16x16xf32>
    %5 = vector.shape_cast %4 : vector<1x16x16xf32> to vector<16x16xf32>
    %c0_6 = arith.constant 0 : index
    %c0_7 = arith.constant 0 : index
    %6 = vector.load %arg57[%c0_6, %c0_7] : memref<80x32xbf16, #tpu.memory_space<vmem>>, vector<80x32xbf16>
    %c0_8 = arith.constant 0 : index
    %c0_9 = arith.constant 0 : index
    %7 = vector.load %arg54[%c0_8, %c0_9] : memref<1x32xf32, #tpu.memory_space<vmem>>, vector<1x32xf32>
    %c0_10 = arith.constant 0 : index
    %c0_11 = arith.constant 0 : index
    %8 = vector.load %arg55[%c0_10, %c0_11] : memref<1x32xf32, #tpu.memory_space<vmem>>, vector<1x32xf32>
    %c0_12 = arith.constant 0 : index
    %c0_13 = arith.constant 0 : index
    %9 = vector.load %arg56[%c0_12, %c0_13] : memref<1x32xf32, #tpu.memory_space<vmem>>, vector<1x32xf32>
    %c4 = arith.constant 4 : index
    %c0_14 = arith.constant 0 : index
    %10 = vector.load %arg59[%c4, %c0_14] : memref<24x16xf32, #tpu.memory_space<vmem>>, vector<16x16xf32>
    tpu.vector_store %arg59[%c4, %c0_14], %5 {strides = array<i32>} : memref<24x16xf32, #tpu.memory_space<vmem>>, vector<16x16xf32>,
    %c2 = arith.constant 2 : index
    %c0_15 = arith.constant 0 : index
    %11 = vector.load %arg59[%c2, %c0_15] : memref<24x16xf32, #tpu.memory_space<vmem>>, vector<16x16xf32>
    %12 = arith.truncf %11 : vector<16x16xf32> to vector<16x16xbf16>
    %c0_16 = arith.constant 0 : index
    %c0_17 = arith.constant 0 : index
    %13 = vector.load %arg60[%c0_16, %c0_17] : memref<16x80xbf16, #tpu.memory_space<vmem>>, vector<16x16xbf16>
    tpu.vector_store %arg60[%c0_16, %c0_17], %12 {strides = array<i32>} : memref<16x80xbf16, #tpu.memory_space<vmem>>, vector<16x16xbf16>,
    %c3 = arith.constant 3 : index
    %c0_18 = arith.constant 0 : index
    %14 = vector.load %arg59[%c3, %c0_18] : memref<24x16xf32, #tpu.memory_space<vmem>>, vector<16x16xf32>
    %15 = arith.truncf %14 : vector<16x16xf32> to vector<16x16xbf16>
    %c0_19 = arith.constant 0 : index
    %c16 = arith.constant 16 : index
    %16 = vector.load %arg60[%c0_19, %c16] : memref<16x80xbf16, #tpu.memory_space<vmem>>, vector<16x16xbf16>
    tpu.vector_store %arg60[%c0_19, %c16], %15 {strides = array<i32>} : memref<16x80xbf16, #tpu.memory_space<vmem>>, vector<16x16xbf16>,
    %c4_20 = arith.constant 4 : index
    %c0_21 = arith.constant 0 : index
    %17 = vector.load %arg59[%c4_20, %c0_21] : memref<24x16xf32, #tpu.memory_space<vmem>>, vector<16x16xf32>
    %18 = arith.truncf %17 : vector<16x16xf32> to vector<16x16xbf16>
    %c0_22 = arith.constant 0 : index
    %c32 = arith.constant 32 : index
    %19 = vector.load %arg60[%c0_22, %c32] : memref<16x80xbf16, #tpu.memory_space<vmem>>, vector<16x16xbf16>
    tpu.vector_store %arg60[%c0_22, %c32], %18 {strides = array<i32>} : memref<16x80xbf16, #tpu.memory_space<vmem>>, vector<16x16xbf16>,
    %c5 = arith.constant 5 : index
    %c0_23 = arith.constant 0 : index
    %20 = vector.load %arg59[%c5, %c0_23] : memref<24x16xf32, #tpu.memory_space<vmem>>, vector<16x16xf32>
    %21 = arith.truncf %20 : vector<16x16xf32> to vector<16x16xbf16>
    %c0_24 = arith.constant 0 : index
    %c48 = arith.constant 48 : index
    %22 = vector.load %arg60[%c0_24, %c48] : memref<16x80xbf16, #tpu.memory_space<vmem>>, vector<16x16xbf16>
    tpu.vector_store %arg60[%c0_24, %c48], %21 {strides = array<i32>} : memref<16x80xbf16, #tpu.memory_space<vmem>>, vector<16x16xbf16>,
    %c6 = arith.constant 6 : index
    %c0_25 = arith.constant 0 : index
    %23 = vector.load %arg59[%c6, %c0_25] : memref<24x16xf32, #tpu.memory_space<vmem>>, vector<16x16xf32>
    %24 = arith.truncf %23 : vector<16x16xf32> to vector<16x16xbf16>
    %c0_26 = arith.constant 0 : index
    %c64 = arith.constant 64 : index
    %25 = vector.load %arg60[%c0_26, %c64] : memref<16x80xbf16, #tpu.memory_space<vmem>>, vector<16x16xbf16>
    tpu.vector_store %arg60[%c0_26, %c64], %24 {strides = array<i32>} : memref<16x80xbf16, #tpu.memory_space<vmem>>, vector<16x16xbf16>,
    %c0_27 = arith.constant 0 : index
    %c0_28 = arith.constant 0 : index
    %26 = vector.load %arg60[%c0_27, %c0_28] : memref<16x80xbf16, #tpu.memory_space<vmem>>, vector<16x80xbf16>
    %cst_29 = arith.constant dense<0.000000e+00> : vector<16x32xf32>
    %27 = tpu.matmul %26, %6, %cst_29 {dimension_numbers = #tpu.dot_dimension_numbers<[1], [0], [0], [1], [0, 0, 1, 1], [], []>} : vector<16x80xbf16>, vector<80x32xbf16>, vector<16x32xf32> -> vector<16x32xf32>
    %28 = vector.broadcast %7 : vector<1x32xf32> to vector<16x32xf32>
    %29 = arith.addf %27, %28 : vector<16x32xf32>
    %cst_30 = arith.constant 0.000000e+00 : f32
    %30 = vector.broadcast %cst_30 : f32 to vector<16x32xf32>
    %31 = arith.maximumf %29, %30 : vector<16x32xf32>
    %32 = vector.broadcast %8 : vector<1x32xf32> to vector<16x32xf32>
    %33 = arith.mulf %31, %32 : vector<16x32xf32>
    %34 = vector.broadcast %9 : vector<1x32xf32> to vector<16x32xf32>
    %35 = arith.addf %33, %34 : vector<16x32xf32>
    %c0_31 = arith.constant 0 : index
    %c0_32 = arith.constant 0 : index
    %36 = vector.load %arg13[%c0_31, %c0_32] : memref<32x32xbf16, #tpu.memory_space<vmem>>, vector<32x32xbf16>
    %c0_33 = arith.constant 0 : index
    %c0_34 = arith.constant 0 : index
    %37 = vector.load %arg10[%c0_33, %c0_34] : memref<1x32xf32, #tpu.memory_space<vmem>>, vector<1x32xf32>
    %c0_35 = arith.constant 0 : index
    %c0_36 = arith.constant 0 : index
    %38 = vector.load %arg11[%c0_35, %c0_36] : memref<1x32xf32, #tpu.memory_space<vmem>>, vector<1x32xf32>
    %c0_37 = arith.constant 0 : index
    %c0_38 = arith.constant 0 : index
    %39 = vector.load %arg12[%c0_37, %c0_38] : memref<1x32xf32, #tpu.memory_space<vmem>>, vector<1x32xf32>
    %40 = arith.truncf %35 : vector<16x32xf32> to vector<16x32xbf16>
    %cst_39 = arith.constant dense<0.000000e+00> : vector<16x32xf32>
    %41 = tpu.matmul %40, %36, %cst_39 {dimension_numbers = #tpu.dot_dimension_numbers<[1], [0], [0], [1], [0, 0, 1, 1], [], []>} : vector<16x32xbf16>, vector<32x32xbf16>, vector<16x32xf32> -> vector<16x32xf32>
    %42 = vector.broadcast %37 : vector<1x32xf32> to vector<16x32xf32>
    %43 = arith.addf %41, %42 : vector<16x32xf32>
    %cst_40 = arith.constant 0.000000e+00 : f32
    %44 = vector.broadcast %cst_40 : f32 to vector<16x32xf32>
    %45 = arith.maximumf %43, %44 : vector<16x32xf32>
    %46 = vector.broadcast %38 : vector<1x32xf32> to vector<16x32xf32>
    %47 = arith.mulf %45, %46 : vector<16x32xf32>
    %48 = vector.broadcast %39 : vector<1x32xf32> to vector<16x32xf32>
    %49 = arith.addf %47, %48 : vector<16x32xf32>
    %c0_41 = arith.constant 0 : index
    %c0_42 = arith.constant 0 : index
    %50 = vector.load %arg61[%c0_41, %c0_42] : memref<16x32xf32, #tpu.memory_space<vmem>>, vector<16x32xf32>
    tpu.vector_store %arg61[%c0_41, %c0_42], %49 {strides = array<i32>} : memref<16x32xf32, #tpu.memory_space<vmem>>, vector<16x32xf32>,
    %c0_43 = arith.constant 0 : index
    %c0_44 = arith.constant 0 : index
    %51 = vector.load %arg61[%c0_43, %c0_44] : memref<16x32xf32, #tpu.memory_space<vmem>>, vector<16x4xf32>
    %c0_45 = arith.constant 0 : index
    %c0_46 = arith.constant 0 : index
    %c0_47 = arith.constant 0 : index
    %52 = vector.load %arg5[%c0_45, %c0_46, %c0_47] : memref<7x12x4xbf16, #tpu.memory_space<vmem>>, vector<1x12x4xbf16>
    %53 = vector.shape_cast %52 : vector<1x12x4xbf16> to vector<12x4xbf16>
    %c0_48 = arith.constant 0 : index
    %c0_49 = arith.constant 0 : index
    %c0_50 = arith.constant 0 : index
    %54 = vector.load %arg2[%c0_48, %c0_49, %c0_50] : memref<7x1x4xf32, #tpu.memory_space<vmem>>, vector<1x1x4xf32>
    %55 = vector.shape_cast %54 : vector<1x1x4xf32> to vector<1x4xf32>
    %c0_51 = arith.constant 0 : index
    %c0_52 = arith.constant 0 : index
    %c0_53 = arith.constant 0 : index
    %56 = vector.load %arg3[%c0_51, %c0_52, %c0_53] : memref<7x1x4xf32, #tpu.memory_space<vmem>>, vector<1x1x4xf32>
    %57 = vector.shape_cast %56 : vector<1x1x4xf32> to vector<1x4xf32>
    %c0_54 = arith.constant 0 : index
    %c0_55 = arith.constant 0 : index
    %c0_56 = arith.constant 0 : index
    %58 = vector.load %arg4[%c0_54, %c0_55, %c0_56] : memref<7x1x4xf32, #tpu.memory_space<vmem>>, vector<1x1x4xf32>
    %59 = vector.shape_cast %58 : vector<1x1x4xf32> to vector<1x4xf32>
    %c4_57 = arith.constant 4 : index
    %c0_58 = arith.constant 0 : index
    %60 = vector.load %arg59[%c4_57, %c0_58] : memref<24x16xf32, #tpu.memory_space<vmem>>, vector<16x4xf32>
    tpu.vector_store %arg59[%c4_57, %c0_58], %51 {strides = array<i32>} : memref<24x16xf32, #tpu.memory_space<vmem>>, vector<16x4xf32>,
    %c2_59 = arith.constant 2 : index
    %c0_60 = arith.constant 0 : index
    %61 = vector.load %arg59[%c2_59, %c0_60] : memref<24x16xf32, #tpu.memory_space<vmem>>, vector<16x4xf32>
    %62 = arith.truncf %61 : vector<16x4xf32> to vector<16x4xbf16>
    %c0_61 = arith.constant 0 : index
    %c0_62 = arith.constant 0 : index
    %63 = vector.load %arg60[%c0_61, %c0_62] : memref<16x80xbf16, #tpu.memory_space<vmem>>, vector<16x4xbf16>
    tpu.vector_store %arg60[%c0_61, %c0_62], %62 {strides = array<i32>} : memref<16x80xbf16, #tpu.memory_space<vmem>>, vector<16x4xbf16>,
    %c4_63 = arith.constant 4 : index
    %c0_64 = arith.constant 0 : index
    %64 = vector.load %arg59[%c4_63, %c0_64] : memref<24x16xf32, #tpu.memory_space<vmem>>, vector<16x4xf32>
    %65 = arith.truncf %64 : vector<16x4xf32> to vector<16x4xbf16>
    %c0_65 = arith.constant 0 : index
    %c4_66 = arith.constant 4 : index
    %66 = vector.load %arg60[%c0_65, %c4_66] : memref<16x80xbf16, #tpu.memory_space<vmem>>, vector<16x4xbf16>
    tpu.vector_store %arg60[%c0_65, %c4_66], %65 {strides = array<i32>} : memref<16x80xbf16, #tpu.memory_space<vmem>>, vector<16x4xbf16>,
    %c6_67 = arith.constant 6 : index
    %c0_68 = arith.constant 0 : index
    %67 = vector.load %arg59[%c6_67, %c0_68] : memref<24x16xf32, #tpu.memory_space<vmem>>, vector<16x4xf32>
    %68 = arith.truncf %67 : vector<16x4xf32> to vector<16x4xbf16>
    %c0_69 = arith.constant 0 : index
    %c8 = arith.constant 8 : index
    %69 = vector.load %arg60[%c0_69, %c8] : memref<16x80xbf16, #tpu.memory_space<vmem>>, vector<16x4xbf16>
    tpu.vector_store %arg60[%c0_69, %c8], %68 {strides = array<i32>} : memref<16x80xbf16, #tpu.memory_space<vmem>>, vector<16x4xbf16>,
    %c0_70 = arith.constant 0 : index
    %c0_71 = arith.constant 0 : index
    %70 = vector.load %arg60[%c0_70, %c0_71] : memref<16x80xbf16, #tpu.memory_space<vmem>>, vector<16x12xbf16>
    %cst_72 = arith.constant dense<0.000000e+00> : vector<16x4xf32>
    %71 = tpu.matmul %70, %53, %cst_72 {dimension_numbers = #tpu.dot_dimension_numbers<[1], [0], [0], [1], [0, 0, 1, 1], [], []>} : vector<16x12xbf16>, vector<12x4xbf16>, vector<16x4xf32> -> vector<16x4xf32>
    %72 = vector.broadcast %55 : vector<1x4xf32> to vector<16x4xf32>
    %73 = arith.addf %71, %72 : vector<16x4xf32>
    %cst_73 = arith.constant 0.000000e+00 : f32
    %74 = vector.broadcast %cst_73 : f32 to vector<16x4xf32>
    %75 = arith.maximumf %73, %74 : vector<16x4xf32>
    %76 = vector.broadcast %57 : vector<1x4xf32> to vector<16x4xf32>
    %77 = arith.mulf %75, %76 : vector<16x4xf32>
    %78 = vector.broadcast %59 : vector<1x4xf32> to vector<16x4xf32>
    %79 = arith.addf %77, %78 : vector<16x4xf32>
    %80 = arith.truncf %79 : vector<16x4xf32> to vector<16x4xbf16>
    %c0_74 = arith.constant 0 : index
    %c0_75 = arith.constant 0 : index
    %81 = vector.load %arg62[%c0_74, %c0_75] : memref<16x32xbf16, #tpu.memory_space<vmem>>, vector<16x4xbf16>
    tpu.vector_store %arg62[%c0_74, %c0_75], %80 {strides = array<i32>} : memref<16x32xbf16, #tpu.memory_space<vmem>>, vector<16x4xbf16>,
    %c0_76 = arith.constant 0 : index
    %c4_77 = arith.constant 4 : index
    %82 = vector.load %arg61[%c0_76, %c4_77] : memref<16x32xf32, #tpu.memory_space<vmem>>, vector<16x4xf32>
    %83 = arith.addf %79, %82 : vector<16x4xf32>
    %c1 = arith.constant 1 : index
    %c0_78 = arith.constant 0 : index
    %c0_79 = arith.constant 0 : index
    %84 = vector.load %arg5[%c1, %c0_78, %c0_79] : memref<7x12x4xbf16, #tpu.memory_space<vmem>>, vector<1x12x4xbf16>
    %85 = vector.shape_cast %84 : vector<1x12x4xbf16> to vector<12x4xbf16>
    %c1_80 = arith.constant 1 : index
    %c0_81 = arith.constant 0 : index
    %c0_82 = arith.constant 0 : index
    %86 = vector.load %arg2[%c1_80, %c0_81, %c0_82] : memref<7x1x4xf32, #tpu.memory_space<vmem>>, vector<1x1x4xf32>
    %87 = vector.shape_cast %86 : vector<1x1x4xf32> to vector<1x4xf32>
    %c1_83 = arith.constant 1 : index
    %c0_84 = arith.constant 0 : index
    %c0_85 = arith.constant 0 : index
    %88 = vector.load %arg3[%c1_83, %c0_84, %c0_85] : memref<7x1x4xf32, #tpu.memory_space<vmem>>, vector<1x1x4xf32>
    %89 = vector.shape_cast %88 : vector<1x1x4xf32> to vector<1x4xf32>
    %c1_86 = arith.constant 1 : index
    %c0_87 = arith.constant 0 : index
    %c0_88 = arith.constant 0 : index
    %90 = vector.load %arg4[%c1_86, %c0_87, %c0_88] : memref<7x1x4xf32, #tpu.memory_space<vmem>>, vector<1x1x4xf32>
    %91 = vector.shape_cast %90 : vector<1x1x4xf32> to vector<1x4xf32>
    %c4_89 = arith.constant 4 : index
    %c0_90 = arith.constant 0 : index
    %92 = vector.load %arg59[%c4_89, %c0_90] : memref<24x16xf32, #tpu.memory_space<vmem>>, vector<16x4xf32>
    tpu.vector_store %arg59[%c4_89, %c0_90], %83 {strides = array<i32>} : memref<24x16xf32, #tpu.memory_space<vmem>>, vector<16x4xf32>,
    %c2_91 = arith.constant 2 : index
    %c0_92 = arith.constant 0 : index
    %93 = vector.load %arg59[%c2_91, %c0_92] : memref<24x16xf32, #tpu.memory_space<vmem>>, vector<16x4xf32>
    %94 = arith.truncf %93 : vector<16x4xf32> to vector<16x4xbf16>
    %c0_93 = arith.constant 0 : index
    %c0_94 = arith.constant 0 : index
    %95 = vector.load %arg60[%c0_93, %c0_94] : memref<16x80xbf16, #tpu.memory_space<vmem>>, vector<16x4xbf16>
    tpu.vector_store %arg60[%c0_93, %c0_94], %94 {strides = array<i32>} : memref<16x80xbf16, #tpu.memory_space<vmem>>, vector<16x4xbf16>,
    %c4_95 = arith.constant 4 : index
    %c0_96 = arith.constant 0 : index
    %96 = vector.load %arg59[%c4_95, %c0_96] : memref<24x16xf32, #tpu.memory_space<vmem>>, vector<16x4xf32>
    %97 = arith.truncf %96 : vector<16x4xf32> to vector<16x4xbf16>
    %c0_97 = arith.constant 0 : index
    %c4_98 = arith.constant 4 : index
    %98 = vector.load %arg60[%c0_97, %c4_98] : memref<16x80xbf16, #tpu.memory_space<vmem>>, vector<16x4xbf16>
    tpu.vector_store %arg60[%c0_97, %c4_98], %97 {strides = array<i32>} : memref<16x80xbf16, #tpu.memory_space<vmem>>, vector<16x4xbf16>,
    %c6_99 = arith.constant 6 : index
    %c0_100 = arith.constant 0 : index
    %99 = vector.load %arg59[%c6_99, %c0_100] : memref<24x16xf32, #tpu.memory_space<vmem>>, vector<16x4xf32>
    %100 = arith.truncf %99 : vector<16x4xf32> to vector<16x4xbf16>
    %c0_101 = arith.constant 0 : index
    %c8_102 = arith.constant 8 : index
    %101 = vector.load %arg60[%c0_101, %c8_102] : memref<16x80xbf16, #tpu.memory_space<vmem>>, vector<16x4xbf16>
    tpu.vector_store %arg60[%c0_101, %c8_102], %100 {strides = array<i32>} : memref<16x80xbf16, #tpu.memory_space<vmem>>, vector<16x4xbf16>,
    %c0_103 = arith.constant 0 : index
    %c0_104 = arith.constant 0 : index
    %102 = vector.load %arg60[%c0_103, %c0_104] : memref<16x80xbf16, #tpu.memory_space<vmem>>, vector<16x12xbf16>
    %cst_105 = arith.constant dense<0.000000e+00> : vector<16x4xf32>
    %103 = tpu.matmul %102, %85, %cst_105 {dimension_numbers = #tpu.dot_dimension_numbers<[1], [0], [0], [1], [0, 0, 1, 1], [], []>} : vector<16x12xbf16>, vector<12x4xbf16>, vector<16x4xf32> -> vector<16x4xf32>
    %104 = vector.broadcast %87 : vector<1x4xf32> to vector<16x4xf32>
    %105 = arith.addf %103, %104 : vector<16x4xf32>
    %cst_106 = arith.constant 0.000000e+00 : f32
    %106 = vector.broadcast %cst_106 : f32 to vector<16x4xf32>
    %107 = arith.maximumf %105, %106 : vector<16x4xf32>
    %108 = vector.broadcast %89 : vector<1x4xf32> to vector<16x4xf32>
    %109 = arith.mulf %107, %108 : vector<16x4xf32>
    %110 = vector.broadcast %91 : vector<1x4xf32> to vector<16x4xf32>
    %111 = arith.addf %109, %110 : vector<16x4xf32>
    %112 = arith.truncf %111 : vector<16x4xf32> to vector<16x4xbf16>
    %c0_107 = arith.constant 0 : index
    %c4_108 = arith.constant 4 : index
    %113 = vector.load %arg62[%c0_107, %c4_108] : memref<16x32xbf16, #tpu.memory_space<vmem>>, vector<16x4xbf16>
    tpu.vector_store %arg62[%c0_107, %c4_108], %112 {strides = array<i32>} : memref<16x32xbf16, #tpu.memory_space<vmem>>, vector<16x4xbf16>,
    %c0_109 = arith.constant 0 : index
    %c8_110 = arith.constant 8 : index
    %114 = vector.load %arg61[%c0_109, %c8_110] : memref<16x32xf32, #tpu.memory_space<vmem>>, vector<16x4xf32>
    %115 = arith.addf %111, %114 : vector<16x4xf32>
    %c2_111 = arith.constant 2 : index
    %c0_112 = arith.constant 0 : index
    %c0_113 = arith.constant 0 : index
    %116 = vector.load %arg5[%c2_111, %c0_112, %c0_113] : memref<7x12x4xbf16, #tpu.memory_space<vmem>>, vector<1x12x4xbf16>
    %117 = vector.shape_cast %116 : vector<1x12x4xbf16> to vector<12x4xbf16>
    %c2_114 = arith.constant 2 : index
    %c0_115 = arith.constant 0 : index
    %c0_116 = arith.constant 0 : index
    %118 = vector.load %arg2[%c2_114, %c0_115, %c0_116] : memref<7x1x4xf32, #tpu.memory_space<vmem>>, vector<1x1x4xf32>
    %119 = vector.shape_cast %118 : vector<1x1x4xf32> to vector<1x4xf32>
    %c2_117 = arith.constant 2 : index
    %c0_118 = arith.constant 0 : index
    %c0_119 = arith.constant 0 : index
    %120 = vector.load %arg3[%c2_117, %c0_118, %c0_119] : memref<7x1x4xf32, #tpu.memory_space<vmem>>, vector<1x1x4xf32>
    %121 = vector.shape_cast %120 : vector<1x1x4xf32> to vector<1x4xf32>
    %c2_120 = arith.constant 2 : index
    %c0_121 = arith.constant 0 : index
    %c0_122 = arith.constant 0 : index
    %122 = vector.load %arg4[%c2_120, %c0_121, %c0_122] : memref<7x1x4xf32, #tpu.memory_space<vmem>>, vector<1x1x4xf32>
    %123 = vector.shape_cast %122 : vector<1x1x4xf32> to vector<1x4xf32>
    %c4_123 = arith.constant 4 : index
    %c0_124 = arith.constant 0 : index
    %124 = vector.load %arg59[%c4_123, %c0_124] : memref<24x16xf32, #tpu.memory_space<vmem>>, vector<16x4xf32>
    tpu.vector_store %arg59[%c4_123, %c0_124], %115 {strides = array<i32>} : memref<24x16xf32, #tpu.memory_space<vmem>>, vector<16x4xf32>,
    %c2_125 = arith.constant 2 : index
    %c0_126 = arith.constant 0 : index
    %125 = vector.load %arg59[%c2_125, %c0_126] : memref<24x16xf32, #tpu.memory_space<vmem>>, vector<16x4xf32>
    %126 = arith.truncf %125 : vector<16x4xf32> to vector<16x4xbf16>
    %c0_127 = arith.constant 0 : index
    %c0_128 = arith.constant 0 : index
    %127 = vector.load %arg60[%c0_127, %c0_128] : memref<16x80xbf16, #tpu.memory_space<vmem>>, vector<16x4xbf16>
    tpu.vector_store %arg60[%c0_127, %c0_128], %126 {strides = array<i32>} : memref<16x80xbf16, #tpu.memory_space<vmem>>, vector<16x4xbf16>,
    %c4_129 = arith.constant 4 : index
    %c0_130 = arith.constant 0 : index
    %128 = vector.load %arg59[%c4_129, %c0_130] : memref<24x16xf32, #tpu.memory_space<vmem>>, vector<16x4xf32>
    %129 = arith.truncf %128 : vector<16x4xf32> to vector<16x4xbf16>
    %c0_131 = arith.constant 0 : index
    %c4_132 = arith.constant 4 : index
    %130 = vector.load %arg60[%c0_131, %c4_132] : memref<16x80xbf16, #tpu.memory_space<vmem>>, vector<16x4xbf16>
    tpu.vector_store %arg60[%c0_131, %c4_132], %129 {strides = array<i32>} : memref<16x80xbf16, #tpu.memory_space<vmem>>, vector<16x4xbf16>,
    %c6_133 = arith.constant 6 : index
    %c0_134 = arith.constant 0 : index
    %131 = vector.load %arg59[%c6_133, %c0_134] : memref<24x16xf32, #tpu.memory_space<vmem>>, vector<16x4xf32>
    %132 = arith.truncf %131 : vector<16x4xf32> to vector<16x4xbf16>
    %c0_135 = arith.constant 0 : index
    %c8_136 = arith.constant 8 : index
    %133 = vector.load %arg60[%c0_135, %c8_136] : memref<16x80xbf16, #tpu.memory_space<vmem>>, vector<16x4xbf16>
    tpu.vector_store %arg60[%c0_135, %c8_136], %132 {strides = array<i32>} : memref<16x80xbf16, #tpu.memory_space<vmem>>, vector<16x4xbf16>,
    %c0_137 = arith.constant 0 : index
    %c0_138 = arith.constant 0 : index
    %134 = vector.load %arg60[%c0_137, %c0_138] : memref<16x80xbf16, #tpu.memory_space<vmem>>, vector<16x12xbf16>
    %cst_139 = arith.constant dense<0.000000e+00> : vector<16x4xf32>
    %135 = tpu.matmul %134, %117, %cst_139 {dimension_numbers = #tpu.dot_dimension_numbers<[1], [0], [0], [1], [0, 0, 1, 1], [], []>} : vector<16x12xbf16>, vector<12x4xbf16>, vector<16x4xf32> -> vector<16x4xf32>
    %136 = vector.broadcast %119 : vector<1x4xf32> to vector<16x4xf32>
    %137 = arith.addf %135, %136 : vector<16x4xf32>
    %cst_140 = arith.constant 0.000000e+00 : f32
    %138 = vector.broadcast %cst_140 : f32 to vector<16x4xf32>
    %139 = arith.maximumf %137, %138 : vector<16x4xf32>
    %140 = vector.broadcast %121 : vector<1x4xf32> to vector<16x4xf32>
    %141 = arith.mulf %139, %140 : vector<16x4xf32>
    %142 = vector.broadcast %123 : vector<1x4xf32> to vector<16x4xf32>
    %143 = arith.addf %141, %142 : vector<16x4xf32>
    %144 = arith.truncf %143 : vector<16x4xf32> to vector<16x4xbf16>
    %c0_141 = arith.constant 0 : index
    %c8_142 = arith.constant 8 : index
    %145 = vector.load %arg62[%c0_141, %c8_142] : memref<16x32xbf16, #tpu.memory_space<vmem>>, vector<16x4xbf16>
    tpu.vector_store %arg62[%c0_141, %c8_142], %144 {strides = array<i32>} : memref<16x32xbf16, #tpu.memory_space<vmem>>, vector<16x4xbf16>,
    %c0_143 = arith.constant 0 : index
    %c12 = arith.constant 12 : index
    %146 = vector.load %arg61[%c0_143, %c12] : memref<16x32xf32, #tpu.memory_space<vmem>>, vector<16x4xf32>
    %147 = arith.addf %143, %146 : vector<16x4xf32>
    %c3_144 = arith.constant 3 : index
    %c0_145 = arith.constant 0 : index
    %c0_146 = arith.constant 0 : index
    %148 = vector.load %arg5[%c3_144, %c0_145, %c0_146] : memref<7x12x4xbf16, #tpu.memory_space<vmem>>, vector<1x12x4xbf16>
    %149 = vector.shape_cast %148 : vector<1x12x4xbf16> to vector<12x4xbf16>
    %c3_147 = arith.constant 3 : index
    %c0_148 = arith.constant 0 : index
    %c0_149 = arith.constant 0 : index
    %150 = vector.load %arg2[%c3_147, %c0_148, %c0_149] : memref<7x1x4xf32, #tpu.memory_space<vmem>>, vector<1x1x4xf32>
    %151 = vector.shape_cast %150 : vector<1x1x4xf32> to vector<1x4xf32>
    %c3_150 = arith.constant 3 : index
    %c0_151 = arith.constant 0 : index
    %c0_152 = arith.constant 0 : index
    %152 = vector.load %arg3[%c3_150, %c0_151, %c0_152] : memref<7x1x4xf32, #tpu.memory_space<vmem>>, vector<1x1x4xf32>
    %153 = vector.shape_cast %152 : vector<1x1x4xf32> to vector<1x4xf32>
    %c3_153 = arith.constant 3 : index
    %c0_154 = arith.constant 0 : index
    %c0_155 = arith.constant 0 : index
    %154 = vector.load %arg4[%c3_153, %c0_154, %c0_155] : memref<7x1x4xf32, #tpu.memory_space<vmem>>, vector<1x1x4xf32>
    %155 = vector.shape_cast %154 : vector<1x1x4xf32> to vector<1x4xf32>
    %c4_156 = arith.constant 4 : index
    %c0_157 = arith.constant 0 : index
    %156 = vector.load %arg59[%c4_156, %c0_157] : memref<24x16xf32, #tpu.memory_space<vmem>>, vector<16x4xf32>
    tpu.vector_store %arg59[%c4_156, %c0_157], %147 {strides = array<i32>} : memref<24x16xf32, #tpu.memory_space<vmem>>, vector<16x4xf32>,
    %c2_158 = arith.constant 2 : index
    %c0_159 = arith.constant 0 : index
    %157 = vector.load %arg59[%c2_158, %c0_159] : memref<24x16xf32, #tpu.memory_space<vmem>>, vector<16x4xf32>
    %158 = arith.truncf %157 : vector<16x4xf32> to vector<16x4xbf16>
    %c0_160 = arith.constant 0 : index
    %c0_161 = arith.constant 0 : index
    %159 = vector.load %arg60[%c0_160, %c0_161] : memref<16x80xbf16, #tpu.memory_space<vmem>>, vector<16x4xbf16>
    tpu.vector_store %arg60[%c0_160, %c0_161], %158 {strides = array<i32>} : memref<16x80xbf16, #tpu.memory_space<vmem>>, vector<16x4xbf16>,
    %c4_162 = arith.constant 4 : index
    %c0_163 = arith.constant 0 : index
    %160 = vector.load %arg59[%c4_162, %c0_163] : memref<24x16xf32, #tpu.memory_space<vmem>>, vector<16x4xf32>
    %161 = arith.truncf %160 : vector<16x4xf32> to vector<16x4xbf16>
    %c0_164 = arith.constant 0 : index
    %c4_165 = arith.constant 4 : index
    %162 = vector.load %arg60[%c0_164, %c4_165] : memref<16x80xbf16, #tpu.memory_space<vmem>>, vector<16x4xbf16>
    tpu.vector_store %arg60[%c0_164, %c4_165], %161 {strides = array<i32>} : memref<16x80xbf16, #tpu.memory_space<vmem>>, vector<16x4xbf16>,
    %c6_166 = arith.constant 6 : index
    %c0_167 = arith.constant 0 : index
    %163 = vector.load %arg59[%c6_166, %c0_167] : memref<24x16xf32, #tpu.memory_space<vmem>>, vector<16x4xf32>
    %164 = arith.truncf %163 : vector<16x4xf32> to vector<16x4xbf16>
    %c0_168 = arith.constant 0 : index
    %c8_169 = arith.constant 8 : index
    %165 = vector.load %arg60[%c0_168, %c8_169] : memref<16x80xbf16, #tpu.memory_space<vmem>>, vector<16x4xbf16>
    tpu.vector_store %arg60[%c0_168, %c8_169], %164 {strides = array<i32>} : memref<16x80xbf16, #tpu.memory_space<vmem>>, vector<16x4xbf16>,
    %c0_170 = arith.constant 0 : index
    %c0_171 = arith.constant 0 : index
    %166 = vector.load %arg60[%c0_170, %c0_171] : memref<16x80xbf16, #tpu.memory_space<vmem>>, vector<16x12xbf16>
    %cst_172 = arith.constant dense<0.000000e+00> : vector<16x4xf32>
    %167 = tpu.matmul %166, %149, %cst_172 {dimension_numbers = #tpu.dot_dimension_numbers<[1], [0], [0], [1], [0, 0, 1, 1], [], []>} : vector<16x12xbf16>, vector<12x4xbf16>, vector<16x4xf32> -> vector<16x4xf32>
    %168 = vector.broadcast %151 : vector<1x4xf32> to vector<16x4xf32>
    %169 = arith.addf %167, %168 : vector<16x4xf32>
    %cst_173 = arith.constant 0.000000e+00 : f32
    %170 = vector.broadcast %cst_173 : f32 to vector<16x4xf32>
    %171 = arith.maximumf %169, %170 : vector<16x4xf32>
    %172 = vector.broadcast %153 : vector<1x4xf32> to vector<16x4xf32>
    %173 = arith.mulf %171, %172 : vector<16x4xf32>
    %174 = vector.broadcast %155 : vector<1x4xf32> to vector<16x4xf32>
    %175 = arith.addf %173, %174 : vector<16x4xf32>
    %176 = arith.truncf %175 : vector<16x4xf32> to vector<16x4xbf16>
    %c0_174 = arith.constant 0 : index
    %c12_175 = arith.constant 12 : index
    %177 = vector.load %arg62[%c0_174, %c12_175] : memref<16x32xbf16, #tpu.memory_space<vmem>>, vector<16x4xbf16>
    tpu.vector_store %arg62[%c0_174, %c12_175], %176 {strides = array<i32>} : memref<16x32xbf16, #tpu.memory_space<vmem>>, vector<16x4xbf16>,
    %c0_176 = arith.constant 0 : index
    %c16_177 = arith.constant 16 : index
    %178 = vector.load %arg61[%c0_176, %c16_177] : memref<16x32xf32, #tpu.memory_space<vmem>>, vector<16x4xf32>
    %179 = arith.addf %175, %178 : vector<16x4xf32>
    %c4_178 = arith.constant 4 : index
    %c0_179 = arith.constant 0 : index
    %c0_180 = arith.constant 0 : index
    %180 = vector.load %arg5[%c4_178, %c0_179, %c0_180] : memref<7x12x4xbf16, #tpu.memory_space<vmem>>, vector<1x12x4xbf16>
    %181 = vector.shape_cast %180 : vector<1x12x4xbf16> to vector<12x4xbf16>
    %c4_181 = arith.constant 4 : index
    %c0_182 = arith.constant 0 : index
    %c0_183 = arith.constant 0 : index
    %182 = vector.load %arg2[%c4_181, %c0_182, %c0_183] : memref<7x1x4xf32, #tpu.memory_space<vmem>>, vector<1x1x4xf32>
    %183 = vector.shape_cast %182 : vector<1x1x4xf32> to vector<1x4xf32>
    %c4_184 = arith.constant 4 : index
    %c0_185 = arith.constant 0 : index
    %c0_186 = arith.constant 0 : index
    %184 = vector.load %arg3[%c4_184, %c0_185, %c0_186] : memref<7x1x4xf32, #tpu.memory_space<vmem>>, vector<1x1x4xf32>
    %185 = vector.shape_cast %184 : vector<1x1x4xf32> to vector<1x4xf32>
    %c4_187 = arith.constant 4 : index
    %c0_188 = arith.constant 0 : index
    %c0_189 = arith.constant 0 : index
    %186 = vector.load %arg4[%c4_187, %c0_188, %c0_189] : memref<7x1x4xf32, #tpu.memory_space<vmem>>, vector<1x1x4xf32>
    %187 = vector.shape_cast %186 : vector<1x1x4xf32> to vector<1x4xf32>
    %c4_190 = arith.constant 4 : index
    %c0_191 = arith.constant 0 : index
    %188 = vector.load %arg59[%c4_190, %c0_191] : memref<24x16xf32, #tpu.memory_space<vmem>>, vector<16x4xf32>
    tpu.vector_store %arg59[%c4_190, %c0_191], %179 {strides = array<i32>} : memref<24x16xf32, #tpu.memory_space<vmem>>, vector<16x4xf32>,
    %c2_192 = arith.constant 2 : index
    %c0_193 = arith.constant 0 : index
    %189 = vector.load %arg59[%c2_192, %c0_193] : memref<24x16xf32, #tpu.memory_space<vmem>>, vector<16x4xf32>
    %190 = arith.truncf %189 : vector<16x4xf32> to vector<16x4xbf16>
    %c0_194 = arith.constant 0 : index
    %c0_195 = arith.constant 0 : index
    %191 = vector.load %arg60[%c0_194, %c0_195] : memref<16x80xbf16, #tpu.memory_space<vmem>>, vector<16x4xbf16>
    tpu.vector_store %arg60[%c0_194, %c0_195], %190 {strides = array<i32>} : memref<16x80xbf16, #tpu.memory_space<vmem>>, vector<16x4xbf16>,
    %c4_196 = arith.constant 4 : index
    %c0_197 = arith.constant 0 : index
    %192 = vector.load %arg59[%c4_196, %c0_197] : memref<24x16xf32, #tpu.memory_space<vmem>>, vector<16x4xf32>
    %193 = arith.truncf %192 : vector<16x4xf32> to vector<16x4xbf16>
    %c0_198 = arith.constant 0 : index
    %c4_199 = arith.constant 4 : index
    %194 = vector.load %arg60[%c0_198, %c4_199] : memref<16x80xbf16, #tpu.memory_space<vmem>>, vector<16x4xbf16>
    tpu.vector_store %arg60[%c0_198, %c4_199], %193 {strides = array<i32>} : memref<16x80xbf16, #tpu.memory_space<vmem>>, vector<16x4xbf16>,
    %c6_200 = arith.constant 6 : index
    %c0_201 = arith.constant 0 : index
    %195 = vector.load %arg59[%c6_200, %c0_201] : memref<24x16xf32, #tpu.memory_space<vmem>>, vector<16x4xf32>
    %196 = arith.truncf %195 : vector<16x4xf32> to vector<16x4xbf16>
    %c0_202 = arith.constant 0 : index
    %c8_203 = arith.constant 8 : index
    %197 = vector.load %arg60[%c0_202, %c8_203] : memref<16x80xbf16, #tpu.memory_space<vmem>>, vector<16x4xbf16>
    tpu.vector_store %arg60[%c0_202, %c8_203], %196 {strides = array<i32>} : memref<16x80xbf16, #tpu.memory_space<vmem>>, vector<16x4xbf16>,
    %c0_204 = arith.constant 0 : index
    %c0_205 = arith.constant 0 : index
    %198 = vector.load %arg60[%c0_204, %c0_205] : memref<16x80xbf16, #tpu.memory_space<vmem>>, vector<16x12xbf16>
    %cst_206 = arith.constant dense<0.000000e+00> : vector<16x4xf32>
    %199 = tpu.matmul %198, %181, %cst_206 {dimension_numbers = #tpu.dot_dimension_numbers<[1], [0], [0], [1], [0, 0, 1, 1], [], []>} : vector<16x12xbf16>, vector<12x4xbf16>, vector<16x4xf32> -> vector<16x4xf32>
    %200 = vector.broadcast %183 : vector<1x4xf32> to vector<16x4xf32>
    %201 = arith.addf %199, %200 : vector<16x4xf32>
    %cst_207 = arith.constant 0.000000e+00 : f32
    %202 = vector.broadcast %cst_207 : f32 to vector<16x4xf32>
    %203 = arith.maximumf %201, %202 : vector<16x4xf32>
    %204 = vector.broadcast %185 : vector<1x4xf32> to vector<16x4xf32>
    %205 = arith.mulf %203, %204 : vector<16x4xf32>
    %206 = vector.broadcast %187 : vector<1x4xf32> to vector<16x4xf32>
    %207 = arith.addf %205, %206 : vector<16x4xf32>
    %208 = arith.truncf %207 : vector<16x4xf32> to vector<16x4xbf16>
    %c0_208 = arith.constant 0 : index
    %c16_209 = arith.constant 16 : index
    %209 = vector.load %arg62[%c0_208, %c16_209] : memref<16x32xbf16, #tpu.memory_space<vmem>>, vector<16x4xbf16>
    tpu.vector_store %arg62[%c0_208, %c16_209], %208 {strides = array<i32>} : memref<16x32xbf16, #tpu.memory_space<vmem>>, vector<16x4xbf16>,
    %c0_210 = arith.constant 0 : index
    %c20_211 = arith.constant 20 : index
    %210 = vector.load %arg61[%c0_210, %c20_211] : memref<16x32xf32, #tpu.memory_space<vmem>>, vector<16x4xf32>
    %211 = arith.addf %207, %210 : vector<16x4xf32>
    %c5_212 = arith.constant 5 : index
    %c0_213 = arith.constant 0 : index
    %c0_214 = arith.constant 0 : index
    %212 = vector.load %arg5[%c5_212, %c0_213, %c0_214] : memref<7x12x4xbf16, #tpu.memory_space<vmem>>, vector<1x12x4xbf16>
    %213 = vector.shape_cast %212 : vector<1x12x4xbf16> to vector<12x4xbf16>
    %c5_215 = arith.constant 5 : index
    %c0_216 = arith.constant 0 : index
    %c0_217 = arith.constant 0 : index
    %214 = vector.load %arg2[%c5_215, %c0_216, %c0_217] : memref<7x1x4xf32, #tpu.memory_space<vmem>>, vector<1x1x4xf32>
    %215 = vector.shape_cast %214 : vector<1x1x4xf32> to vector<1x4xf32>
    %c5_218 = arith.constant 5 : index
    %c0_219 = arith.constant 0 : index
    %c0_220 = arith.constant 0 : index
    %216 = vector.load %arg3[%c5_218, %c0_219, %c0_220] : memref<7x1x4xf32, #tpu.memory_space<vmem>>, vector<1x1x4xf32>
    %217 = vector.shape_cast %216 : vector<1x1x4xf32> to vector<1x4xf32>
    %c5_221 = arith.constant 5 : index
    %c0_222 = arith.constant 0 : index
    %c0_223 = arith.constant 0 : index
    %218 = vector.load %arg4[%c5_221, %c0_222, %c0_223] : memref<7x1x4xf32, #tpu.memory_space<vmem>>, vector<1x1x4xf32>
    %219 = vector.shape_cast %218 : vector<1x1x4xf32> to vector<1x4xf32>
    %c4_224 = arith.constant 4 : index
    %c0_225 = arith.constant 0 : index
    %220 = vector.load %arg59[%c4_224, %c0_225] : memref<24x16xf32, #tpu.memory_space<vmem>>, vector<16x4xf32>
    tpu.vector_store %arg59[%c4_224, %c0_225], %211 {strides = array<i32>} : memref<24x16xf32, #tpu.memory_space<vmem>>, vector<16x4xf32>,
    %c2_226 = arith.constant 2 : index
    %c0_227 = arith.constant 0 : index
    %221 = vector.load %arg59[%c2_226, %c0_227] : memref<24x16xf32, #tpu.memory_space<vmem>>, vector<16x4xf32>
    %222 = arith.truncf %221 : vector<16x4xf32> to vector<16x4xbf16>
    %c0_228 = arith.constant 0 : index
    %c0_229 = arith.constant 0 : index
    %223 = vector.load %arg60[%c0_228, %c0_229] : memref<16x80xbf16, #tpu.memory_space<vmem>>, vector<16x4xbf16>
    tpu.vector_store %arg60[%c0_228, %c0_229], %222 {strides = array<i32>} : memref<16x80xbf16, #tpu.memory_space<vmem>>, vector<16x4xbf16>,
    %c4_230 = arith.constant 4 : index
    %c0_231 = arith.constant 0 : index
    %224 = vector.load %arg59[%c4_230, %c0_231] : memref<24x16xf32, #tpu.memory_space<vmem>>, vector<16x4xf32>
    %225 = arith.truncf %224 : vector<16x4xf32> to vector<16x4xbf16>
    %c0_232 = arith.constant 0 : index
    %c4_233 = arith.constant 4 : index
    %226 = vector.load %arg60[%c0_232, %c4_233] : memref<16x80xbf16, #tpu.memory_space<vmem>>, vector<16x4xbf16>
    tpu.vector_store %arg60[%c0_232, %c4_233], %225 {strides = array<i32>} : memref<16x80xbf16, #tpu.memory_space<vmem>>, vector<16x4xbf16>,
    %c6_234 = arith.constant 6 : index
    %c0_235 = arith.constant 0 : index
    %227 = vector.load %arg59[%c6_234, %c0_235] : memref<24x16xf32, #tpu.memory_space<vmem>>, vector<16x4xf32>
    %228 = arith.truncf %227 : vector<16x4xf32> to vector<16x4xbf16>
    %c0_236 = arith.constant 0 : index
    %c8_237 = arith.constant 8 : index
    %229 = vector.load %arg60[%c0_236, %c8_237] : memref<16x80xbf16, #tpu.memory_space<vmem>>, vector<16x4xbf16>
    tpu.vector_store %arg60[%c0_236, %c8_237], %228 {strides = array<i32>} : memref<16x80xbf16, #tpu.memory_space<vmem>>, vector<16x4xbf16>,
    %c0_238 = arith.constant 0 : index
    %c0_239 = arith.constant 0 : index
    %230 = vector.load %arg60[%c0_238, %c0_239] : memref<16x80xbf16, #tpu.memory_space<vmem>>, vector<16x12xbf16>
    %cst_240 = arith.constant dense<0.000000e+00> : vector<16x4xf32>
    %231 = tpu.matmul %230, %213, %cst_240 {dimension_numbers = #tpu.dot_dimension_numbers<[1], [0], [0], [1], [0, 0, 1, 1], [], []>} : vector<16x12xbf16>, vector<12x4xbf16>, vector<16x4xf32> -> vector<16x4xf32>
    %232 = vector.broadcast %215 : vector<1x4xf32> to vector<16x4xf32>
    %233 = arith.addf %231, %232 : vector<16x4xf32>
    %cst_241 = arith.constant 0.000000e+00 : f32
    %234 = vector.broadcast %cst_241 : f32 to vector<16x4xf32>
    %235 = arith.maximumf %233, %234 : vector<16x4xf32>
    %236 = vector.broadcast %217 : vector<1x4xf32> to vector<16x4xf32>
    %237 = arith.mulf %235, %236 : vector<16x4xf32>
    %238 = vector.broadcast %219 : vector<1x4xf32> to vector<16x4xf32>
    %239 = arith.addf %237, %238 : vector<16x4xf32>
    %240 = arith.truncf %239 : vector<16x4xf32> to vector<16x4xbf16>
    %c0_242 = arith.constant 0 : index
    %c20_243 = arith.constant 20 : index
    %241 = vector.load %arg62[%c0_242, %c20_243] : memref<16x32xbf16, #tpu.memory_space<vmem>>, vector<16x4xbf16>
    tpu.vector_store %arg62[%c0_242, %c20_243], %240 {strides = array<i32>} : memref<16x32xbf16, #tpu.memory_space<vmem>>, vector<16x4xbf16>,
    %c0_244 = arith.constant 0 : index
    %c24 = arith.constant 24 : index
    %242 = vector.load %arg61[%c0_244, %c24] : memref<16x32xf32, #tpu.memory_space<vmem>>, vector<16x4xf32>
    %243 = arith.addf %239, %242 : vector<16x4xf32>
    %c6_245 = arith.constant 6 : index
    %c0_246 = arith.constant 0 : index
    %c0_247 = arith.constant 0 : index
    %244 = vector.load %arg5[%c6_245, %c0_246, %c0_247] : memref<7x12x4xbf16, #tpu.memory_space<vmem>>, vector<1x12x4xbf16>
    %245 = vector.shape_cast %244 : vector<1x12x4xbf16> to vector<12x4xbf16>
    %c6_248 = arith.constant 6 : index
    %c0_249 = arith.constant 0 : index
    %c0_250 = arith.constant 0 : index
    %246 = vector.load %arg2[%c6_248, %c0_249, %c0_250] : memref<7x1x4xf32, #tpu.memory_space<vmem>>, vector<1x1x4xf32>
    %247 = vector.shape_cast %246 : vector<1x1x4xf32> to vector<1x4xf32>
    %c6_251 = arith.constant 6 : index
    %c0_252 = arith.constant 0 : index
    %c0_253 = arith.constant 0 : index
    %248 = vector.load %arg3[%c6_251, %c0_252, %c0_253] : memref<7x1x4xf32, #tpu.memory_space<vmem>>, vector<1x1x4xf32>
    %249 = vector.shape_cast %248 : vector<1x1x4xf32> to vector<1x4xf32>
    %c6_254 = arith.constant 6 : index
    %c0_255 = arith.constant 0 : index
    %c0_256 = arith.constant 0 : index
    %250 = vector.load %arg4[%c6_254, %c0_255, %c0_256] : memref<7x1x4xf32, #tpu.memory_space<vmem>>, vector<1x1x4xf32>
    %251 = vector.shape_cast %250 : vector<1x1x4xf32> to vector<1x4xf32>
    %c4_257 = arith.constant 4 : index
    %c0_258 = arith.constant 0 : index
    %252 = vector.load %arg59[%c4_257, %c0_258] : memref<24x16xf32, #tpu.memory_space<vmem>>, vector<16x4xf32>
    tpu.vector_store %arg59[%c4_257, %c0_258], %243 {strides = array<i32>} : memref<24x16xf32, #tpu.memory_space<vmem>>, vector<16x4xf32>,
    %c2_259 = arith.constant 2 : index
    %c0_260 = arith.constant 0 : index
    %253 = vector.load %arg59[%c2_259, %c0_260] : memref<24x16xf32, #tpu.memory_space<vmem>>, vector<16x4xf32>
    %254 = arith.truncf %253 : vector<16x4xf32> to vector<16x4xbf16>
    %c0_261 = arith.constant 0 : index
    %c0_262 = arith.constant 0 : index
    %255 = vector.load %arg60[%c0_261, %c0_262] : memref<16x80xbf16, #tpu.memory_space<vmem>>, vector<16x4xbf16>
    tpu.vector_store %arg60[%c0_261, %c0_262], %254 {strides = array<i32>} : memref<16x80xbf16, #tpu.memory_space<vmem>>, vector<16x4xbf16>,
    %c4_263 = arith.constant 4 : index
    %c0_264 = arith.constant 0 : index
    %256 = vector.load %arg59[%c4_263, %c0_264] : memref<24x16xf32, #tpu.memory_space<vmem>>, vector<16x4xf32>
    %257 = arith.truncf %256 : vector<16x4xf32> to vector<16x4xbf16>
    %c0_265 = arith.constant 0 : index
    %c4_266 = arith.constant 4 : index
    %258 = vector.load %arg60[%c0_265, %c4_266] : memref<16x80xbf16, #tpu.memory_space<vmem>>, vector<16x4xbf16>
    tpu.vector_store %arg60[%c0_265, %c4_266], %257 {strides = array<i32>} : memref<16x80xbf16, #tpu.memory_space<vmem>>, vector<16x4xbf16>,
    %c6_267 = arith.constant 6 : index
    %c0_268 = arith.constant 0 : index
    %259 = vector.load %arg59[%c6_267, %c0_268] : memref<24x16xf32, #tpu.memory_space<vmem>>, vector<16x4xf32>
    %260 = arith.truncf %259 : vector<16x4xf32> to vector<16x4xbf16>
    %c0_269 = arith.constant 0 : index
    %c8_270 = arith.constant 8 : index
    %261 = vector.load %arg60[%c0_269, %c8_270] : memref<16x80xbf16, #tpu.memory_space<vmem>>, vector<16x4xbf16>
    tpu.vector_store %arg60[%c0_269, %c8_270], %260 {strides = array<i32>} : memref<16x80xbf16, #tpu.memory_space<vmem>>, vector<16x4xbf16>,
    %c0_271 = arith.constant 0 : index
    %c0_272 = arith.constant 0 : index
    %262 = vector.load %arg60[%c0_271, %c0_272] : memref<16x80xbf16, #tpu.memory_space<vmem>>, vector<16x12xbf16>
    %cst_273 = arith.constant dense<0.000000e+00> : vector<16x4xf32>
    %263 = tpu.matmul %262, %245, %cst_273 {dimension_numbers = #tpu.dot_dimension_numbers<[1], [0], [0], [1], [0, 0, 1, 1], [], []>} : vector<16x12xbf16>, vector<12x4xbf16>, vector<16x4xf32> -> vector<16x4xf32>
    %264 = vector.broadcast %247 : vector<1x4xf32> to vector<16x4xf32>
    %265 = arith.addf %263, %264 : vector<16x4xf32>
    %cst_274 = arith.constant 0.000000e+00 : f32
    %266 = vector.broadcast %cst_274 : f32 to vector<16x4xf32>
    %267 = arith.maximumf %265, %266 : vector<16x4xf32>
    %268 = vector.broadcast %249 : vector<1x4xf32> to vector<16x4xf32>
    %269 = arith.mulf %267, %268 : vector<16x4xf32>
    %270 = vector.broadcast %251 : vector<1x4xf32> to vector<16x4xf32>
    %271 = arith.addf %269, %270 : vector<16x4xf32>
    %272 = arith.truncf %271 : vector<16x4xf32> to vector<16x4xbf16>
    %c0_275 = arith.constant 0 : index
    %c24_276 = arith.constant 24 : index
    %273 = vector.load %arg62[%c0_275, %c24_276] : memref<16x32xbf16, #tpu.memory_space<vmem>>, vector<16x4xbf16>
    tpu.vector_store %arg62[%c0_275, %c24_276], %272 {strides = array<i32>} : memref<16x32xbf16, #tpu.memory_space<vmem>>, vector<16x4xbf16>,
    %c0_277 = arith.constant 0 : index
    %c28 = arith.constant 28 : index
    %274 = vector.load %arg61[%c0_277, %c28] : memref<16x32xf32, #tpu.memory_space<vmem>>, vector<16x4xf32>
    %275 = arith.truncf %274 : vector<16x4xf32> to vector<16x4xbf16>
    %c0_278 = arith.constant 0 : index
    %c28_279 = arith.constant 28 : index
    %276 = vector.load %arg62[%c0_278, %c28_279] : memref<16x32xbf16, #tpu.memory_space<vmem>>, vector<16x4xbf16>
    tpu.vector_store %arg62[%c0_278, %c28_279], %275 {strides = array<i32>} : memref<16x32xbf16, #tpu.memory_space<vmem>>, vector<16x4xbf16>,
    %c0_280 = arith.constant 0 : index
    %c0_281 = arith.constant 0 : index
    %277 = vector.load %arg62[%c0_280, %c0_281] : memref<16x32xbf16, #tpu.memory_space<vmem>>, vector<16x32xbf16>
    %c0_282 = arith.constant 0 : index
    %c0_283 = arith.constant 0 : index
    %278 = vector.load %arg17[%c0_282, %c0_283] : memref<32x32xbf16, #tpu.memory_space<vmem>>, vector<32x32xbf16>
    %c0_284 = arith.constant 0 : index
    %c0_285 = arith.constant 0 : index
    %279 = vector.load %arg14[%c0_284, %c0_285] : memref<1x32xf32, #tpu.memory_space<vmem>>, vector<1x32xf32>
    %c0_286 = arith.constant 0 : index
    %c0_287 = arith.constant 0 : index
    %280 = vector.load %arg15[%c0_286, %c0_287] : memref<1x32xf32, #tpu.memory_space<vmem>>, vector<1x32xf32>
    %c0_288 = arith.constant 0 : index
    %c0_289 = arith.constant 0 : index
    %281 = vector.load %arg16[%c0_288, %c0_289] : memref<1x32xf32, #tpu.memory_space<vmem>>, vector<1x32xf32>
    %cst_290 = arith.constant dense<0.000000e+00> : vector<16x32xf32>
    %282 = tpu.matmul %277, %278, %cst_290 {dimension_numbers = #tpu.dot_dimension_numbers<[1], [0], [0], [1], [0, 0, 1, 1], [], []>} : vector<16x32xbf16>, vector<32x32xbf16>, vector<16x32xf32> -> vector<16x32xf32>
    %283 = vector.broadcast %279 : vector<1x32xf32> to vector<16x32xf32>
    %284 = arith.addf %282, %283 : vector<16x32xf32>
    %cst_291 = arith.constant 0.000000e+00 : f32
    %285 = vector.broadcast %cst_291 : f32 to vector<16x32xf32>
    %286 = arith.maximumf %284, %285 : vector<16x32xf32>
    %287 = vector.broadcast %280 : vector<1x32xf32> to vector<16x32xf32>
    %288 = arith.mulf %286, %287 : vector<16x32xf32>
    %289 = vector.broadcast %281 : vector<1x32xf32> to vector<16x32xf32>
    %290 = arith.addf %288, %289 : vector<16x32xf32>
    %cst_292 = arith.constant dense<0.000000e+00> : vector<32xf32>
    %291 = vector.multi_reduction <add>, %290, %cst_292 [0] : vector<16x32xf32> to vector<32xf32>
    %292 = vector.shape_cast %291 : vector<32xf32> to vector<1x32xf32>
    %cst_293 = arith.constant 1.600000e+01 : f32
    %293 = vector.broadcast %cst_293 : f32 to vector<1x32xf32>
    %294 = arith.divf %292, %293 : vector<1x32xf32>
    %295 = arith.truncf %294 : vector<1x32xf32> to vector<1x32xbf16>
    %c0_294 = arith.constant 0 : index
    %c0_295 = arith.constant 0 : index
    %296 = vector.load %arg8[%c0_294, %c0_295] : memref<32x16xbf16, #tpu.memory_space<vmem>>, vector<32x16xbf16>
    %cst_296 = arith.constant dense<0.000000e+00> : vector<1x16xf32>
    %297 = tpu.matmul %295, %296, %cst_296 {dimension_numbers = #tpu.dot_dimension_numbers<[1], [0], [0], [1], [0, 0, 1, 1], [], []>} : vector<1x32xbf16>, vector<32x16xbf16>, vector<1x16xf32> -> vector<1x16xf32>
    %c0_297 = arith.constant 0 : index
    %c0_298 = arith.constant 0 : index
    %298 = vector.load %arg6[%c0_297, %c0_298] : memref<1x16xf32, #tpu.memory_space<vmem>>, vector<1x16xf32>
    %299 = arith.addf %297, %298 : vector<1x16xf32>
    %cst_299 = arith.constant 0.000000e+00 : f32
    %300 = vector.broadcast %cst_299 : f32 to vector<1x16xf32>
    %301 = arith.maximumf %299, %300 : vector<1x16xf32>
    %302 = arith.truncf %301 : vector<1x16xf32> to vector<1x16xbf16>
    %c0_300 = arith.constant 0 : index
    %c0_301 = arith.constant 0 : index
    %303 = vector.load %arg9[%c0_300, %c0_301] : memref<16x32xbf16, #tpu.memory_space<vmem>>, vector<16x32xbf16>
    %cst_302 = arith.constant dense<0.000000e+00> : vector<1x32xf32>
    %304 = tpu.matmul %302, %303, %cst_302 {dimension_numbers = #tpu.dot_dimension_numbers<[1], [0], [0], [1], [0, 0, 1, 1], [], []>} : vector<1x16xbf16>, vector<16x32xbf16>, vector<1x32xf32> -> vector<1x32xf32>
    %c0_303 = arith.constant 0 : index
    %c0_304 = arith.constant 0 : index
    %305 = vector.load %arg7[%c0_303, %c0_304] : memref<1x32xf32, #tpu.memory_space<vmem>>, vector<1x32xf32>
    %306 = arith.addf %304, %305 : vector<1x32xf32>
    %307 = arith.negf %306 : vector<1x32xf32>
    %308 = math.exp %307 : vector<1x32xf32>
    %cst_305 = arith.constant 1.000000e+00 : f32
    %309 = vector.broadcast %cst_305 : f32 to vector<1x32xf32>
    %310 = arith.addf %309, %308 : vector<1x32xf32>
    %311 = arith.divf %309, %310 : vector<1x32xf32>
    %312 = vector.broadcast %311 : vector<1x32xf32> to vector<16x32xf32>
    %313 = arith.mulf %290, %312 : vector<16x32xf32>
    %314 = arith.addf %35, %313 : vector<16x32xf32>
    %315 = arith.truncf %314 : vector<16x32xf32> to vector<16x32xbf16>
    %c0_306 = arith.constant 0 : index
    %c0_307 = arith.constant 0 : index
    %316 = vector.load %arg63[%c0_306, %c0_307] : memref<16x96xbf16, #tpu.memory_space<vmem>>, vector<16x32xbf16>
    tpu.vector_store %arg63[%c0_306, %c0_307], %315 {strides = array<i32>} : memref<16x96xbf16, #tpu.memory_space<vmem>>, vector<16x32xbf16>,
    %317 = arith.addf %35, %314 : vector<16x32xf32>
    %c0_308 = arith.constant 0 : index
    %c0_309 = arith.constant 0 : index
    %318 = vector.load %arg29[%c0_308, %c0_309] : memref<32x32xbf16, #tpu.memory_space<vmem>>, vector<32x32xbf16>
    %c0_310 = arith.constant 0 : index
    %c0_311 = arith.constant 0 : index
    %319 = vector.load %arg26[%c0_310, %c0_311] : memref<1x32xf32, #tpu.memory_space<vmem>>, vector<1x32xf32>
    %c0_312 = arith.constant 0 : index
    %c0_313 = arith.constant 0 : index
    %320 = vector.load %arg27[%c0_312, %c0_313] : memref<1x32xf32, #tpu.memory_space<vmem>>, vector<1x32xf32>
    %c0_314 = arith.constant 0 : index
    %c0_315 = arith.constant 0 : index
    %321 = vector.load %arg28[%c0_314, %c0_315] : memref<1x32xf32, #tpu.memory_space<vmem>>, vector<1x32xf32>
    %322 = arith.truncf %317 : vector<16x32xf32> to vector<16x32xbf16>
    %cst_316 = arith.constant dense<0.000000e+00> : vector<16x32xf32>
    %323 = tpu.matmul %322, %318, %cst_316 {dimension_numbers = #tpu.dot_dimension_numbers<[1], [0], [0], [1], [0, 0, 1, 1], [], []>} : vector<16x32xbf16>, vector<32x32xbf16>, vector<16x32xf32> -> vector<16x32xf32>
    %324 = vector.broadcast %319 : vector<1x32xf32> to vector<16x32xf32>
    %325 = arith.addf %323, %324 : vector<16x32xf32>
    %cst_317 = arith.constant 0.000000e+00 : f32
    %326 = vector.broadcast %cst_317 : f32 to vector<16x32xf32>
    %327 = arith.maximumf %325, %326 : vector<16x32xf32>
    %328 = vector.broadcast %320 : vector<1x32xf32> to vector<16x32xf32>
    %329 = arith.mulf %327, %328 : vector<16x32xf32>
    %330 = vector.broadcast %321 : vector<1x32xf32> to vector<16x32xf32>
    %331 = arith.addf %329, %330 : vector<16x32xf32>
    %c0_318 = arith.constant 0 : index
    %c0_319 = arith.constant 0 : index
    %332 = vector.load %arg61[%c0_318, %c0_319] : memref<16x32xf32, #tpu.memory_space<vmem>>, vector<16x32xf32>
    tpu.vector_store %arg61[%c0_318, %c0_319], %331 {strides = array<i32>} : memref<16x32xf32, #tpu.memory_space<vmem>>, vector<16x32xf32>,
    %c0_320 = arith.constant 0 : index
    %c0_321 = arith.constant 0 : index
    %333 = vector.load %arg61[%c0_320, %c0_321] : memref<16x32xf32, #tpu.memory_space<vmem>>, vector<16x4xf32>
    %c0_322 = arith.constant 0 : index
    %c0_323 = arith.constant 0 : index
    %c0_324 = arith.constant 0 : index
    %334 = vector.load %arg21[%c0_322, %c0_323, %c0_324] : memref<7x12x4xbf16, #tpu.memory_space<vmem>>, vector<1x12x4xbf16>
    %335 = vector.shape_cast %334 : vector<1x12x4xbf16> to vector<12x4xbf16>
    %c0_325 = arith.constant 0 : index
    %c0_326 = arith.constant 0 : index
    %c0_327 = arith.constant 0 : index
    %336 = vector.load %arg18[%c0_325, %c0_326, %c0_327] : memref<7x1x4xf32, #tpu.memory_space<vmem>>, vector<1x1x4xf32>
    %337 = vector.shape_cast %336 : vector<1x1x4xf32> to vector<1x4xf32>
    %c0_328 = arith.constant 0 : index
    %c0_329 = arith.constant 0 : index
    %c0_330 = arith.constant 0 : index
    %338 = vector.load %arg19[%c0_328, %c0_329, %c0_330] : memref<7x1x4xf32, #tpu.memory_space<vmem>>, vector<1x1x4xf32>
    %339 = vector.shape_cast %338 : vector<1x1x4xf32> to vector<1x4xf32>
    %c0_331 = arith.constant 0 : index
    %c0_332 = arith.constant 0 : index
    %c0_333 = arith.constant 0 : index
    %340 = vector.load %arg20[%c0_331, %c0_332, %c0_333] : memref<7x1x4xf32, #tpu.memory_space<vmem>>, vector<1x1x4xf32>
    %341 = vector.shape_cast %340 : vector<1x1x4xf32> to vector<1x4xf32>
    %c4_334 = arith.constant 4 : index
    %c0_335 = arith.constant 0 : index
    %342 = vector.load %arg59[%c4_334, %c0_335] : memref<24x16xf32, #tpu.memory_space<vmem>>, vector<16x4xf32>
    tpu.vector_store %arg59[%c4_334, %c0_335], %333 {strides = array<i32>} : memref<24x16xf32, #tpu.memory_space<vmem>>, vector<16x4xf32>,
    %c1_336 = arith.constant 1 : index
    %c0_337 = arith.constant 0 : index
    %343 = vector.load %arg59[%c1_336, %c0_337] : memref<24x16xf32, #tpu.memory_space<vmem>>, vector<16x4xf32>
    %344 = arith.truncf %343 : vector<16x4xf32> to vector<16x4xbf16>
    %c0_338 = arith.constant 0 : index
    %c0_339 = arith.constant 0 : index
    %345 = vector.load %arg60[%c0_338, %c0_339] : memref<16x80xbf16, #tpu.memory_space<vmem>>, vector<16x4xbf16>
    tpu.vector_store %arg60[%c0_338, %c0_339], %344 {strides = array<i32>} : memref<16x80xbf16, #tpu.memory_space<vmem>>, vector<16x4xbf16>,
    %c4_340 = arith.constant 4 : index
    %c0_341 = arith.constant 0 : index
    %346 = vector.load %arg59[%c4_340, %c0_341] : memref<24x16xf32, #tpu.memory_space<vmem>>, vector<16x4xf32>
    %347 = arith.truncf %346 : vector<16x4xf32> to vector<16x4xbf16>
    %c0_342 = arith.constant 0 : index
    %c4_343 = arith.constant 4 : index
    %348 = vector.load %arg60[%c0_342, %c4_343] : memref<16x80xbf16, #tpu.memory_space<vmem>>, vector<16x4xbf16>
    tpu.vector_store %arg60[%c0_342, %c4_343], %347 {strides = array<i32>} : memref<16x80xbf16, #tpu.memory_space<vmem>>, vector<16x4xbf16>,
    %c7 = arith.constant 7 : index
    %c0_344 = arith.constant 0 : index
    %349 = vector.load %arg59[%c7, %c0_344] : memref<24x16xf32, #tpu.memory_space<vmem>>, vector<16x4xf32>
    %350 = arith.truncf %349 : vector<16x4xf32> to vector<16x4xbf16>
    %c0_345 = arith.constant 0 : index
    %c8_346 = arith.constant 8 : index
    %351 = vector.load %arg60[%c0_345, %c8_346] : memref<16x80xbf16, #tpu.memory_space<vmem>>, vector<16x4xbf16>
    tpu.vector_store %arg60[%c0_345, %c8_346], %350 {strides = array<i32>} : memref<16x80xbf16, #tpu.memory_space<vmem>>, vector<16x4xbf16>,
    %c0_347 = arith.constant 0 : index
    %c0_348 = arith.constant 0 : index
    %352 = vector.load %arg60[%c0_347, %c0_348] : memref<16x80xbf16, #tpu.memory_space<vmem>>, vector<16x12xbf16>
    %cst_349 = arith.constant dense<0.000000e+00> : vector<16x4xf32>
    %353 = tpu.matmul %352, %335, %cst_349 {dimension_numbers = #tpu.dot_dimension_numbers<[1], [0], [0], [1], [0, 0, 1, 1], [], []>} : vector<16x12xbf16>, vector<12x4xbf16>, vector<16x4xf32> -> vector<16x4xf32>
    %354 = vector.broadcast %337 : vector<1x4xf32> to vector<16x4xf32>
    %355 = arith.addf %353, %354 : vector<16x4xf32>
    %cst_350 = arith.constant 0.000000e+00 : f32
    %356 = vector.broadcast %cst_350 : f32 to vector<16x4xf32>
    %357 = arith.maximumf %355, %356 : vector<16x4xf32>
    %358 = vector.broadcast %339 : vector<1x4xf32> to vector<16x4xf32>
    %359 = arith.mulf %357, %358 : vector<16x4xf32>
    %360 = vector.broadcast %341 : vector<1x4xf32> to vector<16x4xf32>
    %361 = arith.addf %359, %360 : vector<16x4xf32>
    %362 = arith.truncf %361 : vector<16x4xf32> to vector<16x4xbf16>
    %c0_351 = arith.constant 0 : index
    %c0_352 = arith.constant 0 : index
    %363 = vector.load %arg62[%c0_351, %c0_352] : memref<16x32xbf16, #tpu.memory_space<vmem>>, vector<16x4xbf16>
    tpu.vector_store %arg62[%c0_351, %c0_352], %362 {strides = array<i32>} : memref<16x32xbf16, #tpu.memory_space<vmem>>, vector<16x4xbf16>,
    %c0_353 = arith.constant 0 : index
    %c4_354 = arith.constant 4 : index
    %364 = vector.load %arg61[%c0_353, %c4_354] : memref<16x32xf32, #tpu.memory_space<vmem>>, vector<16x4xf32>
    %365 = arith.addf %361, %364 : vector<16x4xf32>
    %c1_355 = arith.constant 1 : index
    %c0_356 = arith.constant 0 : index
    %c0_357 = arith.constant 0 : index
    %366 = vector.load %arg21[%c1_355, %c0_356, %c0_357] : memref<7x12x4xbf16, #tpu.memory_space<vmem>>, vector<1x12x4xbf16>
    %367 = vector.shape_cast %366 : vector<1x12x4xbf16> to vector<12x4xbf16>
    %c1_358 = arith.constant 1 : index
    %c0_359 = arith.constant 0 : index
    %c0_360 = arith.constant 0 : index
    %368 = vector.load %arg18[%c1_358, %c0_359, %c0_360] : memref<7x1x4xf32, #tpu.memory_space<vmem>>, vector<1x1x4xf32>
    %369 = vector.shape_cast %368 : vector<1x1x4xf32> to vector<1x4xf32>
    %c1_361 = arith.constant 1 : index
    %c0_362 = arith.constant 0 : index
    %c0_363 = arith.constant 0 : index
    %370 = vector.load %arg19[%c1_361, %c0_362, %c0_363] : memref<7x1x4xf32, #tpu.memory_space<vmem>>, vector<1x1x4xf32>
    %371 = vector.shape_cast %370 : vector<1x1x4xf32> to vector<1x4xf32>
    %c1_364 = arith.constant 1 : index
    %c0_365 = arith.constant 0 : index
    %c0_366 = arith.constant 0 : index
    %372 = vector.load %arg20[%c1_364, %c0_365, %c0_366] : memref<7x1x4xf32, #tpu.memory_space<vmem>>, vector<1x1x4xf32>
    %373 = vector.shape_cast %372 : vector<1x1x4xf32> to vector<1x4xf32>
    %c4_367 = arith.constant 4 : index
    %c0_368 = arith.constant 0 : index
    %374 = vector.load %arg59[%c4_367, %c0_368] : memref<24x16xf32, #tpu.memory_space<vmem>>, vector<16x4xf32>
    tpu.vector_store %arg59[%c4_367, %c0_368], %365 {strides = array<i32>} : memref<24x16xf32, #tpu.memory_space<vmem>>, vector<16x4xf32>,
    %c1_369 = arith.constant 1 : index
    %c0_370 = arith.constant 0 : index
    %375 = vector.load %arg59[%c1_369, %c0_370] : memref<24x16xf32, #tpu.memory_space<vmem>>, vector<16x4xf32>
    %376 = arith.truncf %375 : vector<16x4xf32> to vector<16x4xbf16>
    %c0_371 = arith.constant 0 : index
    %c0_372 = arith.constant 0 : index
    %377 = vector.load %arg60[%c0_371, %c0_372] : memref<16x80xbf16, #tpu.memory_space<vmem>>, vector<16x4xbf16>
    tpu.vector_store %arg60[%c0_371, %c0_372], %376 {strides = array<i32>} : memref<16x80xbf16, #tpu.memory_space<vmem>>, vector<16x4xbf16>,
    %c4_373 = arith.constant 4 : index
    %c0_374 = arith.constant 0 : index
    %378 = vector.load %arg59[%c4_373, %c0_374] : memref<24x16xf32, #tpu.memory_space<vmem>>, vector<16x4xf32>
    %379 = arith.truncf %378 : vector<16x4xf32> to vector<16x4xbf16>
    %c0_375 = arith.constant 0 : index
    %c4_376 = arith.constant 4 : index
    %380 = vector.load %arg60[%c0_375, %c4_376] : memref<16x80xbf16, #tpu.memory_space<vmem>>, vector<16x4xbf16>
    tpu.vector_store %arg60[%c0_375, %c4_376], %379 {strides = array<i32>} : memref<16x80xbf16, #tpu.memory_space<vmem>>, vector<16x4xbf16>,
    %c7_377 = arith.constant 7 : index
    %c0_378 = arith.constant 0 : index
    %381 = vector.load %arg59[%c7_377, %c0_378] : memref<24x16xf32, #tpu.memory_space<vmem>>, vector<16x4xf32>
    %382 = arith.truncf %381 : vector<16x4xf32> to vector<16x4xbf16>
    %c0_379 = arith.constant 0 : index
    %c8_380 = arith.constant 8 : index
    %383 = vector.load %arg60[%c0_379, %c8_380] : memref<16x80xbf16, #tpu.memory_space<vmem>>, vector<16x4xbf16>
    tpu.vector_store %arg60[%c0_379, %c8_380], %382 {strides = array<i32>} : memref<16x80xbf16, #tpu.memory_space<vmem>>, vector<16x4xbf16>,
    %c0_381 = arith.constant 0 : index
    %c0_382 = arith.constant 0 : index
    %384 = vector.load %arg60[%c0_381, %c0_382] : memref<16x80xbf16, #tpu.memory_space<vmem>>, vector<16x12xbf16>
    %cst_383 = arith.constant dense<0.000000e+00> : vector<16x4xf32>
    %385 = tpu.matmul %384, %367, %cst_383 {dimension_numbers = #tpu.dot_dimension_numbers<[1], [0], [0], [1], [0, 0, 1, 1], [], []>} : vector<16x12xbf16>, vector<12x4xbf16>, vector<16x4xf32> -> vector<16x4xf32>
    %386 = vector.broadcast %369 : vector<1x4xf32> to vector<16x4xf32>
    %387 = arith.addf %385, %386 : vector<16x4xf32>
    %cst_384 = arith.constant 0.000000e+00 : f32
    %388 = vector.broadcast %cst_384 : f32 to vector<16x4xf32>
    %389 = arith.maximumf %387, %388 : vector<16x4xf32>
    %390 = vector.broadcast %371 : vector<1x4xf32> to vector<16x4xf32>
    %391 = arith.mulf %389, %390 : vector<16x4xf32>
    %392 = vector.broadcast %373 : vector<1x4xf32> to vector<16x4xf32>
    %393 = arith.addf %391, %392 : vector<16x4xf32>
    %394 = arith.truncf %393 : vector<16x4xf32> to vector<16x4xbf16>
    %c0_385 = arith.constant 0 : index
    %c4_386 = arith.constant 4 : index
    %395 = vector.load %arg62[%c0_385, %c4_386] : memref<16x32xbf16, #tpu.memory_space<vmem>>, vector<16x4xbf16>
    tpu.vector_store %arg62[%c0_385, %c4_386], %394 {strides = array<i32>} : memref<16x32xbf16, #tpu.memory_space<vmem>>, vector<16x4xbf16>,
    %c0_387 = arith.constant 0 : index
    %c8_388 = arith.constant 8 : index
    %396 = vector.load %arg61[%c0_387, %c8_388] : memref<16x32xf32, #tpu.memory_space<vmem>>, vector<16x4xf32>
    %397 = arith.addf %393, %396 : vector<16x4xf32>
    %c2_389 = arith.constant 2 : index
    %c0_390 = arith.constant 0 : index
    %c0_391 = arith.constant 0 : index
    %398 = vector.load %arg21[%c2_389, %c0_390, %c0_391] : memref<7x12x4xbf16, #tpu.memory_space<vmem>>, vector<1x12x4xbf16>
    %399 = vector.shape_cast %398 : vector<1x12x4xbf16> to vector<12x4xbf16>
    %c2_392 = arith.constant 2 : index
    %c0_393 = arith.constant 0 : index
    %c0_394 = arith.constant 0 : index
    %400 = vector.load %arg18[%c2_392, %c0_393, %c0_394] : memref<7x1x4xf32, #tpu.memory_space<vmem>>, vector<1x1x4xf32>
    %401 = vector.shape_cast %400 : vector<1x1x4xf32> to vector<1x4xf32>
    %c2_395 = arith.constant 2 : index
    %c0_396 = arith.constant 0 : index
    %c0_397 = arith.constant 0 : index
    %402 = vector.load %arg19[%c2_395, %c0_396, %c0_397] : memref<7x1x4xf32, #tpu.memory_space<vmem>>, vector<1x1x4xf32>
    %403 = vector.shape_cast %402 : vector<1x1x4xf32> to vector<1x4xf32>
    %c2_398 = arith.constant 2 : index
    %c0_399 = arith.constant 0 : index
    %c0_400 = arith.constant 0 : index
    %404 = vector.load %arg20[%c2_398, %c0_399, %c0_400] : memref<7x1x4xf32, #tpu.memory_space<vmem>>, vector<1x1x4xf32>
    %405 = vector.shape_cast %404 : vector<1x1x4xf32> to vector<1x4xf32>
    %c4_401 = arith.constant 4 : index
    %c0_402 = arith.constant 0 : index
    %406 = vector.load %arg59[%c4_401, %c0_402] : memref<24x16xf32, #tpu.memory_space<vmem>>, vector<16x4xf32>
    tpu.vector_store %arg59[%c4_401, %c0_402], %397 {strides = array<i32>} : memref<24x16xf32, #tpu.memory_space<vmem>>, vector<16x4xf32>,
    %c1_403 = arith.constant 1 : index
    %c0_404 = arith.constant 0 : index
    %407 = vector.load %arg59[%c1_403, %c0_404] : memref<24x16xf32, #tpu.memory_space<vmem>>, vector<16x4xf32>
    %408 = arith.truncf %407 : vector<16x4xf32> to vector<16x4xbf16>
    %c0_405 = arith.constant 0 : index
    %c0_406 = arith.constant 0 : index
    %409 = vector.load %arg60[%c0_405, %c0_406] : memref<16x80xbf16, #tpu.memory_space<vmem>>, vector<16x4xbf16>
    tpu.vector_store %arg60[%c0_405, %c0_406], %408 {strides = array<i32>} : memref<16x80xbf16, #tpu.memory_space<vmem>>, vector<16x4xbf16>,
    %c4_407 = arith.constant 4 : index
    %c0_408 = arith.constant 0 : index
    %410 = vector.load %arg59[%c4_407, %c0_408] : memref<24x16xf32, #tpu.memory_space<vmem>>, vector<16x4xf32>
    %411 = arith.truncf %410 : vector<16x4xf32> to vector<16x4xbf16>
    %c0_409 = arith.constant 0 : index
    %c4_410 = arith.constant 4 : index
    %412 = vector.load %arg60[%c0_409, %c4_410] : memref<16x80xbf16, #tpu.memory_space<vmem>>, vector<16x4xbf16>
    tpu.vector_store %arg60[%c0_409, %c4_410], %411 {strides = array<i32>} : memref<16x80xbf16, #tpu.memory_space<vmem>>, vector<16x4xbf16>,
    %c7_411 = arith.constant 7 : index
    %c0_412 = arith.constant 0 : index
    %413 = vector.load %arg59[%c7_411, %c0_412] : memref<24x16xf32, #tpu.memory_space<vmem>>, vector<16x4xf32>
    %414 = arith.truncf %413 : vector<16x4xf32> to vector<16x4xbf16>
    %c0_413 = arith.constant 0 : index
    %c8_414 = arith.constant 8 : index
    %415 = vector.load %arg60[%c0_413, %c8_414] : memref<16x80xbf16, #tpu.memory_space<vmem>>, vector<16x4xbf16>
    tpu.vector_store %arg60[%c0_413, %c8_414], %414 {strides = array<i32>} : memref<16x80xbf16, #tpu.memory_space<vmem>>, vector<16x4xbf16>,
    %c0_415 = arith.constant 0 : index
    %c0_416 = arith.constant 0 : index
    %416 = vector.load %arg60[%c0_415, %c0_416] : memref<16x80xbf16, #tpu.memory_space<vmem>>, vector<16x12xbf16>
    %cst_417 = arith.constant dense<0.000000e+00> : vector<16x4xf32>
    %417 = tpu.matmul %416, %399, %cst_417 {dimension_numbers = #tpu.dot_dimension_numbers<[1], [0], [0], [1], [0, 0, 1, 1], [], []>} : vector<16x12xbf16>, vector<12x4xbf16>, vector<16x4xf32> -> vector<16x4xf32>
    %418 = vector.broadcast %401 : vector<1x4xf32> to vector<16x4xf32>
    %419 = arith.addf %417, %418 : vector<16x4xf32>
    %cst_418 = arith.constant 0.000000e+00 : f32
    %420 = vector.broadcast %cst_418 : f32 to vector<16x4xf32>
    %421 = arith.maximumf %419, %420 : vector<16x4xf32>
    %422 = vector.broadcast %403 : vector<1x4xf32> to vector<16x4xf32>
    %423 = arith.mulf %421, %422 : vector<16x4xf32>
    %424 = vector.broadcast %405 : vector<1x4xf32> to vector<16x4xf32>
    %425 = arith.addf %423, %424 : vector<16x4xf32>
    %426 = arith.truncf %425 : vector<16x4xf32> to vector<16x4xbf16>
    %c0_419 = arith.constant 0 : index
    %c8_420 = arith.constant 8 : index
    %427 = vector.load %arg62[%c0_419, %c8_420] : memref<16x32xbf16, #tpu.memory_space<vmem>>, vector<16x4xbf16>
    tpu.vector_store %arg62[%c0_419, %c8_420], %426 {strides = array<i32>} : memref<16x32xbf16, #tpu.memory_space<vmem>>, vector<16x4xbf16>,
    %c0_421 = arith.constant 0 : index
    %c12_422 = arith.constant 12 : index
    %428 = vector.load %arg61[%c0_421, %c12_422] : memref<16x32xf32, #tpu.memory_space<vmem>>, vector<16x4xf32>
    %429 = arith.addf %425, %428 : vector<16x4xf32>
    %c3_423 = arith.constant 3 : index
    %c0_424 = arith.constant 0 : index
    %c0_425 = arith.constant 0 : index
    %430 = vector.load %arg21[%c3_423, %c0_424, %c0_425] : memref<7x12x4xbf16, #tpu.memory_space<vmem>>, vector<1x12x4xbf16>
    %431 = vector.shape_cast %430 : vector<1x12x4xbf16> to vector<12x4xbf16>
    %c3_426 = arith.constant 3 : index
    %c0_427 = arith.constant 0 : index
    %c0_428 = arith.constant 0 : index
    %432 = vector.load %arg18[%c3_426, %c0_427, %c0_428] : memref<7x1x4xf32, #tpu.memory_space<vmem>>, vector<1x1x4xf32>
    %433 = vector.shape_cast %432 : vector<1x1x4xf32> to vector<1x4xf32>
    %c3_429 = arith.constant 3 : index
    %c0_430 = arith.constant 0 : index
    %c0_431 = arith.constant 0 : index
    %434 = vector.load %arg19[%c3_429, %c0_430, %c0_431] : memref<7x1x4xf32, #tpu.memory_space<vmem>>, vector<1x1x4xf32>
    %435 = vector.shape_cast %434 : vector<1x1x4xf32> to vector<1x4xf32>
    %c3_432 = arith.constant 3 : index
    %c0_433 = arith.constant 0 : index
    %c0_434 = arith.constant 0 : index
    %436 = vector.load %arg20[%c3_432, %c0_433, %c0_434] : memref<7x1x4xf32, #tpu.memory_space<vmem>>, vector<1x1x4xf32>
    %437 = vector.shape_cast %436 : vector<1x1x4xf32> to vector<1x4xf32>
    %c4_435 = arith.constant 4 : index
    %c0_436 = arith.constant 0 : index
    %438 = vector.load %arg59[%c4_435, %c0_436] : memref<24x16xf32, #tpu.memory_space<vmem>>, vector<16x4xf32>
    tpu.vector_store %arg59[%c4_435, %c0_436], %429 {strides = array<i32>} : memref<24x16xf32, #tpu.memory_space<vmem>>, vector<16x4xf32>,
    %c1_437 = arith.constant 1 : index
    %c0_438 = arith.constant 0 : index
    %439 = vector.load %arg59[%c1_437, %c0_438] : memref<24x16xf32, #tpu.memory_space<vmem>>, vector<16x4xf32>
    %440 = arith.truncf %439 : vector<16x4xf32> to vector<16x4xbf16>
    %c0_439 = arith.constant 0 : index
    %c0_440 = arith.constant 0 : index
    %441 = vector.load %arg60[%c0_439, %c0_440] : memref<16x80xbf16, #tpu.memory_space<vmem>>, vector<16x4xbf16>
    tpu.vector_store %arg60[%c0_439, %c0_440], %440 {strides = array<i32>} : memref<16x80xbf16, #tpu.memory_space<vmem>>, vector<16x4xbf16>,
    %c4_441 = arith.constant 4 : index
    %c0_442 = arith.constant 0 : index
    %442 = vector.load %arg59[%c4_441, %c0_442] : memref<24x16xf32, #tpu.memory_space<vmem>>, vector<16x4xf32>
    %443 = arith.truncf %442 : vector<16x4xf32> to vector<16x4xbf16>
    %c0_443 = arith.constant 0 : index
    %c4_444 = arith.constant 4 : index
    %444 = vector.load %arg60[%c0_443, %c4_444] : memref<16x80xbf16, #tpu.memory_space<vmem>>, vector<16x4xbf16>
    tpu.vector_store %arg60[%c0_443, %c4_444], %443 {strides = array<i32>} : memref<16x80xbf16, #tpu.memory_space<vmem>>, vector<16x4xbf16>,
    %c7_445 = arith.constant 7 : index
    %c0_446 = arith.constant 0 : index
    %445 = vector.load %arg59[%c7_445, %c0_446] : memref<24x16xf32, #tpu.memory_space<vmem>>, vector<16x4xf32>
    %446 = arith.truncf %445 : vector<16x4xf32> to vector<16x4xbf16>
    %c0_447 = arith.constant 0 : index
    %c8_448 = arith.constant 8 : index
    %447 = vector.load %arg60[%c0_447, %c8_448] : memref<16x80xbf16, #tpu.memory_space<vmem>>, vector<16x4xbf16>
    tpu.vector_store %arg60[%c0_447, %c8_448], %446 {strides = array<i32>} : memref<16x80xbf16, #tpu.memory_space<vmem>>, vector<16x4xbf16>,
    %c0_449 = arith.constant 0 : index
    %c0_450 = arith.constant 0 : index
    %448 = vector.load %arg60[%c0_449, %c0_450] : memref<16x80xbf16, #tpu.memory_space<vmem>>, vector<16x12xbf16>
    %cst_451 = arith.constant dense<0.000000e+00> : vector<16x4xf32>
    %449 = tpu.matmul %448, %431, %cst_451 {dimension_numbers = #tpu.dot_dimension_numbers<[1], [0], [0], [1], [0, 0, 1, 1], [], []>} : vector<16x12xbf16>, vector<12x4xbf16>, vector<16x4xf32> -> vector<16x4xf32>
    %450 = vector.broadcast %433 : vector<1x4xf32> to vector<16x4xf32>
    %451 = arith.addf %449, %450 : vector<16x4xf32>
    %cst_452 = arith.constant 0.000000e+00 : f32
    %452 = vector.broadcast %cst_452 : f32 to vector<16x4xf32>
    %453 = arith.maximumf %451, %452 : vector<16x4xf32>
    %454 = vector.broadcast %435 : vector<1x4xf32> to vector<16x4xf32>
    %455 = arith.mulf %453, %454 : vector<16x4xf32>
    %456 = vector.broadcast %437 : vector<1x4xf32> to vector<16x4xf32>
    %457 = arith.addf %455, %456 : vector<16x4xf32>
    %458 = arith.truncf %457 : vector<16x4xf32> to vector<16x4xbf16>
    %c0_453 = arith.constant 0 : index
    %c12_454 = arith.constant 12 : index
    %459 = vector.load %arg62[%c0_453, %c12_454] : memref<16x32xbf16, #tpu.memory_space<vmem>>, vector<16x4xbf16>
    tpu.vector_store %arg62[%c0_453, %c12_454], %458 {strides = array<i32>} : memref<16x32xbf16, #tpu.memory_space<vmem>>, vector<16x4xbf16>,
    %c0_455 = arith.constant 0 : index
    %c16_456 = arith.constant 16 : index
    %460 = vector.load %arg61[%c0_455, %c16_456] : memref<16x32xf32, #tpu.memory_space<vmem>>, vector<16x4xf32>
    %461 = arith.addf %457, %460 : vector<16x4xf32>
    %c4_457 = arith.constant 4 : index
    %c0_458 = arith.constant 0 : index
    %c0_459 = arith.constant 0 : index
    %462 = vector.load %arg21[%c4_457, %c0_458, %c0_459] : memref<7x12x4xbf16, #tpu.memory_space<vmem>>, vector<1x12x4xbf16>
    %463 = vector.shape_cast %462 : vector<1x12x4xbf16> to vector<12x4xbf16>
    %c4_460 = arith.constant 4 : index
    %c0_461 = arith.constant 0 : index
    %c0_462 = arith.constant 0 : index
    %464 = vector.load %arg18[%c4_460, %c0_461, %c0_462] : memref<7x1x4xf32, #tpu.memory_space<vmem>>, vector<1x1x4xf32>
    %465 = vector.shape_cast %464 : vector<1x1x4xf32> to vector<1x4xf32>
    %c4_463 = arith.constant 4 : index
    %c0_464 = arith.constant 0 : index
    %c0_465 = arith.constant 0 : index
    %466 = vector.load %arg19[%c4_463, %c0_464, %c0_465] : memref<7x1x4xf32, #tpu.memory_space<vmem>>, vector<1x1x4xf32>
    %467 = vector.shape_cast %466 : vector<1x1x4xf32> to vector<1x4xf32>
    %c4_466 = arith.constant 4 : index
    %c0_467 = arith.constant 0 : index
    %c0_468 = arith.constant 0 : index
    %468 = vector.load %arg20[%c4_466, %c0_467, %c0_468] : memref<7x1x4xf32, #tpu.memory_space<vmem>>, vector<1x1x4xf32>
    %469 = vector.shape_cast %468 : vector<1x1x4xf32> to vector<1x4xf32>
    %c4_469 = arith.constant 4 : index
    %c0_470 = arith.constant 0 : index
    %470 = vector.load %arg59[%c4_469, %c0_470] : memref<24x16xf32, #tpu.memory_space<vmem>>, vector<16x4xf32>
    tpu.vector_store %arg59[%c4_469, %c0_470], %461 {strides = array<i32>} : memref<24x16xf32, #tpu.memory_space<vmem>>, vector<16x4xf32>,
    %c1_471 = arith.constant 1 : index
    %c0_472 = arith.constant 0 : index
    %471 = vector.load %arg59[%c1_471, %c0_472] : memref<24x16xf32, #tpu.memory_space<vmem>>, vector<16x4xf32>
    %472 = arith.truncf %471 : vector<16x4xf32> to vector<16x4xbf16>
    %c0_473 = arith.constant 0 : index
    %c0_474 = arith.constant 0 : index
    %473 = vector.load %arg60[%c0_473, %c0_474] : memref<16x80xbf16, #tpu.memory_space<vmem>>, vector<16x4xbf16>
    tpu.vector_store %arg60[%c0_473, %c0_474], %472 {strides = array<i32>} : memref<16x80xbf16, #tpu.memory_space<vmem>>, vector<16x4xbf16>,
    %c4_475 = arith.constant 4 : index
    %c0_476 = arith.constant 0 : index
    %474 = vector.load %arg59[%c4_475, %c0_476] : memref<24x16xf32, #tpu.memory_space<vmem>>, vector<16x4xf32>
    %475 = arith.truncf %474 : vector<16x4xf32> to vector<16x4xbf16>
    %c0_477 = arith.constant 0 : index
    %c4_478 = arith.constant 4 : index
    %476 = vector.load %arg60[%c0_477, %c4_478] : memref<16x80xbf16, #tpu.memory_space<vmem>>, vector<16x4xbf16>
    tpu.vector_store %arg60[%c0_477, %c4_478], %475 {strides = array<i32>} : memref<16x80xbf16, #tpu.memory_space<vmem>>, vector<16x4xbf16>,
    %c7_479 = arith.constant 7 : index
    %c0_480 = arith.constant 0 : index
    %477 = vector.load %arg59[%c7_479, %c0_480] : memref<24x16xf32, #tpu.memory_space<vmem>>, vector<16x4xf32>
    %478 = arith.truncf %477 : vector<16x4xf32> to vector<16x4xbf16>
    %c0_481 = arith.constant 0 : index
    %c8_482 = arith.constant 8 : index
    %479 = vector.load %arg60[%c0_481, %c8_482] : memref<16x80xbf16, #tpu.memory_space<vmem>>, vector<16x4xbf16>
    tpu.vector_store %arg60[%c0_481, %c8_482], %478 {strides = array<i32>} : memref<16x80xbf16, #tpu.memory_space<vmem>>, vector<16x4xbf16>,
    %c0_483 = arith.constant 0 : index
    %c0_484 = arith.constant 0 : index
    %480 = vector.load %arg60[%c0_483, %c0_484] : memref<16x80xbf16, #tpu.memory_space<vmem>>, vector<16x12xbf16>
    %cst_485 = arith.constant dense<0.000000e+00> : vector<16x4xf32>
    %481 = tpu.matmul %480, %463, %cst_485 {dimension_numbers = #tpu.dot_dimension_numbers<[1], [0], [0], [1], [0, 0, 1, 1], [], []>} : vector<16x12xbf16>, vector<12x4xbf16>, vector<16x4xf32> -> vector<16x4xf32>
    %482 = vector.broadcast %465 : vector<1x4xf32> to vector<16x4xf32>
    %483 = arith.addf %481, %482 : vector<16x4xf32>
    %cst_486 = arith.constant 0.000000e+00 : f32
    %484 = vector.broadcast %cst_486 : f32 to vector<16x4xf32>
    %485 = arith.maximumf %483, %484 : vector<16x4xf32>
    %486 = vector.broadcast %467 : vector<1x4xf32> to vector<16x4xf32>
    %487 = arith.mulf %485, %486 : vector<16x4xf32>
    %488 = vector.broadcast %469 : vector<1x4xf32> to vector<16x4xf32>
    %489 = arith.addf %487, %488 : vector<16x4xf32>
    %490 = arith.truncf %489 : vector<16x4xf32> to vector<16x4xbf16>
    %c0_487 = arith.constant 0 : index
    %c16_488 = arith.constant 16 : index
    %491 = vector.load %arg62[%c0_487, %c16_488] : memref<16x32xbf16, #tpu.memory_space<vmem>>, vector<16x4xbf16>
    tpu.vector_store %arg62[%c0_487, %c16_488], %490 {strides = array<i32>} : memref<16x32xbf16, #tpu.memory_space<vmem>>, vector<16x4xbf16>,
    %c0_489 = arith.constant 0 : index
    %c20_490 = arith.constant 20 : index
    %492 = vector.load %arg61[%c0_489, %c20_490] : memref<16x32xf32, #tpu.memory_space<vmem>>, vector<16x4xf32>
    %493 = arith.addf %489, %492 : vector<16x4xf32>
    %c5_491 = arith.constant 5 : index
    %c0_492 = arith.constant 0 : index
    %c0_493 = arith.constant 0 : index
    %494 = vector.load %arg21[%c5_491, %c0_492, %c0_493] : memref<7x12x4xbf16, #tpu.memory_space<vmem>>, vector<1x12x4xbf16>
    %495 = vector.shape_cast %494 : vector<1x12x4xbf16> to vector<12x4xbf16>
    %c5_494 = arith.constant 5 : index
    %c0_495 = arith.constant 0 : index
    %c0_496 = arith.constant 0 : index
    %496 = vector.load %arg18[%c5_494, %c0_495, %c0_496] : memref<7x1x4xf32, #tpu.memory_space<vmem>>, vector<1x1x4xf32>
    %497 = vector.shape_cast %496 : vector<1x1x4xf32> to vector<1x4xf32>
    %c5_497 = arith.constant 5 : index
    %c0_498 = arith.constant 0 : index
    %c0_499 = arith.constant 0 : index
    %498 = vector.load %arg19[%c5_497, %c0_498, %c0_499] : memref<7x1x4xf32, #tpu.memory_space<vmem>>, vector<1x1x4xf32>
    %499 = vector.shape_cast %498 : vector<1x1x4xf32> to vector<1x4xf32>
    %c5_500 = arith.constant 5 : index
    %c0_501 = arith.constant 0 : index
    %c0_502 = arith.constant 0 : index
    %500 = vector.load %arg20[%c5_500, %c0_501, %c0_502] : memref<7x1x4xf32, #tpu.memory_space<vmem>>, vector<1x1x4xf32>
    %501 = vector.shape_cast %500 : vector<1x1x4xf32> to vector<1x4xf32>
    %c4_503 = arith.constant 4 : index
    %c0_504 = arith.constant 0 : index
    %502 = vector.load %arg59[%c4_503, %c0_504] : memref<24x16xf32, #tpu.memory_space<vmem>>, vector<16x4xf32>
    tpu.vector_store %arg59[%c4_503, %c0_504], %493 {strides = array<i32>} : memref<24x16xf32, #tpu.memory_space<vmem>>, vector<16x4xf32>,
    %c1_505 = arith.constant 1 : index
    %c0_506 = arith.constant 0 : index
    %503 = vector.load %arg59[%c1_505, %c0_506] : memref<24x16xf32, #tpu.memory_space<vmem>>, vector<16x4xf32>
    %504 = arith.truncf %503 : vector<16x4xf32> to vector<16x4xbf16>
    %c0_507 = arith.constant 0 : index
    %c0_508 = arith.constant 0 : index
    %505 = vector.load %arg60[%c0_507, %c0_508] : memref<16x80xbf16, #tpu.memory_space<vmem>>, vector<16x4xbf16>
    tpu.vector_store %arg60[%c0_507, %c0_508], %504 {strides = array<i32>} : memref<16x80xbf16, #tpu.memory_space<vmem>>, vector<16x4xbf16>,
    %c4_509 = arith.constant 4 : index
    %c0_510 = arith.constant 0 : index
    %506 = vector.load %arg59[%c4_509, %c0_510] : memref<24x16xf32, #tpu.memory_space<vmem>>, vector<16x4xf32>
    %507 = arith.truncf %506 : vector<16x4xf32> to vector<16x4xbf16>
    %c0_511 = arith.constant 0 : index
    %c4_512 = arith.constant 4 : index
    %508 = vector.load %arg60[%c0_511, %c4_512] : memref<16x80xbf16, #tpu.memory_space<vmem>>, vector<16x4xbf16>
    tpu.vector_store %arg60[%c0_511, %c4_512], %507 {strides = array<i32>} : memref<16x80xbf16, #tpu.memory_space<vmem>>, vector<16x4xbf16>,
    %c7_513 = arith.constant 7 : index
    %c0_514 = arith.constant 0 : index
    %509 = vector.load %arg59[%c7_513, %c0_514] : memref<24x16xf32, #tpu.memory_space<vmem>>, vector<16x4xf32>
    %510 = arith.truncf %509 : vector<16x4xf32> to vector<16x4xbf16>
    %c0_515 = arith.constant 0 : index
    %c8_516 = arith.constant 8 : index
    %511 = vector.load %arg60[%c0_515, %c8_516] : memref<16x80xbf16, #tpu.memory_space<vmem>>, vector<16x4xbf16>
    tpu.vector_store %arg60[%c0_515, %c8_516], %510 {strides = array<i32>} : memref<16x80xbf16, #tpu.memory_space<vmem>>, vector<16x4xbf16>,
    %c0_517 = arith.constant 0 : index
    %c0_518 = arith.constant 0 : index
    %512 = vector.load %arg60[%c0_517, %c0_518] : memref<16x80xbf16, #tpu.memory_space<vmem>>, vector<16x12xbf16>
    %cst_519 = arith.constant dense<0.000000e+00> : vector<16x4xf32>
    %513 = tpu.matmul %512, %495, %cst_519 {dimension_numbers = #tpu.dot_dimension_numbers<[1], [0], [0], [1], [0, 0, 1, 1], [], []>} : vector<16x12xbf16>, vector<12x4xbf16>, vector<16x4xf32> -> vector<16x4xf32>
    %514 = vector.broadcast %497 : vector<1x4xf32> to vector<16x4xf32>
    %515 = arith.addf %513, %514 : vector<16x4xf32>
    %cst_520 = arith.constant 0.000000e+00 : f32
    %516 = vector.broadcast %cst_520 : f32 to vector<16x4xf32>
    %517 = arith.maximumf %515, %516 : vector<16x4xf32>
    %518 = vector.broadcast %499 : vector<1x4xf32> to vector<16x4xf32>
    %519 = arith.mulf %517, %518 : vector<16x4xf32>
    %520 = vector.broadcast %501 : vector<1x4xf32> to vector<16x4xf32>
    %521 = arith.addf %519, %520 : vector<16x4xf32>
    %522 = arith.truncf %521 : vector<16x4xf32> to vector<16x4xbf16>
    %c0_521 = arith.constant 0 : index
    %c20_522 = arith.constant 20 : index
    %523 = vector.load %arg62[%c0_521, %c20_522] : memref<16x32xbf16, #tpu.memory_space<vmem>>, vector<16x4xbf16>
    tpu.vector_store %arg62[%c0_521, %c20_522], %522 {strides = array<i32>} : memref<16x32xbf16, #tpu.memory_space<vmem>>, vector<16x4xbf16>,
    %c0_523 = arith.constant 0 : index
    %c24_524 = arith.constant 24 : index
    %524 = vector.load %arg61[%c0_523, %c24_524] : memref<16x32xf32, #tpu.memory_space<vmem>>, vector<16x4xf32>
    %525 = arith.addf %521, %524 : vector<16x4xf32>
    %c6_525 = arith.constant 6 : index
    %c0_526 = arith.constant 0 : index
    %c0_527 = arith.constant 0 : index
    %526 = vector.load %arg21[%c6_525, %c0_526, %c0_527] : memref<7x12x4xbf16, #tpu.memory_space<vmem>>, vector<1x12x4xbf16>
    %527 = vector.shape_cast %526 : vector<1x12x4xbf16> to vector<12x4xbf16>
    %c6_528 = arith.constant 6 : index
    %c0_529 = arith.constant 0 : index
    %c0_530 = arith.constant 0 : index
    %528 = vector.load %arg18[%c6_528, %c0_529, %c0_530] : memref<7x1x4xf32, #tpu.memory_space<vmem>>, vector<1x1x4xf32>
    %529 = vector.shape_cast %528 : vector<1x1x4xf32> to vector<1x4xf32>
    %c6_531 = arith.constant 6 : index
    %c0_532 = arith.constant 0 : index
    %c0_533 = arith.constant 0 : index
    %530 = vector.load %arg19[%c6_531, %c0_532, %c0_533] : memref<7x1x4xf32, #tpu.memory_space<vmem>>, vector<1x1x4xf32>
    %531 = vector.shape_cast %530 : vector<1x1x4xf32> to vector<1x4xf32>
    %c6_534 = arith.constant 6 : index
    %c0_535 = arith.constant 0 : index
    %c0_536 = arith.constant 0 : index
    %532 = vector.load %arg20[%c6_534, %c0_535, %c0_536] : memref<7x1x4xf32, #tpu.memory_space<vmem>>, vector<1x1x4xf32>
    %533 = vector.shape_cast %532 : vector<1x1x4xf32> to vector<1x4xf32>
    %c4_537 = arith.constant 4 : index
    %c0_538 = arith.constant 0 : index
    %534 = vector.load %arg59[%c4_537, %c0_538] : memref<24x16xf32, #tpu.memory_space<vmem>>, vector<16x4xf32>
    tpu.vector_store %arg59[%c4_537, %c0_538], %525 {strides = array<i32>} : memref<24x16xf32, #tpu.memory_space<vmem>>, vector<16x4xf32>,
    %c1_539 = arith.constant 1 : index
    %c0_540 = arith.constant 0 : index
    %535 = vector.load %arg59[%c1_539, %c0_540] : memref<24x16xf32, #tpu.memory_space<vmem>>, vector<16x4xf32>
    %536 = arith.truncf %535 : vector<16x4xf32> to vector<16x4xbf16>
    %c0_541 = arith.constant 0 : index
    %c0_542 = arith.constant 0 : index
    %537 = vector.load %arg60[%c0_541, %c0_542] : memref<16x80xbf16, #tpu.memory_space<vmem>>, vector<16x4xbf16>
    tpu.vector_store %arg60[%c0_541, %c0_542], %536 {strides = array<i32>} : memref<16x80xbf16, #tpu.memory_space<vmem>>, vector<16x4xbf16>,
    %c4_543 = arith.constant 4 : index
    %c0_544 = arith.constant 0 : index
    %538 = vector.load %arg59[%c4_543, %c0_544] : memref<24x16xf32, #tpu.memory_space<vmem>>, vector<16x4xf32>
    %539 = arith.truncf %538 : vector<16x4xf32> to vector<16x4xbf16>
    %c0_545 = arith.constant 0 : index
    %c4_546 = arith.constant 4 : index
    %540 = vector.load %arg60[%c0_545, %c4_546] : memref<16x80xbf16, #tpu.memory_space<vmem>>, vector<16x4xbf16>
    tpu.vector_store %arg60[%c0_545, %c4_546], %539 {strides = array<i32>} : memref<16x80xbf16, #tpu.memory_space<vmem>>, vector<16x4xbf16>,
    %c7_547 = arith.constant 7 : index
    %c0_548 = arith.constant 0 : index
    %541 = vector.load %arg59[%c7_547, %c0_548] : memref<24x16xf32, #tpu.memory_space<vmem>>, vector<16x4xf32>
    %542 = arith.truncf %541 : vector<16x4xf32> to vector<16x4xbf16>
    %c0_549 = arith.constant 0 : index
    %c8_550 = arith.constant 8 : index
    %543 = vector.load %arg60[%c0_549, %c8_550] : memref<16x80xbf16, #tpu.memory_space<vmem>>, vector<16x4xbf16>
    tpu.vector_store %arg60[%c0_549, %c8_550], %542 {strides = array<i32>} : memref<16x80xbf16, #tpu.memory_space<vmem>>, vector<16x4xbf16>,
    %c0_551 = arith.constant 0 : index
    %c0_552 = arith.constant 0 : index
    %544 = vector.load %arg60[%c0_551, %c0_552] : memref<16x80xbf16, #tpu.memory_space<vmem>>, vector<16x12xbf16>
    %cst_553 = arith.constant dense<0.000000e+00> : vector<16x4xf32>
    %545 = tpu.matmul %544, %527, %cst_553 {dimension_numbers = #tpu.dot_dimension_numbers<[1], [0], [0], [1], [0, 0, 1, 1], [], []>} : vector<16x12xbf16>, vector<12x4xbf16>, vector<16x4xf32> -> vector<16x4xf32>
    %546 = vector.broadcast %529 : vector<1x4xf32> to vector<16x4xf32>
    %547 = arith.addf %545, %546 : vector<16x4xf32>
    %cst_554 = arith.constant 0.000000e+00 : f32
    %548 = vector.broadcast %cst_554 : f32 to vector<16x4xf32>
    %549 = arith.maximumf %547, %548 : vector<16x4xf32>
    %550 = vector.broadcast %531 : vector<1x4xf32> to vector<16x4xf32>
    %551 = arith.mulf %549, %550 : vector<16x4xf32>
    %552 = vector.broadcast %533 : vector<1x4xf32> to vector<16x4xf32>
    %553 = arith.addf %551, %552 : vector<16x4xf32>
    %554 = arith.truncf %553 : vector<16x4xf32> to vector<16x4xbf16>
    %c0_555 = arith.constant 0 : index
    %c24_556 = arith.constant 24 : index
    %555 = vector.load %arg62[%c0_555, %c24_556] : memref<16x32xbf16, #tpu.memory_space<vmem>>, vector<16x4xbf16>
    tpu.vector_store %arg62[%c0_555, %c24_556], %554 {strides = array<i32>} : memref<16x32xbf16, #tpu.memory_space<vmem>>, vector<16x4xbf16>,
    %c0_557 = arith.constant 0 : index
    %c28_558 = arith.constant 28 : index
    %556 = vector.load %arg61[%c0_557, %c28_558] : memref<16x32xf32, #tpu.memory_space<vmem>>, vector<16x4xf32>
    %557 = arith.truncf %556 : vector<16x4xf32> to vector<16x4xbf16>
    %c0_559 = arith.constant 0 : index
    %c28_560 = arith.constant 28 : index
    %558 = vector.load %arg62[%c0_559, %c28_560] : memref<16x32xbf16, #tpu.memory_space<vmem>>, vector<16x4xbf16>
    tpu.vector_store %arg62[%c0_559, %c28_560], %557 {strides = array<i32>} : memref<16x32xbf16, #tpu.memory_space<vmem>>, vector<16x4xbf16>,
    %c0_561 = arith.constant 0 : index
    %c0_562 = arith.constant 0 : index
    %559 = vector.load %arg62[%c0_561, %c0_562] : memref<16x32xbf16, #tpu.memory_space<vmem>>, vector<16x32xbf16>
    %c0_563 = arith.constant 0 : index
    %c0_564 = arith.constant 0 : index
    %560 = vector.load %arg33[%c0_563, %c0_564] : memref<32x32xbf16, #tpu.memory_space<vmem>>, vector<32x32xbf16>
    %c0_565 = arith.constant 0 : index
    %c0_566 = arith.constant 0 : index
    %561 = vector.load %arg30[%c0_565, %c0_566] : memref<1x32xf32, #tpu.memory_space<vmem>>, vector<1x32xf32>
    %c0_567 = arith.constant 0 : index
    %c0_568 = arith.constant 0 : index
    %562 = vector.load %arg31[%c0_567, %c0_568] : memref<1x32xf32, #tpu.memory_space<vmem>>, vector<1x32xf32>
    %c0_569 = arith.constant 0 : index
    %c0_570 = arith.constant 0 : index
    %563 = vector.load %arg32[%c0_569, %c0_570] : memref<1x32xf32, #tpu.memory_space<vmem>>, vector<1x32xf32>
    %cst_571 = arith.constant dense<0.000000e+00> : vector<16x32xf32>
    %564 = tpu.matmul %559, %560, %cst_571 {dimension_numbers = #tpu.dot_dimension_numbers<[1], [0], [0], [1], [0, 0, 1, 1], [], []>} : vector<16x32xbf16>, vector<32x32xbf16>, vector<16x32xf32> -> vector<16x32xf32>
    %565 = vector.broadcast %561 : vector<1x32xf32> to vector<16x32xf32>
    %566 = arith.addf %564, %565 : vector<16x32xf32>
    %cst_572 = arith.constant 0.000000e+00 : f32
    %567 = vector.broadcast %cst_572 : f32 to vector<16x32xf32>
    %568 = arith.maximumf %566, %567 : vector<16x32xf32>
    %569 = vector.broadcast %562 : vector<1x32xf32> to vector<16x32xf32>
    %570 = arith.mulf %568, %569 : vector<16x32xf32>
    %571 = vector.broadcast %563 : vector<1x32xf32> to vector<16x32xf32>
    %572 = arith.addf %570, %571 : vector<16x32xf32>
    %cst_573 = arith.constant dense<0.000000e+00> : vector<32xf32>
    %573 = vector.multi_reduction <add>, %572, %cst_573 [0] : vector<16x32xf32> to vector<32xf32>
    %574 = vector.shape_cast %573 : vector<32xf32> to vector<1x32xf32>
    %cst_574 = arith.constant 1.600000e+01 : f32
    %575 = vector.broadcast %cst_574 : f32 to vector<1x32xf32>
    %576 = arith.divf %574, %575 : vector<1x32xf32>
    %577 = arith.truncf %576 : vector<1x32xf32> to vector<1x32xbf16>
    %c0_575 = arith.constant 0 : index
    %c0_576 = arith.constant 0 : index
    %578 = vector.load %arg24[%c0_575, %c0_576] : memref<32x16xbf16, #tpu.memory_space<vmem>>, vector<32x16xbf16>
    %cst_577 = arith.constant dense<0.000000e+00> : vector<1x16xf32>
    %579 = tpu.matmul %577, %578, %cst_577 {dimension_numbers = #tpu.dot_dimension_numbers<[1], [0], [0], [1], [0, 0, 1, 1], [], []>} : vector<1x32xbf16>, vector<32x16xbf16>, vector<1x16xf32> -> vector<1x16xf32>
    %c0_578 = arith.constant 0 : index
    %c0_579 = arith.constant 0 : index
    %580 = vector.load %arg22[%c0_578, %c0_579] : memref<1x16xf32, #tpu.memory_space<vmem>>, vector<1x16xf32>
    %581 = arith.addf %579, %580 : vector<1x16xf32>
    %cst_580 = arith.constant 0.000000e+00 : f32
    %582 = vector.broadcast %cst_580 : f32 to vector<1x16xf32>
    %583 = arith.maximumf %581, %582 : vector<1x16xf32>
    %584 = arith.truncf %583 : vector<1x16xf32> to vector<1x16xbf16>
    %c0_581 = arith.constant 0 : index
    %c0_582 = arith.constant 0 : index
    %585 = vector.load %arg25[%c0_581, %c0_582] : memref<16x32xbf16, #tpu.memory_space<vmem>>, vector<16x32xbf16>
    %cst_583 = arith.constant dense<0.000000e+00> : vector<1x32xf32>
    %586 = tpu.matmul %584, %585, %cst_583 {dimension_numbers = #tpu.dot_dimension_numbers<[1], [0], [0], [1], [0, 0, 1, 1], [], []>} : vector<1x16xbf16>, vector<16x32xbf16>, vector<1x32xf32> -> vector<1x32xf32>
    %c0_584 = arith.constant 0 : index
    %c0_585 = arith.constant 0 : index
    %587 = vector.load %arg23[%c0_584, %c0_585] : memref<1x32xf32, #tpu.memory_space<vmem>>, vector<1x32xf32>
    %588 = arith.addf %586, %587 : vector<1x32xf32>
    %589 = arith.negf %588 : vector<1x32xf32>
    %590 = math.exp %589 : vector<1x32xf32>
    %cst_586 = arith.constant 1.000000e+00 : f32
    %591 = vector.broadcast %cst_586 : f32 to vector<1x32xf32>
    %592 = arith.addf %591, %590 : vector<1x32xf32>
    %593 = arith.divf %591, %592 : vector<1x32xf32>
    %594 = vector.broadcast %593 : vector<1x32xf32> to vector<16x32xf32>
    %595 = arith.mulf %572, %594 : vector<16x32xf32>
    %596 = arith.addf %317, %595 : vector<16x32xf32>
    %597 = arith.truncf %596 : vector<16x32xf32> to vector<16x32xbf16>
    %c0_587 = arith.constant 0 : index
    %c32_588 = arith.constant 32 : index
    %598 = vector.load %arg63[%c0_587, %c32_588] : memref<16x96xbf16, #tpu.memory_space<vmem>>, vector<16x32xbf16>
    tpu.vector_store %arg63[%c0_587, %c32_588], %597 {strides = array<i32>} : memref<16x96xbf16, #tpu.memory_space<vmem>>, vector<16x32xbf16>,
    %599 = arith.addf %317, %596 : vector<16x32xf32>
    %c0_589 = arith.constant 0 : index
    %c0_590 = arith.constant 0 : index
    %600 = vector.load %arg45[%c0_589, %c0_590] : memref<32x32xbf16, #tpu.memory_space<vmem>>, vector<32x32xbf16>
    %c0_591 = arith.constant 0 : index
    %c0_592 = arith.constant 0 : index
    %601 = vector.load %arg42[%c0_591, %c0_592] : memref<1x32xf32, #tpu.memory_space<vmem>>, vector<1x32xf32>
    %c0_593 = arith.constant 0 : index
    %c0_594 = arith.constant 0 : index
    %602 = vector.load %arg43[%c0_593, %c0_594] : memref<1x32xf32, #tpu.memory_space<vmem>>, vector<1x32xf32>
    %c0_595 = arith.constant 0 : index
    %c0_596 = arith.constant 0 : index
    %603 = vector.load %arg44[%c0_595, %c0_596] : memref<1x32xf32, #tpu.memory_space<vmem>>, vector<1x32xf32>
    %604 = arith.truncf %599 : vector<16x32xf32> to vector<16x32xbf16>
    %cst_597 = arith.constant dense<0.000000e+00> : vector<16x32xf32>
    %605 = tpu.matmul %604, %600, %cst_597 {dimension_numbers = #tpu.dot_dimension_numbers<[1], [0], [0], [1], [0, 0, 1, 1], [], []>} : vector<16x32xbf16>, vector<32x32xbf16>, vector<16x32xf32> -> vector<16x32xf32>
    %606 = vector.broadcast %601 : vector<1x32xf32> to vector<16x32xf32>
    %607 = arith.addf %605, %606 : vector<16x32xf32>
    %cst_598 = arith.constant 0.000000e+00 : f32
    %608 = vector.broadcast %cst_598 : f32 to vector<16x32xf32>
    %609 = arith.maximumf %607, %608 : vector<16x32xf32>
    %610 = vector.broadcast %602 : vector<1x32xf32> to vector<16x32xf32>
    %611 = arith.mulf %609, %610 : vector<16x32xf32>
    %612 = vector.broadcast %603 : vector<1x32xf32> to vector<16x32xf32>
    %613 = arith.addf %611, %612 : vector<16x32xf32>
    %c0_599 = arith.constant 0 : index
    %c0_600 = arith.constant 0 : index
    %614 = vector.load %arg61[%c0_599, %c0_600] : memref<16x32xf32, #tpu.memory_space<vmem>>, vector<16x32xf32>
    tpu.vector_store %arg61[%c0_599, %c0_600], %613 {strides = array<i32>} : memref<16x32xf32, #tpu.memory_space<vmem>>, vector<16x32xf32>,
    %c0_601 = arith.constant 0 : index
    %c0_602 = arith.constant 0 : index
    %615 = vector.load %arg61[%c0_601, %c0_602] : memref<16x32xf32, #tpu.memory_space<vmem>>, vector<16x4xf32>
    %c0_603 = arith.constant 0 : index
    %c0_604 = arith.constant 0 : index
    %c0_605 = arith.constant 0 : index
    %616 = vector.load %arg37[%c0_603, %c0_604, %c0_605] : memref<7x12x4xbf16, #tpu.memory_space<vmem>>, vector<1x12x4xbf16>
    %617 = vector.shape_cast %616 : vector<1x12x4xbf16> to vector<12x4xbf16>
    %c0_606 = arith.constant 0 : index
    %c0_607 = arith.constant 0 : index
    %c0_608 = arith.constant 0 : index
    %618 = vector.load %arg34[%c0_606, %c0_607, %c0_608] : memref<7x1x4xf32, #tpu.memory_space<vmem>>, vector<1x1x4xf32>
    %619 = vector.shape_cast %618 : vector<1x1x4xf32> to vector<1x4xf32>
    %c0_609 = arith.constant 0 : index
    %c0_610 = arith.constant 0 : index
    %c0_611 = arith.constant 0 : index
    %620 = vector.load %arg35[%c0_609, %c0_610, %c0_611] : memref<7x1x4xf32, #tpu.memory_space<vmem>>, vector<1x1x4xf32>
    %621 = vector.shape_cast %620 : vector<1x1x4xf32> to vector<1x4xf32>
    %c0_612 = arith.constant 0 : index
    %c0_613 = arith.constant 0 : index
    %c0_614 = arith.constant 0 : index
    %622 = vector.load %arg36[%c0_612, %c0_613, %c0_614] : memref<7x1x4xf32, #tpu.memory_space<vmem>>, vector<1x1x4xf32>
    %623 = vector.shape_cast %622 : vector<1x1x4xf32> to vector<1x4xf32>
    %c4_615 = arith.constant 4 : index
    %c0_616 = arith.constant 0 : index
    %624 = vector.load %arg59[%c4_615, %c0_616] : memref<24x16xf32, #tpu.memory_space<vmem>>, vector<16x4xf32>
    tpu.vector_store %arg59[%c4_615, %c0_616], %615 {strides = array<i32>} : memref<24x16xf32, #tpu.memory_space<vmem>>, vector<16x4xf32>,
    %c0_617 = arith.constant 0 : index
    %c0_618 = arith.constant 0 : index
    %625 = vector.load %arg59[%c0_617, %c0_618] : memref<24x16xf32, #tpu.memory_space<vmem>>, vector<16x4xf32>
    %626 = arith.truncf %625 : vector<16x4xf32> to vector<16x4xbf16>
    %c0_619 = arith.constant 0 : index
    %c0_620 = arith.constant 0 : index
    %627 = vector.load %arg60[%c0_619, %c0_620] : memref<16x80xbf16, #tpu.memory_space<vmem>>, vector<16x4xbf16>
    tpu.vector_store %arg60[%c0_619, %c0_620], %626 {strides = array<i32>} : memref<16x80xbf16, #tpu.memory_space<vmem>>, vector<16x4xbf16>,
    %c4_621 = arith.constant 4 : index
    %c0_622 = arith.constant 0 : index
    %628 = vector.load %arg59[%c4_621, %c0_622] : memref<24x16xf32, #tpu.memory_space<vmem>>, vector<16x4xf32>
    %629 = arith.truncf %628 : vector<16x4xf32> to vector<16x4xbf16>
    %c0_623 = arith.constant 0 : index
    %c4_624 = arith.constant 4 : index
    %630 = vector.load %arg60[%c0_623, %c4_624] : memref<16x80xbf16, #tpu.memory_space<vmem>>, vector<16x4xbf16>
    tpu.vector_store %arg60[%c0_623, %c4_624], %629 {strides = array<i32>} : memref<16x80xbf16, #tpu.memory_space<vmem>>, vector<16x4xbf16>,
    %c8_625 = arith.constant 8 : index
    %c0_626 = arith.constant 0 : index
    %631 = vector.load %arg59[%c8_625, %c0_626] : memref<24x16xf32, #tpu.memory_space<vmem>>, vector<16x4xf32>
    %632 = arith.truncf %631 : vector<16x4xf32> to vector<16x4xbf16>
    %c0_627 = arith.constant 0 : index
    %c8_628 = arith.constant 8 : index
    %633 = vector.load %arg60[%c0_627, %c8_628] : memref<16x80xbf16, #tpu.memory_space<vmem>>, vector<16x4xbf16>
    tpu.vector_store %arg60[%c0_627, %c8_628], %632 {strides = array<i32>} : memref<16x80xbf16, #tpu.memory_space<vmem>>, vector<16x4xbf16>,
    %c0_629 = arith.constant 0 : index
    %c0_630 = arith.constant 0 : index
    %634 = vector.load %arg60[%c0_629, %c0_630] : memref<16x80xbf16, #tpu.memory_space<vmem>>, vector<16x12xbf16>
    %cst_631 = arith.constant dense<0.000000e+00> : vector<16x4xf32>
    %635 = tpu.matmul %634, %617, %cst_631 {dimension_numbers = #tpu.dot_dimension_numbers<[1], [0], [0], [1], [0, 0, 1, 1], [], []>} : vector<16x12xbf16>, vector<12x4xbf16>, vector<16x4xf32> -> vector<16x4xf32>
    %636 = vector.broadcast %619 : vector<1x4xf32> to vector<16x4xf32>
    %637 = arith.addf %635, %636 : vector<16x4xf32>
    %cst_632 = arith.constant 0.000000e+00 : f32
    %638 = vector.broadcast %cst_632 : f32 to vector<16x4xf32>
    %639 = arith.maximumf %637, %638 : vector<16x4xf32>
    %640 = vector.broadcast %621 : vector<1x4xf32> to vector<16x4xf32>
    %641 = arith.mulf %639, %640 : vector<16x4xf32>
    %642 = vector.broadcast %623 : vector<1x4xf32> to vector<16x4xf32>
    %643 = arith.addf %641, %642 : vector<16x4xf32>
    %644 = arith.truncf %643 : vector<16x4xf32> to vector<16x4xbf16>
    %c0_633 = arith.constant 0 : index
    %c0_634 = arith.constant 0 : index
    %645 = vector.load %arg62[%c0_633, %c0_634] : memref<16x32xbf16, #tpu.memory_space<vmem>>, vector<16x4xbf16>
    tpu.vector_store %arg62[%c0_633, %c0_634], %644 {strides = array<i32>} : memref<16x32xbf16, #tpu.memory_space<vmem>>, vector<16x4xbf16>,
    %c0_635 = arith.constant 0 : index
    %c4_636 = arith.constant 4 : index
    %646 = vector.load %arg61[%c0_635, %c4_636] : memref<16x32xf32, #tpu.memory_space<vmem>>, vector<16x4xf32>
    %647 = arith.addf %643, %646 : vector<16x4xf32>
    %c1_637 = arith.constant 1 : index
    %c0_638 = arith.constant 0 : index
    %c0_639 = arith.constant 0 : index
    %648 = vector.load %arg37[%c1_637, %c0_638, %c0_639] : memref<7x12x4xbf16, #tpu.memory_space<vmem>>, vector<1x12x4xbf16>
    %649 = vector.shape_cast %648 : vector<1x12x4xbf16> to vector<12x4xbf16>
    %c1_640 = arith.constant 1 : index
    %c0_641 = arith.constant 0 : index
    %c0_642 = arith.constant 0 : index
    %650 = vector.load %arg34[%c1_640, %c0_641, %c0_642] : memref<7x1x4xf32, #tpu.memory_space<vmem>>, vector<1x1x4xf32>
    %651 = vector.shape_cast %650 : vector<1x1x4xf32> to vector<1x4xf32>
    %c1_643 = arith.constant 1 : index
    %c0_644 = arith.constant 0 : index
    %c0_645 = arith.constant 0 : index
    %652 = vector.load %arg35[%c1_643, %c0_644, %c0_645] : memref<7x1x4xf32, #tpu.memory_space<vmem>>, vector<1x1x4xf32>
    %653 = vector.shape_cast %652 : vector<1x1x4xf32> to vector<1x4xf32>
    %c1_646 = arith.constant 1 : index
    %c0_647 = arith.constant 0 : index
    %c0_648 = arith.constant 0 : index
    %654 = vector.load %arg36[%c1_646, %c0_647, %c0_648] : memref<7x1x4xf32, #tpu.memory_space<vmem>>, vector<1x1x4xf32>
    %655 = vector.shape_cast %654 : vector<1x1x4xf32> to vector<1x4xf32>
    %c4_649 = arith.constant 4 : index
    %c0_650 = arith.constant 0 : index
    %656 = vector.load %arg59[%c4_649, %c0_650] : memref<24x16xf32, #tpu.memory_space<vmem>>, vector<16x4xf32>
    tpu.vector_store %arg59[%c4_649, %c0_650], %647 {strides = array<i32>} : memref<24x16xf32, #tpu.memory_space<vmem>>, vector<16x4xf32>,
    %c0_651 = arith.constant 0 : index
    %c0_652 = arith.constant 0 : index
    %657 = vector.load %arg59[%c0_651, %c0_652] : memref<24x16xf32, #tpu.memory_space<vmem>>, vector<16x4xf32>
    %658 = arith.truncf %657 : vector<16x4xf32> to vector<16x4xbf16>
    %c0_653 = arith.constant 0 : index
    %c0_654 = arith.constant 0 : index
    %659 = vector.load %arg60[%c0_653, %c0_654] : memref<16x80xbf16, #tpu.memory_space<vmem>>, vector<16x4xbf16>
    tpu.vector_store %arg60[%c0_653, %c0_654], %658 {strides = array<i32>} : memref<16x80xbf16, #tpu.memory_space<vmem>>, vector<16x4xbf16>,
    %c4_655 = arith.constant 4 : index
    %c0_656 = arith.constant 0 : index
    %660 = vector.load %arg59[%c4_655, %c0_656] : memref<24x16xf32, #tpu.memory_space<vmem>>, vector<16x4xf32>
    %661 = arith.truncf %660 : vector<16x4xf32> to vector<16x4xbf16>
    %c0_657 = arith.constant 0 : index
    %c4_658 = arith.constant 4 : index
    %662 = vector.load %arg60[%c0_657, %c4_658] : memref<16x80xbf16, #tpu.memory_space<vmem>>, vector<16x4xbf16>
    tpu.vector_store %arg60[%c0_657, %c4_658], %661 {strides = array<i32>} : memref<16x80xbf16, #tpu.memory_space<vmem>>, vector<16x4xbf16>,
    %c8_659 = arith.constant 8 : index
    %c0_660 = arith.constant 0 : index
    %663 = vector.load %arg59[%c8_659, %c0_660] : memref<24x16xf32, #tpu.memory_space<vmem>>, vector<16x4xf32>
    %664 = arith.truncf %663 : vector<16x4xf32> to vector<16x4xbf16>
    %c0_661 = arith.constant 0 : index
    %c8_662 = arith.constant 8 : index
    %665 = vector.load %arg60[%c0_661, %c8_662] : memref<16x80xbf16, #tpu.memory_space<vmem>>, vector<16x4xbf16>
    tpu.vector_store %arg60[%c0_661, %c8_662], %664 {strides = array<i32>} : memref<16x80xbf16, #tpu.memory_space<vmem>>, vector<16x4xbf16>,
    %c0_663 = arith.constant 0 : index
    %c0_664 = arith.constant 0 : index
    %666 = vector.load %arg60[%c0_663, %c0_664] : memref<16x80xbf16, #tpu.memory_space<vmem>>, vector<16x12xbf16>
    %cst_665 = arith.constant dense<0.000000e+00> : vector<16x4xf32>
    %667 = tpu.matmul %666, %649, %cst_665 {dimension_numbers = #tpu.dot_dimension_numbers<[1], [0], [0], [1], [0, 0, 1, 1], [], []>} : vector<16x12xbf16>, vector<12x4xbf16>, vector<16x4xf32> -> vector<16x4xf32>
    %668 = vector.broadcast %651 : vector<1x4xf32> to vector<16x4xf32>
    %669 = arith.addf %667, %668 : vector<16x4xf32>
    %cst_666 = arith.constant 0.000000e+00 : f32
    %670 = vector.broadcast %cst_666 : f32 to vector<16x4xf32>
    %671 = arith.maximumf %669, %670 : vector<16x4xf32>
    %672 = vector.broadcast %653 : vector<1x4xf32> to vector<16x4xf32>
    %673 = arith.mulf %671, %672 : vector<16x4xf32>
    %674 = vector.broadcast %655 : vector<1x4xf32> to vector<16x4xf32>
    %675 = arith.addf %673, %674 : vector<16x4xf32>
    %676 = arith.truncf %675 : vector<16x4xf32> to vector<16x4xbf16>
    %c0_667 = arith.constant 0 : index
    %c4_668 = arith.constant 4 : index
    %677 = vector.load %arg62[%c0_667, %c4_668] : memref<16x32xbf16, #tpu.memory_space<vmem>>, vector<16x4xbf16>
    tpu.vector_store %arg62[%c0_667, %c4_668], %676 {strides = array<i32>} : memref<16x32xbf16, #tpu.memory_space<vmem>>, vector<16x4xbf16>,
    %c0_669 = arith.constant 0 : index
    %c8_670 = arith.constant 8 : index
    %678 = vector.load %arg61[%c0_669, %c8_670] : memref<16x32xf32, #tpu.memory_space<vmem>>, vector<16x4xf32>
    %679 = arith.addf %675, %678 : vector<16x4xf32>
    %c2_671 = arith.constant 2 : index
    %c0_672 = arith.constant 0 : index
    %c0_673 = arith.constant 0 : index
    %680 = vector.load %arg37[%c2_671, %c0_672, %c0_673] : memref<7x12x4xbf16, #tpu.memory_space<vmem>>, vector<1x12x4xbf16>
    %681 = vector.shape_cast %680 : vector<1x12x4xbf16> to vector<12x4xbf16>
    %c2_674 = arith.constant 2 : index
    %c0_675 = arith.constant 0 : index
    %c0_676 = arith.constant 0 : index
    %682 = vector.load %arg34[%c2_674, %c0_675, %c0_676] : memref<7x1x4xf32, #tpu.memory_space<vmem>>, vector<1x1x4xf32>
    %683 = vector.shape_cast %682 : vector<1x1x4xf32> to vector<1x4xf32>
    %c2_677 = arith.constant 2 : index
    %c0_678 = arith.constant 0 : index
    %c0_679 = arith.constant 0 : index
    %684 = vector.load %arg35[%c2_677, %c0_678, %c0_679] : memref<7x1x4xf32, #tpu.memory_space<vmem>>, vector<1x1x4xf32>
    %685 = vector.shape_cast %684 : vector<1x1x4xf32> to vector<1x4xf32>
    %c2_680 = arith.constant 2 : index
    %c0_681 = arith.constant 0 : index
    %c0_682 = arith.constant 0 : index
    %686 = vector.load %arg36[%c2_680, %c0_681, %c0_682] : memref<7x1x4xf32, #tpu.memory_space<vmem>>, vector<1x1x4xf32>
    %687 = vector.shape_cast %686 : vector<1x1x4xf32> to vector<1x4xf32>
    %c4_683 = arith.constant 4 : index
    %c0_684 = arith.constant 0 : index
    %688 = vector.load %arg59[%c4_683, %c0_684] : memref<24x16xf32, #tpu.memory_space<vmem>>, vector<16x4xf32>
    tpu.vector_store %arg59[%c4_683, %c0_684], %679 {strides = array<i32>} : memref<24x16xf32, #tpu.memory_space<vmem>>, vector<16x4xf32>,
    %c0_685 = arith.constant 0 : index
    %c0_686 = arith.constant 0 : index
    %689 = vector.load %arg59[%c0_685, %c0_686] : memref<24x16xf32, #tpu.memory_space<vmem>>, vector<16x4xf32>
    %690 = arith.truncf %689 : vector<16x4xf32> to vector<16x4xbf16>
    %c0_687 = arith.constant 0 : index
    %c0_688 = arith.constant 0 : index
    %691 = vector.load %arg60[%c0_687, %c0_688] : memref<16x80xbf16, #tpu.memory_space<vmem>>, vector<16x4xbf16>
    tpu.vector_store %arg60[%c0_687, %c0_688], %690 {strides = array<i32>} : memref<16x80xbf16, #tpu.memory_space<vmem>>, vector<16x4xbf16>,
    %c4_689 = arith.constant 4 : index
    %c0_690 = arith.constant 0 : index
    %692 = vector.load %arg59[%c4_689, %c0_690] : memref<24x16xf32, #tpu.memory_space<vmem>>, vector<16x4xf32>
    %693 = arith.truncf %692 : vector<16x4xf32> to vector<16x4xbf16>
    %c0_691 = arith.constant 0 : index
    %c4_692 = arith.constant 4 : index
    %694 = vector.load %arg60[%c0_691, %c4_692] : memref<16x80xbf16, #tpu.memory_space<vmem>>, vector<16x4xbf16>
    tpu.vector_store %arg60[%c0_691, %c4_692], %693 {strides = array<i32>} : memref<16x80xbf16, #tpu.memory_space<vmem>>, vector<16x4xbf16>,
    %c8_693 = arith.constant 8 : index
    %c0_694 = arith.constant 0 : index
    %695 = vector.load %arg59[%c8_693, %c0_694] : memref<24x16xf32, #tpu.memory_space<vmem>>, vector<16x4xf32>
    %696 = arith.truncf %695 : vector<16x4xf32> to vector<16x4xbf16>
    %c0_695 = arith.constant 0 : index
    %c8_696 = arith.constant 8 : index
    %697 = vector.load %arg60[%c0_695, %c8_696] : memref<16x80xbf16, #tpu.memory_space<vmem>>, vector<16x4xbf16>
    tpu.vector_store %arg60[%c0_695, %c8_696], %696 {strides = array<i32>} : memref<16x80xbf16, #tpu.memory_space<vmem>>, vector<16x4xbf16>,
    %c0_697 = arith.constant 0 : index
    %c0_698 = arith.constant 0 : index
    %698 = vector.load %arg60[%c0_697, %c0_698] : memref<16x80xbf16, #tpu.memory_space<vmem>>, vector<16x12xbf16>
    %cst_699 = arith.constant dense<0.000000e+00> : vector<16x4xf32>
    %699 = tpu.matmul %698, %681, %cst_699 {dimension_numbers = #tpu.dot_dimension_numbers<[1], [0], [0], [1], [0, 0, 1, 1], [], []>} : vector<16x12xbf16>, vector<12x4xbf16>, vector<16x4xf32> -> vector<16x4xf32>
    %700 = vector.broadcast %683 : vector<1x4xf32> to vector<16x4xf32>
    %701 = arith.addf %699, %700 : vector<16x4xf32>
    %cst_700 = arith.constant 0.000000e+00 : f32
    %702 = vector.broadcast %cst_700 : f32 to vector<16x4xf32>
    %703 = arith.maximumf %701, %702 : vector<16x4xf32>
    %704 = vector.broadcast %685 : vector<1x4xf32> to vector<16x4xf32>
    %705 = arith.mulf %703, %704 : vector<16x4xf32>
    %706 = vector.broadcast %687 : vector<1x4xf32> to vector<16x4xf32>
    %707 = arith.addf %705, %706 : vector<16x4xf32>
    %708 = arith.truncf %707 : vector<16x4xf32> to vector<16x4xbf16>
    %c0_701 = arith.constant 0 : index
    %c8_702 = arith.constant 8 : index
    %709 = vector.load %arg62[%c0_701, %c8_702] : memref<16x32xbf16, #tpu.memory_space<vmem>>, vector<16x4xbf16>
    tpu.vector_store %arg62[%c0_701, %c8_702], %708 {strides = array<i32>} : memref<16x32xbf16, #tpu.memory_space<vmem>>, vector<16x4xbf16>,
    %c0_703 = arith.constant 0 : index
    %c12_704 = arith.constant 12 : index
    %710 = vector.load %arg61[%c0_703, %c12_704] : memref<16x32xf32, #tpu.memory_space<vmem>>, vector<16x4xf32>
    %711 = arith.addf %707, %710 : vector<16x4xf32>
    %c3_705 = arith.constant 3 : index
    %c0_706 = arith.constant 0 : index
    %c0_707 = arith.constant 0 : index
    %712 = vector.load %arg37[%c3_705, %c0_706, %c0_707] : memref<7x12x4xbf16, #tpu.memory_space<vmem>>, vector<1x12x4xbf16>
    %713 = vector.shape_cast %712 : vector<1x12x4xbf16> to vector<12x4xbf16>
    %c3_708 = arith.constant 3 : index
    %c0_709 = arith.constant 0 : index
    %c0_710 = arith.constant 0 : index
    %714 = vector.load %arg34[%c3_708, %c0_709, %c0_710] : memref<7x1x4xf32, #tpu.memory_space<vmem>>, vector<1x1x4xf32>
    %715 = vector.shape_cast %714 : vector<1x1x4xf32> to vector<1x4xf32>
    %c3_711 = arith.constant 3 : index
    %c0_712 = arith.constant 0 : index
    %c0_713 = arith.constant 0 : index
    %716 = vector.load %arg35[%c3_711, %c0_712, %c0_713] : memref<7x1x4xf32, #tpu.memory_space<vmem>>, vector<1x1x4xf32>
    %717 = vector.shape_cast %716 : vector<1x1x4xf32> to vector<1x4xf32>
    %c3_714 = arith.constant 3 : index
    %c0_715 = arith.constant 0 : index
    %c0_716 = arith.constant 0 : index
    %718 = vector.load %arg36[%c3_714, %c0_715, %c0_716] : memref<7x1x4xf32, #tpu.memory_space<vmem>>, vector<1x1x4xf32>
    %719 = vector.shape_cast %718 : vector<1x1x4xf32> to vector<1x4xf32>
    %c4_717 = arith.constant 4 : index
    %c0_718 = arith.constant 0 : index
    %720 = vector.load %arg59[%c4_717, %c0_718] : memref<24x16xf32, #tpu.memory_space<vmem>>, vector<16x4xf32>
    tpu.vector_store %arg59[%c4_717, %c0_718], %711 {strides = array<i32>} : memref<24x16xf32, #tpu.memory_space<vmem>>, vector<16x4xf32>,
    %c0_719 = arith.constant 0 : index
    %c0_720 = arith.constant 0 : index
    %721 = vector.load %arg59[%c0_719, %c0_720] : memref<24x16xf32, #tpu.memory_space<vmem>>, vector<16x4xf32>
    %722 = arith.truncf %721 : vector<16x4xf32> to vector<16x4xbf16>
    %c0_721 = arith.constant 0 : index
    %c0_722 = arith.constant 0 : index
    %723 = vector.load %arg60[%c0_721, %c0_722] : memref<16x80xbf16, #tpu.memory_space<vmem>>, vector<16x4xbf16>
    tpu.vector_store %arg60[%c0_721, %c0_722], %722 {strides = array<i32>} : memref<16x80xbf16, #tpu.memory_space<vmem>>, vector<16x4xbf16>,
    %c4_723 = arith.constant 4 : index
    %c0_724 = arith.constant 0 : index
    %724 = vector.load %arg59[%c4_723, %c0_724] : memref<24x16xf32, #tpu.memory_space<vmem>>, vector<16x4xf32>
    %725 = arith.truncf %724 : vector<16x4xf32> to vector<16x4xbf16>
    %c0_725 = arith.constant 0 : index
    %c4_726 = arith.constant 4 : index
    %726 = vector.load %arg60[%c0_725, %c4_726] : memref<16x80xbf16, #tpu.memory_space<vmem>>, vector<16x4xbf16>
    tpu.vector_store %arg60[%c0_725, %c4_726], %725 {strides = array<i32>} : memref<16x80xbf16, #tpu.memory_space<vmem>>, vector<16x4xbf16>,
    %c8_727 = arith.constant 8 : index
    %c0_728 = arith.constant 0 : index
    %727 = vector.load %arg59[%c8_727, %c0_728] : memref<24x16xf32, #tpu.memory_space<vmem>>, vector<16x4xf32>
    %728 = arith.truncf %727 : vector<16x4xf32> to vector<16x4xbf16>
    %c0_729 = arith.constant 0 : index
    %c8_730 = arith.constant 8 : index
    %729 = vector.load %arg60[%c0_729, %c8_730] : memref<16x80xbf16, #tpu.memory_space<vmem>>, vector<16x4xbf16>
    tpu.vector_store %arg60[%c0_729, %c8_730], %728 {strides = array<i32>} : memref<16x80xbf16, #tpu.memory_space<vmem>>, vector<16x4xbf16>,
    %c0_731 = arith.constant 0 : index
    %c0_732 = arith.constant 0 : index
    %730 = vector.load %arg60[%c0_731, %c0_732] : memref<16x80xbf16, #tpu.memory_space<vmem>>, vector<16x12xbf16>
    %cst_733 = arith.constant dense<0.000000e+00> : vector<16x4xf32>
    %731 = tpu.matmul %730, %713, %cst_733 {dimension_numbers = #tpu.dot_dimension_numbers<[1], [0], [0], [1], [0, 0, 1, 1], [], []>} : vector<16x12xbf16>, vector<12x4xbf16>, vector<16x4xf32> -> vector<16x4xf32>
    %732 = vector.broadcast %715 : vector<1x4xf32> to vector<16x4xf32>
    %733 = arith.addf %731, %732 : vector<16x4xf32>
    %cst_734 = arith.constant 0.000000e+00 : f32
    %734 = vector.broadcast %cst_734 : f32 to vector<16x4xf32>
    %735 = arith.maximumf %733, %734 : vector<16x4xf32>
    %736 = vector.broadcast %717 : vector<1x4xf32> to vector<16x4xf32>
    %737 = arith.mulf %735, %736 : vector<16x4xf32>
    %738 = vector.broadcast %719 : vector<1x4xf32> to vector<16x4xf32>
    %739 = arith.addf %737, %738 : vector<16x4xf32>
    %740 = arith.truncf %739 : vector<16x4xf32> to vector<16x4xbf16>
    %c0_735 = arith.constant 0 : index
    %c12_736 = arith.constant 12 : index
    %741 = vector.load %arg62[%c0_735, %c12_736] : memref<16x32xbf16, #tpu.memory_space<vmem>>, vector<16x4xbf16>
    tpu.vector_store %arg62[%c0_735, %c12_736], %740 {strides = array<i32>} : memref<16x32xbf16, #tpu.memory_space<vmem>>, vector<16x4xbf16>,
    %c0_737 = arith.constant 0 : index
    %c16_738 = arith.constant 16 : index
    %742 = vector.load %arg61[%c0_737, %c16_738] : memref<16x32xf32, #tpu.memory_space<vmem>>, vector<16x4xf32>
    %743 = arith.addf %739, %742 : vector<16x4xf32>
    %c4_739 = arith.constant 4 : index
    %c0_740 = arith.constant 0 : index
    %c0_741 = arith.constant 0 : index
    %744 = vector.load %arg37[%c4_739, %c0_740, %c0_741] : memref<7x12x4xbf16, #tpu.memory_space<vmem>>, vector<1x12x4xbf16>
    %745 = vector.shape_cast %744 : vector<1x12x4xbf16> to vector<12x4xbf16>
    %c4_742 = arith.constant 4 : index
    %c0_743 = arith.constant 0 : index
    %c0_744 = arith.constant 0 : index
    %746 = vector.load %arg34[%c4_742, %c0_743, %c0_744] : memref<7x1x4xf32, #tpu.memory_space<vmem>>, vector<1x1x4xf32>
    %747 = vector.shape_cast %746 : vector<1x1x4xf32> to vector<1x4xf32>
    %c4_745 = arith.constant 4 : index
    %c0_746 = arith.constant 0 : index
    %c0_747 = arith.constant 0 : index
    %748 = vector.load %arg35[%c4_745, %c0_746, %c0_747] : memref<7x1x4xf32, #tpu.memory_space<vmem>>, vector<1x1x4xf32>
    %749 = vector.shape_cast %748 : vector<1x1x4xf32> to vector<1x4xf32>
    %c4_748 = arith.constant 4 : index
    %c0_749 = arith.constant 0 : index
    %c0_750 = arith.constant 0 : index
    %750 = vector.load %arg36[%c4_748, %c0_749, %c0_750] : memref<7x1x4xf32, #tpu.memory_space<vmem>>, vector<1x1x4xf32>
    %751 = vector.shape_cast %750 : vector<1x1x4xf32> to vector<1x4xf32>
    %c4_751 = arith.constant 4 : index
    %c0_752 = arith.constant 0 : index
    %752 = vector.load %arg59[%c4_751, %c0_752] : memref<24x16xf32, #tpu.memory_space<vmem>>, vector<16x4xf32>
    tpu.vector_store %arg59[%c4_751, %c0_752], %743 {strides = array<i32>} : memref<24x16xf32, #tpu.memory_space<vmem>>, vector<16x4xf32>,
    %c0_753 = arith.constant 0 : index
    %c0_754 = arith.constant 0 : index
    %753 = vector.load %arg59[%c0_753, %c0_754] : memref<24x16xf32, #tpu.memory_space<vmem>>, vector<16x4xf32>
    %754 = arith.truncf %753 : vector<16x4xf32> to vector<16x4xbf16>
    %c0_755 = arith.constant 0 : index
    %c0_756 = arith.constant 0 : index
    %755 = vector.load %arg60[%c0_755, %c0_756] : memref<16x80xbf16, #tpu.memory_space<vmem>>, vector<16x4xbf16>
    tpu.vector_store %arg60[%c0_755, %c0_756], %754 {strides = array<i32>} : memref<16x80xbf16, #tpu.memory_space<vmem>>, vector<16x4xbf16>,
    %c4_757 = arith.constant 4 : index
    %c0_758 = arith.constant 0 : index
    %756 = vector.load %arg59[%c4_757, %c0_758] : memref<24x16xf32, #tpu.memory_space<vmem>>, vector<16x4xf32>
    %757 = arith.truncf %756 : vector<16x4xf32> to vector<16x4xbf16>
    %c0_759 = arith.constant 0 : index
    %c4_760 = arith.constant 4 : index
    %758 = vector.load %arg60[%c0_759, %c4_760] : memref<16x80xbf16, #tpu.memory_space<vmem>>, vector<16x4xbf16>
    tpu.vector_store %arg60[%c0_759, %c4_760], %757 {strides = array<i32>} : memref<16x80xbf16, #tpu.memory_space<vmem>>, vector<16x4xbf16>,
    %c8_761 = arith.constant 8 : index
    %c0_762 = arith.constant 0 : index
    %759 = vector.load %arg59[%c8_761, %c0_762] : memref<24x16xf32, #tpu.memory_space<vmem>>, vector<16x4xf32>
    %760 = arith.truncf %759 : vector<16x4xf32> to vector<16x4xbf16>
    %c0_763 = arith.constant 0 : index
    %c8_764 = arith.constant 8 : index
    %761 = vector.load %arg60[%c0_763, %c8_764] : memref<16x80xbf16, #tpu.memory_space<vmem>>, vector<16x4xbf16>
    tpu.vector_store %arg60[%c0_763, %c8_764], %760 {strides = array<i32>} : memref<16x80xbf16, #tpu.memory_space<vmem>>, vector<16x4xbf16>,
    %c0_765 = arith.constant 0 : index
    %c0_766 = arith.constant 0 : index
    %762 = vector.load %arg60[%c0_765, %c0_766] : memref<16x80xbf16, #tpu.memory_space<vmem>>, vector<16x12xbf16>
    %cst_767 = arith.constant dense<0.000000e+00> : vector<16x4xf32>
    %763 = tpu.matmul %762, %745, %cst_767 {dimension_numbers = #tpu.dot_dimension_numbers<[1], [0], [0], [1], [0, 0, 1, 1], [], []>} : vector<16x12xbf16>, vector<12x4xbf16>, vector<16x4xf32> -> vector<16x4xf32>
    %764 = vector.broadcast %747 : vector<1x4xf32> to vector<16x4xf32>
    %765 = arith.addf %763, %764 : vector<16x4xf32>
    %cst_768 = arith.constant 0.000000e+00 : f32
    %766 = vector.broadcast %cst_768 : f32 to vector<16x4xf32>
    %767 = arith.maximumf %765, %766 : vector<16x4xf32>
    %768 = vector.broadcast %749 : vector<1x4xf32> to vector<16x4xf32>
    %769 = arith.mulf %767, %768 : vector<16x4xf32>
    %770 = vector.broadcast %751 : vector<1x4xf32> to vector<16x4xf32>
    %771 = arith.addf %769, %770 : vector<16x4xf32>
    %772 = arith.truncf %771 : vector<16x4xf32> to vector<16x4xbf16>
    %c0_769 = arith.constant 0 : index
    %c16_770 = arith.constant 16 : index
    %773 = vector.load %arg62[%c0_769, %c16_770] : memref<16x32xbf16, #tpu.memory_space<vmem>>, vector<16x4xbf16>
    tpu.vector_store %arg62[%c0_769, %c16_770], %772 {strides = array<i32>} : memref<16x32xbf16, #tpu.memory_space<vmem>>, vector<16x4xbf16>,
    %c0_771 = arith.constant 0 : index
    %c20_772 = arith.constant 20 : index
    %774 = vector.load %arg61[%c0_771, %c20_772] : memref<16x32xf32, #tpu.memory_space<vmem>>, vector<16x4xf32>
    %775 = arith.addf %771, %774 : vector<16x4xf32>
    %c5_773 = arith.constant 5 : index
    %c0_774 = arith.constant 0 : index
    %c0_775 = arith.constant 0 : index
    %776 = vector.load %arg37[%c5_773, %c0_774, %c0_775] : memref<7x12x4xbf16, #tpu.memory_space<vmem>>, vector<1x12x4xbf16>
    %777 = vector.shape_cast %776 : vector<1x12x4xbf16> to vector<12x4xbf16>
    %c5_776 = arith.constant 5 : index
    %c0_777 = arith.constant 0 : index
    %c0_778 = arith.constant 0 : index
    %778 = vector.load %arg34[%c5_776, %c0_777, %c0_778] : memref<7x1x4xf32, #tpu.memory_space<vmem>>, vector<1x1x4xf32>
    %779 = vector.shape_cast %778 : vector<1x1x4xf32> to vector<1x4xf32>
    %c5_779 = arith.constant 5 : index
    %c0_780 = arith.constant 0 : index
    %c0_781 = arith.constant 0 : index
    %780 = vector.load %arg35[%c5_779, %c0_780, %c0_781] : memref<7x1x4xf32, #tpu.memory_space<vmem>>, vector<1x1x4xf32>
    %781 = vector.shape_cast %780 : vector<1x1x4xf32> to vector<1x4xf32>
    %c5_782 = arith.constant 5 : index
    %c0_783 = arith.constant 0 : index
    %c0_784 = arith.constant 0 : index
    %782 = vector.load %arg36[%c5_782, %c0_783, %c0_784] : memref<7x1x4xf32, #tpu.memory_space<vmem>>, vector<1x1x4xf32>
    %783 = vector.shape_cast %782 : vector<1x1x4xf32> to vector<1x4xf32>
    %c4_785 = arith.constant 4 : index
    %c0_786 = arith.constant 0 : index
    %784 = vector.load %arg59[%c4_785, %c0_786] : memref<24x16xf32, #tpu.memory_space<vmem>>, vector<16x4xf32>
    tpu.vector_store %arg59[%c4_785, %c0_786], %775 {strides = array<i32>} : memref<24x16xf32, #tpu.memory_space<vmem>>, vector<16x4xf32>,
    %c0_787 = arith.constant 0 : index
    %c0_788 = arith.constant 0 : index
    %785 = vector.load %arg59[%c0_787, %c0_788] : memref<24x16xf32, #tpu.memory_space<vmem>>, vector<16x4xf32>
    %786 = arith.truncf %785 : vector<16x4xf32> to vector<16x4xbf16>
    %c0_789 = arith.constant 0 : index
    %c0_790 = arith.constant 0 : index
    %787 = vector.load %arg60[%c0_789, %c0_790] : memref<16x80xbf16, #tpu.memory_space<vmem>>, vector<16x4xbf16>
    tpu.vector_store %arg60[%c0_789, %c0_790], %786 {strides = array<i32>} : memref<16x80xbf16, #tpu.memory_space<vmem>>, vector<16x4xbf16>,
    %c4_791 = arith.constant 4 : index
    %c0_792 = arith.constant 0 : index
    %788 = vector.load %arg59[%c4_791, %c0_792] : memref<24x16xf32, #tpu.memory_space<vmem>>, vector<16x4xf32>
    %789 = arith.truncf %788 : vector<16x4xf32> to vector<16x4xbf16>
    %c0_793 = arith.constant 0 : index
    %c4_794 = arith.constant 4 : index
    %790 = vector.load %arg60[%c0_793, %c4_794] : memref<16x80xbf16, #tpu.memory_space<vmem>>, vector<16x4xbf16>
    tpu.vector_store %arg60[%c0_793, %c4_794], %789 {strides = array<i32>} : memref<16x80xbf16, #tpu.memory_space<vmem>>, vector<16x4xbf16>,
    %c8_795 = arith.constant 8 : index
    %c0_796 = arith.constant 0 : index
    %791 = vector.load %arg59[%c8_795, %c0_796] : memref<24x16xf32, #tpu.memory_space<vmem>>, vector<16x4xf32>
    %792 = arith.truncf %791 : vector<16x4xf32> to vector<16x4xbf16>
    %c0_797 = arith.constant 0 : index
    %c8_798 = arith.constant 8 : index
    %793 = vector.load %arg60[%c0_797, %c8_798] : memref<16x80xbf16, #tpu.memory_space<vmem>>, vector<16x4xbf16>
    tpu.vector_store %arg60[%c0_797, %c8_798], %792 {strides = array<i32>} : memref<16x80xbf16, #tpu.memory_space<vmem>>, vector<16x4xbf16>,
    %c0_799 = arith.constant 0 : index
    %c0_800 = arith.constant 0 : index
    %794 = vector.load %arg60[%c0_799, %c0_800] : memref<16x80xbf16, #tpu.memory_space<vmem>>, vector<16x12xbf16>
    %cst_801 = arith.constant dense<0.000000e+00> : vector<16x4xf32>
    %795 = tpu.matmul %794, %777, %cst_801 {dimension_numbers = #tpu.dot_dimension_numbers<[1], [0], [0], [1], [0, 0, 1, 1], [], []>} : vector<16x12xbf16>, vector<12x4xbf16>, vector<16x4xf32> -> vector<16x4xf32>
    %796 = vector.broadcast %779 : vector<1x4xf32> to vector<16x4xf32>
    %797 = arith.addf %795, %796 : vector<16x4xf32>
    %cst_802 = arith.constant 0.000000e+00 : f32
    %798 = vector.broadcast %cst_802 : f32 to vector<16x4xf32>
    %799 = arith.maximumf %797, %798 : vector<16x4xf32>
    %800 = vector.broadcast %781 : vector<1x4xf32> to vector<16x4xf32>
    %801 = arith.mulf %799, %800 : vector<16x4xf32>
    %802 = vector.broadcast %783 : vector<1x4xf32> to vector<16x4xf32>
    %803 = arith.addf %801, %802 : vector<16x4xf32>
    %804 = arith.truncf %803 : vector<16x4xf32> to vector<16x4xbf16>
    %c0_803 = arith.constant 0 : index
    %c20_804 = arith.constant 20 : index
    %805 = vector.load %arg62[%c0_803, %c20_804] : memref<16x32xbf16, #tpu.memory_space<vmem>>, vector<16x4xbf16>
    tpu.vector_store %arg62[%c0_803, %c20_804], %804 {strides = array<i32>} : memref<16x32xbf16, #tpu.memory_space<vmem>>, vector<16x4xbf16>,
    %c0_805 = arith.constant 0 : index
    %c24_806 = arith.constant 24 : index
    %806 = vector.load %arg61[%c0_805, %c24_806] : memref<16x32xf32, #tpu.memory_space<vmem>>, vector<16x4xf32>
    %807 = arith.addf %803, %806 : vector<16x4xf32>
    %c6_807 = arith.constant 6 : index
    %c0_808 = arith.constant 0 : index
    %c0_809 = arith.constant 0 : index
    %808 = vector.load %arg37[%c6_807, %c0_808, %c0_809] : memref<7x12x4xbf16, #tpu.memory_space<vmem>>, vector<1x12x4xbf16>
    %809 = vector.shape_cast %808 : vector<1x12x4xbf16> to vector<12x4xbf16>
    %c6_810 = arith.constant 6 : index
    %c0_811 = arith.constant 0 : index
    %c0_812 = arith.constant 0 : index
    %810 = vector.load %arg34[%c6_810, %c0_811, %c0_812] : memref<7x1x4xf32, #tpu.memory_space<vmem>>, vector<1x1x4xf32>
    %811 = vector.shape_cast %810 : vector<1x1x4xf32> to vector<1x4xf32>
    %c6_813 = arith.constant 6 : index
    %c0_814 = arith.constant 0 : index
    %c0_815 = arith.constant 0 : index
    %812 = vector.load %arg35[%c6_813, %c0_814, %c0_815] : memref<7x1x4xf32, #tpu.memory_space<vmem>>, vector<1x1x4xf32>
    %813 = vector.shape_cast %812 : vector<1x1x4xf32> to vector<1x4xf32>
    %c6_816 = arith.constant 6 : index
    %c0_817 = arith.constant 0 : index
    %c0_818 = arith.constant 0 : index
    %814 = vector.load %arg36[%c6_816, %c0_817, %c0_818] : memref<7x1x4xf32, #tpu.memory_space<vmem>>, vector<1x1x4xf32>
    %815 = vector.shape_cast %814 : vector<1x1x4xf32> to vector<1x4xf32>
    %c4_819 = arith.constant 4 : index
    %c0_820 = arith.constant 0 : index
    %816 = vector.load %arg59[%c4_819, %c0_820] : memref<24x16xf32, #tpu.memory_space<vmem>>, vector<16x4xf32>
    tpu.vector_store %arg59[%c4_819, %c0_820], %807 {strides = array<i32>} : memref<24x16xf32, #tpu.memory_space<vmem>>, vector<16x4xf32>,
    %c0_821 = arith.constant 0 : index
    %c0_822 = arith.constant 0 : index
    %817 = vector.load %arg59[%c0_821, %c0_822] : memref<24x16xf32, #tpu.memory_space<vmem>>, vector<16x4xf32>
    %818 = arith.truncf %817 : vector<16x4xf32> to vector<16x4xbf16>
    %c0_823 = arith.constant 0 : index
    %c0_824 = arith.constant 0 : index
    %819 = vector.load %arg60[%c0_823, %c0_824] : memref<16x80xbf16, #tpu.memory_space<vmem>>, vector<16x4xbf16>
    tpu.vector_store %arg60[%c0_823, %c0_824], %818 {strides = array<i32>} : memref<16x80xbf16, #tpu.memory_space<vmem>>, vector<16x4xbf16>,
    %c4_825 = arith.constant 4 : index
    %c0_826 = arith.constant 0 : index
    %820 = vector.load %arg59[%c4_825, %c0_826] : memref<24x16xf32, #tpu.memory_space<vmem>>, vector<16x4xf32>
    %821 = arith.truncf %820 : vector<16x4xf32> to vector<16x4xbf16>
    %c0_827 = arith.constant 0 : index
    %c4_828 = arith.constant 4 : index
    %822 = vector.load %arg60[%c0_827, %c4_828] : memref<16x80xbf16, #tpu.memory_space<vmem>>, vector<16x4xbf16>
    tpu.vector_store %arg60[%c0_827, %c4_828], %821 {strides = array<i32>} : memref<16x80xbf16, #tpu.memory_space<vmem>>, vector<16x4xbf16>,
    %c8_829 = arith.constant 8 : index
    %c0_830 = arith.constant 0 : index
    %823 = vector.load %arg59[%c8_829, %c0_830] : memref<24x16xf32, #tpu.memory_space<vmem>>, vector<16x4xf32>
    %824 = arith.truncf %823 : vector<16x4xf32> to vector<16x4xbf16>
    %c0_831 = arith.constant 0 : index
    %c8_832 = arith.constant 8 : index
    %825 = vector.load %arg60[%c0_831, %c8_832] : memref<16x80xbf16, #tpu.memory_space<vmem>>, vector<16x4xbf16>
    tpu.vector_store %arg60[%c0_831, %c8_832], %824 {strides = array<i32>} : memref<16x80xbf16, #tpu.memory_space<vmem>>, vector<16x4xbf16>,
    %c0_833 = arith.constant 0 : index
    %c0_834 = arith.constant 0 : index
    %826 = vector.load %arg60[%c0_833, %c0_834] : memref<16x80xbf16, #tpu.memory_space<vmem>>, vector<16x12xbf16>
    %cst_835 = arith.constant dense<0.000000e+00> : vector<16x4xf32>
    %827 = tpu.matmul %826, %809, %cst_835 {dimension_numbers = #tpu.dot_dimension_numbers<[1], [0], [0], [1], [0, 0, 1, 1], [], []>} : vector<16x12xbf16>, vector<12x4xbf16>, vector<16x4xf32> -> vector<16x4xf32>
    %828 = vector.broadcast %811 : vector<1x4xf32> to vector<16x4xf32>
    %829 = arith.addf %827, %828 : vector<16x4xf32>
    %cst_836 = arith.constant 0.000000e+00 : f32
    %830 = vector.broadcast %cst_836 : f32 to vector<16x4xf32>
    %831 = arith.maximumf %829, %830 : vector<16x4xf32>
    %832 = vector.broadcast %813 : vector<1x4xf32> to vector<16x4xf32>
    %833 = arith.mulf %831, %832 : vector<16x4xf32>
    %834 = vector.broadcast %815 : vector<1x4xf32> to vector<16x4xf32>
    %835 = arith.addf %833, %834 : vector<16x4xf32>
    %836 = arith.truncf %835 : vector<16x4xf32> to vector<16x4xbf16>
    %c0_837 = arith.constant 0 : index
    %c24_838 = arith.constant 24 : index
    %837 = vector.load %arg62[%c0_837, %c24_838] : memref<16x32xbf16, #tpu.memory_space<vmem>>, vector<16x4xbf16>
    tpu.vector_store %arg62[%c0_837, %c24_838], %836 {strides = array<i32>} : memref<16x32xbf16, #tpu.memory_space<vmem>>, vector<16x4xbf16>,
    %c0_839 = arith.constant 0 : index
    %c28_840 = arith.constant 28 : index
    %838 = vector.load %arg61[%c0_839, %c28_840] : memref<16x32xf32, #tpu.memory_space<vmem>>, vector<16x4xf32>
    %839 = arith.truncf %838 : vector<16x4xf32> to vector<16x4xbf16>
    %c0_841 = arith.constant 0 : index
    %c28_842 = arith.constant 28 : index
    %840 = vector.load %arg62[%c0_841, %c28_842] : memref<16x32xbf16, #tpu.memory_space<vmem>>, vector<16x4xbf16>
    tpu.vector_store %arg62[%c0_841, %c28_842], %839 {strides = array<i32>} : memref<16x32xbf16, #tpu.memory_space<vmem>>, vector<16x4xbf16>,
    %c0_843 = arith.constant 0 : index
    %c0_844 = arith.constant 0 : index
    %841 = vector.load %arg62[%c0_843, %c0_844] : memref<16x32xbf16, #tpu.memory_space<vmem>>, vector<16x32xbf16>
    %c0_845 = arith.constant 0 : index
    %c0_846 = arith.constant 0 : index
    %842 = vector.load %arg49[%c0_845, %c0_846] : memref<32x32xbf16, #tpu.memory_space<vmem>>, vector<32x32xbf16>
    %c0_847 = arith.constant 0 : index
    %c0_848 = arith.constant 0 : index
    %843 = vector.load %arg46[%c0_847, %c0_848] : memref<1x32xf32, #tpu.memory_space<vmem>>, vector<1x32xf32>
    %c0_849 = arith.constant 0 : index
    %c0_850 = arith.constant 0 : index
    %844 = vector.load %arg47[%c0_849, %c0_850] : memref<1x32xf32, #tpu.memory_space<vmem>>, vector<1x32xf32>
    %c0_851 = arith.constant 0 : index
    %c0_852 = arith.constant 0 : index
    %845 = vector.load %arg48[%c0_851, %c0_852] : memref<1x32xf32, #tpu.memory_space<vmem>>, vector<1x32xf32>
    %cst_853 = arith.constant dense<0.000000e+00> : vector<16x32xf32>
    %846 = tpu.matmul %841, %842, %cst_853 {dimension_numbers = #tpu.dot_dimension_numbers<[1], [0], [0], [1], [0, 0, 1, 1], [], []>} : vector<16x32xbf16>, vector<32x32xbf16>, vector<16x32xf32> -> vector<16x32xf32>
    %847 = vector.broadcast %843 : vector<1x32xf32> to vector<16x32xf32>
    %848 = arith.addf %846, %847 : vector<16x32xf32>
    %cst_854 = arith.constant 0.000000e+00 : f32
    %849 = vector.broadcast %cst_854 : f32 to vector<16x32xf32>
    %850 = arith.maximumf %848, %849 : vector<16x32xf32>
    %851 = vector.broadcast %844 : vector<1x32xf32> to vector<16x32xf32>
    %852 = arith.mulf %850, %851 : vector<16x32xf32>
    %853 = vector.broadcast %845 : vector<1x32xf32> to vector<16x32xf32>
    %854 = arith.addf %852, %853 : vector<16x32xf32>
    %cst_855 = arith.constant dense<0.000000e+00> : vector<32xf32>
    %855 = vector.multi_reduction <add>, %854, %cst_855 [0] : vector<16x32xf32> to vector<32xf32>
    %856 = vector.shape_cast %855 : vector<32xf32> to vector<1x32xf32>
    %cst_856 = arith.constant 1.600000e+01 : f32
    %857 = vector.broadcast %cst_856 : f32 to vector<1x32xf32>
    %858 = arith.divf %856, %857 : vector<1x32xf32>
    %859 = arith.truncf %858 : vector<1x32xf32> to vector<1x32xbf16>
    %c0_857 = arith.constant 0 : index
    %c0_858 = arith.constant 0 : index
    %860 = vector.load %arg40[%c0_857, %c0_858] : memref<32x16xbf16, #tpu.memory_space<vmem>>, vector<32x16xbf16>
    %cst_859 = arith.constant dense<0.000000e+00> : vector<1x16xf32>
    %861 = tpu.matmul %859, %860, %cst_859 {dimension_numbers = #tpu.dot_dimension_numbers<[1], [0], [0], [1], [0, 0, 1, 1], [], []>} : vector<1x32xbf16>, vector<32x16xbf16>, vector<1x16xf32> -> vector<1x16xf32>
    %c0_860 = arith.constant 0 : index
    %c0_861 = arith.constant 0 : index
    %862 = vector.load %arg38[%c0_860, %c0_861] : memref<1x16xf32, #tpu.memory_space<vmem>>, vector<1x16xf32>
    %863 = arith.addf %861, %862 : vector<1x16xf32>
    %cst_862 = arith.constant 0.000000e+00 : f32
    %864 = vector.broadcast %cst_862 : f32 to vector<1x16xf32>
    %865 = arith.maximumf %863, %864 : vector<1x16xf32>
    %866 = arith.truncf %865 : vector<1x16xf32> to vector<1x16xbf16>
    %c0_863 = arith.constant 0 : index
    %c0_864 = arith.constant 0 : index
    %867 = vector.load %arg41[%c0_863, %c0_864] : memref<16x32xbf16, #tpu.memory_space<vmem>>, vector<16x32xbf16>
    %cst_865 = arith.constant dense<0.000000e+00> : vector<1x32xf32>
    %868 = tpu.matmul %866, %867, %cst_865 {dimension_numbers = #tpu.dot_dimension_numbers<[1], [0], [0], [1], [0, 0, 1, 1], [], []>} : vector<1x16xbf16>, vector<16x32xbf16>, vector<1x32xf32> -> vector<1x32xf32>
    %c0_866 = arith.constant 0 : index
    %c0_867 = arith.constant 0 : index
    %869 = vector.load %arg39[%c0_866, %c0_867] : memref<1x32xf32, #tpu.memory_space<vmem>>, vector<1x32xf32>
    %870 = arith.addf %868, %869 : vector<1x32xf32>
    %871 = arith.negf %870 : vector<1x32xf32>
    %872 = math.exp %871 : vector<1x32xf32>
    %cst_868 = arith.constant 1.000000e+00 : f32
    %873 = vector.broadcast %cst_868 : f32 to vector<1x32xf32>
    %874 = arith.addf %873, %872 : vector<1x32xf32>
    %875 = arith.divf %873, %874 : vector<1x32xf32>
    %876 = vector.broadcast %875 : vector<1x32xf32> to vector<16x32xf32>
    %877 = arith.mulf %854, %876 : vector<16x32xf32>
    %878 = arith.addf %599, %877 : vector<16x32xf32>
    %879 = arith.truncf %878 : vector<16x32xf32> to vector<16x32xbf16>
    %c0_869 = arith.constant 0 : index
    %c64_870 = arith.constant 64 : index
    %880 = vector.load %arg63[%c0_869, %c64_870] : memref<16x96xbf16, #tpu.memory_space<vmem>>, vector<16x32xbf16>
    tpu.vector_store %arg63[%c0_869, %c64_870], %879 {strides = array<i32>} : memref<16x96xbf16, #tpu.memory_space<vmem>>, vector<16x32xbf16>,
    %c0_871 = arith.constant 0 : index
    %c0_872 = arith.constant 0 : index
    %881 = vector.load %arg63[%c0_871, %c0_872] : memref<16x96xbf16, #tpu.memory_space<vmem>>, vector<16x96xbf16>
    %c0_873 = arith.constant 0 : index
    %c0_874 = arith.constant 0 : index
    %882 = vector.load %arg53[%c0_873, %c0_874] : memref<96x48xbf16, #tpu.memory_space<vmem>>, vector<96x48xbf16>
    %c0_875 = arith.constant 0 : index
    %c0_876 = arith.constant 0 : index
    %883 = vector.load %arg50[%c0_875, %c0_876] : memref<1x48xf32, #tpu.memory_space<vmem>>, vector<1x48xf32>
    %c0_877 = arith.constant 0 : index
    %c0_878 = arith.constant 0 : index
    %884 = vector.load %arg51[%c0_877, %c0_878] : memref<1x48xf32, #tpu.memory_space<vmem>>, vector<1x48xf32>
    %c0_879 = arith.constant 0 : index
    %c0_880 = arith.constant 0 : index
    %885 = vector.load %arg52[%c0_879, %c0_880] : memref<1x48xf32, #tpu.memory_space<vmem>>, vector<1x48xf32>
    %cst_881 = arith.constant dense<0.000000e+00> : vector<16x48xf32>
    %886 = tpu.matmul %881, %882, %cst_881 {dimension_numbers = #tpu.dot_dimension_numbers<[1], [0], [0], [1], [0, 0, 1, 1], [], []>} : vector<16x96xbf16>, vector<96x48xbf16>, vector<16x48xf32> -> vector<16x48xf32>
    %887 = vector.broadcast %883 : vector<1x48xf32> to vector<16x48xf32>
    %888 = arith.addf %886, %887 : vector<16x48xf32>
    %cst_882 = arith.constant 0.000000e+00 : f32
    %889 = vector.broadcast %cst_882 : f32 to vector<16x48xf32>
    %890 = arith.maximumf %888, %889 : vector<16x48xf32>
    %891 = vector.broadcast %884 : vector<1x48xf32> to vector<16x48xf32>
    %892 = arith.mulf %890, %891 : vector<16x48xf32>
    %893 = vector.broadcast %885 : vector<1x48xf32> to vector<16x48xf32>
    %894 = arith.addf %892, %893 : vector<16x48xf32>
    %c0_883 = arith.constant 0 : index
    %c0_884 = arith.constant 0 : index
    %c0_885 = arith.constant 0 : index
    %895 = vector.load %arg58[%c0_883, %c0_884, %c0_885] : memref<1x16x48xf32, #tpu.memory_space<vmem>>, vector<1x16x48xf32>
    %896 = vector.shape_cast %895 : vector<1x16x48xf32> to vector<16x48xf32>
    %897 = vector.shape_cast %894 : vector<16x48xf32> to vector<1x16x48xf32>
    tpu.vector_store %arg58[%c0_883, %c0_884, %c0_885], %897 {strides = array<i32>} : memref<1x16x48xf32, #tpu.memory_space<vmem>>, vector<1x16x48xf32>,
    return
  }
  func.func @transform_0(%arg0: i32) -> (i32, i32, i32) {
    %c0_i32 = arith.constant 0 : i32
    %c0_i32_0 = arith.constant 0 : i32
    %c0_i32_1 = arith.constant 0 : i32
    return %arg0, %c0_i32, %c0_i32_0 : i32, i32, i32
  }
  func.func @transform_1(%arg0: i32) -> (i32, i32, i32) {
    %c0_i32 = arith.constant 0 : i32
    %c0_i32_0 = arith.constant 0 : i32
    %c0_i32_1 = arith.constant 0 : i32
    %c0_i32_2 = arith.constant 0 : i32
    return %c0_i32, %c0_i32_0, %c0_i32_1 : i32, i32, i32
  }
  func.func @transform_2(%arg0: i32) -> (i32, i32, i32) {
    %c0_i32 = arith.constant 0 : i32
    %c0_i32_0 = arith.constant 0 : i32
    %c0_i32_1 = arith.constant 0 : i32
    %c0_i32_2 = arith.constant 0 : i32
    return %c0_i32, %c0_i32_0, %c0_i32_1 : i32, i32, i32
  }
  func.func @transform_3(%arg0: i32) -> (i32, i32, i32) {
    %c0_i32 = arith.constant 0 : i32
    %c0_i32_0 = arith.constant 0 : i32
    %c0_i32_1 = arith.constant 0 : i32
    %c0_i32_2 = arith.constant 0 : i32
    return %c0_i32, %c0_i32_0, %c0_i32_1 : i32, i32, i32
  }
  func.func @transform_4(%arg0: i32) -> (i32, i32, i32) {
    %c0_i32 = arith.constant 0 : i32
    %c0_i32_0 = arith.constant 0 : i32
    %c0_i32_1 = arith.constant 0 : i32
    %c0_i32_2 = arith.constant 0 : i32
    return %c0_i32, %c0_i32_0, %c0_i32_1 : i32, i32, i32
  }
  func.func @transform_5(%arg0: i32) -> (i32, i32) {
    %c0_i32 = arith.constant 0 : i32
    %c0_i32_0 = arith.constant 0 : i32
    %c0_i32_1 = arith.constant 0 : i32
    return %c0_i32, %c0_i32_0 : i32, i32
  }
  func.func @transform_6(%arg0: i32) -> (i32, i32) {
    %c0_i32 = arith.constant 0 : i32
    %c0_i32_0 = arith.constant 0 : i32
    %c0_i32_1 = arith.constant 0 : i32
    return %c0_i32, %c0_i32_0 : i32, i32
  }
  func.func @transform_7(%arg0: i32) -> (i32, i32) {
    %c0_i32 = arith.constant 0 : i32
    %c0_i32_0 = arith.constant 0 : i32
    %c0_i32_1 = arith.constant 0 : i32
    return %c0_i32, %c0_i32_0 : i32, i32
  }
  func.func @transform_8(%arg0: i32) -> (i32, i32) {
    %c0_i32 = arith.constant 0 : i32
    %c0_i32_0 = arith.constant 0 : i32
    %c0_i32_1 = arith.constant 0 : i32
    return %c0_i32, %c0_i32_0 : i32, i32
  }
  func.func @transform_9(%arg0: i32) -> (i32, i32) {
    %c0_i32 = arith.constant 0 : i32
    %c0_i32_0 = arith.constant 0 : i32
    %c0_i32_1 = arith.constant 0 : i32
    return %c0_i32, %c0_i32_0 : i32, i32
  }
  func.func @transform_10(%arg0: i32) -> (i32, i32) {
    %c0_i32 = arith.constant 0 : i32
    %c0_i32_0 = arith.constant 0 : i32
    %c0_i32_1 = arith.constant 0 : i32
    return %c0_i32, %c0_i32_0 : i32, i32
  }
  func.func @transform_11(%arg0: i32) -> (i32, i32) {
    %c0_i32 = arith.constant 0 : i32
    %c0_i32_0 = arith.constant 0 : i32
    %c0_i32_1 = arith.constant 0 : i32
    return %c0_i32, %c0_i32_0 : i32, i32
  }
  func.func @transform_12(%arg0: i32) -> (i32, i32) {
    %c0_i32 = arith.constant 0 : i32
    %c0_i32_0 = arith.constant 0 : i32
    %c0_i32_1 = arith.constant 0 : i32
    return %c0_i32, %c0_i32_0 : i32, i32
  }
  func.func @transform_13(%arg0: i32) -> (i32, i32) {
    %c0_i32 = arith.constant 0 : i32
    %c0_i32_0 = arith.constant 0 : i32
    %c0_i32_1 = arith.constant 0 : i32
    return %c0_i32, %c0_i32_0 : i32, i32
  }
  func.func @transform_14(%arg0: i32) -> (i32, i32) {
    %c0_i32 = arith.constant 0 : i32
    %c0_i32_0 = arith.constant 0 : i32
    %c0_i32_1 = arith.constant 0 : i32
    return %c0_i32, %c0_i32_0 : i32, i32
  }
  func.func @transform_15(%arg0: i32) -> (i32, i32) {
    %c0_i32 = arith.constant 0 : i32
    %c0_i32_0 = arith.constant 0 : i32
    %c0_i32_1 = arith.constant 0 : i32
    return %c0_i32, %c0_i32_0 : i32, i32
  }
  func.func @transform_16(%arg0: i32) -> (i32, i32) {
    %c0_i32 = arith.constant 0 : i32
    %c0_i32_0 = arith.constant 0 : i32
    %c0_i32_1 = arith.constant 0 : i32
    return %c0_i32, %c0_i32_0 : i32, i32
  }
  func.func @transform_17(%arg0: i32) -> (i32, i32, i32) {
    %c0_i32 = arith.constant 0 : i32
    %c0_i32_0 = arith.constant 0 : i32
    %c0_i32_1 = arith.constant 0 : i32
    %c0_i32_2 = arith.constant 0 : i32
    return %c0_i32, %c0_i32_0, %c0_i32_1 : i32, i32, i32
  }
  func.func @transform_18(%arg0: i32) -> (i32, i32, i32) {
    %c0_i32 = arith.constant 0 : i32
    %c0_i32_0 = arith.constant 0 : i32
    %c0_i32_1 = arith.constant 0 : i32
    %c0_i32_2 = arith.constant 0 : i32
    return %c0_i32, %c0_i32_0, %c0_i32_1 : i32, i32, i32
  }
  func.func @transform_19(%arg0: i32) -> (i32, i32, i32) {
    %c0_i32 = arith.constant 0 : i32
    %c0_i32_0 = arith.constant 0 : i32
    %c0_i32_1 = arith.constant 0 : i32
    %c0_i32_2 = arith.constant 0 : i32
    return %c0_i32, %c0_i32_0, %c0_i32_1 : i32, i32, i32
  }
  func.func @transform_20(%arg0: i32) -> (i32, i32, i32) {
    %c0_i32 = arith.constant 0 : i32
    %c0_i32_0 = arith.constant 0 : i32
    %c0_i32_1 = arith.constant 0 : i32
    %c0_i32_2 = arith.constant 0 : i32
    return %c0_i32, %c0_i32_0, %c0_i32_1 : i32, i32, i32
  }
  func.func @transform_21(%arg0: i32) -> (i32, i32) {
    %c0_i32 = arith.constant 0 : i32
    %c0_i32_0 = arith.constant 0 : i32
    %c0_i32_1 = arith.constant 0 : i32
    return %c0_i32, %c0_i32_0 : i32, i32
  }
  func.func @transform_22(%arg0: i32) -> (i32, i32) {
    %c0_i32 = arith.constant 0 : i32
    %c0_i32_0 = arith.constant 0 : i32
    %c0_i32_1 = arith.constant 0 : i32
    return %c0_i32, %c0_i32_0 : i32, i32
  }
  func.func @transform_23(%arg0: i32) -> (i32, i32) {
    %c0_i32 = arith.constant 0 : i32
    %c0_i32_0 = arith.constant 0 : i32
    %c0_i32_1 = arith.constant 0 : i32
    return %c0_i32, %c0_i32_0 : i32, i32
  }
  func.func @transform_24(%arg0: i32) -> (i32, i32) {
    %c0_i32 = arith.constant 0 : i32
    %c0_i32_0 = arith.constant 0 : i32
    %c0_i32_1 = arith.constant 0 : i32
    return %c0_i32, %c0_i32_0 : i32, i32
  }
  func.func @transform_25(%arg0: i32) -> (i32, i32) {
    %c0_i32 = arith.constant 0 : i32
    %c0_i32_0 = arith.constant 0 : i32
    %c0_i32_1 = arith.constant 0 : i32
    return %c0_i32, %c0_i32_0 : i32, i32
  }
  func.func @transform_26(%arg0: i32) -> (i32, i32) {
    %c0_i32 = arith.constant 0 : i32
    %c0_i32_0 = arith.constant 0 : i32
    %c0_i32_1 = arith.constant 0 : i32
    return %c0_i32, %c0_i32_0 : i32, i32
  }
  func.func @transform_27(%arg0: i32) -> (i32, i32) {
    %c0_i32 = arith.constant 0 : i32
    %c0_i32_0 = arith.constant 0 : i32
    %c0_i32_1 = arith.constant 0 : i32
    return %c0_i32, %c0_i32_0 : i32, i32
  }
  func.func @transform_28(%arg0: i32) -> (i32, i32) {
    %c0_i32 = arith.constant 0 : i32
    %c0_i32_0 = arith.constant 0 : i32
    %c0_i32_1 = arith.constant 0 : i32
    return %c0_i32, %c0_i32_0 : i32, i32
  }
  func.func @transform_29(%arg0: i32) -> (i32, i32) {
    %c0_i32 = arith.constant 0 : i32
    %c0_i32_0 = arith.constant 0 : i32
    %c0_i32_1 = arith.constant 0 : i32
    return %c0_i32, %c0_i32_0 : i32, i32
  }
  func.func @transform_30(%arg0: i32) -> (i32, i32) {
    %c0_i32 = arith.constant 0 : i32
    %c0_i32_0 = arith.constant 0 : i32
    %c0_i32_1 = arith.constant 0 : i32
    return %c0_i32, %c0_i32_0 : i32, i32
  }
  func.func @transform_31(%arg0: i32) -> (i32, i32) {
    %c0_i32 = arith.constant 0 : i32
    %c0_i32_0 = arith.constant 0 : i32
    %c0_i32_1 = arith.constant 0 : i32
    return %c0_i32, %c0_i32_0 : i32, i32
  }
  func.func @transform_32(%arg0: i32) -> (i32, i32) {
    %c0_i32 = arith.constant 0 : i32
    %c0_i32_0 = arith.constant 0 : i32
    %c0_i32_1 = arith.constant 0 : i32
    return %c0_i32, %c0_i32_0 : i32, i32
  }
  func.func @transform_33(%arg0: i32) -> (i32, i32, i32) {
    %c0_i32 = arith.constant 0 : i32
    %c0_i32_0 = arith.constant 0 : i32
    %c0_i32_1 = arith.constant 0 : i32
    %c0_i32_2 = arith.constant 0 : i32
    return %c0_i32, %c0_i32_0, %c0_i32_1 : i32, i32, i32
  }
  func.func @transform_34(%arg0: i32) -> (i32, i32, i32) {
    %c0_i32 = arith.constant 0 : i32
    %c0_i32_0 = arith.constant 0 : i32
    %c0_i32_1 = arith.constant 0 : i32
    %c0_i32_2 = arith.constant 0 : i32
    return %c0_i32, %c0_i32_0, %c0_i32_1 : i32, i32, i32
  }
  func.func @transform_35(%arg0: i32) -> (i32, i32, i32) {
    %c0_i32 = arith.constant 0 : i32
    %c0_i32_0 = arith.constant 0 : i32
    %c0_i32_1 = arith.constant 0 : i32
    %c0_i32_2 = arith.constant 0 : i32
    return %c0_i32, %c0_i32_0, %c0_i32_1 : i32, i32, i32
  }
  func.func @transform_36(%arg0: i32) -> (i32, i32, i32) {
    %c0_i32 = arith.constant 0 : i32
    %c0_i32_0 = arith.constant 0 : i32
    %c0_i32_1 = arith.constant 0 : i32
    %c0_i32_2 = arith.constant 0 : i32
    return %c0_i32, %c0_i32_0, %c0_i32_1 : i32, i32, i32
  }
  func.func @transform_37(%arg0: i32) -> (i32, i32) {
    %c0_i32 = arith.constant 0 : i32
    %c0_i32_0 = arith.constant 0 : i32
    %c0_i32_1 = arith.constant 0 : i32
    return %c0_i32, %c0_i32_0 : i32, i32
  }
  func.func @transform_38(%arg0: i32) -> (i32, i32) {
    %c0_i32 = arith.constant 0 : i32
    %c0_i32_0 = arith.constant 0 : i32
    %c0_i32_1 = arith.constant 0 : i32
    return %c0_i32, %c0_i32_0 : i32, i32
  }
  func.func @transform_39(%arg0: i32) -> (i32, i32) {
    %c0_i32 = arith.constant 0 : i32
    %c0_i32_0 = arith.constant 0 : i32
    %c0_i32_1 = arith.constant 0 : i32
    return %c0_i32, %c0_i32_0 : i32, i32
  }
  func.func @transform_40(%arg0: i32) -> (i32, i32) {
    %c0_i32 = arith.constant 0 : i32
    %c0_i32_0 = arith.constant 0 : i32
    %c0_i32_1 = arith.constant 0 : i32
    return %c0_i32, %c0_i32_0 : i32, i32
  }
  func.func @transform_41(%arg0: i32) -> (i32, i32) {
    %c0_i32 = arith.constant 0 : i32
    %c0_i32_0 = arith.constant 0 : i32
    %c0_i32_1 = arith.constant 0 : i32
    return %c0_i32, %c0_i32_0 : i32, i32
  }
  func.func @transform_42(%arg0: i32) -> (i32, i32) {
    %c0_i32 = arith.constant 0 : i32
    %c0_i32_0 = arith.constant 0 : i32
    %c0_i32_1 = arith.constant 0 : i32
    return %c0_i32, %c0_i32_0 : i32, i32
  }
  func.func @transform_43(%arg0: i32) -> (i32, i32) {
    %c0_i32 = arith.constant 0 : i32
    %c0_i32_0 = arith.constant 0 : i32
    %c0_i32_1 = arith.constant 0 : i32
    return %c0_i32, %c0_i32_0 : i32, i32
  }
  func.func @transform_44(%arg0: i32) -> (i32, i32) {
    %c0_i32 = arith.constant 0 : i32
    %c0_i32_0 = arith.constant 0 : i32
    %c0_i32_1 = arith.constant 0 : i32
    return %c0_i32, %c0_i32_0 : i32, i32
  }
  func.func @transform_45(%arg0: i32) -> (i32, i32) {
    %c0_i32 = arith.constant 0 : i32
    %c0_i32_0 = arith.constant 0 : i32
    %c0_i32_1 = arith.constant 0 : i32
    return %c0_i32, %c0_i32_0 : i32, i32
  }
  func.func @transform_46(%arg0: i32) -> (i32, i32) {
    %c0_i32 = arith.constant 0 : i32
    %c0_i32_0 = arith.constant 0 : i32
    %c0_i32_1 = arith.constant 0 : i32
    return %c0_i32, %c0_i32_0 : i32, i32
  }
  func.func @transform_47(%arg0: i32) -> (i32, i32) {
    %c0_i32 = arith.constant 0 : i32
    %c0_i32_0 = arith.constant 0 : i32
    %c0_i32_1 = arith.constant 0 : i32
    return %c0_i32, %c0_i32_0 : i32, i32
  }
  func.func @transform_48(%arg0: i32) -> (i32, i32) {
    %c0_i32 = arith.constant 0 : i32
    %c0_i32_0 = arith.constant 0 : i32
    %c0_i32_1 = arith.constant 0 : i32
    return %c0_i32, %c0_i32_0 : i32, i32
  }
  func.func @transform_49(%arg0: i32) -> (i32, i32) {
    %c0_i32 = arith.constant 0 : i32
    %c0_i32_0 = arith.constant 0 : i32
    %c0_i32_1 = arith.constant 0 : i32
    return %c0_i32, %c0_i32_0 : i32, i32
  }
  func.func @transform_50(%arg0: i32) -> (i32, i32) {
    %c0_i32 = arith.constant 0 : i32
    %c0_i32_0 = arith.constant 0 : i32
    %c0_i32_1 = arith.constant 0 : i32
    return %c0_i32, %c0_i32_0 : i32, i32
  }
  func.func @transform_51(%arg0: i32) -> (i32, i32) {
    %c0_i32 = arith.constant 0 : i32
    %c0_i32_0 = arith.constant 0 : i32
    %c0_i32_1 = arith.constant 0 : i32
    return %c0_i32, %c0_i32_0 : i32, i32
  }
  func.func @transform_52(%arg0: i32) -> (i32, i32) {
    %c0_i32 = arith.constant 0 : i32
    %c0_i32_0 = arith.constant 0 : i32
    %c0_i32_1 = arith.constant 0 : i32
    return %c0_i32, %c0_i32_0 : i32, i32
  }
  func.func @transform_53(%arg0: i32) -> (i32, i32) {
    %c0_i32 = arith.constant 0 : i32
    %c0_i32_0 = arith.constant 0 : i32
    %c0_i32_1 = arith.constant 0 : i32
    return %c0_i32, %c0_i32_0 : i32, i32
  }
  func.func @transform_54(%arg0: i32) -> (i32, i32) {
    %c0_i32 = arith.constant 0 : i32
    %c0_i32_0 = arith.constant 0 : i32
    %c0_i32_1 = arith.constant 0 : i32
    return %c0_i32, %c0_i32_0 : i32, i32
  }
  func.func @transform_55(%arg0: i32) -> (i32, i32) {
    %c0_i32 = arith.constant 0 : i32
    %c0_i32_0 = arith.constant 0 : i32
    %c0_i32_1 = arith.constant 0 : i32
    return %c0_i32, %c0_i32_0 : i32, i32
  }
  func.func @transform_56(%arg0: i32) -> (i32, i32) {
    %c0_i32 = arith.constant 0 : i32
    %c0_i32_0 = arith.constant 0 : i32
    %c0_i32_1 = arith.constant 0 : i32
    return %c0_i32, %c0_i32_0 : i32, i32
  }
  func.func @transform_57(%arg0: i32) -> (i32, i32, i32) {
    %c0_i32 = arith.constant 0 : i32
    %c0_i32_0 = arith.constant 0 : i32
    %c0_i32_1 = arith.constant 0 : i32
    return %arg0, %c0_i32, %c0_i32_0 : i32, i32, i32
  }
}

</mosaic_0001>

<llo_original>
// kernel: tpu_custom_call.1
$region0: #{tpu_custom_call.1}
  #allocation0 [shape = 'u32[]', space=smem, size = 0x4, offset = 0x4, fixed_abs, tag = 'smem constant byte address 0x4 - core index']
  #allocation1 [shape = 'u32[72,128]{1,0:T(1,128)}', space=vmem, size = 0x9000, scoped, tag = 'internal scratch']
  #allocation2 [shape = 'f32[24,16]{1,0:T(8,128)}', space=vmem, size = 0x3000, scoped, tag = 'scratch operand']
  #allocation3 [shape = 'bf16[16,80]{1,0:T(8,128)(2,1)}', space=vmem, size = 0x1000, scoped, tag = 'scratch operand']
  #allocation4 [shape = 'f32[16,32]{1,0:T(8,128)}', space=vmem, size = 0x2000, scoped, tag = 'scratch operand']
  #allocation5 [shape = 'bf16[16,32]{1,0:T(8,128)(2,1)}', space=vmem, size = 0x1000, scoped, tag = 'scratch operand']
  #allocation6 [shape = 'bf16[16,96]{1,0:T(8,128)(2,1)}', space=vmem, size = 0x1000, scoped, tag = 'scratch operand']
  %s0 = inlined_call_operand.smem [shape: u32[58], index: -1, kind: input, shape index: {}]
  %s1 = sld [smem:[%s0]]
  %s2 = scalar_lea.smem %s0, 1
  %s3 = sld [smem:[%s2]]
  %s4 = scalar_lea.smem %s0, 2
  %s5 = sld [smem:[%s4]]
  %s6 = scalar_lea.smem %s0, 3
  %s7 = sld [smem:[%s6]]
  %s8 = scalar_lea.smem %s0, 4
  %s9 = sld [smem:[%s8]]
  %s10 = scalar_lea.smem %s0, 5
  %s11 = sld [smem:[%s10]]
  %s12 = scalar_lea.smem %s0, 6
  %s13 = sld [smem:[%s12]]
  %s14 = scalar_lea.smem %s0, 7
  %s15 = sld [smem:[%s14]]
  %s16 = scalar_lea.smem %s0, 8
  %s17 = sld [smem:[%s16]]
  %s18 = scalar_lea.smem %s0, 9
  %s19 = sld [smem:[%s18]]
  %s20 = scalar_lea.smem %s0, 10
  %s21 = sld [smem:[%s20]]
  %s22 = scalar_lea.smem %s0, 11
  %s23 = sld [smem:[%s22]]
  %s24 = scalar_lea.smem %s0, 12
  %s25 = sld [smem:[%s24]]
  %s26 = scalar_lea.smem %s0, 13
  %s27 = sld [smem:[%s26]]
  %s28 = scalar_lea.smem %s0, 14
  %s29 = sld [smem:[%s28]]
  %s30 = scalar_lea.smem %s0, 15
  %s31 = sld [smem:[%s30]]
  %s32 = scalar_lea.smem %s0, 16
  %s33 = sld [smem:[%s32]]
  %s34 = scalar_lea.smem %s0, 17
  %s35 = sld [smem:[%s34]]
  %s36 = scalar_lea.smem %s0, 18
  %s37 = sld [smem:[%s36]]
  %s38 = scalar_lea.smem %s0, 19
  %s39 = sld [smem:[%s38]]
  %s40 = scalar_lea.smem %s0, 20
  %s41 = sld [smem:[%s40]]
  %s42 = scalar_lea.smem %s0, 21
  %s43 = sld [smem:[%s42]]
  %s44 = scalar_lea.smem %s0, 22
  %s45 = sld [smem:[%s44]]
  %s46 = scalar_lea.smem %s0, 23
  %s47 = sld [smem:[%s46]]
  %s48 = scalar_lea.smem %s0, 24
  %s49 = sld [smem:[%s48]]
  %s50 = scalar_lea.smem %s0, 25
  %s51 = sld [smem:[%s50]]
  %s52 = scalar_lea.smem %s0, 26
  %s53 = sld [smem:[%s52]]
  %s54 = scalar_lea.smem %s0, 27
  %s55 = sld [smem:[%s54]]
  %s56 = scalar_lea.smem %s0, 28
  %s57 = sld [smem:[%s56]]
  %s58 = scalar_lea.smem %s0, 29
  %s59 = sld [smem:[%s58]]
  %s60 = scalar_lea.smem %s0, 30
  %s61 = sld [smem:[%s60]]
  %s62 = scalar_lea.smem %s0, 31
  %s63 = sld [smem:[%s62]]
  %s64 = scalar_lea.smem %s0, 32
  %s65 = sld [smem:[%s64]]
  %s66 = scalar_lea.smem %s0, 33
  %s67 = sld [smem:[%s66]]
  %s68 = scalar_lea.smem %s0, 34
  %s69 = sld [smem:[%s68]]
  %s70 = scalar_lea.smem %s0, 35
  %s71 = sld [smem:[%s70]]
  %s72 = scalar_lea.smem %s0, 36
  %s73 = sld [smem:[%s72]]
  %s74 = scalar_lea.smem %s0, 37
  %s75 = sld [smem:[%s74]]
  %s76 = scalar_lea.smem %s0, 38
  %s77 = sld [smem:[%s76]]
  %s78 = scalar_lea.smem %s0, 39
  %s79 = sld [smem:[%s78]]
  %s80 = scalar_lea.smem %s0, 40
  %s81 = sld [smem:[%s80]]
  %s82 = scalar_lea.smem %s0, 41
  %s83 = sld [smem:[%s82]]
  %s84 = scalar_lea.smem %s0, 42
  %s85 = sld [smem:[%s84]]
  %s86 = scalar_lea.smem %s0, 43
  %s87 = sld [smem:[%s86]]
  %s88 = scalar_lea.smem %s0, 44
  %s89 = sld [smem:[%s88]]
  %s90 = scalar_lea.smem %s0, 45
  %s91 = sld [smem:[%s90]]
  %s92 = scalar_lea.smem %s0, 46
  %s93 = sld [smem:[%s92]]
  %s94 = scalar_lea.smem %s0, 47
  %s95 = sld [smem:[%s94]]
  %s96 = scalar_lea.smem %s0, 48
  %s97 = sld [smem:[%s96]]
  %s98 = scalar_lea.smem %s0, 49
  %s99 = sld [smem:[%s98]]
  %s100 = scalar_lea.smem %s0, 50
  %s101 = sld [smem:[%s100]]
  %s102 = scalar_lea.smem %s0, 51
  %s103 = sld [smem:[%s102]]
  %s104 = scalar_lea.smem %s0, 52
  %s105 = sld [smem:[%s104]]
  %s106 = scalar_lea.smem %s0, 53
  %s107 = sld [smem:[%s106]]
  %s108 = scalar_lea.smem %s0, 54
  %s109 = sld [smem:[%s108]]
  %s110 = scalar_lea.smem %s0, 55
  %s111 = sld [smem:[%s110]]
  %s112 = scalar_lea.smem %s0, 56
  %s113 = sld [smem:[%s112]]
  %s114 = scalar_lea.smem %s0, 57
  %s115 = sld [smem:[%s114]]
  %s116 = sld [smem:[#allocation0]]
  $region277: #{tpu_custom_call.1} parent=0
    _
  %s118 = ssub.s32 1, %s116
  %s119 = scalar_select 0, %s118, %s116
  $region1: #{tpu_custom_call.1} parent=0
    #allocation7 [shape = 'u8[512]{0}', space=vmem, size = 0x400, scoped, tag = 'input window, operand 51, single buffered']
    #allocation8 [shape = 's32[2]{0}', space=sflag, size = 0x8, scoped, tag = 'scoped memory for tpu_custom_call.1']
    #allocation9 [shape = 's32[2]{0}', space=sflag, size = 0x8, scoped, tag = 'scoped memory for tpu_custom_call.1']
    #allocation10 [shape = 'u8[512]{0}', space=vmem, size = 0x400, scoped, tag = 'input window, operand 53, single buffered']
    #allocation11 [shape = 's32[1]{0}', space=sflag, size = 0x4, scoped, tag = 'scoped memory for tpu_custom_call.1']
    #allocation12 [shape = 'u8[512]{0}', space=vmem, size = 0x400, scoped, tag = 'input window, operand 54, single buffered']
    #allocation13 [shape = 'u8[512]{0}', space=vmem, size = 0x400, scoped, tag = 'input window, operand 55, single buffered']
    #allocation14 [shape = 's32[1]{0}', space=sflag, size = 0x4, scoped, tag = 'scoped memory for tpu_custom_call.1']
    #allocation15 [shape = 'u8[16384]{0}', space=vmem, size = 0x4000, scoped, tag = 'output window, operand 0']
    %120 = vsyncpa [#allocation8], 0
    %121 = vsyncpa [#allocation11], 0
    %122 = vsyncpa [#allocation14], 0
    %123 = vsyncpa [#allocation9], 0
    %s124 = scalar_lea.sflag [#allocation9], 1
    %125 = vsyncpa %s124, 0
    loop: start=0, step=1, limit=4
    $region2: #{tpu_custom_call.1} parent=1 // loop_pre_header
      _
    $region3: #{tpu_custom_call.1} parent=1 // loop_header
      %s127 = sphi 0, %s131
      %p128 = scmp.ge.s32.totalorder %s127, 4
      %s137 = sphi 0, %s139
      %s140 = sphi 0, %s137
      %s141 = sphi 0, %s140
      %s157 = sphi 0, %s141
      %s161 = sphi 0, %s161
      %s163 = sphi 0, %s161
      %s164 = sphi 0, %s163
      %s178 = sphi 0, %s164
      %s182 = sphi 0, %s182
      %s184 = sphi 0, %s182
      %s185 = sphi 0, %s184
      %s199 = sphi 0, %s185
      %s203 = sphi 0, %s203
      %s205 = sphi 0, %s203
      %s206 = sphi 0, %s205
      %s220 = sphi 0, %s206
      %s224 = sphi 0, %s224
      %s226 = sphi 0, %s224
      %s227 = sphi 0, %s226
      %s241 = sphi 0, %s227
      %s245 = sphi 0, %s245
      %s247 = sphi 0, %s245
      %s248 = sphi 0, %s247
      %s262 = sphi 0, %s248
      %s266 = sphi 0, %s266
      %s268 = sphi 0, %s266
      %s269 = sphi 0, %s268
      %s283 = sphi 0, %s269
      %s287 = sphi 0, %s287
      %s289 = sphi 0, %s287
      %s290 = sphi 0, %s289
      %s304 = sphi 0, %s290
      %s308 = sphi 0, %s308
      %s310 = sphi 0, %s308
      %s311 = sphi 0, %s310
      %s325 = sphi 0, %s311
      %s329 = sphi 0, %s329
      %s331 = sphi 0, %s329
      %s332 = sphi 0, %s331
      %s346 = sphi 0, %s332
      %s350 = sphi 0, %s350
      %s352 = sphi 0, %s350
      %s353 = sphi 0, %s352
      %s367 = sphi 0, %s353
      %s371 = sphi 0, %s371
      %s373 = sphi 0, %s371
      %s374 = sphi 0, %s373
      %s388 = sphi 0, %s374
      %s392 = sphi 0, %s392
      %s394 = sphi 0, %s392
      %s395 = sphi 0, %s394
      %s409 = sphi 0, %s395
      %s413 = sphi 0, %s413
      %s415 = sphi 0, %s413
      %s416 = sphi 0, %s415
      %s430 = sphi 0, %s416
      %s434 = sphi 0, %s434
      %s436 = sphi 0, %s434
      %s437 = sphi 0, %s436
      %s451 = sphi 0, %s437
      %s455 = sphi 0, %s455
      %s457 = sphi 0, %s455
      %s458 = sphi 0, %s457
      %s472 = sphi 0, %s458
      %s476 = sphi 0, %s476
      %s478 = sphi 0, %s476
      %s479 = sphi 0, %s478
      %s493 = sphi 0, %s479
      %s497 = sphi 0, %s497
      %s499 = sphi 0, %s497
      %s500 = sphi 0, %s499
      %s514 = sphi 0, %s500
      %s518 = sphi 0, %s518
      %s520 = sphi 0, %s518
      %s521 = sphi 0, %s520
      %s535 = sphi 0, %s521
      %s539 = sphi 0, %s539
      %s541 = sphi 0, %s539
      %s542 = sphi 0, %s541
      %s556 = sphi 0, %s542
      %s560 = sphi 0, %s560
      %s562 = sphi 0, %s560
      %s563 = sphi 0, %s562
      %s577 = sphi 0, %s563
      %s581 = sphi 0, %s581
      %s583 = sphi 0, %s581
      %s584 = sphi 0, %s583
      %s598 = sphi 0, %s584
      %s602 = sphi 0, %s602
      %s604 = sphi 0, %s602
      %s605 = sphi 0, %s604
      %s619 = sphi 0, %s605
      %s623 = sphi 0, %s623
      %s625 = sphi 0, %s623
      %s626 = sphi 0, %s625
      %s640 = sphi 0, %s626
      %s644 = sphi 0, %s644
      %s646 = sphi 0, %s644
      %s647 = sphi 0, %s646
      %s661 = sphi 0, %s647
      %s665 = sphi 0, %s665
      %s667 = sphi 0, %s665
      %s668 = sphi 0, %s667
      %s682 = sphi 0, %s668
      %s686 = sphi 0, %s686
      %s688 = sphi 0, %s686
      %s689 = sphi 0, %s688
      %s703 = sphi 0, %s689
      %s707 = sphi 0, %s707
      %s709 = sphi 0, %s707
      %s710 = sphi 0, %s709
      %s724 = sphi 0, %s710
      %s728 = sphi 0, %s728
      %s730 = sphi 0, %s728
      %s731 = sphi 0, %s730
      %s745 = sphi 0, %s731
      %s749 = sphi 0, %s749
      %s751 = sphi 0, %s749
      %s752 = sphi 0, %s751
      %s766 = sphi 0, %s752
      %s770 = sphi 0, %s770
      %s772 = sphi 0, %s770
      %s773 = sphi 0, %s772
      %s787 = sphi 0, %s773
      %s791 = sphi 0, %s791
      %s793 = sphi 0, %s791
      %s794 = sphi 0, %s793
      %s808 = sphi 0, %s794
      %s812 = sphi 0, %s812
      %s814 = sphi 0, %s812
      %s815 = sphi 0, %s814
      %s829 = sphi 0, %s815
      %s833 = sphi 0, %s833
      %s835 = sphi 0, %s833
      %s836 = sphi 0, %s835
      %s850 = sphi 0, %s836
      %s854 = sphi 0, %s854
      %s856 = sphi 0, %s854
      %s857 = sphi 0, %s856
      %s871 = sphi 0, %s857
      %s875 = sphi 0, %s875
      %s877 = sphi 0, %s875
      %s878 = sphi 0, %s877
      %s892 = sphi 0, %s878
      %s896 = sphi 0, %s896
      %s898 = sphi 0, %s896
      %s899 = sphi 0, %s898
      %s913 = sphi 0, %s899
      %s917 = sphi 0, %s917
      %s919 = sphi 0, %s917
      %s920 = sphi 0, %s919
      %s934 = sphi 0, %s920
      %s938 = sphi 0, %s938
      %s940 = sphi 0, %s938
      %s941 = sphi 0, %s940
      %s955 = sphi 0, %s941
      %s959 = sphi 0, %s959
      %s961 = sphi 0, %s959
      %s962 = sphi 0, %s961
      %s976 = sphi 0, %s962
      %s980 = sphi 0, %s980
      %s982 = sphi 0, %s980
      %s983 = sphi 0, %s982
      %s997 = sphi 0, %s983
      %s1001 = sphi 0, %s1001
      %s1003 = sphi 0, %s1001
      %s1004 = sphi 0, %s1003
      %s1018 = sphi 0, %s1004
      %s1022 = sphi 0, %s1022
      %s1024 = sphi 0, %s1022
      %s1025 = sphi 0, %s1024
      %s1039 = sphi 0, %s1025
      %s1043 = sphi 0, %s1043
      %s1045 = sphi 0, %s1043
      %s1046 = sphi 0, %s1045
      %s1060 = sphi 0, %s1046
      %s1064 = sphi 0, %s1064
      %s1066 = sphi 0, %s1064
      %s1067 = sphi 0, %s1066
      %s1081 = sphi 0, %s1067
      %s1085 = sphi 0, %s1085
      %s1087 = sphi 0, %s1085
      %s1088 = sphi 0, %s1087
      %s1102 = sphi 0, %s1088
      %s1106 = sphi 0, %s1106
      %s1108 = sphi 0, %s1106
      %s1109 = sphi 0, %s1108
      %s1123 = sphi 0, %s1109
      %s1127 = sphi 0, %s1127
      %s1129 = sphi 0, %s1127
      %s1130 = sphi 0, %s1129
      %s1144 = sphi 0, %s1130
      %s1148 = sphi 0, %s1148
      %s1150 = sphi 0, %s1148
      %s1151 = sphi 0, %s1150
      %s1165 = sphi 0, %s1151
      %s1169 = sphi 0, %s1169
      %s1171 = sphi 0, %s1169
      %s1172 = sphi 0, %s1171
      %s1186 = sphi 0, %s1172
      %s1190 = sphi 0, %s1190
      %s1192 = sphi 0, %s1190
      %s1193 = sphi 0, %s1192
      %s1207 = sphi 0, %s1193
      %s1211 = sphi 0, %s1211
      %s1213 = sphi 0, %s1211
      %s1214 = sphi 0, %s1213
      %s1228 = sphi 0, %s1214
      %s1232 = sphi 0, %s1232
      %s1234 = sphi 0, %s1232
      %s1235 = sphi 0, %s1234
      %s1249 = sphi 0, %s1235
      %s1253 = sphi 0, %s1253
      %s1255 = sphi 0, %s1253
      %s1256 = sphi 0, %s1255
      %s1270 = sphi 0, %s1256
      %s1274 = sphi 0, %s1274
      %s1276 = sphi 0, %s1274
      %s1277 = sphi 0, %s1276
      %s1291 = sphi 0, %s1277
      %s1295 = sphi 0, %s1295
      %s1297 = sphi 0, %s1295
      %s1298 = sphi 0, %s1297
      %s1312 = sphi 0, %s1298
      %s1316 = sphi 0, %s1316
      %s1318 = sphi 0, %s1316
      %s1319 = sphi 0, %s1318
      %s1333 = sphi 0, %s1319
      %s1339 = sphi 0, %s1341
      %s1342 = sphi 0, %s1339
      %s1343 = sphi 0, %s1342
      %s1359 = sphi 0, %s1343
    $region4: #{tpu_custom_call.1} parent=1 // loop_header_branch
      %130 = sbr.rel (%p128) target = $region8
    $region5: #{tpu_custom_call.1} parent=1 // loop_body
      %s132 = ssub.s32 %s127, 1
      %s133 = ssub.s32 %s127, 2
      %s134 = sadd.s32 %s127, 1
      %s135 = ssub.s32 %s127, %s134
      %p136 = scmp.eq.s32.totalorder %s135, 0
      %s138 = sadd.s32 %s137, 1
      %s139 = scalar_select %p136, %s137, %s138
      %p142 = pneg %p136
      %p143 = scmp.eq.s32.totalorder %s127, 1
      %p144 = por %p142, %p143
      %p145 = scmp.ne.s32.totalorder %s137, %s140
      %p146 = scmp.eq.s32.totalorder %s127, 0
      %p147 = por %p145, %p146
      %p148 = scmp.ne.s32.totalorder %s137, %s140
      %p149 = scmp.eq.s32.totalorder %s132, 1
      %p150 = por %p148, %p149
      %p151 = scmp.ne.s32.totalorder %s140, %s141
      %p152 = scmp.eq.s32.totalorder %s132, 0
      %p153 = por %p151, %p152
      %p154 = scmp.ne.s32.totalorder %s140, %s141
      %p155 = scmp.eq.s32.totalorder %s133, 1
      %p156 = por %p154, %p155
      %p158 = scmp.ne.s32.totalorder %s141, %s157
      %p159 = scmp.eq.s32.totalorder %s133, 0
      %p160 = por %p158, %p159
      %s162 = sadd.s32 %s161, 1
      %p165 = scmp.eq.s32.totalorder %s127, 1
      %p166 = scmp.ne.s32.totalorder %s161, %s163
      %p167 = scmp.eq.s32.totalorder %s127, 0
      %p168 = por %p166, %p167
      %p169 = scmp.ne.s32.totalorder %s161, %s163
      %p170 = scmp.eq.s32.totalorder %s132, 1
      %p171 = por %p169, %p170
      %p172 = scmp.ne.s32.totalorder %s163, %s164
      %p173 = scmp.eq.s32.totalorder %s132, 0
      %p174 = por %p172, %p173
      %p175 = scmp.ne.s32.totalorder %s163, %s164
      %p176 = scmp.eq.s32.totalorder %s133, 1
      %p177 = por %p175, %p176
      %p179 = scmp.ne.s32.totalorder %s164, %s178
      %p180 = scmp.eq.s32.totalorder %s133, 0
      %p181 = por %p179, %p180
      %s183 = sadd.s32 %s182, 1
      %p186 = scmp.eq.s32.totalorder %s127, 1
      %p187 = scmp.ne.s32.totalorder %s182, %s184
      %p188 = scmp.eq.s32.totalorder %s127, 0
      %p189 = por %p187, %p188
      %p190 = scmp.ne.s32.totalorder %s182, %s184
      %p191 = scmp.eq.s32.totalorder %s132, 1
      %p192 = por %p190, %p191
      %p193 = scmp.ne.s32.totalorder %s184, %s185
      %p194 = scmp.eq.s32.totalorder %s132, 0
      %p195 = por %p193, %p194
      %p196 = scmp.ne.s32.totalorder %s184, %s185
      %p197 = scmp.eq.s32.totalorder %s133, 1
      %p198 = por %p196, %p197
      %p200 = scmp.ne.s32.totalorder %s185, %s199
      %p201 = scmp.eq.s32.totalorder %s133, 0
      %p202 = por %p200, %p201
      %s204 = sadd.s32 %s203, 1
      %p207 = scmp.eq.s32.totalorder %s127, 1
      %p208 = scmp.ne.s32.totalorder %s203, %s205
      %p209 = scmp.eq.s32.totalorder %s127, 0
      %p210 = por %p208, %p209
      %p211 = scmp.ne.s32.totalorder %s203, %s205
      %p212 = scmp.eq.s32.totalorder %s132, 1
      %p213 = por %p211, %p212
      %p214 = scmp.ne.s32.totalorder %s205, %s206
      %p215 = scmp.eq.s32.totalorder %s132, 0
      %p216 = por %p214, %p215
      %p217 = scmp.ne.s32.totalorder %s205, %s206
      %p218 = scmp.eq.s32.totalorder %s133, 1
      %p219 = por %p217, %p218
      %p221 = scmp.ne.s32.totalorder %s206, %s220
      %p222 = scmp.eq.s32.totalorder %s133, 0
      %p223 = por %p221, %p222
      %s225 = sadd.s32 %s224, 1
      %p228 = scmp.eq.s32.totalorder %s127, 1
      %p229 = scmp.ne.s32.totalorder %s224, %s226
      %p230 = scmp.eq.s32.totalorder %s127, 0
      %p231 = por %p229, %p230
      %p232 = scmp.ne.s32.totalorder %s224, %s226
      %p233 = scmp.eq.s32.totalorder %s132, 1
      %p234 = por %p232, %p233
      %p235 = scmp.ne.s32.totalorder %s226, %s227
      %p236 = scmp.eq.s32.totalorder %s132, 0
      %p237 = por %p235, %p236
      %p238 = scmp.ne.s32.totalorder %s226, %s227
      %p239 = scmp.eq.s32.totalorder %s133, 1
      %p240 = por %p238, %p239
      %p242 = scmp.ne.s32.totalorder %s227, %s241
      %p243 = scmp.eq.s32.totalorder %s133, 0
      %p244 = por %p242, %p243
      %s246 = sadd.s32 %s245, 1
      %p249 = scmp.eq.s32.totalorder %s127, 1
      %p250 = scmp.ne.s32.totalorder %s245, %s247
      %p251 = scmp.eq.s32.totalorder %s127, 0
      %p252 = por %p250, %p251
      %p253 = scmp.ne.s32.totalorder %s245, %s247
      %p254 = scmp.eq.s32.totalorder %s132, 1
      %p255 = por %p253, %p254
      %p256 = scmp.ne.s32.totalorder %s247, %s248
      %p257 = scmp.eq.s32.totalorder %s132, 0
      %p258 = por %p256, %p257
      %p259 = scmp.ne.s32.totalorder %s247, %s248
      %p260 = scmp.eq.s32.totalorder %s133, 1
      %p261 = por %p259, %p260
      %p263 = scmp.ne.s32.totalorder %s248, %s262
      %p264 = scmp.eq.s32.totalorder %s133, 0
      %p265 = por %p263, %p264
      %s267 = sadd.s32 %s266, 1
      %p270 = scmp.eq.s32.totalorder %s127, 1
      %p271 = scmp.ne.s32.totalorder %s266, %s268
      %p272 = scmp.eq.s32.totalorder %s127, 0
      %p273 = por %p271, %p272
      %p274 = scmp.ne.s32.totalorder %s266, %s268
      %p275 = scmp.eq.s32.totalorder %s132, 1
      %p276 = por %p274, %p275
      %p277 = scmp.ne.s32.totalorder %s268, %s269
      %p278 = scmp.eq.s32.totalorder %s132, 0
      %p279 = por %p277, %p278
      %p280 = scmp.ne.s32.totalorder %s268, %s269
      %p281 = scmp.eq.s32.totalorder %s133, 1
      %p282 = por %p280, %p281
      %p284 = scmp.ne.s32.totalorder %s269, %s283
      %p285 = scmp.eq.s32.totalorder %s133, 0
      %p286 = por %p284, %p285
      %s288 = sadd.s32 %s287, 1
      %p291 = scmp.eq.s32.totalorder %s127, 1
      %p292 = scmp.ne.s32.totalorder %s287, %s289
      %p293 = scmp.eq.s32.totalorder %s127, 0
      %p294 = por %p292, %p293
      %p295 = scmp.ne.s32.totalorder %s287, %s289
      %p296 = scmp.eq.s32.totalorder %s132, 1
      %p297 = por %p295, %p296
      %p298 = scmp.ne.s32.totalorder %s289, %s290
      %p299 = scmp.eq.s32.totalorder %s132, 0
      %p300 = por %p298, %p299
      %p301 = scmp.ne.s32.totalorder %s289, %s290
      %p302 = scmp.eq.s32.totalorder %s133, 1
      %p303 = por %p301, %p302
      %p305 = scmp.ne.s32.totalorder %s290, %s304
      %p306 = scmp.eq.s32.totalorder %s133, 0
      %p307 = por %p305, %p306
      %s309 = sadd.s32 %s308, 1
      %p312 = scmp.eq.s32.totalorder %s127, 1
      %p313 = scmp.ne.s32.totalorder %s308, %s310
      %p314 = scmp.eq.s32.totalorder %s127, 0
      %p315 = por %p313, %p314
      %p316 = scmp.ne.s32.totalorder %s308, %s310
      %p317 = scmp.eq.s32.totalorder %s132, 1
      %p318 = por %p316, %p317
      %p319 = scmp.ne.s32.totalorder %s310, %s311
      %p320 = scmp.eq.s32.totalorder %s132, 0
      %p321 = por %p319, %p320
      %p322 = scmp.ne.s32.totalorder %s310, %s311
      %p323 = scmp.eq.s32.totalorder %s133, 1
      %p324 = por %p322, %p323
      %p326 = scmp.ne.s32.totalorder %s311, %s325
      %p327 = scmp.eq.s32.totalorder %s133, 0
      %p328 = por %p326, %p327
      %s330 = sadd.s32 %s329, 1
      %p333 = scmp.eq.s32.totalorder %s127, 1
      %p334 = scmp.ne.s32.totalorder %s329, %s331
      %p335 = scmp.eq.s32.totalorder %s127, 0
      %p336 = por %p334, %p335
      %p337 = scmp.ne.s32.totalorder %s329, %s331
      %p338 = scmp.eq.s32.totalorder %s132, 1
      %p339 = por %p337, %p338
      %p340 = scmp.ne.s32.totalorder %s331, %s332
      %p341 = scmp.eq.s32.totalorder %s132, 0
      %p342 = por %p340, %p341
      %p343 = scmp.ne.s32.totalorder %s331, %s332
      %p344 = scmp.eq.s32.totalorder %s133, 1
      %p345 = por %p343, %p344
      %p347 = scmp.ne.s32.totalorder %s332, %s346
      %p348 = scmp.eq.s32.totalorder %s133, 0
      %p349 = por %p347, %p348
      %s351 = sadd.s32 %s350, 1
      %p354 = scmp.eq.s32.totalorder %s127, 1
      %p355 = scmp.ne.s32.totalorder %s350, %s352
      %p356 = scmp.eq.s32.totalorder %s127, 0
      %p357 = por %p355, %p356
      %p358 = scmp.ne.s32.totalorder %s350, %s352
      %p359 = scmp.eq.s32.totalorder %s132, 1
      %p360 = por %p358, %p359
      %p361 = scmp.ne.s32.totalorder %s352, %s353
      %p362 = scmp.eq.s32.totalorder %s132, 0
      %p363 = por %p361, %p362
      %p364 = scmp.ne.s32.totalorder %s352, %s353
      %p365 = scmp.eq.s32.totalorder %s133, 1
      %p366 = por %p364, %p365
      %p368 = scmp.ne.s32.totalorder %s353, %s367
      %p369 = scmp.eq.s32.totalorder %s133, 0
      %p370 = por %p368, %p369
      %s372 = sadd.s32 %s371, 1
      %p375 = scmp.eq.s32.totalorder %s127, 1
      %p376 = scmp.ne.s32.totalorder %s371, %s373
      %p377 = scmp.eq.s32.totalorder %s127, 0
      %p378 = por %p376, %p377
      %p379 = scmp.ne.s32.totalorder %s371, %s373
      %p380 = scmp.eq.s32.totalorder %s132, 1
      %p381 = por %p379, %p380
      %p382 = scmp.ne.s32.totalorder %s373, %s374
      %p383 = scmp.eq.s32.totalorder %s132, 0
      %p384 = por %p382, %p383
      %p385 = scmp.ne.s32.totalorder %s373, %s374
      %p386 = scmp.eq.s32.totalorder %s133, 1
      %p387 = por %p385, %p386
      %p389 = scmp.ne.s32.totalorder %s374, %s388
      %p390 = scmp.eq.s32.totalorder %s133, 0
      %p391 = por %p389, %p390
      %s393 = sadd.s32 %s392, 1
      %p396 = scmp.eq.s32.totalorder %s127, 1
      %p397 = scmp.ne.s32.totalorder %s392, %s394
      %p398 = scmp.eq.s32.totalorder %s127, 0
      %p399 = por %p397, %p398
      %p400 = scmp.ne.s32.totalorder %s392, %s394
      %p401 = scmp.eq.s32.totalorder %s132, 1
      %p402 = por %p400, %p401
      %p403 = scmp.ne.s32.totalorder %s394, %s395
      %p404 = scmp.eq.s32.totalorder %s132, 0
      %p405 = por %p403, %p404
      %p406 = scmp.ne.s32.totalorder %s394, %s395
      %p407 = scmp.eq.s32.totalorder %s133, 1
      %p408 = por %p406, %p407
      %p410 = scmp.ne.s32.totalorder %s395, %s409
      %p411 = scmp.eq.s32.totalorder %s133, 0
      %p412 = por %p410, %p411
      %s414 = sadd.s32 %s413, 1
      %p417 = scmp.eq.s32.totalorder %s127, 1
      %p418 = scmp.ne.s32.totalorder %s413, %s415
      %p419 = scmp.eq.s32.totalorder %s127, 0
      %p420 = por %p418, %p419
      %p421 = scmp.ne.s32.totalorder %s413, %s415
      %p422 = scmp.eq.s32.totalorder %s132, 1
      %p423 = por %p421, %p422
      %p424 = scmp.ne.s32.totalorder %s415, %s416
      %p425 = scmp.eq.s32.totalorder %s132, 0
      %p426 = por %p424, %p425
      %p427 = scmp.ne.s32.totalorder %s415, %s416
      %p428 = scmp.eq.s32.totalorder %s133, 1
      %p429 = por %p427, %p428
      %p431 = scmp.ne.s32.totalorder %s416, %s430
      %p432 = scmp.eq.s32.totalorder %s133, 0
      %p433 = por %p431, %p432
      %s435 = sadd.s32 %s434, 1
      %p438 = scmp.eq.s32.totalorder %s127, 1
      %p439 = scmp.ne.s32.totalorder %s434, %s436
      %p440 = scmp.eq.s32.totalorder %s127, 0
      %p441 = por %p439, %p440
      %p442 = scmp.ne.s32.totalorder %s434, %s436
      %p443 = scmp.eq.s32.totalorder %s132, 1
      %p444 = por %p442, %p443
      %p445 = scmp.ne.s32.totalorder %s436, %s437
      %p446 = scmp.eq.s32.totalorder %s132, 0
      %p447 = por %p445, %p446
      %p448 = scmp.ne.s32.totalorder %s436, %s437
      %p449 = scmp.eq.s32.totalorder %s133, 1
      %p450 = por %p448, %p449
      %p452 = scmp.ne.s32.totalorder %s437, %s451
      %p453 = scmp.eq.s32.totalorder %s133, 0
      %p454 = por %p452, %p453
      %s456 = sadd.s32 %s455, 1
      %p459 = scmp.eq.s32.totalorder %s127, 1
      %p460 = scmp.ne.s32.totalorder %s455, %s457
      %p461 = scmp.eq.s32.totalorder %s127, 0
      %p462 = por %p460, %p461
      %p463 = scmp.ne.s32.totalorder %s455, %s457
      %p464 = scmp.eq.s32.totalorder %s132, 1
      %p465 = por %p463, %p464
      %p466 = scmp.ne.s32.totalorder %s457, %s458
      %p467 = scmp.eq.s32.totalorder %s132, 0
      %p468 = por %p466, %p467
      %p469 = scmp.ne.s32.totalorder %s457, %s458
      %p470 = scmp.eq.s32.totalorder %s133, 1
      %p471 = por %p469, %p470
      %p473 = scmp.ne.s32.totalorder %s458, %s472
      %p474 = scmp.eq.s32.totalorder %s133, 0
      %p475 = por %p473, %p474
      %s477 = sadd.s32 %s476, 1
      %p480 = scmp.eq.s32.totalorder %s127, 1
      %p481 = scmp.ne.s32.totalorder %s476, %s478
      %p482 = scmp.eq.s32.totalorder %s127, 0
      %p483 = por %p481, %p482
      %p484 = scmp.ne.s32.totalorder %s476, %s478
      %p485 = scmp.eq.s32.totalorder %s132, 1
      %p486 = por %p484, %p485
      %p487 = scmp.ne.s32.totalorder %s478, %s479
      %p488 = scmp.eq.s32.totalorder %s132, 0
      %p489 = por %p487, %p488
      %p490 = scmp.ne.s32.totalorder %s478, %s479
      %p491 = scmp.eq.s32.totalorder %s133, 1
      %p492 = por %p490, %p491
      %p494 = scmp.ne.s32.totalorder %s479, %s493
      %p495 = scmp.eq.s32.totalorder %s133, 0
      %p496 = por %p494, %p495
      %s498 = sadd.s32 %s497, 1
      %p501 = scmp.eq.s32.totalorder %s127, 1
      %p502 = scmp.ne.s32.totalorder %s497, %s499
      %p503 = scmp.eq.s32.totalorder %s127, 0
      %p504 = por %p502, %p503
      %p505 = scmp.ne.s32.totalorder %s497, %s499
      %p506 = scmp.eq.s32.totalorder %s132, 1
      %p507 = por %p505, %p506
      %p508 = scmp.ne.s32.totalorder %s499, %s500
      %p509 = scmp.eq.s32.totalorder %s132, 0
      %p510 = por %p508, %p509
      %p511 = scmp.ne.s32.totalorder %s499, %s500
      %p512 = scmp.eq.s32.totalorder %s133, 1
      %p513 = por %p511, %p512
      %p515 = scmp.ne.s32.totalorder %s500, %s514
      %p516 = scmp.eq.s32.totalorder %s133, 0
      %p517 = por %p515, %p516
      %s519 = sadd.s32 %s518, 1
      %p522 = scmp.eq.s32.totalorder %s127, 1
      %p523 = scmp.ne.s32.totalorder %s518, %s520
      %p524 = scmp.eq.s32.totalorder %s127, 0
      %p525 = por %p523, %p524
      %p526 = scmp.ne.s32.totalorder %s518, %s520
      %p527 = scmp.eq.s32.totalorder %s132, 1
      %p528 = por %p526, %p527
      %p529 = scmp.ne.s32.totalorder %s520, %s521
      %p530 = scmp.eq.s32.totalorder %s132, 0
      %p531 = por %p529, %p530
      %p532 = scmp.ne.s32.totalorder %s520, %s521
      %p533 = scmp.eq.s32.totalorder %s133, 1
      %p534 = por %p532, %p533
      %p536 = scmp.ne.s32.totalorder %s521, %s535
      %p537 = scmp.eq.s32.totalorder %s133, 0
      %p538 = por %p536, %p537
      %s540 = sadd.s32 %s539, 1
      %p543 = scmp.eq.s32.totalorder %s127, 1
      %p544 = scmp.ne.s32.totalorder %s539, %s541
      %p545 = scmp.eq.s32.totalorder %s127, 0
      %p546 = por %p544, %p545
      %p547 = scmp.ne.s32.totalorder %s539, %s541
      %p548 = scmp.eq.s32.totalorder %s132, 1
      %p549 = por %p547, %p548
      %p550 = scmp.ne.s32.totalorder %s541, %s542
      %p551 = scmp.eq.s32.totalorder %s132, 0
      %p552 = por %p550, %p551
      %p553 = scmp.ne.s32.totalorder %s541, %s542
      %p554 = scmp.eq.s32.totalorder %s133, 1
      %p555 = por %p553, %p554
      %p557 = scmp.ne.s32.totalorder %s542, %s556
      %p558 = scmp.eq.s32.totalorder %s133, 0
      %p559 = por %p557, %p558
      %s561 = sadd.s32 %s560, 1
      %p564 = scmp.eq.s32.totalorder %s127, 1
      %p565 = scmp.ne.s32.totalorder %s560, %s562
      %p566 = scmp.eq.s32.totalorder %s127, 0
      %p567 = por %p565, %p566
      %p568 = scmp.ne.s32.totalorder %s560, %s562
      %p569 = scmp.eq.s32.totalorder %s132, 1
      %p570 = por %p568, %p569
      %p571 = scmp.ne.s32.totalorder %s562, %s563
      %p572 = scmp.eq.s32.totalorder %s132, 0
      %p573 = por %p571, %p572
      %p574 = scmp.ne.s32.totalorder %s562, %s563
      %p575 = scmp.eq.s32.totalorder %s133, 1
      %p576 = por %p574, %p575
      %p578 = scmp.ne.s32.totalorder %s563, %s577
      %p579 = scmp.eq.s32.totalorder %s133, 0
      %p580 = por %p578, %p579
      %s582 = sadd.s32 %s581, 1
      %p585 = scmp.eq.s32.totalorder %s127, 1
      %p586 = scmp.ne.s32.totalorder %s581, %s583
      %p587 = scmp.eq.s32.totalorder %s127, 0
      %p588 = por %p586, %p587
      %p589 = scmp.ne.s32.totalorder %s581, %s583
      %p590 = scmp.eq.s32.totalorder %s132, 1
      %p591 = por %p589, %p590
      %p592 = scmp.ne.s32.totalorder %s583, %s584
      %p593 = scmp.eq.s32.totalorder %s132, 0
      %p594 = por %p592, %p593
      %p595 = scmp.ne.s32.totalorder %s583, %s584
      %p596 = scmp.eq.s32.totalorder %s133, 1
      %p597 = por %p595, %p596
      %p599 = scmp.ne.s32.totalorder %s584, %s598
      %p600 = scmp.eq.s32.totalorder %s133, 0
      %p601 = por %p599, %p600
      %s603 = sadd.s32 %s602, 1
      %p606 = scmp.eq.s32.totalorder %s127, 1
      %p607 = scmp.ne.s32.totalorder %s602, %s604
      %p608 = scmp.eq.s32.totalorder %s127, 0
      %p609 = por %p607, %p608
      %p610 = scmp.ne.s32.totalorder %s602, %s604
      %p611 = scmp.eq.s32.totalorder %s132, 1
      %p612 = por %p610, %p611
      %p613 = scmp.ne.s32.totalorder %s604, %s605
      %p614 = scmp.eq.s32.totalorder %s132, 0
      %p615 = por %p613, %p614
      %p616 = scmp.ne.s32.totalorder %s604, %s605
      %p617 = scmp.eq.s32.totalorder %s133, 1
      %p618 = por %p616, %p617
      %p620 = scmp.ne.s32.totalorder %s605, %s619
      %p621 = scmp.eq.s32.totalorder %s133, 0
      %p622 = por %p620, %p621
      %s624 = sadd.s32 %s623, 1
      %p627 = scmp.eq.s32.totalorder %s127, 1
      %p628 = scmp.ne.s32.totalorder %s623, %s625
      %p629 = scmp.eq.s32.totalorder %s127, 0
      %p630 = por %p628, %p629
      %p631 = scmp.ne.s32.totalorder %s623, %s625
      %p632 = scmp.eq.s32.totalorder %s132, 1
      %p633 = por %p631, %p632
      %p634 = scmp.ne.s32.totalorder %s625, %s626
      %p635 = scmp.eq.s32.totalorder %s132, 0
      %p636 = por %p634, %p635
      %p637 = scmp.ne.s32.totalorder %s625, %s626
      %p638 = scmp.eq.s32.totalorder %s133, 1
      %p639 = por %p637, %p638
      %p641 = scmp.ne.s32.totalorder %s626, %s640
      %p642 = scmp.eq.s32.totalorder %s133, 0
      %p643 = por %p641, %p642
      %s645 = sadd.s32 %s644, 1
      %p648 = scmp.eq.s32.totalorder %s127, 1
      %p649 = scmp.ne.s32.totalorder %s644, %s646
      %p650 = scmp.eq.s32.totalorder %s127, 0
      %p651 = por %p649, %p650
      %p652 = scmp.ne.s32.totalorder %s644, %s646
      %p653 = scmp.eq.s32.totalorder %s132, 1
      %p654 = por %p652, %p653
      %p655 = scmp.ne.s32.totalorder %s646, %s647
      %p656 = scmp.eq.s32.totalorder %s132, 0
      %p657 = por %p655, %p656
      %p658 = scmp.ne.s32.totalorder %s646, %s647
      %p659 = scmp.eq.s32.totalorder %s133, 1
      %p660 = por %p658, %p659
      %p662 = scmp.ne.s32.totalorder %s647, %s661
      %p663 = scmp.eq.s32.totalorder %s133, 0
      %p664 = por %p662, %p663
      %s666 = sadd.s32 %s665, 1
      %p669 = scmp.eq.s32.totalorder %s127, 1
      %p670 = scmp.ne.s32.totalorder %s665, %s667
      %p671 = scmp.eq.s32.totalorder %s127, 0
      %p672 = por %p670, %p671
      %p673 = scmp.ne.s32.totalorder %s665, %s667
      %p674 = scmp.eq.s32.totalorder %s132, 1
      %p675 = por %p673, %p674
      %p676 = scmp.ne.s32.totalorder %s667, %s668
      %p677 = scmp.eq.s32.totalorder %s132, 0
      %p678 = por %p676, %p677
      %p679 = scmp.ne.s32.totalorder %s667, %s668
      %p680 = scmp.eq.s32.totalorder %s133, 1
      %p681 = por %p679, %p680
      %p683 = scmp.ne.s32.totalorder %s668, %s682
      %p684 = scmp.eq.s32.totalorder %s133, 0
      %p685 = por %p683, %p684
      %s687 = sadd.s32 %s686, 1
      %p690 = scmp.eq.s32.totalorder %s127, 1
      %p691 = scmp.ne.s32.totalorder %s686, %s688
      %p692 = scmp.eq.s32.totalorder %s127, 0
      %p693 = por %p691, %p692
      %p694 = scmp.ne.s32.totalorder %s686, %s688
      %p695 = scmp.eq.s32.totalorder %s132, 1
      %p696 = por %p694, %p695
      %p697 = scmp.ne.s32.totalorder %s688, %s689
      %p698 = scmp.eq.s32.totalorder %s132, 0
      %p699 = por %p697, %p698
      %p700 = scmp.ne.s32.totalorder %s688, %s689
      %p701 = scmp.eq.s32.totalorder %s133, 1
      %p702 = por %p700, %p701
      %p704 = scmp.ne.s32.totalorder %s689, %s703
      %p705 = scmp.eq.s32.totalorder %s133, 0
      %p706 = por %p704, %p705
      %s708 = sadd.s32 %s707, 1
      %p711 = scmp.eq.s32.totalorder %s127, 1
      %p712 = scmp.ne.s32.totalorder %s707, %s709
      %p713 = scmp.eq.s32.totalorder %s127, 0
      %p714 = por %p712, %p713
      %p715 = scmp.ne.s32.totalorder %s707, %s709
      %p716 = scmp.eq.s32.totalorder %s132, 1
      %p717 = por %p715, %p716
      %p718 = scmp.ne.s32.totalorder %s709, %s710
      %p719 = scmp.eq.s32.totalorder %s132, 0
      %p720 = por %p718, %p719
      %p721 = scmp.ne.s32.totalorder %s709, %s710
      %p722 = scmp.eq.s32.totalorder %s133, 1
      %p723 = por %p721, %p722
      %p725 = scmp.ne.s32.totalorder %s710, %s724
      %p726 = scmp.eq.s32.totalorder %s133, 0
      %p727 = por %p725, %p726
      %s729 = sadd.s32 %s728, 1
      %p732 = scmp.eq.s32.totalorder %s127, 1
      %p733 = scmp.ne.s32.totalorder %s728, %s730
      %p734 = scmp.eq.s32.totalorder %s127, 0
      %p735 = por %p733, %p734
      %p736 = scmp.ne.s32.totalorder %s728, %s730
      %p737 = scmp.eq.s32.totalorder %s132, 1
      %p738 = por %p736, %p737
      %p739 = scmp.ne.s32.totalorder %s730, %s731
      %p740 = scmp.eq.s32.totalorder %s132, 0
      %p741 = por %p739, %p740
      %p742 = scmp.ne.s32.totalorder %s730, %s731
      %p743 = scmp.eq.s32.totalorder %s133, 1
      %p744 = por %p742, %p743
      %p746 = scmp.ne.s32.totalorder %s731, %s745
      %p747 = scmp.eq.s32.totalorder %s133, 0
      %p748 = por %p746, %p747
      %s750 = sadd.s32 %s749, 1
      %p753 = scmp.eq.s32.totalorder %s127, 1
      %p754 = scmp.ne.s32.totalorder %s749, %s751
      %p755 = scmp.eq.s32.totalorder %s127, 0
      %p756 = por %p754, %p755
      %p757 = scmp.ne.s32.totalorder %s749, %s751
      %p758 = scmp.eq.s32.totalorder %s132, 1
      %p759 = por %p757, %p758
      %p760 = scmp.ne.s32.totalorder %s751, %s752
      %p761 = scmp.eq.s32.totalorder %s132, 0
      %p762 = por %p760, %p761
      %p763 = scmp.ne.s32.totalorder %s751, %s752
      %p764 = scmp.eq.s32.totalorder %s133, 1
      %p765 = por %p763, %p764
      %p767 = scmp.ne.s32.totalorder %s752, %s766
      %p768 = scmp.eq.s32.totalorder %s133, 0
      %p769 = por %p767, %p768
      %s771 = sadd.s32 %s770, 1
      %p774 = scmp.eq.s32.totalorder %s127, 1
      %p775 = scmp.ne.s32.totalorder %s770, %s772
      %p776 = scmp.eq.s32.totalorder %s127, 0
      %p777 = por %p775, %p776
      %p778 = scmp.ne.s32.totalorder %s770, %s772
      %p779 = scmp.eq.s32.totalorder %s132, 1
      %p780 = por %p778, %p779
      %p781 = scmp.ne.s32.totalorder %s772, %s773
      %p782 = scmp.eq.s32.totalorder %s132, 0
      %p783 = por %p781, %p782
      %p784 = scmp.ne.s32.totalorder %s772, %s773
      %p785 = scmp.eq.s32.totalorder %s133, 1
      %p786 = por %p784, %p785
      %p788 = scmp.ne.s32.totalorder %s773, %s787
      %p789 = scmp.eq.s32.totalorder %s133, 0
      %p790 = por %p788, %p789
      %s792 = sadd.s32 %s791, 1
      %p795 = scmp.eq.s32.totalorder %s127, 1
      %p796 = scmp.ne.s32.totalorder %s791, %s793
      %p797 = scmp.eq.s32.totalorder %s127, 0
      %p798 = por %p796, %p797
      %p799 = scmp.ne.s32.totalorder %s791, %s793
      %p800 = scmp.eq.s32.totalorder %s132, 1
      %p801 = por %p799, %p800
      %p802 = scmp.ne.s32.totalorder %s793, %s794
      %p803 = scmp.eq.s32.totalorder %s132, 0
      %p804 = por %p802, %p803
      %p805 = scmp.ne.s32.totalorder %s793, %s794
      %p806 = scmp.eq.s32.totalorder %s133, 1
      %p807 = por %p805, %p806
      %p809 = scmp.ne.s32.totalorder %s794, %s808
      %p810 = scmp.eq.s32.totalorder %s133, 0
      %p811 = por %p809, %p810
      %s813 = sadd.s32 %s812, 1
      %p816 = scmp.eq.s32.totalorder %s127, 1
      %p817 = scmp.ne.s32.totalorder %s812, %s814
      %p818 = scmp.eq.s32.totalorder %s127, 0
      %p819 = por %p817, %p818
      %p820 = scmp.ne.s32.totalorder %s812, %s814
      %p821 = scmp.eq.s32.totalorder %s132, 1
      %p822 = por %p820, %p821
      %p823 = scmp.ne.s32.totalorder %s814, %s815
      %p824 = scmp.eq.s32.totalorder %s132, 0
      %p825 = por %p823, %p824
      %p826 = scmp.ne.s32.totalorder %s814, %s815
      %p827 = scmp.eq.s32.totalorder %s133, 1
      %p828 = por %p826, %p827
      %p830 = scmp.ne.s32.totalorder %s815, %s829
      %p831 = scmp.eq.s32.totalorder %s133, 0
      %p832 = por %p830, %p831
      %s834 = sadd.s32 %s833, 1
      %p837 = scmp.eq.s32.totalorder %s127, 1
      %p838 = scmp.ne.s32.totalorder %s833, %s835
      %p839 = scmp.eq.s32.totalorder %s127, 0
      %p840 = por %p838, %p839
      %p841 = scmp.ne.s32.totalorder %s833, %s835
      %p842 = scmp.eq.s32.totalorder %s132, 1
      %p843 = por %p841, %p842
      %p844 = scmp.ne.s32.totalorder %s835, %s836
      %p845 = scmp.eq.s32.totalorder %s132, 0
      %p846 = por %p844, %p845
      %p847 = scmp.ne.s32.totalorder %s835, %s836
      %p848 = scmp.eq.s32.totalorder %s133, 1
      %p849 = por %p847, %p848
      %p851 = scmp.ne.s32.totalorder %s836, %s850
      %p852 = scmp.eq.s32.totalorder %s133, 0
      %p853 = por %p851, %p852
      %s855 = sadd.s32 %s854, 1
      %p858 = scmp.eq.s32.totalorder %s127, 1
      %p859 = scmp.ne.s32.totalorder %s854, %s856
      %p860 = scmp.eq.s32.totalorder %s127, 0
      %p861 = por %p859, %p860
      %p862 = scmp.ne.s32.totalorder %s854, %s856
      %p863 = scmp.eq.s32.totalorder %s132, 1
      %p864 = por %p862, %p863
      %p865 = scmp.ne.s32.totalorder %s856, %s857
      %p866 = scmp.eq.s32.totalorder %s132, 0
      %p867 = por %p865, %p866
      %p868 = scmp.ne.s32.totalorder %s856, %s857
      %p869 = scmp.eq.s32.totalorder %s133, 1
      %p870 = por %p868, %p869
      %p872 = scmp.ne.s32.totalorder %s857, %s871
      %p873 = scmp.eq.s32.totalorder %s133, 0
      %p874 = por %p872, %p873
      %s876 = sadd.s32 %s875, 1
      %p879 = scmp.eq.s32.totalorder %s127, 1
      %p880 = scmp.ne.s32.totalorder %s875, %s877
      %p881 = scmp.eq.s32.totalorder %s127, 0
      %p882 = por %p880, %p881
      %p883 = scmp.ne.s32.totalorder %s875, %s877
      %p884 = scmp.eq.s32.totalorder %s132, 1
      %p885 = por %p883, %p884
      %p886 = scmp.ne.s32.totalorder %s877, %s878
      %p887 = scmp.eq.s32.totalorder %s132, 0
      %p888 = por %p886, %p887
      %p889 = scmp.ne.s32.totalorder %s877, %s878
      %p890 = scmp.eq.s32.totalorder %s133, 1
      %p891 = por %p889, %p890
      %p893 = scmp.ne.s32.totalorder %s878, %s892
      %p894 = scmp.eq.s32.totalorder %s133, 0
      %p895 = por %p893, %p894
      %s897 = sadd.s32 %s896, 1
      %p900 = scmp.eq.s32.totalorder %s127, 1
      %p901 = scmp.ne.s32.totalorder %s896, %s898
      %p902 = scmp.eq.s32.totalorder %s127, 0
      %p903 = por %p901, %p902
      %p904 = scmp.ne.s32.totalorder %s896, %s898
      %p905 = scmp.eq.s32.totalorder %s132, 1
      %p906 = por %p904, %p905
      %p907 = scmp.ne.s32.totalorder %s898, %s899
      %p908 = scmp.eq.s32.totalorder %s132, 0
      %p909 = por %p907, %p908
      %p910 = scmp.ne.s32.totalorder %s898, %s899
      %p911 = scmp.eq.s32.totalorder %s133, 1
      %p912 = por %p910, %p911
      %p914 = scmp.ne.s32.totalorder %s899, %s913
      %p915 = scmp.eq.s32.totalorder %s133, 0
      %p916 = por %p914, %p915
      %s918 = sadd.s32 %s917, 1
      %p921 = scmp.eq.s32.totalorder %s127, 1
      %p922 = scmp.ne.s32.totalorder %s917, %s919
      %p923 = scmp.eq.s32.totalorder %s127, 0
      %p924 = por %p922, %p923
      %p925 = scmp.ne.s32.totalorder %s917, %s919
      %p926 = scmp.eq.s32.totalorder %s132, 1
      %p927 = por %p925, %p926
      %p928 = scmp.ne.s32.totalorder %s919, %s920
      %p929 = scmp.eq.s32.totalorder %s132, 0
      %p930 = por %p928, %p929
      %p931 = scmp.ne.s32.totalorder %s919, %s920
      %p932 = scmp.eq.s32.totalorder %s133, 1
      %p933 = por %p931, %p932
      %p935 = scmp.ne.s32.totalorder %s920, %s934
      %p936 = scmp.eq.s32.totalorder %s133, 0
      %p937 = por %p935, %p936
      %s939 = sadd.s32 %s938, 1
      %p942 = scmp.eq.s32.totalorder %s127, 1
      %p943 = scmp.ne.s32.totalorder %s938, %s940
      %p944 = scmp.eq.s32.totalorder %s127, 0
      %p945 = por %p943, %p944
      %p946 = scmp.ne.s32.totalorder %s938, %s940
      %p947 = scmp.eq.s32.totalorder %s132, 1
      %p948 = por %p946, %p947
      %p949 = scmp.ne.s32.totalorder %s940, %s941
      %p950 = scmp.eq.s32.totalorder %s132, 0
      %p951 = por %p949, %p950
      %p952 = scmp.ne.s32.totalorder %s940, %s941
      %p953 = scmp.eq.s32.totalorder %s133, 1
      %p954 = por %p952, %p953
      %p956 = scmp.ne.s32.totalorder %s941, %s955
      %p957 = scmp.eq.s32.totalorder %s133, 0
      %p958 = por %p956, %p957
      %s960 = sadd.s32 %s959, 1
      %p963 = scmp.eq.s32.totalorder %s127, 1
      %p964 = scmp.ne.s32.totalorder %s959, %s961
      %p965 = scmp.eq.s32.totalorder %s127, 0
      %p966 = por %p964, %p965
      %p967 = scmp.ne.s32.totalorder %s959, %s961
      %p968 = scmp.eq.s32.totalorder %s132, 1
      %p969 = por %p967, %p968
      %p970 = scmp.ne.s32.totalorder %s961, %s962
      %p971 = scmp.eq.s32.totalorder %s132, 0
      %p972 = por %p970, %p971
      %p973 = scmp.ne.s32.totalorder %s961, %s962
      %p974 = scmp.eq.s32.totalorder %s133, 1
      %p975 = por %p973, %p974
      %p977 = scmp.ne.s32.totalorder %s962, %s976
      %p978 = scmp.eq.s32.totalorder %s133, 0
      %p979 = por %p977, %p978
      %s981 = sadd.s32 %s980, 1
      %p984 = scmp.eq.s32.totalorder %s127, 1
      %p985 = scmp.ne.s32.totalorder %s980, %s982
      %p986 = scmp.eq.s32.totalorder %s127, 0
      %p987 = por %p985, %p986
      %p988 = scmp.ne.s32.totalorder %s980, %s982
      %p989 = scmp.eq.s32.totalorder %s132, 1
      %p990 = por %p988, %p989
      %p991 = scmp.ne.s32.totalorder %s982, %s983
      %p992 = scmp.eq.s32.totalorder %s132, 0
      %p993 = por %p991, %p992
      %p994 = scmp.ne.s32.totalorder %s982, %s983
      %p995 = scmp.eq.s32.totalorder %s133, 1
      %p996 = por %p994, %p995
      %p998 = scmp.ne.s32.totalorder %s983, %s997
      %p999 = scmp.eq.s32.totalorder %s133, 0
      %p1000 = por %p998, %p999
      %s1002 = sadd.s32 %s1001, 1
      %p1005 = scmp.eq.s32.totalorder %s127, 1
      %p1006 = scmp.ne.s32.totalorder %s1001, %s1003
      %p1007 = scmp.eq.s32.totalorder %s127, 0
      %p1008 = por %p1006, %p1007
      %p1009 = scmp.ne.s32.totalorder %s1001, %s1003
      %p1010 = scmp.eq.s32.totalorder %s132, 1
      %p1011 = por %p1009, %p1010
      %p1012 = scmp.ne.s32.totalorder %s1003, %s1004
      %p1013 = scmp.eq.s32.totalorder %s132, 0
      %p1014 = por %p1012, %p1013
      %p1015 = scmp.ne.s32.totalorder %s1003, %s1004
      %p1016 = scmp.eq.s32.totalorder %s133, 1
      %p1017 = por %p1015, %p1016
      %p1019 = scmp.ne.s32.totalorder %s1004, %s1018
      %p1020 = scmp.eq.s32.totalorder %s133, 0
      %p1021 = por %p1019, %p1020
      %s1023 = sadd.s32 %s1022, 1
      %p1026 = scmp.eq.s32.totalorder %s127, 1
      %p1027 = scmp.ne.s32.totalorder %s1022, %s1024
      %p1028 = scmp.eq.s32.totalorder %s127, 0
      %p1029 = por %p1027, %p1028
      %p1030 = scmp.ne.s32.totalorder %s1022, %s1024
      %p1031 = scmp.eq.s32.totalorder %s132, 1
      %p1032 = por %p1030, %p1031
      %p1033 = scmp.ne.s32.totalorder %s1024, %s1025
      %p1034 = scmp.eq.s32.totalorder %s132, 0
      %p1035 = por %p1033, %p1034
      %p1036 = scmp.ne.s32.totalorder %s1024, %s1025
      %p1037 = scmp.eq.s32.totalorder %s133, 1
      %p1038 = por %p1036, %p1037
      %p1040 = scmp.ne.s32.totalorder %s1025, %s1039
      %p1041 = scmp.eq.s32.totalorder %s133, 0
      %p1042 = por %p1040, %p1041
      %s1044 = sadd.s32 %s1043, 1
      %p1047 = scmp.eq.s32.totalorder %s127, 1
      %p1048 = scmp.ne.s32.totalorder %s1043, %s1045
      %p1049 = scmp.eq.s32.totalorder %s127, 0
      %p1050 = por %p1048, %p1049
      %p1051 = scmp.ne.s32.totalorder %s1043, %s1045
      %p1052 = scmp.eq.s32.totalorder %s132, 1
      %p1053 = por %p1051, %p1052
      %p1054 = scmp.ne.s32.totalorder %s1045, %s1046
      %p1055 = scmp.eq.s32.totalorder %s132, 0
      %p1056 = por %p1054, %p1055
      %p1057 = scmp.ne.s32.totalorder %s1045, %s1046
      %p1058 = scmp.eq.s32.totalorder %s133, 1
      %p1059 = por %p1057, %p1058
      %p1061 = scmp.ne.s32.totalorder %s1046, %s1060
      %p1062 = scmp.eq.s32.totalorder %s133, 0
      %p1063 = por %p1061, %p1062
      %s1065 = sadd.s32 %s1064, 1
      %p1068 = scmp.eq.s32.totalorder %s127, 1
      %p1069 = scmp.ne.s32.totalorder %s1064, %s1066
      %p1070 = scmp.eq.s32.totalorder %s127, 0
      %p1071 = por %p1069, %p1070
      %p1072 = scmp.ne.s32.totalorder %s1064, %s1066
      %p1073 = scmp.eq.s32.totalorder %s132, 1
      %p1074 = por %p1072, %p1073
      %p1075 = scmp.ne.s32.totalorder %s1066, %s1067
      %p1076 = scmp.eq.s32.totalorder %s132, 0
      %p1077 = por %p1075, %p1076
      %p1078 = scmp.ne.s32.totalorder %s1066, %s1067
      %p1079 = scmp.eq.s32.totalorder %s133, 1
      %p1080 = por %p1078, %p1079
      %p1082 = scmp.ne.s32.totalorder %s1067, %s1081
      %p1083 = scmp.eq.s32.totalorder %s133, 0
      %p1084 = por %p1082, %p1083
      %s1086 = sadd.s32 %s1085, 1
      %p1089 = scmp.eq.s32.totalorder %s127, 1
      %p1090 = scmp.ne.s32.totalorder %s1085, %s1087
      %p1091 = scmp.eq.s32.totalorder %s127, 0
      %p1092 = por %p1090, %p1091
      %p1093 = scmp.ne.s32.totalorder %s1085, %s1087
      %p1094 = scmp.eq.s32.totalorder %s132, 1
      %p1095 = por %p1093, %p1094
      %p1096 = scmp.ne.s32.totalorder %s1087, %s1088
      %p1097 = scmp.eq.s32.totalorder %s132, 0
      %p1098 = por %p1096, %p1097
      %p1099 = scmp.ne.s32.totalorder %s1087, %s1088
      %p1100 = scmp.eq.s32.totalorder %s133, 1
      %p1101 = por %p1099, %p1100
      %p1103 = scmp.ne.s32.totalorder %s1088, %s1102
      %p1104 = scmp.eq.s32.totalorder %s133, 0
      %p1105 = por %p1103, %p1104
      %s1107 = sadd.s32 %s1106, 1
      %p1110 = scmp.eq.s32.totalorder %s127, 1
      %p1111 = scmp.ne.s32.totalorder %s1106, %s1108
      %p1112 = scmp.eq.s32.totalorder %s127, 0
      %p1113 = por %p1111, %p1112
      %p1114 = scmp.ne.s32.totalorder %s1106, %s1108
      %p1115 = scmp.eq.s32.totalorder %s132, 1
      %p1116 = por %p1114, %p1115
      %p1117 = scmp.ne.s32.totalorder %s1108, %s1109
      %p1118 = scmp.eq.s32.totalorder %s132, 0
      %p1119 = por %p1117, %p1118
      %p1120 = scmp.ne.s32.totalorder %s1108, %s1109
      %p1121 = scmp.eq.s32.totalorder %s133, 1
      %p1122 = por %p1120, %p1121
      %p1124 = scmp.ne.s32.totalorder %s1109, %s1123
      %p1125 = scmp.eq.s32.totalorder %s133, 0
      %p1126 = por %p1124, %p1125
      %s1128 = sadd.s32 %s1127, 1
      %p1131 = scmp.eq.s32.totalorder %s127, 1
      %p1132 = scmp.ne.s32.totalorder %s1127, %s1129
      %p1133 = scmp.eq.s32.totalorder %s127, 0
      %p1134 = por %p1132, %p1133
      %p1135 = scmp.ne.s32.totalorder %s1127, %s1129
      %p1136 = scmp.eq.s32.totalorder %s132, 1
      %p1137 = por %p1135, %p1136
      %p1138 = scmp.ne.s32.totalorder %s1129, %s1130
      %p1139 = scmp.eq.s32.totalorder %s132, 0
      %p1140 = por %p1138, %p1139
      %p1141 = scmp.ne.s32.totalorder %s1129, %s1130
      %p1142 = scmp.eq.s32.totalorder %s133, 1
      %p1143 = por %p1141, %p1142
      %p1145 = scmp.ne.s32.totalorder %s1130, %s1144
      %p1146 = scmp.eq.s32.totalorder %s133, 0
      %p1147 = por %p1145, %p1146
      %s1149 = sadd.s32 %s1148, 1
      %p1152 = scmp.eq.s32.totalorder %s127, 1
      %p1153 = scmp.ne.s32.totalorder %s1148, %s1150
      %p1154 = scmp.eq.s32.totalorder %s127, 0
      %p1155 = por %p1153, %p1154
      %p1156 = scmp.ne.s32.totalorder %s1148, %s1150
      %p1157 = scmp.eq.s32.totalorder %s132, 1
      %p1158 = por %p1156, %p1157
      %p1159 = scmp.ne.s32.totalorder %s1150, %s1151
      %p1160 = scmp.eq.s32.totalorder %s132, 0
      %p1161 = por %p1159, %p1160
      %p1162 = scmp.ne.s32.totalorder %s1150, %s1151
      %p1163 = scmp.eq.s32.totalorder %s133, 1
      %p1164 = por %p1162, %p1163
      %p1166 = scmp.ne.s32.totalorder %s1151, %s1165
      %p1167 = scmp.eq.s32.totalorder %s133, 0
      %p1168 = por %p1166, %p1167
      %s1170 = sadd.s32 %s1169, 1
      %p1173 = scmp.eq.s32.totalorder %s127, 1
      %p1174 = scmp.ne.s32.totalorder %s1169, %s1171
      %p1175 = scmp.eq.s32.totalorder %s127, 0
      %p1176 = por %p1174, %p1175
      %p1177 = scmp.ne.s32.totalorder %s1169, %s1171
      %p1178 = scmp.eq.s32.totalorder %s132, 1
      %p1179 = por %p1177, %p1178
      %p1180 = scmp.ne.s32.totalorder %s1171, %s1172
      %p1181 = scmp.eq.s32.totalorder %s132, 0
      %p1182 = por %p1180, %p1181
      %p1183 = scmp.ne.s32.totalorder %s1171, %s1172
      %p1184 = scmp.eq.s32.totalorder %s133, 1
      %p1185 = por %p1183, %p1184
      %p1187 = scmp.ne.s32.totalorder %s1172, %s1186
      %p1188 = scmp.eq.s32.totalorder %s133, 0
      %p1189 = por %p1187, %p1188
      %s1191 = sadd.s32 %s1190, 1
      %p1194 = scmp.eq.s32.totalorder %s127, 1
      %p1195 = scmp.ne.s32.totalorder %s1190, %s1192
      %p1196 = scmp.eq.s32.totalorder %s127, 0
      %p1197 = por %p1195, %p1196
      %p1198 = scmp.ne.s32.totalorder %s1190, %s1192
      %p1199 = scmp.eq.s32.totalorder %s132, 1
      %p1200 = por %p1198, %p1199
      %p1201 = scmp.ne.s32.totalorder %s1192, %s1193
      %p1202 = scmp.eq.s32.totalorder %s132, 0
      %p1203 = por %p1201, %p1202
      %p1204 = scmp.ne.s32.totalorder %s1192, %s1193
      %p1205 = scmp.eq.s32.totalorder %s133, 1
      %p1206 = por %p1204, %p1205
      %p1208 = scmp.ne.s32.totalorder %s1193, %s1207
      %p1209 = scmp.eq.s32.totalorder %s133, 0
      %p1210 = por %p1208, %p1209
      %s1212 = sadd.s32 %s1211, 1
      %p1215 = scmp.eq.s32.totalorder %s127, 1
      %p1216 = scmp.ne.s32.totalorder %s1211, %s1213
      %p1217 = scmp.eq.s32.totalorder %s127, 0
      %p1218 = por %p1216, %p1217
      %p1219 = scmp.ne.s32.totalorder %s1211, %s1213
      %p1220 = scmp.eq.s32.totalorder %s132, 1
      %p1221 = por %p1219, %p1220
      %p1222 = scmp.ne.s32.totalorder %s1213, %s1214
      %p1223 = scmp.eq.s32.totalorder %s132, 0
      %p1224 = por %p1222, %p1223
      %p1225 = scmp.ne.s32.totalorder %s1213, %s1214
      %p1226 = scmp.eq.s32.totalorder %s133, 1
      %p1227 = por %p1225, %p1226
      %p1229 = scmp.ne.s32.totalorder %s1214, %s1228
      %p1230 = scmp.eq.s32.totalorder %s133, 0
      %p1231 = por %p1229, %p1230
      %s1233 = sadd.s32 %s1232, 1
      %p1236 = scmp.eq.s32.totalorder %s127, 1
      %p1237 = scmp.ne.s32.totalorder %s1232, %s1234
      %p1238 = scmp.eq.s32.totalorder %s127, 0
      %p1239 = por %p1237, %p1238
      %p1240 = scmp.ne.s32.totalorder %s1232, %s1234
      %p1241 = scmp.eq.s32.totalorder %s132, 1
      %p1242 = por %p1240, %p1241
      %p1243 = scmp.ne.s32.totalorder %s1234, %s1235
      %p1244 = scmp.eq.s32.totalorder %s132, 0
      %p1245 = por %p1243, %p1244
      %p1246 = scmp.ne.s32.totalorder %s1234, %s1235
      %p1247 = scmp.eq.s32.totalorder %s133, 1
      %p1248 = por %p1246, %p1247
      %p1250 = scmp.ne.s32.totalorder %s1235, %s1249
      %p1251 = scmp.eq.s32.totalorder %s133, 0
      %p1252 = por %p1250, %p1251
      %s1254 = sadd.s32 %s1253, 1
      %p1257 = scmp.eq.s32.totalorder %s127, 1
      %p1258 = scmp.ne.s32.totalorder %s1253, %s1255
      %p1259 = scmp.eq.s32.totalorder %s127, 0
      %p1260 = por %p1258, %p1259
      %p1261 = scmp.ne.s32.totalorder %s1253, %s1255
      %p1262 = scmp.eq.s32.totalorder %s132, 1
      %p1263 = por %p1261, %p1262
      %p1264 = scmp.ne.s32.totalorder %s1255, %s1256
      %p1265 = scmp.eq.s32.totalorder %s132, 0
      %p1266 = por %p1264, %p1265
      %p1267 = scmp.ne.s32.totalorder %s1255, %s1256
      %p1268 = scmp.eq.s32.totalorder %s133, 1
      %p1269 = por %p1267, %p1268
      %p1271 = scmp.ne.s32.totalorder %s1256, %s1270
      %p1272 = scmp.eq.s32.totalorder %s133, 0
      %p1273 = por %p1271, %p1272
      %s1275 = sadd.s32 %s1274, 1
      %p1278 = scmp.eq.s32.totalorder %s127, 1
      %p1279 = scmp.ne.s32.totalorder %s1274, %s1276
      %p1280 = scmp.eq.s32.totalorder %s127, 0
      %p1281 = por %p1279, %p1280
      %p1282 = scmp.ne.s32.totalorder %s1274, %s1276
      %p1283 = scmp.eq.s32.totalorder %s132, 1
      %p1284 = por %p1282, %p1283
      %p1285 = scmp.ne.s32.totalorder %s1276, %s1277
      %p1286 = scmp.eq.s32.totalorder %s132, 0
      %p1287 = por %p1285, %p1286
      %p1288 = scmp.ne.s32.totalorder %s1276, %s1277
      %p1289 = scmp.eq.s32.totalorder %s133, 1
      %p1290 = por %p1288, %p1289
      %p1292 = scmp.ne.s32.totalorder %s1277, %s1291
      %p1293 = scmp.eq.s32.totalorder %s133, 0
      %p1294 = por %p1292, %p1293
      %s1296 = sadd.s32 %s1295, 1
      %p1299 = scmp.eq.s32.totalorder %s127, 1
      %p1300 = scmp.ne.s32.totalorder %s1295, %s1297
      %p1301 = scmp.eq.s32.totalorder %s127, 0
      %p1302 = por %p1300, %p1301
      %p1303 = scmp.ne.s32.totalorder %s1295, %s1297
      %p1304 = scmp.eq.s32.totalorder %s132, 1
      %p1305 = por %p1303, %p1304
      %p1306 = scmp.ne.s32.totalorder %s1297, %s1298
      %p1307 = scmp.eq.s32.totalorder %s132, 0
      %p1308 = por %p1306, %p1307
      %p1309 = scmp.ne.s32.totalorder %s1297, %s1298
      %p1310 = scmp.eq.s32.totalorder %s133, 1
      %p1311 = por %p1309, %p1310
      %p1313 = scmp.ne.s32.totalorder %s1298, %s1312
      %p1314 = scmp.eq.s32.totalorder %s133, 0
      %p1315 = por %p1313, %p1314
      %s1317 = sadd.s32 %s1316, 1
      %p1320 = scmp.eq.s32.totalorder %s127, 1
      %p1321 = scmp.ne.s32.totalorder %s1316, %s1318
      %p1322 = scmp.eq.s32.totalorder %s127, 0
      %p1323 = por %p1321, %p1322
      %p1324 = scmp.ne.s32.totalorder %s1316, %s1318
      %p1325 = scmp.eq.s32.totalorder %s132, 1
      %p1326 = por %p1324, %p1325
      %p1327 = scmp.ne.s32.totalorder %s1318, %s1319
      %p1328 = scmp.eq.s32.totalorder %s132, 0
      %p1329 = por %p1327, %p1328
      %p1330 = scmp.ne.s32.totalorder %s1318, %s1319
      %p1331 = scmp.eq.s32.totalorder %s133, 1
      %p1332 = por %p1330, %p1331
      %p1334 = scmp.ne.s32.totalorder %s1319, %s1333
      %p1335 = scmp.eq.s32.totalorder %s133, 0
      %p1336 = por %p1334, %p1335
      %s1337 = ssub.s32 %s127, %s134
      %p1338 = scmp.eq.s32.totalorder %s1337, 0
      %s1340 = sadd.s32 %s1339, 1
      %s1341 = scalar_select %p1338, %s1339, %s1340
      %p1344 = pneg %p1338
      %p1345 = scmp.eq.s32.totalorder %s127, 1
      %p1346 = por %p1344, %p1345
      %p1347 = scmp.ne.s32.totalorder %s1339, %s1342
      %p1348 = scmp.eq.s32.totalorder %s127, 0
      %p1349 = por %p1347, %p1348
      %p1350 = scmp.ne.s32.totalorder %s1339, %s1342
      %p1351 = scmp.eq.s32.totalorder %s132, 1
      %p1352 = por %p1350, %p1351
      %p1353 = scmp.ne.s32.totalorder %s1342, %s1343
      %p1354 = scmp.eq.s32.totalorder %s132, 0
      %p1355 = por %p1353, %p1354
      %p1356 = scmp.ne.s32.totalorder %s1342, %s1343
      %p1357 = scmp.eq.s32.totalorder %s133, 1
      %p1358 = por %p1356, %p1357
      %p1360 = scmp.ne.s32.totalorder %s1343, %s1359
      %p1361 = scmp.eq.s32.totalorder %s133, 0
      %p1362 = por %p1360, %p1361
      %p1363 = scmp.le.s32.totalorder 1, %s127
      %p1364 = scmp.lt.s32.totalorder %s127, 3
      %p1365 = pnand %p1363, %p1364
      %p1366 = pneg %p1365
      // Predicated region
      $region9: #{tpu_custom_call.1} parent=5 // pred_check
        _
      $region10: #{tpu_custom_call.1} parent=5 // pred_check_branch
        %1368 = sbr.rel (%p1365) target = $region12
      $region11: #{tpu_custom_call.1} parent=5 // pred_region
        %s1369 = ssub.s32 %s127, 1
        // Predicated region
        $region13: #{tpu_custom_call.1} parent=11 // pred_check
          %p1370 = pneg %p174
        $region14: #{tpu_custom_call.1} parent=11 // pred_check_branch
          %1372 = sbr.rel (%p1370) target = $region16
        $region15: #{tpu_custom_call.1} parent=11 // pred_region
          _
        $region16: #{tpu_custom_call.1} parent=11 // pred_fallthru
          _
        // Predicated region
        $region17: #{tpu_custom_call.1} parent=11 // pred_check
          %p1373 = pneg %p195
        $region18: #{tpu_custom_call.1} parent=11 // pred_check_branch
          %1375 = sbr.rel (%p1373) target = $region20
        $region19: #{tpu_custom_call.1} parent=11 // pred_region
          _
        $region20: #{tpu_custom_call.1} parent=11 // pred_fallthru
          _
        // Predicated region
        $region21: #{tpu_custom_call.1} parent=11 // pred_check
          %p1376 = pneg %p216
        $region22: #{tpu_custom_call.1} parent=11 // pred_check_branch
          %1378 = sbr.rel (%p1376) target = $region24
        $region23: #{tpu_custom_call.1} parent=11 // pred_region
          _
        $region24: #{tpu_custom_call.1} parent=11 // pred_fallthru
          _
        // Predicated region
        $region25: #{tpu_custom_call.1} parent=11 // pred_check
          %p1379 = pneg %p237
        $region26: #{tpu_custom_call.1} parent=11 // pred_check_branch
          %1381 = sbr.rel (%p1379) target = $region28
        $region27: #{tpu_custom_call.1} parent=11 // pred_region
          _
        $region28: #{tpu_custom_call.1} parent=11 // pred_fallthru
          _
        // Predicated region
        $region29: #{tpu_custom_call.1} parent=11 // pred_check
          %p1382 = pneg %p258
        $region30: #{tpu_custom_call.1} parent=11 // pred_check_branch
          %1384 = sbr.rel (%p1382) target = $region32
        $region31: #{tpu_custom_call.1} parent=11 // pred_region
          _
        $region32: #{tpu_custom_call.1} parent=11 // pred_fallthru
          _
        // Predicated region
        $region33: #{tpu_custom_call.1} parent=11 // pred_check
          %p1385 = pneg %p279
        $region34: #{tpu_custom_call.1} parent=11 // pred_check_branch
          %1387 = sbr.rel (%p1385) target = $region36
        $region35: #{tpu_custom_call.1} parent=11 // pred_region
          _
        $region36: #{tpu_custom_call.1} parent=11 // pred_fallthru
          _
        // Predicated region
        $region37: #{tpu_custom_call.1} parent=11 // pred_check
          %p1388 = pneg %p300
        $region38: #{tpu_custom_call.1} parent=11 // pred_check_branch
          %1390 = sbr.rel (%p1388) target = $region40
        $region39: #{tpu_custom_call.1} parent=11 // pred_region
          _
        $region40: #{tpu_custom_call.1} parent=11 // pred_fallthru
          _
        // Predicated region
        $region41: #{tpu_custom_call.1} parent=11 // pred_check
          %p1391 = pneg %p321
        $region42: #{tpu_custom_call.1} parent=11 // pred_check_branch
          %1393 = sbr.rel (%p1391) target = $region44
        $region43: #{tpu_custom_call.1} parent=11 // pred_region
          _
        $region44: #{tpu_custom_call.1} parent=11 // pred_fallthru
          _
        // Predicated region
        $region45: #{tpu_custom_call.1} parent=11 // pred_check
          %p1394 = pneg %p342
        $region46: #{tpu_custom_call.1} parent=11 // pred_check_branch
          %1396 = sbr.rel (%p1394) target = $region48
        $region47: #{tpu_custom_call.1} parent=11 // pred_region
          _
        $region48: #{tpu_custom_call.1} parent=11 // pred_fallthru
          _
        // Predicated region
        $region49: #{tpu_custom_call.1} parent=11 // pred_check
          %p1397 = pneg %p363
        $region50: #{tpu_custom_call.1} parent=11 // pred_check_branch
          %1399 = sbr.rel (%p1397) target = $region52
        $region51: #{tpu_custom_call.1} parent=11 // pred_region
          _
        $region52: #{tpu_custom_call.1} parent=11 // pred_fallthru
          _
        // Predicated region
        $region53: #{tpu_custom_call.1} parent=11 // pred_check
          %p1400 = pneg %p384
        $region54: #{tpu_custom_call.1} parent=11 // pred_check_branch
          %1402 = sbr.rel (%p1400) target = $region56
        $region55: #{tpu_custom_call.1} parent=11 // pred_region
          _
        $region56: #{tpu_custom_call.1} parent=11 // pred_fallthru
          _
        // Predicated region
        $region57: #{tpu_custom_call.1} parent=11 // pred_check
          %p1403 = pneg %p405
        $region58: #{tpu_custom_call.1} parent=11 // pred_check_branch
          %1405 = sbr.rel (%p1403) target = $region60
        $region59: #{tpu_custom_call.1} parent=11 // pred_region
          _
        $region60: #{tpu_custom_call.1} parent=11 // pred_fallthru
          _
        // Predicated region
        $region61: #{tpu_custom_call.1} parent=11 // pred_check
          %p1406 = pneg %p426
        $region62: #{tpu_custom_call.1} parent=11 // pred_check_branch
          %1408 = sbr.rel (%p1406) target = $region64
        $region63: #{tpu_custom_call.1} parent=11 // pred_region
          _
        $region64: #{tpu_custom_call.1} parent=11 // pred_fallthru
          _
        // Predicated region
        $region65: #{tpu_custom_call.1} parent=11 // pred_check
          %p1409 = pneg %p447
        $region66: #{tpu_custom_call.1} parent=11 // pred_check_branch
          %1411 = sbr.rel (%p1409) target = $region68
        $region67: #{tpu_custom_call.1} parent=11 // pred_region
          _
        $region68: #{tpu_custom_call.1} parent=11 // pred_fallthru
          _
        // Predicated region
        $region69: #{tpu_custom_call.1} parent=11 // pred_check
          %p1412 = pneg %p468
        $region70: #{tpu_custom_call.1} parent=11 // pred_check_branch
          %1414 = sbr.rel (%p1412) target = $region72
        $region71: #{tpu_custom_call.1} parent=11 // pred_region
          _
        $region72: #{tpu_custom_call.1} parent=11 // pred_fallthru
          _
        // Predicated region
        $region73: #{tpu_custom_call.1} parent=11 // pred_check
          %p1415 = pneg %p489
        $region74: #{tpu_custom_call.1} parent=11 // pred_check_branch
          %1417 = sbr.rel (%p1415) target = $region76
        $region75: #{tpu_custom_call.1} parent=11 // pred_region
          _
        $region76: #{tpu_custom_call.1} parent=11 // pred_fallthru
          _
        // Predicated region
        $region77: #{tpu_custom_call.1} parent=11 // pred_check
          %p1418 = pneg %p510
        $region78: #{tpu_custom_call.1} parent=11 // pred_check_branch
          %1420 = sbr.rel (%p1418) target = $region80
        $region79: #{tpu_custom_call.1} parent=11 // pred_region
          _
        $region80: #{tpu_custom_call.1} parent=11 // pred_fallthru
          _
        // Predicated region
        $region81: #{tpu_custom_call.1} parent=11 // pred_check
          %p1421 = pneg %p531
        $region82: #{tpu_custom_call.1} parent=11 // pred_check_branch
          %1423 = sbr.rel (%p1421) target = $region84
        $region83: #{tpu_custom_call.1} parent=11 // pred_region
          _
        $region84: #{tpu_custom_call.1} parent=11 // pred_fallthru
          _
        // Predicated region
        $region85: #{tpu_custom_call.1} parent=11 // pred_check
          %p1424 = pneg %p552
        $region86: #{tpu_custom_call.1} parent=11 // pred_check_branch
          %1426 = sbr.rel (%p1424) target = $region88
        $region87: #{tpu_custom_call.1} parent=11 // pred_region
          _
        $region88: #{tpu_custom_call.1} parent=11 // pred_fallthru
          _
        // Predicated region
        $region89: #{tpu_custom_call.1} parent=11 // pred_check
          %p1427 = pneg %p573
        $region90: #{tpu_custom_call.1} parent=11 // pred_check_branch
          %1429 = sbr.rel (%p1427) target = $region92
        $region91: #{tpu_custom_call.1} parent=11 // pred_region
          _
        $region92: #{tpu_custom_call.1} parent=11 // pred_fallthru
          _
        // Predicated region
        $region93: #{tpu_custom_call.1} parent=11 // pred_check
          %p1430 = pneg %p594
        $region94: #{tpu_custom_call.1} parent=11 // pred_check_branch
          %1432 = sbr.rel (%p1430) target = $region96
        $region95: #{tpu_custom_call.1} parent=11 // pred_region
          _
        $region96: #{tpu_custom_call.1} parent=11 // pred_fallthru
          _
        // Predicated region
        $region97: #{tpu_custom_call.1} parent=11 // pred_check
          %p1433 = pneg %p615
        $region98: #{tpu_custom_call.1} parent=11 // pred_check_branch
          %1435 = sbr.rel (%p1433) target = $region100
        $region99: #{tpu_custom_call.1} parent=11 // pred_region
          _
        $region100: #{tpu_custom_call.1} parent=11 // pred_fallthru
          _
        // Predicated region
        $region101: #{tpu_custom_call.1} parent=11 // pred_check
          %p1436 = pneg %p636
        $region102: #{tpu_custom_call.1} parent=11 // pred_check_branch
          %1438 = sbr.rel (%p1436) target = $region104
        $region103: #{tpu_custom_call.1} parent=11 // pred_region
          _
        $region104: #{tpu_custom_call.1} parent=11 // pred_fallthru
          _
        // Predicated region
        $region105: #{tpu_custom_call.1} parent=11 // pred_check
          %p1439 = pneg %p657
        $region106: #{tpu_custom_call.1} parent=11 // pred_check_branch
          %1441 = sbr.rel (%p1439) target = $region108
        $region107: #{tpu_custom_call.1} parent=11 // pred_region
          _
        $region108: #{tpu_custom_call.1} parent=11 // pred_fallthru
          _
        // Predicated region
        $region109: #{tpu_custom_call.1} parent=11 // pred_check
          %p1442 = pneg %p678
        $region110: #{tpu_custom_call.1} parent=11 // pred_check_branch
          %1444 = sbr.rel (%p1442) target = $region112
        $region111: #{tpu_custom_call.1} parent=11 // pred_region
          _
        $region112: #{tpu_custom_call.1} parent=11 // pred_fallthru
          _
        // Predicated region
        $region113: #{tpu_custom_call.1} parent=11 // pred_check
          %p1445 = pneg %p699
        $region114: #{tpu_custom_call.1} parent=11 // pred_check_branch
          %1447 = sbr.rel (%p1445) target = $region116
        $region115: #{tpu_custom_call.1} parent=11 // pred_region
          _
        $region116: #{tpu_custom_call.1} parent=11 // pred_fallthru
          _
        // Predicated region
        $region117: #{tpu_custom_call.1} parent=11 // pred_check
          %p1448 = pneg %p720
        $region118: #{tpu_custom_call.1} parent=11 // pred_check_branch
          %1450 = sbr.rel (%p1448) target = $region120
        $region119: #{tpu_custom_call.1} parent=11 // pred_region
          _
        $region120: #{tpu_custom_call.1} parent=11 // pred_fallthru
          _
        // Predicated region
        $region121: #{tpu_custom_call.1} parent=11 // pred_check
          %p1451 = pneg %p741
        $region122: #{tpu_custom_call.1} parent=11 // pred_check_branch
          %1453 = sbr.rel (%p1451) target = $region124
        $region123: #{tpu_custom_call.1} parent=11 // pred_region
          _
        $region124: #{tpu_custom_call.1} parent=11 // pred_fallthru
          _
        // Predicated region
        $region125: #{tpu_custom_call.1} parent=11 // pred_check
          %p1454 = pneg %p762
        $region126: #{tpu_custom_call.1} parent=11 // pred_check_branch
          %1456 = sbr.rel (%p1454) target = $region128
        $region127: #{tpu_custom_call.1} parent=11 // pred_region
          _
        $region128: #{tpu_custom_call.1} parent=11 // pred_fallthru
          _
        // Predicated region
        $region129: #{tpu_custom_call.1} parent=11 // pred_check
          %p1457 = pneg %p783
        $region130: #{tpu_custom_call.1} parent=11 // pred_check_branch
          %1459 = sbr.rel (%p1457) target = $region132
        $region131: #{tpu_custom_call.1} parent=11 // pred_region
          _
        $region132: #{tpu_custom_call.1} parent=11 // pred_fallthru
          _
        // Predicated region
        $region133: #{tpu_custom_call.1} parent=11 // pred_check
          %p1460 = pneg %p804
        $region134: #{tpu_custom_call.1} parent=11 // pred_check_branch
          %1462 = sbr.rel (%p1460) target = $region136
        $region135: #{tpu_custom_call.1} parent=11 // pred_region
          _
        $region136: #{tpu_custom_call.1} parent=11 // pred_fallthru
          _
        // Predicated region
        $region137: #{tpu_custom_call.1} parent=11 // pred_check
          %p1463 = pneg %p825
        $region138: #{tpu_custom_call.1} parent=11 // pred_check_branch
          %1465 = sbr.rel (%p1463) target = $region140
        $region139: #{tpu_custom_call.1} parent=11 // pred_region
          _
        $region140: #{tpu_custom_call.1} parent=11 // pred_fallthru
          _
        // Predicated region
        $region141: #{tpu_custom_call.1} parent=11 // pred_check
          %p1466 = pneg %p846
        $region142: #{tpu_custom_call.1} parent=11 // pred_check_branch
          %1468 = sbr.rel (%p1466) target = $region144
        $region143: #{tpu_custom_call.1} parent=11 // pred_region
          _
        $region144: #{tpu_custom_call.1} parent=11 // pred_fallthru
          _
        // Predicated region
        $region145: #{tpu_custom_call.1} parent=11 // pred_check
          %p1469 = pneg %p867
        $region146: #{tpu_custom_call.1} parent=11 // pred_check_branch
          %1471 = sbr.rel (%p1469) target = $region148
        $region147: #{tpu_custom_call.1} parent=11 // pred_region
          _
        $region148: #{tpu_custom_call.1} parent=11 // pred_fallthru
          _
        // Predicated region
        $region149: #{tpu_custom_call.1} parent=11 // pred_check
          %p1472 = pneg %p888
        $region150: #{tpu_custom_call.1} parent=11 // pred_check_branch
          %1474 = sbr.rel (%p1472) target = $region152
        $region151: #{tpu_custom_call.1} parent=11 // pred_region
          _
        $region152: #{tpu_custom_call.1} parent=11 // pred_fallthru
          _
        // Predicated region
        $region153: #{tpu_custom_call.1} parent=11 // pred_check
          %p1475 = pneg %p909
        $region154: #{tpu_custom_call.1} parent=11 // pred_check_branch
          %1477 = sbr.rel (%p1475) target = $region156
        $region155: #{tpu_custom_call.1} parent=11 // pred_region
          _
        $region156: #{tpu_custom_call.1} parent=11 // pred_fallthru
          _
        // Predicated region
        $region157: #{tpu_custom_call.1} parent=11 // pred_check
          %p1478 = pneg %p930
        $region158: #{tpu_custom_call.1} parent=11 // pred_check_branch
          %1480 = sbr.rel (%p1478) target = $region160
        $region159: #{tpu_custom_call.1} parent=11 // pred_region
          _
        $region160: #{tpu_custom_call.1} parent=11 // pred_fallthru
          _
        // Predicated region
        $region161: #{tpu_custom_call.1} parent=11 // pred_check
          %p1481 = pneg %p951
        $region162: #{tpu_custom_call.1} parent=11 // pred_check_branch
          %1483 = sbr.rel (%p1481) target = $region164
        $region163: #{tpu_custom_call.1} parent=11 // pred_region
          _
        $region164: #{tpu_custom_call.1} parent=11 // pred_fallthru
          _
        // Predicated region
        $region165: #{tpu_custom_call.1} parent=11 // pred_check
          %p1484 = pneg %p972
        $region166: #{tpu_custom_call.1} parent=11 // pred_check_branch
          %1486 = sbr.rel (%p1484) target = $region168
        $region167: #{tpu_custom_call.1} parent=11 // pred_region
          _
        $region168: #{tpu_custom_call.1} parent=11 // pred_fallthru
          _
        // Predicated region
        $region169: #{tpu_custom_call.1} parent=11 // pred_check
          %p1487 = pneg %p993
        $region170: #{tpu_custom_call.1} parent=11 // pred_check_branch
          %1489 = sbr.rel (%p1487) target = $region172
        $region171: #{tpu_custom_call.1} parent=11 // pred_region
          _
        $region172: #{tpu_custom_call.1} parent=11 // pred_fallthru
          _
        // Predicated region
        $region173: #{tpu_custom_call.1} parent=11 // pred_check
          %p1490 = pneg %p1014
        $region174: #{tpu_custom_call.1} parent=11 // pred_check_branch
          %1492 = sbr.rel (%p1490) target = $region176
        $region175: #{tpu_custom_call.1} parent=11 // pred_region
          _
        $region176: #{tpu_custom_call.1} parent=11 // pred_fallthru
          _
        // Predicated region
        $region177: #{tpu_custom_call.1} parent=11 // pred_check
          %p1493 = pneg %p1035
        $region178: #{tpu_custom_call.1} parent=11 // pred_check_branch
          %1495 = sbr.rel (%p1493) target = $region180
        $region179: #{tpu_custom_call.1} parent=11 // pred_region
          _
        $region180: #{tpu_custom_call.1} parent=11 // pred_fallthru
          _
        // Predicated region
        $region181: #{tpu_custom_call.1} parent=11 // pred_check
          %p1496 = pneg %p1056
        $region182: #{tpu_custom_call.1} parent=11 // pred_check_branch
          %1498 = sbr.rel (%p1496) target = $region184
        $region183: #{tpu_custom_call.1} parent=11 // pred_region
          _
        $region184: #{tpu_custom_call.1} parent=11 // pred_fallthru
          _
        // Predicated region
        $region185: #{tpu_custom_call.1} parent=11 // pred_check
          %p1499 = pneg %p1077
        $region186: #{tpu_custom_call.1} parent=11 // pred_check_branch
          %1501 = sbr.rel (%p1499) target = $region188
        $region187: #{tpu_custom_call.1} parent=11 // pred_region
          _
        $region188: #{tpu_custom_call.1} parent=11 // pred_fallthru
          _
        // Predicated region
        $region189: #{tpu_custom_call.1} parent=11 // pred_check
          %p1502 = pneg %p1098
        $region190: #{tpu_custom_call.1} parent=11 // pred_check_branch
          %1504 = sbr.rel (%p1502) target = $region192
        $region191: #{tpu_custom_call.1} parent=11 // pred_region
          _
        $region192: #{tpu_custom_call.1} parent=11 // pred_fallthru
          _
        // Predicated region
        $region193: #{tpu_custom_call.1} parent=11 // pred_check
          %p1505 = pneg %p1119
        $region194: #{tpu_custom_call.1} parent=11 // pred_check_branch
          %1507 = sbr.rel (%p1505) target = $region196
        $region195: #{tpu_custom_call.1} parent=11 // pred_region
          _
        $region196: #{tpu_custom_call.1} parent=11 // pred_fallthru
          _
        // Predicated region
        $region197: #{tpu_custom_call.1} parent=11 // pred_check
          %p1508 = pneg %p1140
        $region198: #{tpu_custom_call.1} parent=11 // pred_check_branch
          %1510 = sbr.rel (%p1508) target = $region200
        $region199: #{tpu_custom_call.1} parent=11 // pred_region
          _
        $region200: #{tpu_custom_call.1} parent=11 // pred_fallthru
          _
        // Predicated region
        $region201: #{tpu_custom_call.1} parent=11 // pred_check
          %p1511 = pneg %p1161
        $region202: #{tpu_custom_call.1} parent=11 // pred_check_branch
          %1513 = sbr.rel (%p1511) target = $region204
        $region203: #{tpu_custom_call.1} parent=11 // pred_region
          _
        $region204: #{tpu_custom_call.1} parent=11 // pred_fallthru
          _
        // Predicated region
        $region205: #{tpu_custom_call.1} parent=11 // pred_check
          %p1514 = pneg %p1182
        $region206: #{tpu_custom_call.1} parent=11 // pred_check_branch
          %1516 = sbr.rel (%p1514) target = $region208
        $region207: #{tpu_custom_call.1} parent=11 // pred_region
          _
        $region208: #{tpu_custom_call.1} parent=11 // pred_fallthru
          _
        // Predicated region
        $region209: #{tpu_custom_call.1} parent=11 // pred_check
          %p1517 = pneg %p1203
        $region210: #{tpu_custom_call.1} parent=11 // pred_check_branch
          %1519 = sbr.rel (%p1517) target = $region212
        $region211: #{tpu_custom_call.1} parent=11 // pred_region
          _
        $region212: #{tpu_custom_call.1} parent=11 // pred_fallthru
          _
        // Predicated region
        $region213: #{tpu_custom_call.1} parent=11 // pred_check
          %p1520 = pneg %p1224
        $region214: #{tpu_custom_call.1} parent=11 // pred_check_branch
          %1522 = sbr.rel (%p1520) target = $region216
        $region215: #{tpu_custom_call.1} parent=11 // pred_region
          %1524 = vsyncadd [#allocation8], 0
          %s1526 = sshll.u32 %s103, 4
          %s1527 = int_to_ptr.hbm [resolvable:$true] %s1526
          %s1528 = sshll.u32 [#allocation7], 4
          %s1529 = int_to_ptr.vmem [resolvable:$true] %s1528
          %1531 = dma.hbm_to_vmem [thread:$0]  %s1527, 16, %s1529, [#allocation8]
        $region216: #{tpu_custom_call.1} parent=11 // pred_fallthru
          _
        // Predicated region
        $region217: #{tpu_custom_call.1} parent=11 // pred_check
          %p1532 = pneg %p1245
        $region218: #{tpu_custom_call.1} parent=11 // pred_check_branch
          %1534 = sbr.rel (%p1532) target = $region220
        $region219: #{tpu_custom_call.1} parent=11 // pred_region
          _
        $region220: #{tpu_custom_call.1} parent=11 // pred_fallthru
          _
        // Predicated region
        $region221: #{tpu_custom_call.1} parent=11 // pred_check
          %p1535 = pneg %p1266
        $region222: #{tpu_custom_call.1} parent=11 // pred_check_branch
          %1537 = sbr.rel (%p1535) target = $region224
        $region223: #{tpu_custom_call.1} parent=11 // pred_region
          %1539 = vsyncadd [#allocation11], 0
          %s1541 = sshll.u32 %s107, 4
          %s1542 = int_to_ptr.hbm [resolvable:$true] %s1541
          %s1543 = sshll.u32 [#allocation10], 4
          %s1544 = int_to_ptr.vmem [resolvable:$true] %s1543
          %1546 = dma.hbm_to_vmem [thread:$0]  %s1542, 16, %s1544, [#allocation11]
        $region224: #{tpu_custom_call.1} parent=11 // pred_fallthru
          _
        // Predicated region
        $region225: #{tpu_custom_call.1} parent=11 // pred_check
          %p1547 = pneg %p1287
        $region226: #{tpu_custom_call.1} parent=11 // pred_check_branch
          %1549 = sbr.rel (%p1547) target = $region228
        $region227: #{tpu_custom_call.1} parent=11 // pred_region
          %1551 = vsyncadd [#allocation11], 0
          %s1553 = sshll.u32 %s109, 4
          %s1554 = int_to_ptr.hbm [resolvable:$true] %s1553
          %s1555 = sshll.u32 [#allocation12], 4
          %s1556 = int_to_ptr.vmem [resolvable:$true] %s1555
          %1558 = dma.hbm_to_vmem [thread:$0]  %s1554, 16, %s1556, [#allocation11]
        $region228: #{tpu_custom_call.1} parent=11 // pred_fallthru
          _
        // Predicated region
        $region229: #{tpu_custom_call.1} parent=11 // pred_check
          %p1559 = pneg %p1308
        $region230: #{tpu_custom_call.1} parent=11 // pred_check_branch
          %1561 = sbr.rel (%p1559) target = $region232
        $region231: #{tpu_custom_call.1} parent=11 // pred_region
          %1563 = vsyncadd [#allocation14], 0
          %s1565 = sshll.u32 %s111, 4
          %s1566 = int_to_ptr.hbm [resolvable:$true] %s1565
          %s1567 = sshll.u32 [#allocation13], 4
          %s1568 = int_to_ptr.vmem [resolvable:$true] %s1567
          %1570 = dma.hbm_to_vmem [thread:$0]  %s1566, 16, %s1568, [#allocation14]
        $region232: #{tpu_custom_call.1} parent=11 // pred_fallthru
          _
        // Predicated region
        $region233: #{tpu_custom_call.1} parent=11 // pred_check
          %p1571 = pneg %p1329
        $region234: #{tpu_custom_call.1} parent=11 // pred_check_branch
          %1573 = sbr.rel (%p1571) target = $region236
        $region235: #{tpu_custom_call.1} parent=11 // pred_region
          _
        $region236: #{tpu_custom_call.1} parent=11 // pred_fallthru
          _
      $region12: #{tpu_custom_call.1} parent=5 // pred_fallthru
        _
      %p1574 = scmp.lt.s32.totalorder %s127, 2
      // Predicated region
      $region237: #{tpu_custom_call.1} parent=5 // pred_check
        %p1575 = pneg %p1574
      $region238: #{tpu_custom_call.1} parent=5 // pred_check_branch
        %1577 = sbr.rel (%p1575) target = $region240
      $region239: #{tpu_custom_call.1} parent=5 // pred_region
        // Predicated region
        $region241: #{tpu_custom_call.1} parent=239 // pred_check
          %p1578 = pneg %p147
        $region242: #{tpu_custom_call.1} parent=239 // pred_check_branch
          %1580 = sbr.rel (%p1578) target = $region244
        $region243: #{tpu_custom_call.1} parent=239 // pred_region
          %p1581 = scmp.lt.s32.totalorder %s127, 1
          %s1582 = scalar_select %p1581, %s127, 1
          %s1583 = smul.addr %s1582, 2
          %s1584 = smul.addr %s1583, 8
          %s1585 = scalar_lea.vmem %s1, %s1584
        $region244: #{tpu_custom_call.1} parent=239 // pred_fallthru
          _
      $region240: #{tpu_custom_call.1} parent=5 // pred_fallthru
        _
      %p1586 = scmp.le.s32.totalorder 1, %s127
      %p1587 = scmp.lt.s32.totalorder %s127, 3
      %p1588 = pnand %p1586, %p1587
      %p1589 = pneg %p1588
      // Predicated region
      $region245: #{tpu_custom_call.1} parent=5 // pred_check
        _
      $region246: #{tpu_custom_call.1} parent=5 // pred_check_branch
        %1591 = sbr.rel (%p1588) target = $region248
      $region247: #{tpu_custom_call.1} parent=5 // pred_region
        %s1592 = ssub.s32 %s127, 1
        // Predicated region
        $region249: #{tpu_custom_call.1} parent=247 // pred_check
          %p1593 = pneg %p1224
        $region250: #{tpu_custom_call.1} parent=247 // pred_check_branch
          %1595 = sbr.rel (%p1593) target = $region252
        $region251: #{tpu_custom_call.1} parent=247 // pred_region
          %1597 = dma.done [#allocation8], 16
        $region252: #{tpu_custom_call.1} parent=247 // pred_fallthru
          _
        // Predicated region
        $region253: #{tpu_custom_call.1} parent=247 // pred_check
          %p1598 = pneg %p1266
        $region254: #{tpu_custom_call.1} parent=247 // pred_check_branch
          %1600 = sbr.rel (%p1598) target = $region256
        $region255: #{tpu_custom_call.1} parent=247 // pred_region
          %1602 = dma.done [#allocation11], 16
        $region256: #{tpu_custom_call.1} parent=247 // pred_fallthru
          _
        // Predicated region
        $region257: #{tpu_custom_call.1} parent=247 // pred_check
          %p1603 = pneg %p1287
        $region258: #{tpu_custom_call.1} parent=247 // pred_check_branch
          %1605 = sbr.rel (%p1603) target = $region260
        $region259: #{tpu_custom_call.1} parent=247 // pred_region
          %1607 = dma.done [#allocation11], 16
        $region260: #{tpu_custom_call.1} parent=247 // pred_fallthru
          _
        // Predicated region
        $region261: #{tpu_custom_call.1} parent=247 // pred_check
          %p1608 = pneg %p1308
        $region262: #{tpu_custom_call.1} parent=247 // pred_check_branch
          %1610 = sbr.rel (%p1608) target = $region264
        $region263: #{tpu_custom_call.1} parent=247 // pred_region
          %1612 = dma.done [#allocation14], 16
        $region264: #{tpu_custom_call.1} parent=247 // pred_fallthru
          _
        %p1613 = scmp.lt.s32.totalorder %s132, 1
        %s1614 = scalar_select %p1613, %s132, 1
        %s1615 = smul.addr %s1614, 2
        %s1616 = smul.addr %s1615, 8
        %s1617 = scalar_lea.vmem %s1, %s1616
        %p1618 = pneg %p153
        %p1619 = pneg %p150
        %p1620 = pneg %p174
        %p1621 = pneg %p171
        %p1622 = pneg %p195
        %p1623 = pneg %p192
        %p1624 = pneg %p216
        %p1625 = pneg %p213
        %p1626 = pneg %p237
        %p1627 = pneg %p234
        %p1628 = pneg %p258
        %p1629 = pneg %p255
        %p1630 = pneg %p279
        %p1631 = pneg %p276
        %p1632 = pneg %p300
        %p1633 = pneg %p297
        %p1634 = pneg %p321
        %p1635 = pneg %p318
        %p1636 = pneg %p342
        %p1637 = pneg %p339
        %p1638 = pneg %p363
        %p1639 = pneg %p360
        %p1640 = pneg %p384
        %p1641 = pneg %p381
        %p1642 = pneg %p405
        %p1643 = pneg %p402
        %p1644 = pneg %p426
        %p1645 = pneg %p423
        %p1646 = pneg %p447
        %p1647 = pneg %p444
        %p1648 = pneg %p468
        %p1649 = pneg %p465
        %p1650 = pneg %p489
        %p1651 = pneg %p486
        %p1652 = pneg %p510
        %p1653 = pneg %p507
        %p1654 = pneg %p531
        %p1655 = pneg %p528
        %p1656 = pneg %p552
        %p1657 = pneg %p549
        %p1658 = pneg %p573
        %p1659 = pneg %p570
        %p1660 = pneg %p594
        %p1661 = pneg %p591
        %p1662 = pneg %p615
        %p1663 = pneg %p612
        %p1664 = pneg %p636
        %p1665 = pneg %p633
        %p1666 = pneg %p657
        %p1667 = pneg %p654
        %p1668 = pneg %p678
        %p1669 = pneg %p675
        %p1670 = pneg %p699
        %p1671 = pneg %p696
        %p1672 = pneg %p720
        %p1673 = pneg %p717
        %p1674 = pneg %p741
        %p1675 = pneg %p738
        %p1676 = pneg %p762
        %p1677 = pneg %p759
        %p1678 = pneg %p783
        %p1679 = pneg %p780
        %p1680 = pneg %p804
        %p1681 = pneg %p801
        %p1682 = pneg %p825
        %p1683 = pneg %p822
        %p1684 = pneg %p846
        %p1685 = pneg %p843
        %p1686 = pneg %p867
        %p1687 = pneg %p864
        %p1688 = pneg %p888
        %p1689 = pneg %p885
        %p1690 = pneg %p909
        %p1691 = pneg %p906
        %p1692 = pneg %p930
        %p1693 = pneg %p927
        %p1694 = pneg %p951
        %p1695 = pneg %p948
        %p1696 = pneg %p972
        %p1697 = pneg %p969
        %p1698 = pneg %p993
        %p1699 = pneg %p990
        %p1700 = pneg %p1014
        %p1701 = pneg %p1011
        %p1702 = pneg %p1035
        %p1703 = pneg %p1032
        %p1704 = pneg %p1056
        %p1705 = pneg %p1053
        %p1706 = pneg %p1077
        %p1707 = pneg %p1074
        %p1708 = pneg %p1098
        %p1709 = pneg %p1095
        %p1710 = pneg %p1119
        %p1711 = pneg %p1116
        %p1712 = pneg %p1140
        %p1713 = pneg %p1137
        %p1714 = pneg %p1161
        %p1715 = pneg %p1158
        %p1716 = pneg %p1182
        %p1717 = pneg %p1179
        %p1718 = pneg %p1203
        %p1719 = pneg %p1200
        %p1720 = pneg %p1224
        %p1721 = pneg %p1221
        %p1722 = pneg %p1245
        %p1723 = pneg %p1242
        %p1724 = pneg %p1266
        %p1725 = pneg %p1263
        %p1726 = pneg %p1287
        %p1727 = pneg %p1284
        %p1728 = pneg %p1308
        %p1729 = pneg %p1305
        %p1730 = pneg %p1329
        %p1731 = pneg %p1326
        %p1732 = pneg %p1355
        %p1733 = pneg %p1352
        %s1734 = sand.u32 %s1342, 1
        %s1735 = scalar_lea.sflag [#allocation9], %s1734
        %s1736 = sand.u32 %s1342, 1
        %s1737 = smul.addr %s1736, 16
        %s1738 = scalar_lea.vmem [#allocation15], %s1737
        %p1739 = scmp.lt.s32.totalorder %s132, 1
        %s1740 = scalar_select %p1739, %s132, 1
        %s1741 = smul.addr %s1740, 2
        %s1742 = smul.addr %s1741, 8
        %s1743 = scalar_lea.vmem %s1, %s1742
        %vm1745 = vcmask 125952
        %1746 = vst.msk [vmem:[#allocation2] sm:$0xf] %vm1745, 0.0
        %1747 = vst.msk [vmem:[#allocation2 + $0x14] sm:$0xf] %vm1745, 0.0
        %v1748 = vld [vmem:[%s1743] sm:$0xff]
        %v1749 = vld [vmem:[%s1743 + $0x8] sm:$0xff]
        %v1750 = vld [vmem:[%s113] sm:$0xf]
        %v1751 = vld [vmem:[%s113 + $0x4] sm:$0xf]
        %v1752 = vld [vmem:[%s113 + $0x8] sm:$0xf]
        %v1753 = vld [vmem:[%s113 + $0xc] sm:$0xf]
        %v1754 = vld [vmem:[%s113 + $0x10] sm:$0xf]
        %v1755 = vld [vmem:[%s113 + $0x14] sm:$0xf]
        %v1756 = vld [vmem:[%s113 + $0x18] sm:$0xf]
        %v1757 = vld [vmem:[%s113 + $0x1c] sm:$0xf]
        %v1758 = vld [vmem:[%s113 + $0x20] sm:$0xf]
        %v1759 = vld [vmem:[%s113 + $0x24] sm:$0xf]
        %v1760 = vld [vmem:[#allocation10] sm:$0x1]
        %v1761 = vld [vmem:[#allocation12] sm:$0x1]
        %v1762 = vld [vmem:[#allocation13] sm:$0x1]
        %vm1763 = vcmask 130048
        %1764 = vst.msk [vmem:[#allocation2 + $0x4] sm:$0xff] %vm1763, %v1748
        %1765 = vst.msk [vmem:[#allocation2 + $0xc] sm:$0xff] %vm1763, %v1749
        %v1766 = vld [vmem:[#allocation2 + $0x2] sm:$0xff]
        %v1767 = vld [vmem:[#allocation2 + $0xa] sm:$0xff]
        %v1768 = vpack.c.bf16 %v1766, %v1766
        %v1769 = vpack.c.bf16 %v1767, %v1767
        %1770 = vst.msk [vmem:[#allocation3] sm:$0xf] %vm1745, %v1768
        %1771 = vst.msk [vmem:[#allocation3 + $0x4] sm:$0xf] %vm1745, %v1769
        %v1772 = vld [vmem:[#allocation2 + $0x3] sm:$0xff]
        %v1773 = vld [vmem:[#allocation2 + $0xb] sm:$0xff]
        %v1774 = vpack.c.bf16 %v1772, %v1772
        %v1775 = vpack.c.bf16 %v1773, %v1773
        %1778 = vrot.lane.b32.xlu0 %v1774, 16
        %v1779 = vpop.permute.xlu0 %1778
        %1780 = vrot.lane.b32.xlu0 %v1775, 16
        %v1781 = vpop.permute.xlu0 %1780
        %vm1784 = vcmask 257152
        %1785 = vst.msk [vmem:[#allocation3] sm:$0xf] %vm1784, %v1779
        %1786 = vst.msk [vmem:[#allocation3 + $0x4] sm:$0xf] %vm1784, %v1781
        %v1787 = vld [vmem:[#allocation2 + $0x4] sm:$0xff]
        %v1788 = vld [vmem:[#allocation2 + $0xc] sm:$0xff]
        %v1789 = vpack.c.bf16 %v1787, %v1787
        %v1790 = vpack.c.bf16 %v1788, %v1788
        %1793 = vrot.lane.b32.xlu0 %v1789, 32
        %v1794 = vpop.permute.xlu0 %1793
        %1795 = vrot.lane.b32.xlu0 %v1790, 32
        %v1796 = vpop.permute.xlu0 %1795
        %vm1799 = vcmask 388352
        %1800 = vst.msk [vmem:[#allocation3] sm:$0xf] %vm1799, %v1794
        %1801 = vst.msk [vmem:[#allocation3 + $0x4] sm:$0xf] %vm1799, %v1796
        %v1802 = vld [vmem:[#allocation2 + $0x5] sm:$0xff]
        %v1803 = vld [vmem:[#allocation2 + $0xd] sm:$0xff]
        %v1804 = vpack.c.bf16 %v1802, %v1802
        %v1805 = vpack.c.bf16 %v1803, %v1803
        %1808 = vrot.lane.b32.xlu0 %v1804, 48
        %v1809 = vpop.permute.xlu0 %1808
        %1810 = vrot.lane.b32.xlu0 %v1805, 48
        %v1811 = vpop.permute.xlu0 %1810
        %vm1814 = vcmask 519552
        %1815 = vst.msk [vmem:[#allocation3] sm:$0xf] %vm1814, %v1809
        %1816 = vst.msk [vmem:[#allocation3 + $0x4] sm:$0xf] %vm1814, %v1811
        %v1817 = vld [vmem:[#allocation2 + $0x6] sm:$0xff]
        %v1818 = vld [vmem:[#allocation2 + $0xe] sm:$0xff]
        %v1819 = vpack.c.bf16 %v1817, %v1817
        %v1820 = vpack.c.bf16 %v1818, %v1818
        %1823 = vrot.lane.b32.xlu0 %v1819, 64
        %v1824 = vpop.permute.xlu0 %1823
        %1825 = vrot.lane.b32.xlu0 %v1820, 64
        %v1826 = vpop.permute.xlu0 %1825
        %vm1829 = vcmask 650752
        %1830 = vst.msk [vmem:[#allocation3] sm:$0xf] %vm1829, %v1824
        %1831 = vst.msk [vmem:[#allocation3 + $0x4] sm:$0xf] %vm1829, %v1826
        %v1832 = vld [vmem:[#allocation3] sm:$0xf]
        %v1833 = vld [vmem:[#allocation3 + $0x4] sm:$0xf]
        %v1835 = vperm.slane %v1760, 0
        %v1839 = vunpack.c.l.b16 %v1832
        %v1840 = vunpack.c.l.b16 %v1833
        %v1841 = vpack.c.b16 %v1840, %v1839
        %v1852 = vunpack.c.l.b16 %v1750
        %v1853 = vunpack.c.l.b16 %v1751
        %v1854 = vunpack.c.l.b16 %v1752
        %v1855 = vunpack.c.l.b16 %v1753
        %v1856 = vunpack.c.l.b16 %v1754
        %v1857 = vunpack.c.l.b16 %v1755
        %v1858 = vunpack.c.l.b16 %v1756
        %v1859 = vunpack.c.l.b16 %v1757
        %v1860 = vunpack.c.l.b16 %v1758
        %v1861 = vunpack.c.l.b16 %v1759
        %v1862 = vpack.c.b16 %v1853, %v1852
        %v1863 = vpack.c.b16 %v1855, %v1854
        %v1864 = vpack.c.b16 %v1857, %v1856
        %v1865 = vpack.c.b16 %v1859, %v1858
        %v1866 = vpack.c.b16 %v1861, %v1860
        %vm1872 = vcmask 654336
        %v1874 = vsel %vm1872, %v1841, 0
        %1876 = vmatpush.bf16.msra.mxu0 0
        %1877 = vmatpush.bf16.msra.mxu0 0
        %1878 = vmatpush.bf16.msra.mxu0 0
        %1879 = vmatpush.bf16.msra.mxu0 %v1866
        %1880 = vmatpush.bf16.msra.mxu0 %v1865
        %1881 = vmatpush.bf16.msra.mxu0 %v1864
        %1882 = vmatpush.bf16.msra.mxu0 %v1863
        %1883 = vmatpush.bf16.msra.mxu0 %v1862
        %1884 = vmatmul.bf16.gmra.mxu0 %v1874
        %v1885 = vpop.f32.mrf.mxu0
        %v1886 = vadd.f32 %v1835, %v1885
        %v1887 = vpop.f32.mrf.mxu0
        %v1888 = vadd.f32 %v1835, %v1887
        %1889 = vdwg.mxu0
        %v1890 = vmax.f32 %v1886, 0.0
        %v1891 = vmax.f32 %v1888, 0.0
        %v1893 = vperm.slane %v1761, 0
        %v1895 = vmul.f32 %v1890, %v1893
        %v1896 = vmul.f32 %v1891, %v1893
        %v1898 = vperm.slane %v1762, 0
        %v1900 = vadd.f32 %v1895, %v1898
        %v1901 = vadd.f32 %v1896, %v1898
        %v1902 = vld [vmem:[%s25] sm:$0xf]
        %v1903 = vld [vmem:[%s25 + $0x4] sm:$0xf]
        %v1904 = vld [vmem:[%s25 + $0x8] sm:$0xf]
        %v1905 = vld [vmem:[%s25 + $0xc] sm:$0xf]
        %v1906 = vld [vmem:[%s19] sm:$0x1]
        %v1907 = vld [vmem:[%s21] sm:$0x1]
        %v1908 = vld [vmem:[%s23] sm:$0x1]
        %v1909 = vpack.c.bf16 %v1901, %v1900
        %v1911 = vperm.slane %v1906, 0
        %v1917 = vunpack.c.l.b16 %v1902
        %v1918 = vunpack.c.l.b16 %v1903
        %v1919 = vunpack.c.l.b16 %v1904
        %v1920 = vunpack.c.l.b16 %v1905
        %v1921 = vpack.c.b16 %v1918, %v1917
        %v1922 = vpack.c.b16 %v1920, %v1919
        %vm1925 = vcmask 261120
        %v1927 = vsel %vm1925, %v1909, 0
        %1929 = vmatpush.bf16.msra.mxu0 0
        %1930 = vmatpush.bf16.msra.mxu0 0
        %1931 = vmatpush.bf16.msra.mxu0 0
        %1932 = vmatpush.bf16.msra.mxu0 0
        %1933 = vmatpush.bf16.msra.mxu0 0
        %1934 = vmatpush.bf16.msra.mxu0 0
        %1935 = vmatpush.bf16.msra.mxu0 %v1922
        %1936 = vmatpush.bf16.msra.mxu0 %v1921
        %1937 = vmatmul.bf16.gmra.mxu0 %v1927
        %v1938 = vpop.f32.mrf.mxu0
        %v1939 = vadd.f32 %v1911, %v1938
        %v1940 = vpop.f32.mrf.mxu0
        %v1941 = vadd.f32 %v1911, %v1940
        %1942 = vdwg.mxu0
        %v1943 = vmax.f32 %v1939, 0.0
        %v1944 = vmax.f32 %v1941, 0.0
        %v1946 = vperm.slane %v1907, 0
        %v1948 = vmul.f32 %v1943, %v1946
        %v1949 = vmul.f32 %v1944, %v1946
        %v1951 = vperm.slane %v1908, 0
        %v1953 = vadd.f32 %v1948, %v1951
        %v1954 = vadd.f32 %v1949, %v1951
        %1955 = vst.msk [vmem:[#allocation4] sm:$0xff] %vm1925, %v1953
        %1956 = vst.msk [vmem:[#allocation4 + $0x8] sm:$0xff] %vm1925, %v1954
        %v1957 = vld [vmem:[#allocation4] sm:$0xff]
        %v1958 = vld [vmem:[#allocation4 + $0x8] sm:$0xff]
        %v1959 = vld [vmem:[%s9] sm:$0xf]
        %v1960 = vld [vmem:[%s9 + $0x4] sm:$0x3]
        %v1961 = vld [vmem:[%s3] sm:$0x1]
        %v1962 = vld [vmem:[%s5] sm:$0x1]
        %v1963 = vld [vmem:[%s7] sm:$0x1]
        %vm1964 = vcmask 31744
        %1965 = vst.msk [vmem:[#allocation2 + $0x4] sm:$0xff] %vm1964, %v1957
        %1966 = vst.msk [vmem:[#allocation2 + $0xc] sm:$0xff] %vm1964, %v1958
        %v1967 = vld [vmem:[#allocation2 + $0x2] sm:$0xff]
        %v1968 = vld [vmem:[#allocation2 + $0xa] sm:$0xff]
        %v1969 = vpack.c.bf16 %v1967, %v1967
        %v1970 = vpack.c.bf16 %v1968, %v1968
        %vm1971 = vcmask 27648
        %1972 = vst.msk [vmem:[#allocation3] sm:$0xf] %vm1971, %v1969
        %1973 = vst.msk [vmem:[#allocation3 + $0x4] sm:$0xf] %vm1971, %v1970
        %v1974 = vld [vmem:[#allocation2 + $0x4] sm:$0xff]
        %v1975 = vld [vmem:[#allocation2 + $0xc] sm:$0xff]
        %v1976 = vpack.c.bf16 %v1974, %v1974
        %v1977 = vpack.c.bf16 %v1975, %v1975
        %1980 = vrot.lane.b32.xlu0 %v1976, 4
        %v1981 = vpop.permute.xlu0 %1980
        %1982 = vrot.lane.b32.xlu0 %v1977, 4
        %v1983 = vpop.permute.xlu0 %1982
        %vm1986 = vcmask 60448
        %1987 = vst.msk [vmem:[#allocation3] sm:$0xf] %vm1986, %v1981
        %1988 = vst.msk [vmem:[#allocation3 + $0x4] sm:$0xf] %vm1986, %v1983
        %v1989 = vld [vmem:[#allocation2 + $0x6] sm:$0xff]
        %v1990 = vld [vmem:[#allocation2 + $0xe] sm:$0xff]
        %v1991 = vpack.c.bf16 %v1989, %v1989
        %v1992 = vpack.c.bf16 %v1990, %v1990
        %1995 = vrot.lane.b32.xlu0 %v1991, 8
        %v1996 = vpop.permute.xlu0 %1995
        %1997 = vrot.lane.b32.xlu0 %v1992, 8
        %v1998 = vpop.permute.xlu0 %1997
        %vm2001 = vcmask 93248
        %2002 = vst.msk [vmem:[#allocation3] sm:$0xf] %vm2001, %v1996
        %2003 = vst.msk [vmem:[#allocation3 + $0x4] sm:$0xf] %vm2001, %v1998
        %v2004 = vld [vmem:[#allocation3] sm:$0xf]
        %v2005 = vld [vmem:[#allocation3 + $0x4] sm:$0xf]
        %v2007 = vperm.slane %v1961, 0
        %v2011 = vunpack.c.l.b16 %v2004
        %v2012 = vunpack.c.l.b16 %v2005
        %v2013 = vpack.c.b16 %v2012, %v2011
        %v2016 = vunpack.c.l.b16 %v1959
        %v2017 = vunpack.c.l.b16 %v1960
        %v2018 = vpack.c.b16 %v2017, %v2016
        %vm2019 = vcmask 97280
        %v2021 = vsel %vm2019, %v2013, 0
        %vm2023 = vcmask 1045504
        %v2025 = vsel %vm2023, %v2018, 0
        %2027 = vmatpush.bf16.msra.mxu0 0
        %2028 = vmatpush.bf16.msra.mxu0 0
        %2029 = vmatpush.bf16.msra.mxu0 0
        %2030 = vmatpush.bf16.msra.mxu0 0
        %2031 = vmatpush.bf16.msra.mxu0 0
        %2032 = vmatpush.bf16.msra.mxu0 0
        %2033 = vmatpush.bf16.msra.mxu0 0
        %2034 = vmatpush.bf16.msra.mxu0 %v2025
        %2035 = vmatmul.bf16.gmra.mxu0 %v2021
        %v2036 = vpop.f32.mrf.mxu0
        %v2037 = vadd.f32 %v2007, %v2036
        %v2038 = vpop.f32.mrf.mxu0
        %v2039 = vadd.f32 %v2007, %v2038
        %2040 = vdwg.mxu0
        %v2041 = vmax.f32 %v2037, 0.0
        %v2042 = vmax.f32 %v2039, 0.0
        %v2044 = vperm.slane %v1962, 0
        %v2046 = vmul.f32 %v2041, %v2044
        %v2047 = vmul.f32 %v2042, %v2044
        %v2049 = vperm.slane %v1963, 0
        %v2051 = vadd.f32 %v2046, %v2049
        %v2052 = vadd.f32 %v2047, %v2049
        %v2053 = vpack.c.bf16 %v2051, %v2051
        %v2054 = vpack.c.bf16 %v2052, %v2052
        %2055 = vst.msk [vmem:[#allocation5] sm:$0xf] %vm1971, %v2053
        %2056 = vst.msk [vmem:[#allocation5 + $0x4] sm:$0xf] %vm1971, %v2054
        %v2057 = vld [vmem:[#allocation4] sm:$0xff]
        %v2058 = vld [vmem:[#allocation4 + $0x8] sm:$0xff]
        %2061 = vrot.lane.b32.xlu0 %v2057, 124
        %v2062 = vpop.permute.xlu0 %2061
        %2063 = vrot.lane.b32.xlu0 %v2058, 124
        %v2064 = vpop.permute.xlu0 %2063
        %v2067 = vadd.f32 %v2051, %v2062
        %v2068 = vadd.f32 %v2052, %v2064
        %s2069 = scalar_lea.vmem %s9, 8
        %v2070 = vld [vmem:[%s2069] sm:$0xf]
        %v2071 = vld [vmem:[%s2069 + $0x4] sm:$0x3]
        %s2072 = scalar_lea.vmem %s3, 1
        %v2073 = vld [vmem:[%s2072] sm:$0x1]
        %s2074 = scalar_lea.vmem %s5, 1
        %v2075 = vld [vmem:[%s2074] sm:$0x1]
        %s2076 = scalar_lea.vmem %s7, 1
        %v2077 = vld [vmem:[%s2076] sm:$0x1]
        %2078 = vst.msk [vmem:[#allocation2 + $0x4] sm:$0xff] %vm1964, %v2067
        %2079 = vst.msk [vmem:[#allocation2 + $0xc] sm:$0xff] %vm1964, %v2068
        %v2080 = vld [vmem:[#allocation2 + $0x2] sm:$0xff]
        %v2081 = vld [vmem:[#allocation2 + $0xa] sm:$0xff]
        %v2082 = vpack.c.bf16 %v2080, %v2080
        %v2083 = vpack.c.bf16 %v2081, %v2081
        %2084 = vst.msk [vmem:[#allocation3] sm:$0xf] %vm1971, %v2082
        %2085 = vst.msk [vmem:[#allocation3 + $0x4] sm:$0xf] %vm1971, %v2083
        %v2086 = vld [vmem:[#allocation2 + $0x4] sm:$0xff]
        %v2087 = vld [vmem:[#allocation2 + $0xc] sm:$0xff]
        %v2088 = vpack.c.bf16 %v2086, %v2086
        %v2089 = vpack.c.bf16 %v2087, %v2087
        %2092 = vrot.lane.b32.xlu0 %v2088, 4
        %v2093 = vpop.permute.xlu0 %2092
        %2094 = vrot.lane.b32.xlu0 %v2089, 4
        %v2095 = vpop.permute.xlu0 %2094
        %2098 = vst.msk [vmem:[#allocation3] sm:$0xf] %vm1986, %v2093
        %2099 = vst.msk [vmem:[#allocation3 + $0x4] sm:$0xf] %vm1986, %v2095
        %v2100 = vld [vmem:[#allocation2 + $0x6] sm:$0xff]
        %v2101 = vld [vmem:[#allocation2 + $0xe] sm:$0xff]
        %v2102 = vpack.c.bf16 %v2100, %v2100
        %v2103 = vpack.c.bf16 %v2101, %v2101
        %2106 = vrot.lane.b32.xlu0 %v2102, 8
        %v2107 = vpop.permute.xlu0 %2106
        %2108 = vrot.lane.b32.xlu0 %v2103, 8
        %v2109 = vpop.permute.xlu0 %2108
        %2112 = vst.msk [vmem:[#allocation3] sm:$0xf] %vm2001, %v2107
        %2113 = vst.msk [vmem:[#allocation3 + $0x4] sm:$0xf] %vm2001, %v2109
        %v2114 = vld [vmem:[#allocation3] sm:$0xf]
        %v2115 = vld [vmem:[#allocation3 + $0x4] sm:$0xf]
        %v2117 = vperm.slane %v2073, 0
        %v2121 = vunpack.c.l.b16 %v2114
        %v2122 = vunpack.c.l.b16 %v2115
        %v2123 = vpack.c.b16 %v2122, %v2121
        %v2126 = vunpack.c.l.b16 %v2070
        %v2127 = vunpack.c.l.b16 %v2071
        %v2128 = vpack.c.b16 %v2127, %v2126
        %v2130 = vsel %vm2019, %v2123, 0
        %v2133 = vsel %vm2023, %v2128, 0
        %2135 = vmatpush.bf16.msra.mxu0 0
        %2136 = vmatpush.bf16.msra.mxu0 0
        %2137 = vmatpush.bf16.msra.mxu0 0
        %2138 = vmatpush.bf16.msra.mxu0 0
        %2139 = vmatpush.bf16.msra.mxu0 0
        %2140 = vmatpush.bf16.msra.mxu0 0
        %2141 = vmatpush.bf16.msra.mxu0 0
        %2142 = vmatpush.bf16.msra.mxu0 %v2133
        %2143 = vmatmul.bf16.gmra.mxu0 %v2130
        %v2144 = vpop.f32.mrf.mxu0
        %v2145 = vadd.f32 %v2117, %v2144
        %v2146 = vpop.f32.mrf.mxu0
        %v2147 = vadd.f32 %v2117, %v2146
        %2148 = vdwg.mxu0
        %v2149 = vmax.f32 %v2145, 0.0
        %v2150 = vmax.f32 %v2147, 0.0
        %v2152 = vperm.slane %v2075, 0
        %v2154 = vmul.f32 %v2149, %v2152
        %v2155 = vmul.f32 %v2150, %v2152
        %v2157 = vperm.slane %v2077, 0
        %v2159 = vadd.f32 %v2154, %v2157
        %v2160 = vadd.f32 %v2155, %v2157
        %v2161 = vpack.c.bf16 %v2159, %v2159
        %v2162 = vpack.c.bf16 %v2160, %v2160
        %2165 = vrot.lane.b32.xlu0 %v2161, 4
        %v2166 = vpop.permute.xlu0 %2165
        %2167 = vrot.lane.b32.xlu0 %v2162, 4
        %v2168 = vpop.permute.xlu0 %2167
        %2171 = vst.msk [vmem:[#allocation5] sm:$0xf] %vm1986, %v2166
        %2172 = vst.msk [vmem:[#allocation5 + $0x4] sm:$0xf] %vm1986, %v2168
        %v2173 = vld [vmem:[#allocation4] sm:$0xff]
        %v2174 = vld [vmem:[#allocation4 + $0x8] sm:$0xff]
        %2177 = vrot.lane.b32.xlu0 %v2173, 120
        %v2178 = vpop.permute.xlu0 %2177
        %2179 = vrot.lane.b32.xlu0 %v2174, 120
        %v2180 = vpop.permute.xlu0 %2179
        %v2183 = vadd.f32 %v2159, %v2178
        %v2184 = vadd.f32 %v2160, %v2180
        %s2185 = scalar_lea.vmem %s9, 16
        %v2186 = vld [vmem:[%s2185] sm:$0xf]
        %v2187 = vld [vmem:[%s2185 + $0x4] sm:$0x3]
        %s2188 = scalar_lea.vmem %s3, 2
        %v2189 = vld [vmem:[%s2188] sm:$0x1]
        %s2190 = scalar_lea.vmem %s5, 2
        %v2191 = vld [vmem:[%s2190] sm:$0x1]
        %s2192 = scalar_lea.vmem %s7, 2
        %v2193 = vld [vmem:[%s2192] sm:$0x1]
        %2194 = vst.msk [vmem:[#allocation2 + $0x4] sm:$0xff] %vm1964, %v2183
        %2195 = vst.msk [vmem:[#allocation2 + $0xc] sm:$0xff] %vm1964, %v2184
        %v2196 = vld [vmem:[#allocation2 + $0x2] sm:$0xff]
        %v2197 = vld [vmem:[#allocation2 + $0xa] sm:$0xff]
        %v2198 = vpack.c.bf16 %v2196, %v2196
        %v2199 = vpack.c.bf16 %v2197, %v2197
        %2200 = vst.msk [vmem:[#allocation3] sm:$0xf] %vm1971, %v2198
        %2201 = vst.msk [vmem:[#allocation3 + $0x4] sm:$0xf] %vm1971, %v2199
        %v2202 = vld [vmem:[#allocation2 + $0x4] sm:$0xff]
        %v2203 = vld [vmem:[#allocation2 + $0xc] sm:$0xff]
        %v2204 = vpack.c.bf16 %v2202, %v2202
        %v2205 = vpack.c.bf16 %v2203, %v2203
        %2208 = vrot.lane.b32.xlu0 %v2204, 4
        %v2209 = vpop.permute.xlu0 %2208
        %2210 = vrot.lane.b32.xlu0 %v2205, 4
        %v2211 = vpop.permute.xlu0 %2210
        %2214 = vst.msk [vmem:[#allocation3] sm:$0xf] %vm1986, %v2209
        %2215 = vst.msk [vmem:[#allocation3 + $0x4] sm:$0xf] %vm1986, %v2211
        %v2216 = vld [vmem:[#allocation2 + $0x6] sm:$0xff]
        %v2217 = vld [vmem:[#allocation2 + $0xe] sm:$0xff]
        %v2218 = vpack.c.bf16 %v2216, %v2216
        %v2219 = vpack.c.bf16 %v2217, %v2217
        %2222 = vrot.lane.b32.xlu0 %v2218, 8
        %v2223 = vpop.permute.xlu0 %2222
        %2224 = vrot.lane.b32.xlu0 %v2219, 8
        %v2225 = vpop.permute.xlu0 %2224
        %2228 = vst.msk [vmem:[#allocation3] sm:$0xf] %vm2001, %v2223
        %2229 = vst.msk [vmem:[#allocation3 + $0x4] sm:$0xf] %vm2001, %v2225
        %v2230 = vld [vmem:[#allocation3] sm:$0xf]
        %v2231 = vld [vmem:[#allocation3 + $0x4] sm:$0xf]
        %v2233 = vperm.slane %v2189, 0
        %v2237 = vunpack.c.l.b16 %v2230
        %v2238 = vunpack.c.l.b16 %v2231
        %v2239 = vpack.c.b16 %v2238, %v2237
        %v2242 = vunpack.c.l.b16 %v2186
        %v2243 = vunpack.c.l.b16 %v2187
        %v2244 = vpack.c.b16 %v2243, %v2242
        %v2246 = vsel %vm2019, %v2239, 0
        %v2249 = vsel %vm2023, %v2244, 0
        %2251 = vmatpush.bf16.msra.mxu0 0
        %2252 = vmatpush.bf16.msra.mxu0 0
        %2253 = vmatpush.bf16.msra.mxu0 0
        %2254 = vmatpush.bf16.msra.mxu0 0
        %2255 = vmatpush.bf16.msra.mxu0 0
        %2256 = vmatpush.bf16.msra.mxu0 0
        %2257 = vmatpush.bf16.msra.mxu0 0
        %2258 = vmatpush.bf16.msra.mxu0 %v2249
        %2259 = vmatmul.bf16.gmra.mxu0 %v2246
        %v2260 = vpop.f32.mrf.mxu0
        %v2261 = vadd.f32 %v2233, %v2260
        %v2262 = vpop.f32.mrf.mxu0
        %v2263 = vadd.f32 %v2233, %v2262
        %2264 = vdwg.mxu0
        %v2265 = vmax.f32 %v2261, 0.0
        %v2266 = vmax.f32 %v2263, 0.0
        %v2268 = vperm.slane %v2191, 0
        %v2270 = vmul.f32 %v2265, %v2268
        %v2271 = vmul.f32 %v2266, %v2268
        %v2273 = vperm.slane %v2193, 0
        %v2275 = vadd.f32 %v2270, %v2273
        %v2276 = vadd.f32 %v2271, %v2273
        %v2277 = vpack.c.bf16 %v2275, %v2275
        %v2278 = vpack.c.bf16 %v2276, %v2276
        %2281 = vrot.lane.b32.xlu0 %v2277, 8
        %v2282 = vpop.permute.xlu0 %2281
        %2283 = vrot.lane.b32.xlu0 %v2278, 8
        %v2284 = vpop.permute.xlu0 %2283
        %2287 = vst.msk [vmem:[#allocation5] sm:$0xf] %vm2001, %v2282
        %2288 = vst.msk [vmem:[#allocation5 + $0x4] sm:$0xf] %vm2001, %v2284
        %v2289 = vld [vmem:[#allocation4] sm:$0xff]
        %v2290 = vld [vmem:[#allocation4 + $0x8] sm:$0xff]
        %2293 = vrot.lane.b32.xlu0 %v2289, 116
        %v2294 = vpop.permute.xlu0 %2293
        %2295 = vrot.lane.b32.xlu0 %v2290, 116
        %v2296 = vpop.permute.xlu0 %2295
        %v2299 = vadd.f32 %v2275, %v2294
        %v2300 = vadd.f32 %v2276, %v2296
        %s2301 = scalar_lea.vmem %s9, 24
        %v2302 = vld [vmem:[%s2301] sm:$0xf]
        %v2303 = vld [vmem:[%s2301 + $0x4] sm:$0x3]
        %s2304 = scalar_lea.vmem %s3, 3
        %v2305 = vld [vmem:[%s2304] sm:$0x1]
        %s2306 = scalar_lea.vmem %s5, 3
        %v2307 = vld [vmem:[%s2306] sm:$0x1]
        %s2308 = scalar_lea.vmem %s7, 3
        %v2309 = vld [vmem:[%s2308] sm:$0x1]
        %2310 = vst.msk [vmem:[#allocation2 + $0x4] sm:$0xff] %vm1964, %v2299
        %2311 = vst.msk [vmem:[#allocation2 + $0xc] sm:$0xff] %vm1964, %v2300
        %v2312 = vld [vmem:[#allocation2 + $0x2] sm:$0xff]
        %v2313 = vld [vmem:[#allocation2 + $0xa] sm:$0xff]
        %v2314 = vpack.c.bf16 %v2312, %v2312
        %v2315 = vpack.c.bf16 %v2313, %v2313
        %2316 = vst.msk [vmem:[#allocation3] sm:$0xf] %vm1971, %v2314
        %2317 = vst.msk [vmem:[#allocation3 + $0x4] sm:$0xf] %vm1971, %v2315
        %v2318 = vld [vmem:[#allocation2 + $0x4] sm:$0xff]
        %v2319 = vld [vmem:[#allocation2 + $0xc] sm:$0xff]
        %v2320 = vpack.c.bf16 %v2318, %v2318
        %v2321 = vpack.c.bf16 %v2319, %v2319
        %2324 = vrot.lane.b32.xlu0 %v2320, 4
        %v2325 = vpop.permute.xlu0 %2324
        %2326 = vrot.lane.b32.xlu0 %v2321, 4
        %v2327 = vpop.permute.xlu0 %2326
        %2330 = vst.msk [vmem:[#allocation3] sm:$0xf] %vm1986, %v2325
        %2331 = vst.msk [vmem:[#allocation3 + $0x4] sm:$0xf] %vm1986, %v2327
        %v2332 = vld [vmem:[#allocation2 + $0x6] sm:$0xff]
        %v2333 = vld [vmem:[#allocation2 + $0xe] sm:$0xff]
        %v2334 = vpack.c.bf16 %v2332, %v2332
        %v2335 = vpack.c.bf16 %v2333, %v2333
        %2338 = vrot.lane.b32.xlu0 %v2334, 8
        %v2339 = vpop.permute.xlu0 %2338
        %2340 = vrot.lane.b32.xlu0 %v2335, 8
        %v2341 = vpop.permute.xlu0 %2340
        %2344 = vst.msk [vmem:[#allocation3] sm:$0xf] %vm2001, %v2339
        %2345 = vst.msk [vmem:[#allocation3 + $0x4] sm:$0xf] %vm2001, %v2341
        %v2346 = vld [vmem:[#allocation3] sm:$0xf]
        %v2347 = vld [vmem:[#allocation3 + $0x4] sm:$0xf]
        %v2349 = vperm.slane %v2305, 0
        %v2353 = vunpack.c.l.b16 %v2346
        %v2354 = vunpack.c.l.b16 %v2347
        %v2355 = vpack.c.b16 %v2354, %v2353
        %v2358 = vunpack.c.l.b16 %v2302
        %v2359 = vunpack.c.l.b16 %v2303
        %v2360 = vpack.c.b16 %v2359, %v2358
        %v2362 = vsel %vm2019, %v2355, 0
        %v2365 = vsel %vm2023, %v2360, 0
        %2367 = vmatpush.bf16.msra.mxu0 0
        %2368 = vmatpush.bf16.msra.mxu0 0
        %2369 = vmatpush.bf16.msra.mxu0 0
        %2370 = vmatpush.bf16.msra.mxu0 0
        %2371 = vmatpush.bf16.msra.mxu0 0
        %2372 = vmatpush.bf16.msra.mxu0 0
        %2373 = vmatpush.bf16.msra.mxu0 0
        %2374 = vmatpush.bf16.msra.mxu0 %v2365
        %2375 = vmatmul.bf16.gmra.mxu0 %v2362
        %v2376 = vpop.f32.mrf.mxu0
        %v2377 = vadd.f32 %v2349, %v2376
        %v2378 = vpop.f32.mrf.mxu0
        %v2379 = vadd.f32 %v2349, %v2378
        %2380 = vdwg.mxu0
        %v2381 = vmax.f32 %v2377, 0.0
        %v2382 = vmax.f32 %v2379, 0.0
        %v2384 = vperm.slane %v2307, 0
        %v2386 = vmul.f32 %v2381, %v2384
        %v2387 = vmul.f32 %v2382, %v2384
        %v2389 = vperm.slane %v2309, 0
        %v2391 = vadd.f32 %v2386, %v2389
        %v2392 = vadd.f32 %v2387, %v2389
        %v2393 = vpack.c.bf16 %v2391, %v2391
        %v2394 = vpack.c.bf16 %v2392, %v2392
        %2397 = vrot.lane.b32.xlu0 %v2393, 12
        %v2398 = vpop.permute.xlu0 %2397
        %2399 = vrot.lane.b32.xlu0 %v2394, 12
        %v2400 = vpop.permute.xlu0 %2399
        %vm2403 = vcmask 126048
        %2404 = vst.msk [vmem:[#allocation5] sm:$0xf] %vm2403, %v2398
        %2405 = vst.msk [vmem:[#allocation5 + $0x4] sm:$0xf] %vm2403, %v2400
        %v2406 = vld [vmem:[#allocation4] sm:$0xff]
        %v2407 = vld [vmem:[#allocation4 + $0x8] sm:$0xff]
        %2410 = vrot.lane.b32.xlu0 %v2406, 112
        %v2411 = vpop.permute.xlu0 %2410
        %2412 = vrot.lane.b32.xlu0 %v2407, 112
        %v2413 = vpop.permute.xlu0 %2412
        %v2416 = vadd.f32 %v2391, %v2411
        %v2417 = vadd.f32 %v2392, %v2413
        %s2418 = scalar_lea.vmem %s9, 32
        %v2419 = vld [vmem:[%s2418] sm:$0xf]
        %v2420 = vld [vmem:[%s2418 + $0x4] sm:$0x3]
        %s2421 = scalar_lea.vmem %s3, 4
        %v2422 = vld [vmem:[%s2421] sm:$0x1]
        %s2423 = scalar_lea.vmem %s5, 4
        %v2424 = vld [vmem:[%s2423] sm:$0x1]
        %s2425 = scalar_lea.vmem %s7, 4
        %v2426 = vld [vmem:[%s2425] sm:$0x1]
        %2427 = vst.msk [vmem:[#allocation2 + $0x4] sm:$0xff] %vm1964, %v2416
        %2428 = vst.msk [vmem:[#allocation2 + $0xc] sm:$0xff] %vm1964, %v2417
        %v2429 = vld [vmem:[#allocation2 + $0x2] sm:$0xff]
        %v2430 = vld [vmem:[#allocation2 + $0xa] sm:$0xff]
        %v2431 = vpack.c.bf16 %v2429, %v2429
        %v2432 = vpack.c.bf16 %v2430, %v2430
        %2433 = vst.msk [vmem:[#allocation3] sm:$0xf] %vm1971, %v2431
        %2434 = vst.msk [vmem:[#allocation3 + $0x4] sm:$0xf] %vm1971, %v2432
        %v2435 = vld [vmem:[#allocation2 + $0x4] sm:$0xff]
        %v2436 = vld [vmem:[#allocation2 + $0xc] sm:$0xff]
        %v2437 = vpack.c.bf16 %v2435, %v2435
        %v2438 = vpack.c.bf16 %v2436, %v2436
        %2441 = vrot.lane.b32.xlu0 %v2437, 4
        %v2442 = vpop.permute.xlu0 %2441
        %2443 = vrot.lane.b32.xlu0 %v2438, 4
        %v2444 = vpop.permute.xlu0 %2443
        %2447 = vst.msk [vmem:[#allocation3] sm:$0xf] %vm1986, %v2442
        %2448 = vst.msk [vmem:[#allocation3 + $0x4] sm:$0xf] %vm1986, %v2444
        %v2449 = vld [vmem:[#allocation2 + $0x6] sm:$0xff]
        %v2450 = vld [vmem:[#allocation2 + $0xe] sm:$0xff]
        %v2451 = vpack.c.bf16 %v2449, %v2449
        %v2452 = vpack.c.bf16 %v2450, %v2450
        %2455 = vrot.lane.b32.xlu0 %v2451, 8
        %v2456 = vpop.permute.xlu0 %2455
        %2457 = vrot.lane.b32.xlu0 %v2452, 8
        %v2458 = vpop.permute.xlu0 %2457
        %2461 = vst.msk [vmem:[#allocation3] sm:$0xf] %vm2001, %v2456
        %2462 = vst.msk [vmem:[#allocation3 + $0x4] sm:$0xf] %vm2001, %v2458
        %v2463 = vld [vmem:[#allocation3] sm:$0xf]
        %v2464 = vld [vmem:[#allocation3 + $0x4] sm:$0xf]
        %v2466 = vperm.slane %v2422, 0
        %v2470 = vunpack.c.l.b16 %v2463
        %v2471 = vunpack.c.l.b16 %v2464
        %v2472 = vpack.c.b16 %v2471, %v2470
        %v2475 = vunpack.c.l.b16 %v2419
        %v2476 = vunpack.c.l.b16 %v2420
        %v2477 = vpack.c.b16 %v2476, %v2475
        %v2479 = vsel %vm2019, %v2472, 0
        %v2482 = vsel %vm2023, %v2477, 0
        %2484 = vmatpush.bf16.msra.mxu0 0
        %2485 = vmatpush.bf16.msra.mxu0 0
        %2486 = vmatpush.bf16.msra.mxu0 0
        %2487 = vmatpush.bf16.msra.mxu0 0
        %2488 = vmatpush.bf16.msra.mxu0 0
        %2489 = vmatpush.bf16.msra.mxu0 0
        %2490 = vmatpush.bf16.msra.mxu0 0
        %2491 = vmatpush.bf16.msra.mxu0 %v2482
        %2492 = vmatmul.bf16.gmra.mxu0 %v2479
        %v2493 = vpop.f32.mrf.mxu0
        %v2494 = vadd.f32 %v2466, %v2493
        %v2495 = vpop.f32.mrf.mxu0
        %v2496 = vadd.f32 %v2466, %v2495
        %2497 = vdwg.mxu0
        %v2498 = vmax.f32 %v2494, 0.0
        %v2499 = vmax.f32 %v2496, 0.0
        %v2501 = vperm.slane %v2424, 0
        %v2503 = vmul.f32 %v2498, %v2501
        %v2504 = vmul.f32 %v2499, %v2501
        %v2506 = vperm.slane %v2426, 0
        %v2508 = vadd.f32 %v2503, %v2506
        %v2509 = vadd.f32 %v2504, %v2506
        %v2510 = vpack.c.bf16 %v2508, %v2508
        %v2511 = vpack.c.bf16 %v2509, %v2509
        %2514 = vrot.lane.b32.xlu0 %v2510, 16
        %v2515 = vpop.permute.xlu0 %2514
        %2516 = vrot.lane.b32.xlu0 %v2511, 16
        %v2517 = vpop.permute.xlu0 %2516
        %vm2520 = vcmask 158848
        %2521 = vst.msk [vmem:[#allocation5] sm:$0xf] %vm2520, %v2515
        %2522 = vst.msk [vmem:[#allocation5 + $0x4] sm:$0xf] %vm2520, %v2517
        %v2523 = vld [vmem:[#allocation4] sm:$0xff]
        %v2524 = vld [vmem:[#allocation4 + $0x8] sm:$0xff]
        %2527 = vrot.lane.b32.xlu0 %v2523, 108
        %v2528 = vpop.permute.xlu0 %2527
        %2529 = vrot.lane.b32.xlu0 %v2524, 108
        %v2530 = vpop.permute.xlu0 %2529
        %v2533 = vadd.f32 %v2508, %v2528
        %v2534 = vadd.f32 %v2509, %v2530
        %s2535 = scalar_lea.vmem %s9, 40
        %v2536 = vld [vmem:[%s2535] sm:$0xf]
        %v2537 = vld [vmem:[%s2535 + $0x4] sm:$0x3]
        %s2538 = scalar_lea.vmem %s3, 5
        %v2539 = vld [vmem:[%s2538] sm:$0x1]
        %s2540 = scalar_lea.vmem %s5, 5
        %v2541 = vld [vmem:[%s2540] sm:$0x1]
        %s2542 = scalar_lea.vmem %s7, 5
        %v2543 = vld [vmem:[%s2542] sm:$0x1]
        %2544 = vst.msk [vmem:[#allocation2 + $0x4] sm:$0xff] %vm1964, %v2533
        %2545 = vst.msk [vmem:[#allocation2 + $0xc] sm:$0xff] %vm1964, %v2534
        %v2546 = vld [vmem:[#allocation2 + $0x2] sm:$0xff]
        %v2547 = vld [vmem:[#allocation2 + $0xa] sm:$0xff]
        %v2548 = vpack.c.bf16 %v2546, %v2546
        %v2549 = vpack.c.bf16 %v2547, %v2547
        %2550 = vst.msk [vmem:[#allocation3] sm:$0xf] %vm1971, %v2548
        %2551 = vst.msk [vmem:[#allocation3 + $0x4] sm:$0xf] %vm1971, %v2549
        %v2552 = vld [vmem:[#allocation2 + $0x4] sm:$0xff]
        %v2553 = vld [vmem:[#allocation2 + $0xc] sm:$0xff]
        %v2554 = vpack.c.bf16 %v2552, %v2552
        %v2555 = vpack.c.bf16 %v2553, %v2553
        %2558 = vrot.lane.b32.xlu0 %v2554, 4
        %v2559 = vpop.permute.xlu0 %2558
        %2560 = vrot.lane.b32.xlu0 %v2555, 4
        %v2561 = vpop.permute.xlu0 %2560
        %2564 = vst.msk [vmem:[#allocation3] sm:$0xf] %vm1986, %v2559
        %2565 = vst.msk [vmem:[#allocation3 + $0x4] sm:$0xf] %vm1986, %v2561
        %v2566 = vld [vmem:[#allocation2 + $0x6] sm:$0xff]
        %v2567 = vld [vmem:[#allocation2 + $0xe] sm:$0xff]
        %v2568 = vpack.c.bf16 %v2566, %v2566
        %v2569 = vpack.c.bf16 %v2567, %v2567
        %2572 = vrot.lane.b32.xlu0 %v2568, 8
        %v2573 = vpop.permute.xlu0 %2572
        %2574 = vrot.lane.b32.xlu0 %v2569, 8
        %v2575 = vpop.permute.xlu0 %2574
        %2578 = vst.msk [vmem:[#allocation3] sm:$0xf] %vm2001, %v2573
        %2579 = vst.msk [vmem:[#allocation3 + $0x4] sm:$0xf] %vm2001, %v2575
        %v2580 = vld [vmem:[#allocation3] sm:$0xf]
        %v2581 = vld [vmem:[#allocation3 + $0x4] sm:$0xf]
        %v2583 = vperm.slane %v2539, 0
        %v2587 = vunpack.c.l.b16 %v2580
        %v2588 = vunpack.c.l.b16 %v2581
        %v2589 = vpack.c.b16 %v2588, %v2587
        %v2592 = vunpack.c.l.b16 %v2536
        %v2593 = vunpack.c.l.b16 %v2537
        %v2594 = vpack.c.b16 %v2593, %v2592
        %v2596 = vsel %vm2019, %v2589, 0
        %v2599 = vsel %vm2023, %v2594, 0
        %2601 = vmatpush.bf16.msra.mxu0 0
        %2602 = vmatpush.bf16.msra.mxu0 0
        %2603 = vmatpush.bf16.msra.mxu0 0
        %2604 = vmatpush.bf16.msra.mxu0 0
        %2605 = vmatpush.bf16.msra.mxu0 0
        %2606 = vmatpush.bf16.msra.mxu0 0
        %2607 = vmatpush.bf16.msra.mxu0 0
        %2608 = vmatpush.bf16.msra.mxu0 %v2599
        %2609 = vmatmul.bf16.gmra.mxu0 %v2596
        %v2610 = vpop.f32.mrf.mxu0
        %v2611 = vadd.f32 %v2583, %v2610
        %v2612 = vpop.f32.mrf.mxu0
        %v2613 = vadd.f32 %v2583, %v2612
        %2614 = vdwg.mxu0
        %v2615 = vmax.f32 %v2611, 0.0
        %v2616 = vmax.f32 %v2613, 0.0
        %v2618 = vperm.slane %v2541, 0
        %v2620 = vmul.f32 %v2615, %v2618
        %v2621 = vmul.f32 %v2616, %v2618
        %v2623 = vperm.slane %v2543, 0
        %v2625 = vadd.f32 %v2620, %v2623
        %v2626 = vadd.f32 %v2621, %v2623
        %v2627 = vpack.c.bf16 %v2625, %v2625
        %v2628 = vpack.c.bf16 %v2626, %v2626
        %2631 = vrot.lane.b32.xlu0 %v2627, 20
        %v2632 = vpop.permute.xlu0 %2631
        %2633 = vrot.lane.b32.xlu0 %v2628, 20
        %v2634 = vpop.permute.xlu0 %2633
        %vm2637 = vcmask 191648
        %2638 = vst.msk [vmem:[#allocation5] sm:$0xf] %vm2637, %v2632
        %2639 = vst.msk [vmem:[#allocation5 + $0x4] sm:$0xf] %vm2637, %v2634
        %v2640 = vld [vmem:[#allocation4] sm:$0xff]
        %v2641 = vld [vmem:[#allocation4 + $0x8] sm:$0xff]
        %2644 = vrot.lane.b32.xlu0 %v2640, 104
        %v2645 = vpop.permute.xlu0 %2644
        %2646 = vrot.lane.b32.xlu0 %v2641, 104
        %v2647 = vpop.permute.xlu0 %2646
        %v2650 = vadd.f32 %v2625, %v2645
        %v2651 = vadd.f32 %v2626, %v2647
        %s2652 = scalar_lea.vmem %s9, 48
        %v2653 = vld [vmem:[%s2652] sm:$0xf]
        %v2654 = vld [vmem:[%s2652 + $0x4] sm:$0x3]
        %s2655 = scalar_lea.vmem %s3, 6
        %v2656 = vld [vmem:[%s2655] sm:$0x1]
        %s2657 = scalar_lea.vmem %s5, 6
        %v2658 = vld [vmem:[%s2657] sm:$0x1]
        %s2659 = scalar_lea.vmem %s7, 6
        %v2660 = vld [vmem:[%s2659] sm:$0x1]
        %2661 = vst.msk [vmem:[#allocation2 + $0x4] sm:$0xff] %vm1964, %v2650
        %2662 = vst.msk [vmem:[#allocation2 + $0xc] sm:$0xff] %vm1964, %v2651
        %v2663 = vld [vmem:[#allocation2 + $0x2] sm:$0xff]
        %v2664 = vld [vmem:[#allocation2 + $0xa] sm:$0xff]
        %v2665 = vpack.c.bf16 %v2663, %v2663
        %v2666 = vpack.c.bf16 %v2664, %v2664
        %2667 = vst.msk [vmem:[#allocation3] sm:$0xf] %vm1971, %v2665
        %2668 = vst.msk [vmem:[#allocation3 + $0x4] sm:$0xf] %vm1971, %v2666
        %v2669 = vld [vmem:[#allocation2 + $0x4] sm:$0xff]
        %v2670 = vld [vmem:[#allocation2 + $0xc] sm:$0xff]
        %v2671 = vpack.c.bf16 %v2669, %v2669
        %v2672 = vpack.c.bf16 %v2670, %v2670
        %2675 = vrot.lane.b32.xlu0 %v2671, 4
        %v2676 = vpop.permute.xlu0 %2675
        %2677 = vrot.lane.b32.xlu0 %v2672, 4
        %v2678 = vpop.permute.xlu0 %2677
        %2681 = vst.msk [vmem:[#allocation3] sm:$0xf] %vm1986, %v2676
        %2682 = vst.msk [vmem:[#allocation3 + $0x4] sm:$0xf] %vm1986, %v2678
        %v2683 = vld [vmem:[#allocation2 + $0x6] sm:$0xff]
        %v2684 = vld [vmem:[#allocation2 + $0xe] sm:$0xff]
        %v2685 = vpack.c.bf16 %v2683, %v2683
        %v2686 = vpack.c.bf16 %v2684, %v2684
        %2689 = vrot.lane.b32.xlu0 %v2685, 8
        %v2690 = vpop.permute.xlu0 %2689
        %2691 = vrot.lane.b32.xlu0 %v2686, 8
        %v2692 = vpop.permute.xlu0 %2691
        %2695 = vst.msk [vmem:[#allocation3] sm:$0xf] %vm2001, %v2690
        %2696 = vst.msk [vmem:[#allocation3 + $0x4] sm:$0xf] %vm2001, %v2692
        %v2697 = vld [vmem:[#allocation3] sm:$0xf]
        %v2698 = vld [vmem:[#allocation3 + $0x4] sm:$0xf]
        %v2700 = vperm.slane %v2656, 0
        %v2704 = vunpack.c.l.b16 %v2697
        %v2705 = vunpack.c.l.b16 %v2698
        %v2706 = vpack.c.b16 %v2705, %v2704
        %v2709 = vunpack.c.l.b16 %v2653
        %v2710 = vunpack.c.l.b16 %v2654
        %v2711 = vpack.c.b16 %v2710, %v2709
        %v2713 = vsel %vm2019, %v2706, 0
        %v2716 = vsel %vm2023, %v2711, 0
        %2718 = vmatpush.bf16.msra.mxu0 0
        %2719 = vmatpush.bf16.msra.mxu0 0
        %2720 = vmatpush.bf16.msra.mxu0 0
        %2721 = vmatpush.bf16.msra.mxu0 0
        %2722 = vmatpush.bf16.msra.mxu0 0
        %2723 = vmatpush.bf16.msra.mxu0 0
        %2724 = vmatpush.bf16.msra.mxu0 0
        %2725 = vmatpush.bf16.msra.mxu0 %v2716
        %2726 = vmatmul.bf16.gmra.mxu0 %v2713
        %v2727 = vpop.f32.mrf.mxu0
        %v2728 = vadd.f32 %v2700, %v2727
        %v2729 = vpop.f32.mrf.mxu0
        %v2730 = vadd.f32 %v2700, %v2729
        %2731 = vdwg.mxu0
        %v2732 = vmax.f32 %v2728, 0.0
        %v2733 = vmax.f32 %v2730, 0.0
        %v2735 = vperm.slane %v2658, 0
        %v2737 = vmul.f32 %v2732, %v2735
        %v2738 = vmul.f32 %v2733, %v2735
        %v2740 = vperm.slane %v2660, 0
        %v2742 = vadd.f32 %v2737, %v2740
        %v2743 = vadd.f32 %v2738, %v2740
        %v2744 = vpack.c.bf16 %v2742, %v2742
        %v2745 = vpack.c.bf16 %v2743, %v2743
        %2748 = vrot.lane.b32.xlu0 %v2744, 24
        %v2749 = vpop.permute.xlu0 %2748
        %2750 = vrot.lane.b32.xlu0 %v2745, 24
        %v2751 = vpop.permute.xlu0 %2750
        %vm2754 = vcmask 224448
        %2755 = vst.msk [vmem:[#allocation5] sm:$0xf] %vm2754, %v2749
        %2756 = vst.msk [vmem:[#allocation5 + $0x4] sm:$0xf] %vm2754, %v2751
        %v2757 = vld [vmem:[#allocation4] sm:$0xff]
        %v2758 = vld [vmem:[#allocation4 + $0x8] sm:$0xff]
        %v2759 = vpack.c.bf16 %v2757, %v2757
        %v2760 = vpack.c.bf16 %v2758, %v2758
        %vm2761 = vcmask 257248
        %2762 = vst.msk [vmem:[#allocation5] sm:$0xf] %vm2761, %v2759
        %2763 = vst.msk [vmem:[#allocation5 + $0x4] sm:$0xf] %vm2761, %v2760
        %v2764 = vld [vmem:[#allocation5] sm:$0xf]
        %v2765 = vld [vmem:[#allocation5 + $0x4] sm:$0xf]
        %v2766 = vld [vmem:[%s33] sm:$0xf]
        %v2767 = vld [vmem:[%s33 + $0x4] sm:$0xf]
        %v2768 = vld [vmem:[%s33 + $0x8] sm:$0xf]
        %v2769 = vld [vmem:[%s33 + $0xc] sm:$0xf]
        %v2770 = vld [vmem:[%s27] sm:$0x1]
        %v2771 = vld [vmem:[%s29] sm:$0x1]
        %v2772 = vld [vmem:[%s31] sm:$0x1]
        %v2774 = vperm.slane %v2770, 0
        %v2778 = vunpack.c.l.b16 %v2764
        %v2779 = vunpack.c.l.b16 %v2765
        %v2780 = vpack.c.b16 %v2779, %v2778
        %v2785 = vunpack.c.l.b16 %v2766
        %v2786 = vunpack.c.l.b16 %v2767
        %v2787 = vunpack.c.l.b16 %v2768
        %v2788 = vunpack.c.l.b16 %v2769
        %v2789 = vpack.c.b16 %v2786, %v2785
        %v2790 = vpack.c.b16 %v2788, %v2787
        %v2794 = vsel %vm1925, %v2780, 0
        %2796 = vmatpush.bf16.msra.mxu0 0
        %2797 = vmatpush.bf16.msra.mxu0 0
        %2798 = vmatpush.bf16.msra.mxu0 0
        %2799 = vmatpush.bf16.msra.mxu0 0
        %2800 = vmatpush.bf16.msra.mxu0 0
        %2801 = vmatpush.bf16.msra.mxu0 0
        %2802 = vmatpush.bf16.msra.mxu0 %v2790
        %2803 = vmatpush.bf16.msra.mxu0 %v2789
        %2804 = vmatmul.bf16.gmra.mxu0 %v2794
        %v2805 = vpop.f32.mrf.mxu0
        %v2806 = vadd.f32 %v2774, %v2805
        %v2807 = vpop.f32.mrf.mxu0
        %v2808 = vadd.f32 %v2774, %v2807
        %2809 = vdwg.mxu0
        %v2810 = vmax.f32 %v2806, 0.0
        %v2811 = vmax.f32 %v2808, 0.0
        %v2813 = vperm.slane %v2771, 0
        %v2815 = vmul.f32 %v2810, %v2813
        %v2816 = vmul.f32 %v2811, %v2813
        %v2818 = vperm.slane %v2772, 0
        %v2820 = vadd.f32 %v2815, %v2818
        %v2821 = vadd.f32 %v2816, %v2818
        %v2822 = vsel %vm1925, %v2820, 0.0
        %v2823 = vsel %vm1925, %v2821, 0.0
        %v2824 = vadd.f32 %v2822, %v2823
        %v2825 = vrot.slane %v2824, 4
        %v2826 = vadd.f32 %v2824, %v2825
        %v2827 = vrot.slane %v2826, 2
        %v2828 = vadd.f32 %v2826, %v2827
        %v2829 = vrot.slane %v2828, 1
        %v2830 = vadd.f32 %v2828, %v2829
        %v2831 = vrcp.pop 16.0
        %v2832 = vmul.f32 16.0, %v2831
        %v2833 = vsub.f32 1.0, %v2832
        %v2834 = vmul.f32 %v2831, %v2833
        %v2835 = vadd.f32 %v2831, %v2834
        %vm2836 = vweird.f32 %v2831
        %v2837 = vsel %vm2836, %v2831, %v2835
        %v2838 = vmul.f32 %v2830, %v2837
        %v2839 = vpack.c.bf16 %v2838, %v2838
        %v2840 = vld [vmem:[%s15] sm:$0xf]
        %v2841 = vld [vmem:[%s15 + $0x4] sm:$0xf]
        %v2842 = vld [vmem:[%s15 + $0x8] sm:$0xf]
        %v2843 = vld [vmem:[%s15 + $0xc] sm:$0xf]
        %v2844 = vld [vmem:[%s11] sm:$0x1]
        %v2849 = vunpack.c.l.b16 %v2840
        %v2850 = vunpack.c.l.b16 %v2841
        %v2851 = vunpack.c.l.b16 %v2842
        %v2852 = vunpack.c.l.b16 %v2843
        %v2853 = vpack.c.b16 %v2850, %v2849
        %v2854 = vpack.c.b16 %v2852, %v2851
        %v2858 = vsel %vm1925, %v2839, 0
        %2860 = vmatpush.bf16.msra.mxu0 0
        %2861 = vmatpush.bf16.msra.mxu0 0
        %2862 = vmatpush.bf16.msra.mxu0 0
        %2863 = vmatpush.bf16.msra.mxu0 0
        %2864 = vmatpush.bf16.msra.mxu0 0
        %2865 = vmatpush.bf16.msra.mxu0 0
        %2866 = vmatpush.bf16.msra.mxu0 %v2854
        %2867 = vmatpush.bf16.msra.mxu0 %v2853
        %2868 = vmatmul.bf16.gmra.mxu0 %v2858
        %v2869 = vpop.f32.mrf.mxu0
        %v2870 = vadd.f32 %v2844, %v2869
        %v2871 = vpop.f32.mrf.mxu0
        %2872 = vdwg.mxu0
        %v2873 = vmax.f32 %v2870, 0.0
        %v2874 = vpack.c.bf16 %v2873, %v2873
        %v2875 = vld [vmem:[%s17] sm:$0xf]
        %v2876 = vld [vmem:[%s17 + $0x4] sm:$0xf]
        %v2877 = vld [vmem:[%s13] sm:$0x1]
        %v2880 = vunpack.c.l.b16 %v2875
        %v2881 = vunpack.c.l.b16 %v2876
        %v2882 = vpack.c.b16 %v2881, %v2880
        %v2885 = vsel %vm1763, %v2874, 0
        %2887 = vmatpush.bf16.msra.mxu0 0
        %2888 = vmatpush.bf16.msra.mxu0 0
        %2889 = vmatpush.bf16.msra.mxu0 0
        %2890 = vmatpush.bf16.msra.mxu0 0
        %2891 = vmatpush.bf16.msra.mxu0 0
        %2892 = vmatpush.bf16.msra.mxu0 0
        %2893 = vmatpush.bf16.msra.mxu0 0
        %2894 = vmatpush.bf16.msra.mxu0 %v2882
        %2895 = vmatmul.bf16.gmra.mxu0 %v2885
        %v2896 = vpop.f32.mrf.mxu0
        %v2897 = vadd.f32 %v2877, %v2896
        %v2898 = vpop.f32.mrf.mxu0
        %2899 = vdwg.mxu0
        %v2900 = vxor.u32 %v2897, 2147483648
        %v2901 = vmul.f32 %v2900, 1.442695
        %v2902 = vpow.pop %v2901
        %v2903 = vadd.f32 %v2902, 1.0
        %v2904 = vrcp.pop %v2903
        %v2905 = vmul.f32 %v2903, %v2904
        %v2906 = vsub.f32 1.0, %v2905
        %v2907 = vmul.f32 %v2904, %v2906
        %v2908 = vadd.f32 %v2904, %v2907
        %vm2909 = vweird.f32 %v2903
        %vm2910 = vweird.f32 %v2904
        %vm2911 = vmor %vm2909, %vm2910
        %v2912 = vsel %vm2911, %v2904, %v2908
        %v2913 = vand.u32 2147483647, %v2903
        %vm2914 = vcmp.eq.f32.partialorder %v2913, 8.507059e+37
        %v2915 = vand.u32 %v2903, 2147483648
        %v2916 = vor.u32 1.1754944e-38, %v2915
        %v2917 = vsel %vm2914, %v2916, %v2912
        %v2918 = vmul.f32 1.0, %v2917
        %v2919 = vperm.slane %v2918, 0
        %v2920 = vmul.f32 %v2820, %v2919
        %v2921 = vmul.f32 %v2821, %v2919
        %v2922 = vadd.f32 %v1900, %v2920
        %v2923 = vadd.f32 %v1901, %v2921
        %v2924 = vpack.c.bf16 %v2922, %v2922
        %v2925 = vpack.c.bf16 %v2923, %v2923
        %vm2926 = vcmask 257024
        %2927 = vst.msk [vmem:[#allocation6] sm:$0xf] %vm2926, %v2924
        %2928 = vst.msk [vmem:[#allocation6 + $0x4] sm:$0xf] %vm2926, %v2925
        %v2929 = vadd.f32 %v1900, %v2922
        %v2930 = vadd.f32 %v1901, %v2923
        %v2931 = vld [vmem:[%s57] sm:$0xf]
        %v2932 = vld [vmem:[%s57 + $0x4] sm:$0xf]
        %v2933 = vld [vmem:[%s57 + $0x8] sm:$0xf]
        %v2934 = vld [vmem:[%s57 + $0xc] sm:$0xf]
        %v2935 = vld [vmem:[%s51] sm:$0x1]
        %v2936 = vld [vmem:[%s53] sm:$0x1]
        %v2937 = vld [vmem:[%s55] sm:$0x1]
        %v2938 = vpack.c.bf16 %v2930, %v2929
        %v2940 = vperm.slane %v2935, 0
        %v2946 = vunpack.c.l.b16 %v2931
        %v2947 = vunpack.c.l.b16 %v2932
        %v2948 = vunpack.c.l.b16 %v2933
        %v2949 = vunpack.c.l.b16 %v2934
        %v2950 = vpack.c.b16 %v2947, %v2946
        %v2951 = vpack.c.b16 %v2949, %v2948
        %v2955 = vsel %vm1925, %v2938, 0
        %2957 = vmatpush.bf16.msra.mxu0 0
        %2958 = vmatpush.bf16.msra.mxu0 0
        %2959 = vmatpush.bf16.msra.mxu0 0
        %2960 = vmatpush.bf16.msra.mxu0 0
        %2961 = vmatpush.bf16.msra.mxu0 0
        %2962 = vmatpush.bf16.msra.mxu0 0
        %2963 = vmatpush.bf16.msra.mxu0 %v2951
        %2964 = vmatpush.bf16.msra.mxu0 %v2950
        %2965 = vmatmul.bf16.gmra.mxu0 %v2955
        %v2966 = vpop.f32.mrf.mxu0
        %v2967 = vadd.f32 %v2940, %v2966
        %v2968 = vpop.f32.mrf.mxu0
        %v2969 = vadd.f32 %v2940, %v2968
        %2970 = vdwg.mxu0
        %v2971 = vmax.f32 %v2967, 0.0
        %v2972 = vmax.f32 %v2969, 0.0
        %v2974 = vperm.slane %v2936, 0
        %v2976 = vmul.f32 %v2971, %v2974
        %v2977 = vmul.f32 %v2972, %v2974
        %v2979 = vperm.slane %v2937, 0
        %v2981 = vadd.f32 %v2976, %v2979
        %v2982 = vadd.f32 %v2977, %v2979
        %2983 = vst.msk [vmem:[#allocation4] sm:$0xff] %vm1925, %v2981
        %2984 = vst.msk [vmem:[#allocation4 + $0x8] sm:$0xff] %vm1925, %v2982
        %v2985 = vld [vmem:[#allocation4] sm:$0xff]
        %v2986 = vld [vmem:[#allocation4 + $0x8] sm:$0xff]
        %v2987 = vld [vmem:[%s41] sm:$0xf]
        %v2988 = vld [vmem:[%s41 + $0x4] sm:$0x3]
        %v2989 = vld [vmem:[%s35] sm:$0x1]
        %v2990 = vld [vmem:[%s37] sm:$0x1]
        %v2991 = vld [vmem:[%s39] sm:$0x1]
        %2992 = vst.msk [vmem:[#allocation2 + $0x4] sm:$0xff] %vm1964, %v2985
        %2993 = vst.msk [vmem:[#allocation2 + $0xc] sm:$0xff] %vm1964, %v2986
        %v2994 = vld [vmem:[#allocation2 + $0x1] sm:$0xff]
        %v2995 = vld [vmem:[#allocation2 + $0x9] sm:$0xff]
        %v2996 = vpack.c.bf16 %v2994, %v2994
        %v2997 = vpack.c.bf16 %v2995, %v2995
        %2998 = vst.msk [vmem:[#allocation3] sm:$0xf] %vm1971, %v2996
        %2999 = vst.msk [vmem:[#allocation3 + $0x4] sm:$0xf] %vm1971, %v2997
        %v3000 = vld [vmem:[#allocation2 + $0x4] sm:$0xff]
        %v3001 = vld [vmem:[#allocation2 + $0xc] sm:$0xff]
        %v3002 = vpack.c.bf16 %v3000, %v3000
        %v3003 = vpack.c.bf16 %v3001, %v3001
        %3006 = vrot.lane.b32.xlu0 %v3002, 4
        %v3007 = vpop.permute.xlu0 %3006
        %3008 = vrot.lane.b32.xlu0 %v3003, 4
        %v3009 = vpop.permute.xlu0 %3008
        %3012 = vst.msk [vmem:[#allocation3] sm:$0xf] %vm1986, %v3007
        %3013 = vst.msk [vmem:[#allocation3 + $0x4] sm:$0xf] %vm1986, %v3009
        %v3014 = vld [vmem:[#allocation2 + $0x7] sm:$0xff]
        %v3015 = vld [vmem:[#allocation2 + $0xf] sm:$0xff]
        %v3016 = vpack.c.bf16 %v3014, %v3014
        %v3017 = vpack.c.bf16 %v3015, %v3015
        %3020 = vrot.lane.b32.xlu0 %v3016, 8
        %v3021 = vpop.permute.xlu0 %3020
        %3022 = vrot.lane.b32.xlu0 %v3017, 8
        %v3023 = vpop.permute.xlu0 %3022
        %3026 = vst.msk [vmem:[#allocation3] sm:$0xf] %vm2001, %v3021
        %3027 = vst.msk [vmem:[#allocation3 + $0x4] sm:$0xf] %vm2001, %v3023
        %v3028 = vld [vmem:[#allocation3] sm:$0xf]
        %v3029 = vld [vmem:[#allocation3 + $0x4] sm:$0xf]
        %v3031 = vperm.slane %v2989, 0
        %v3035 = vunpack.c.l.b16 %v3028
        %v3036 = vunpack.c.l.b16 %v3029
        %v3037 = vpack.c.b16 %v3036, %v3035
        %v3040 = vunpack.c.l.b16 %v2987
        %v3041 = vunpack.c.l.b16 %v2988
        %v3042 = vpack.c.b16 %v3041, %v3040
        %v3044 = vsel %vm2019, %v3037, 0
        %v3047 = vsel %vm2023, %v3042, 0
        %3049 = vmatpush.bf16.msra.mxu0 0
        %3050 = vmatpush.bf16.msra.mxu0 0
        %3051 = vmatpush.bf16.msra.mxu0 0
        %3052 = vmatpush.bf16.msra.mxu0 0
        %3053 = vmatpush.bf16.msra.mxu0 0
        %3054 = vmatpush.bf16.msra.mxu0 0
        %3055 = vmatpush.bf16.msra.mxu0 0
        %3056 = vmatpush.bf16.msra.mxu0 %v3047
        %3057 = vmatmul.bf16.gmra.mxu0 %v3044
        %v3058 = vpop.f32.mrf.mxu0
        %v3059 = vadd.f32 %v3031, %v3058
        %v3060 = vpop.f32.mrf.mxu0
        %v3061 = vadd.f32 %v3031, %v3060
        %3062 = vdwg.mxu0
        %v3063 = vmax.f32 %v3059, 0.0
        %v3064 = vmax.f32 %v3061, 0.0
        %v3066 = vperm.slane %v2990, 0
        %v3068 = vmul.f32 %v3063, %v3066
        %v3069 = vmul.f32 %v3064, %v3066
        %v3071 = vperm.slane %v2991, 0
        %v3073 = vadd.f32 %v3068, %v3071
        %v3074 = vadd.f32 %v3069, %v3071
        %v3075 = vpack.c.bf16 %v3073, %v3073
        %v3076 = vpack.c.bf16 %v3074, %v3074
        %3077 = vst.msk [vmem:[#allocation5] sm:$0xf] %vm1971, %v3075
        %3078 = vst.msk [vmem:[#allocation5 + $0x4] sm:$0xf] %vm1971, %v3076
        %v3079 = vld [vmem:[#allocation4] sm:$0xff]
        %v3080 = vld [vmem:[#allocation4 + $0x8] sm:$0xff]
        %3083 = vrot.lane.b32.xlu0 %v3079, 124
        %v3084 = vpop.permute.xlu0 %3083
        %3085 = vrot.lane.b32.xlu0 %v3080, 124
        %v3086 = vpop.permute.xlu0 %3085
        %v3089 = vadd.f32 %v3073, %v3084
        %v3090 = vadd.f32 %v3074, %v3086
        %s3091 = scalar_lea.vmem %s41, 8
        %v3092 = vld [vmem:[%s3091] sm:$0xf]
        %v3093 = vld [vmem:[%s3091 + $0x4] sm:$0x3]
        %s3094 = scalar_lea.vmem %s35, 1
        %v3095 = vld [vmem:[%s3094] sm:$0x1]
        %s3096 = scalar_lea.vmem %s37, 1
        %v3097 = vld [vmem:[%s3096] sm:$0x1]
        %s3098 = scalar_lea.vmem %s39, 1
        %v3099 = vld [vmem:[%s3098] sm:$0x1]
        %3100 = vst.msk [vmem:[#allocation2 + $0x4] sm:$0xff] %vm1964, %v3089
        %3101 = vst.msk [vmem:[#allocation2 + $0xc] sm:$0xff] %vm1964, %v3090
        %v3102 = vld [vmem:[#allocation2 + $0x1] sm:$0xff]
        %v3103 = vld [vmem:[#allocation2 + $0x9] sm:$0xff]
        %v3104 = vpack.c.bf16 %v3102, %v3102
        %v3105 = vpack.c.bf16 %v3103, %v3103
        %3106 = vst.msk [vmem:[#allocation3] sm:$0xf] %vm1971, %v3104
        %3107 = vst.msk [vmem:[#allocation3 + $0x4] sm:$0xf] %vm1971, %v3105
        %v3108 = vld [vmem:[#allocation2 + $0x4] sm:$0xff]
        %v3109 = vld [vmem:[#allocation2 + $0xc] sm:$0xff]
        %v3110 = vpack.c.bf16 %v3108, %v3108
        %v3111 = vpack.c.bf16 %v3109, %v3109
        %3114 = vrot.lane.b32.xlu0 %v3110, 4
        %v3115 = vpop.permute.xlu0 %3114
        %3116 = vrot.lane.b32.xlu0 %v3111, 4
        %v3117 = vpop.permute.xlu0 %3116
        %3120 = vst.msk [vmem:[#allocation3] sm:$0xf] %vm1986, %v3115
        %3121 = vst.msk [vmem:[#allocation3 + $0x4] sm:$0xf] %vm1986, %v3117
        %v3122 = vld [vmem:[#allocation2 + $0x7] sm:$0xff]
        %v3123 = vld [vmem:[#allocation2 + $0xf] sm:$0xff]
        %v3124 = vpack.c.bf16 %v3122, %v3122
        %v3125 = vpack.c.bf16 %v3123, %v3123
        %3128 = vrot.lane.b32.xlu0 %v3124, 8
        %v3129 = vpop.permute.xlu0 %3128
        %3130 = vrot.lane.b32.xlu0 %v3125, 8
        %v3131 = vpop.permute.xlu0 %3130
        %3134 = vst.msk [vmem:[#allocation3] sm:$0xf] %vm2001, %v3129
        %3135 = vst.msk [vmem:[#allocation3 + $0x4] sm:$0xf] %vm2001, %v3131
        %v3136 = vld [vmem:[#allocation3] sm:$0xf]
        %v3137 = vld [vmem:[#allocation3 + $0x4] sm:$0xf]
        %v3139 = vperm.slane %v3095, 0
        %v3143 = vunpack.c.l.b16 %v3136
        %v3144 = vunpack.c.l.b16 %v3137
        %v3145 = vpack.c.b16 %v3144, %v3143
        %v3148 = vunpack.c.l.b16 %v3092
        %v3149 = vunpack.c.l.b16 %v3093
        %v3150 = vpack.c.b16 %v3149, %v3148
        %v3152 = vsel %vm2019, %v3145, 0
        %v3155 = vsel %vm2023, %v3150, 0
        %3157 = vmatpush.bf16.msra.mxu0 0
        %3158 = vmatpush.bf16.msra.mxu0 0
        %3159 = vmatpush.bf16.msra.mxu0 0
        %3160 = vmatpush.bf16.msra.mxu0 0
        %3161 = vmatpush.bf16.msra.mxu0 0
        %3162 = vmatpush.bf16.msra.mxu0 0
        %3163 = vmatpush.bf16.msra.mxu0 0
        %3164 = vmatpush.bf16.msra.mxu0 %v3155
        %3165 = vmatmul.bf16.gmra.mxu0 %v3152
        %v3166 = vpop.f32.mrf.mxu0
        %v3167 = vadd.f32 %v3139, %v3166
        %v3168 = vpop.f32.mrf.mxu0
        %v3169 = vadd.f32 %v3139, %v3168
        %3170 = vdwg.mxu0
        %v3171 = vmax.f32 %v3167, 0.0
        %v3172 = vmax.f32 %v3169, 0.0
        %v3174 = vperm.slane %v3097, 0
        %v3176 = vmul.f32 %v3171, %v3174
        %v3177 = vmul.f32 %v3172, %v3174
        %v3179 = vperm.slane %v3099, 0
        %v3181 = vadd.f32 %v3176, %v3179
        %v3182 = vadd.f32 %v3177, %v3179
        %v3183 = vpack.c.bf16 %v3181, %v3181
        %v3184 = vpack.c.bf16 %v3182, %v3182
        %3187 = vrot.lane.b32.xlu0 %v3183, 4
        %v3188 = vpop.permute.xlu0 %3187
        %3189 = vrot.lane.b32.xlu0 %v3184, 4
        %v3190 = vpop.permute.xlu0 %3189
        %3193 = vst.msk [vmem:[#allocation5] sm:$0xf] %vm1986, %v3188
        %3194 = vst.msk [vmem:[#allocation5 + $0x4] sm:$0xf] %vm1986, %v3190
        %v3195 = vld [vmem:[#allocation4] sm:$0xff]
        %v3196 = vld [vmem:[#allocation4 + $0x8] sm:$0xff]
        %3199 = vrot.lane.b32.xlu0 %v3195, 120
        %v3200 = vpop.permute.xlu0 %3199
        %3201 = vrot.lane.b32.xlu0 %v3196, 120
        %v3202 = vpop.permute.xlu0 %3201
        %v3205 = vadd.f32 %v3181, %v3200
        %v3206 = vadd.f32 %v3182, %v3202
        %s3207 = scalar_lea.vmem %s41, 16
        %v3208 = vld [vmem:[%s3207] sm:$0xf]
        %v3209 = vld [vmem:[%s3207 + $0x4] sm:$0x3]
        %s3210 = scalar_lea.vmem %s35, 2
        %v3211 = vld [vmem:[%s3210] sm:$0x1]
        %s3212 = scalar_lea.vmem %s37, 2
        %v3213 = vld [vmem:[%s3212] sm:$0x1]
        %s3214 = scalar_lea.vmem %s39, 2
        %v3215 = vld [vmem:[%s3214] sm:$0x1]
        %3216 = vst.msk [vmem:[#allocation2 + $0x4] sm:$0xff] %vm1964, %v3205
        %3217 = vst.msk [vmem:[#allocation2 + $0xc] sm:$0xff] %vm1964, %v3206
        %v3218 = vld [vmem:[#allocation2 + $0x1] sm:$0xff]
        %v3219 = vld [vmem:[#allocation2 + $0x9] sm:$0xff]
        %v3220 = vpack.c.bf16 %v3218, %v3218
        %v3221 = vpack.c.bf16 %v3219, %v3219
        %3222 = vst.msk [vmem:[#allocation3] sm:$0xf] %vm1971, %v3220
        %3223 = vst.msk [vmem:[#allocation3 + $0x4] sm:$0xf] %vm1971, %v3221
        %v3224 = vld [vmem:[#allocation2 + $0x4] sm:$0xff]
        %v3225 = vld [vmem:[#allocation2 + $0xc] sm:$0xff]
        %v3226 = vpack.c.bf16 %v3224, %v3224
        %v3227 = vpack.c.bf16 %v3225, %v3225
        %3230 = vrot.lane.b32.xlu0 %v3226, 4
        %v3231 = vpop.permute.xlu0 %3230
        %3232 = vrot.lane.b32.xlu0 %v3227, 4
        %v3233 = vpop.permute.xlu0 %3232
        %3236 = vst.msk [vmem:[#allocation3] sm:$0xf] %vm1986, %v3231
        %3237 = vst.msk [vmem:[#allocation3 + $0x4] sm:$0xf] %vm1986, %v3233
        %v3238 = vld [vmem:[#allocation2 + $0x7] sm:$0xff]
        %v3239 = vld [vmem:[#allocation2 + $0xf] sm:$0xff]
        %v3240 = vpack.c.bf16 %v3238, %v3238
        %v3241 = vpack.c.bf16 %v3239, %v3239
        %3244 = vrot.lane.b32.xlu0 %v3240, 8
        %v3245 = vpop.permute.xlu0 %3244
        %3246 = vrot.lane.b32.xlu0 %v3241, 8
        %v3247 = vpop.permute.xlu0 %3246
        %3250 = vst.msk [vmem:[#allocation3] sm:$0xf] %vm2001, %v3245
        %3251 = vst.msk [vmem:[#allocation3 + $0x4] sm:$0xf] %vm2001, %v3247
        %v3252 = vld [vmem:[#allocation3] sm:$0xf]
        %v3253 = vld [vmem:[#allocation3 + $0x4] sm:$0xf]
        %v3255 = vperm.slane %v3211, 0
        %v3259 = vunpack.c.l.b16 %v3252
        %v3260 = vunpack.c.l.b16 %v3253
        %v3261 = vpack.c.b16 %v3260, %v3259
        %v3264 = vunpack.c.l.b16 %v3208
        %v3265 = vunpack.c.l.b16 %v3209
        %v3266 = vpack.c.b16 %v3265, %v3264
        %v3268 = vsel %vm2019, %v3261, 0
        %v3271 = vsel %vm2023, %v3266, 0
        %3273 = vmatpush.bf16.msra.mxu0 0
        %3274 = vmatpush.bf16.msra.mxu0 0
        %3275 = vmatpush.bf16.msra.mxu0 0
        %3276 = vmatpush.bf16.msra.mxu0 0
        %3277 = vmatpush.bf16.msra.mxu0 0
        %3278 = vmatpush.bf16.msra.mxu0 0
        %3279 = vmatpush.bf16.msra.mxu0 0
        %3280 = vmatpush.bf16.msra.mxu0 %v3271
        %3281 = vmatmul.bf16.gmra.mxu0 %v3268
        %v3282 = vpop.f32.mrf.mxu0
        %v3283 = vadd.f32 %v3255, %v3282
        %v3284 = vpop.f32.mrf.mxu0
        %v3285 = vadd.f32 %v3255, %v3284
        %3286 = vdwg.mxu0
        %v3287 = vmax.f32 %v3283, 0.0
        %v3288 = vmax.f32 %v3285, 0.0
        %v3290 = vperm.slane %v3213, 0
        %v3292 = vmul.f32 %v3287, %v3290
        %v3293 = vmul.f32 %v3288, %v3290
        %v3295 = vperm.slane %v3215, 0
        %v3297 = vadd.f32 %v3292, %v3295
        %v3298 = vadd.f32 %v3293, %v3295
        %v3299 = vpack.c.bf16 %v3297, %v3297
        %v3300 = vpack.c.bf16 %v3298, %v3298
        %3303 = vrot.lane.b32.xlu0 %v3299, 8
        %v3304 = vpop.permute.xlu0 %3303
        %3305 = vrot.lane.b32.xlu0 %v3300, 8
        %v3306 = vpop.permute.xlu0 %3305
        %3309 = vst.msk [vmem:[#allocation5] sm:$0xf] %vm2001, %v3304
        %3310 = vst.msk [vmem:[#allocation5 + $0x4] sm:$0xf] %vm2001, %v3306
        %v3311 = vld [vmem:[#allocation4] sm:$0xff]
        %v3312 = vld [vmem:[#allocation4 + $0x8] sm:$0xff]
        %3315 = vrot.lane.b32.xlu0 %v3311, 116
        %v3316 = vpop.permute.xlu0 %3315
        %3317 = vrot.lane.b32.xlu0 %v3312, 116
        %v3318 = vpop.permute.xlu0 %3317
        %v3321 = vadd.f32 %v3297, %v3316
        %v3322 = vadd.f32 %v3298, %v3318
        %s3323 = scalar_lea.vmem %s41, 24
        %v3324 = vld [vmem:[%s3323] sm:$0xf]
        %v3325 = vld [vmem:[%s3323 + $0x4] sm:$0x3]
        %s3326 = scalar_lea.vmem %s35, 3
        %v3327 = vld [vmem:[%s3326] sm:$0x1]
        %s3328 = scalar_lea.vmem %s37, 3
        %v3329 = vld [vmem:[%s3328] sm:$0x1]
        %s3330 = scalar_lea.vmem %s39, 3
        %v3331 = vld [vmem:[%s3330] sm:$0x1]
        %3332 = vst.msk [vmem:[#allocation2 + $0x4] sm:$0xff] %vm1964, %v3321
        %3333 = vst.msk [vmem:[#allocation2 + $0xc] sm:$0xff] %vm1964, %v3322
        %v3334 = vld [vmem:[#allocation2 + $0x1] sm:$0xff]
        %v3335 = vld [vmem:[#allocation2 + $0x9] sm:$0xff]
        %v3336 = vpack.c.bf16 %v3334, %v3334
        %v3337 = vpack.c.bf16 %v3335, %v3335
        %3338 = vst.msk [vmem:[#allocation3] sm:$0xf] %vm1971, %v3336
        %3339 = vst.msk [vmem:[#allocation3 + $0x4] sm:$0xf] %vm1971, %v3337
        %v3340 = vld [vmem:[#allocation2 + $0x4] sm:$0xff]
        %v3341 = vld [vmem:[#allocation2 + $0xc] sm:$0xff]
        %v3342 = vpack.c.bf16 %v3340, %v3340
        %v3343 = vpack.c.bf16 %v3341, %v3341
        %3346 = vrot.lane.b32.xlu0 %v3342, 4
        %v3347 = vpop.permute.xlu0 %3346
        %3348 = vrot.lane.b32.xlu0 %v3343, 4
        %v3349 = vpop.permute.xlu0 %3348
        %3352 = vst.msk [vmem:[#allocation3] sm:$0xf] %vm1986, %v3347
        %3353 = vst.msk [vmem:[#allocation3 + $0x4] sm:$0xf] %vm1986, %v3349
        %v3354 = vld [vmem:[#allocation2 + $0x7] sm:$0xff]
        %v3355 = vld [vmem:[#allocation2 + $0xf] sm:$0xff]
        %v3356 = vpack.c.bf16 %v3354, %v3354
        %v3357 = vpack.c.bf16 %v3355, %v3355
        %3360 = vrot.lane.b32.xlu0 %v3356, 8
        %v3361 = vpop.permute.xlu0 %3360
        %3362 = vrot.lane.b32.xlu0 %v3357, 8
        %v3363 = vpop.permute.xlu0 %3362
        %3366 = vst.msk [vmem:[#allocation3] sm:$0xf] %vm2001, %v3361
        %3367 = vst.msk [vmem:[#allocation3 + $0x4] sm:$0xf] %vm2001, %v3363
        %v3368 = vld [vmem:[#allocation3] sm:$0xf]
        %v3369 = vld [vmem:[#allocation3 + $0x4] sm:$0xf]
        %v3371 = vperm.slane %v3327, 0
        %v3375 = vunpack.c.l.b16 %v3368
        %v3376 = vunpack.c.l.b16 %v3369
        %v3377 = vpack.c.b16 %v3376, %v3375
        %v3380 = vunpack.c.l.b16 %v3324
        %v3381 = vunpack.c.l.b16 %v3325
        %v3382 = vpack.c.b16 %v3381, %v3380
        %v3384 = vsel %vm2019, %v3377, 0
        %v3387 = vsel %vm2023, %v3382, 0
        %3389 = vmatpush.bf16.msra.mxu0 0
        %3390 = vmatpush.bf16.msra.mxu0 0
        %3391 = vmatpush.bf16.msra.mxu0 0
        %3392 = vmatpush.bf16.msra.mxu0 0
        %3393 = vmatpush.bf16.msra.mxu0 0
        %3394 = vmatpush.bf16.msra.mxu0 0
        %3395 = vmatpush.bf16.msra.mxu0 0
        %3396 = vmatpush.bf16.msra.mxu0 %v3387
        %3397 = vmatmul.bf16.gmra.mxu0 %v3384
        %v3398 = vpop.f32.mrf.mxu0
        %v3399 = vadd.f32 %v3371, %v3398
        %v3400 = vpop.f32.mrf.mxu0
        %v3401 = vadd.f32 %v3371, %v3400
        %3402 = vdwg.mxu0
        %v3403 = vmax.f32 %v3399, 0.0
        %v3404 = vmax.f32 %v3401, 0.0
        %v3406 = vperm.slane %v3329, 0
        %v3408 = vmul.f32 %v3403, %v3406
        %v3409 = vmul.f32 %v3404, %v3406
        %v3411 = vperm.slane %v3331, 0
        %v3413 = vadd.f32 %v3408, %v3411
        %v3414 = vadd.f32 %v3409, %v3411
        %v3415 = vpack.c.bf16 %v3413, %v3413
        %v3416 = vpack.c.bf16 %v3414, %v3414
        %3419 = vrot.lane.b32.xlu0 %v3415, 12
        %v3420 = vpop.permute.xlu0 %3419
        %3421 = vrot.lane.b32.xlu0 %v3416, 12
        %v3422 = vpop.permute.xlu0 %3421
        %3425 = vst.msk [vmem:[#allocation5] sm:$0xf] %vm2403, %v3420
        %3426 = vst.msk [vmem:[#allocation5 + $0x4] sm:$0xf] %vm2403, %v3422
        %v3427 = vld [vmem:[#allocation4] sm:$0xff]
        %v3428 = vld [vmem:[#allocation4 + $0x8] sm:$0xff]
        %3431 = vrot.lane.b32.xlu0 %v3427, 112
        %v3432 = vpop.permute.xlu0 %3431
        %3433 = vrot.lane.b32.xlu0 %v3428, 112
        %v3434 = vpop.permute.xlu0 %3433
        %v3437 = vadd.f32 %v3413, %v3432
        %v3438 = vadd.f32 %v3414, %v3434
        %s3439 = scalar_lea.vmem %s41, 32
        %v3440 = vld [vmem:[%s3439] sm:$0xf]
        %v3441 = vld [vmem:[%s3439 + $0x4] sm:$0x3]
        %s3442 = scalar_lea.vmem %s35, 4
        %v3443 = vld [vmem:[%s3442] sm:$0x1]
        %s3444 = scalar_lea.vmem %s37, 4
        %v3445 = vld [vmem:[%s3444] sm:$0x1]
        %s3446 = scalar_lea.vmem %s39, 4
        %v3447 = vld [vmem:[%s3446] sm:$0x1]
        %3448 = vst.msk [vmem:[#allocation2 + $0x4] sm:$0xff] %vm1964, %v3437
        %3449 = vst.msk [vmem:[#allocation2 + $0xc] sm:$0xff] %vm1964, %v3438
        %v3450 = vld [vmem:[#allocation2 + $0x1] sm:$0xff]
        %v3451 = vld [vmem:[#allocation2 + $0x9] sm:$0xff]
        %v3452 = vpack.c.bf16 %v3450, %v3450
        %v3453 = vpack.c.bf16 %v3451, %v3451
        %3454 = vst.msk [vmem:[#allocation3] sm:$0xf] %vm1971, %v3452
        %3455 = vst.msk [vmem:[#allocation3 + $0x4] sm:$0xf] %vm1971, %v3453
        %v3456 = vld [vmem:[#allocation2 + $0x4] sm:$0xff]
        %v3457 = vld [vmem:[#allocation2 + $0xc] sm:$0xff]
        %v3458 = vpack.c.bf16 %v3456, %v3456
        %v3459 = vpack.c.bf16 %v3457, %v3457
        %3462 = vrot.lane.b32.xlu0 %v3458, 4
        %v3463 = vpop.permute.xlu0 %3462
        %3464 = vrot.lane.b32.xlu0 %v3459, 4
        %v3465 = vpop.permute.xlu0 %3464
        %3468 = vst.msk [vmem:[#allocation3] sm:$0xf] %vm1986, %v3463
        %3469 = vst.msk [vmem:[#allocation3 + $0x4] sm:$0xf] %vm1986, %v3465
        %v3470 = vld [vmem:[#allocation2 + $0x7] sm:$0xff]
        %v3471 = vld [vmem:[#allocation2 + $0xf] sm:$0xff]
        %v3472 = vpack.c.bf16 %v3470, %v3470
        %v3473 = vpack.c.bf16 %v3471, %v3471
        %3476 = vrot.lane.b32.xlu0 %v3472, 8
        %v3477 = vpop.permute.xlu0 %3476
        %3478 = vrot.lane.b32.xlu0 %v3473, 8
        %v3479 = vpop.permute.xlu0 %3478
        %3482 = vst.msk [vmem:[#allocation3] sm:$0xf] %vm2001, %v3477
        %3483 = vst.msk [vmem:[#allocation3 + $0x4] sm:$0xf] %vm2001, %v3479
        %v3484 = vld [vmem:[#allocation3] sm:$0xf]
        %v3485 = vld [vmem:[#allocation3 + $0x4] sm:$0xf]
        %v3487 = vperm.slane %v3443, 0
        %v3491 = vunpack.c.l.b16 %v3484
        %v3492 = vunpack.c.l.b16 %v3485
        %v3493 = vpack.c.b16 %v3492, %v3491
        %v3496 = vunpack.c.l.b16 %v3440
        %v3497 = vunpack.c.l.b16 %v3441
        %v3498 = vpack.c.b16 %v3497, %v3496
        %v3500 = vsel %vm2019, %v3493, 0
        %v3503 = vsel %vm2023, %v3498, 0
        %3505 = vmatpush.bf16.msra.mxu0 0
        %3506 = vmatpush.bf16.msra.mxu0 0
        %3507 = vmatpush.bf16.msra.mxu0 0
        %3508 = vmatpush.bf16.msra.mxu0 0
        %3509 = vmatpush.bf16.msra.mxu0 0
        %3510 = vmatpush.bf16.msra.mxu0 0
        %3511 = vmatpush.bf16.msra.mxu0 0
        %3512 = vmatpush.bf16.msra.mxu0 %v3503
        %3513 = vmatmul.bf16.gmra.mxu0 %v3500
        %v3514 = vpop.f32.mrf.mxu0
        %v3515 = vadd.f32 %v3487, %v3514
        %v3516 = vpop.f32.mrf.mxu0
        %v3517 = vadd.f32 %v3487, %v3516
        %3518 = vdwg.mxu0
        %v3519 = vmax.f32 %v3515, 0.0
        %v3520 = vmax.f32 %v3517, 0.0
        %v3522 = vperm.slane %v3445, 0
        %v3524 = vmul.f32 %v3519, %v3522
        %v3525 = vmul.f32 %v3520, %v3522
        %v3527 = vperm.slane %v3447, 0
        %v3529 = vadd.f32 %v3524, %v3527
        %v3530 = vadd.f32 %v3525, %v3527
        %v3531 = vpack.c.bf16 %v3529, %v3529
        %v3532 = vpack.c.bf16 %v3530, %v3530
        %3535 = vrot.lane.b32.xlu0 %v3531, 16
        %v3536 = vpop.permute.xlu0 %3535
        %3537 = vrot.lane.b32.xlu0 %v3532, 16
        %v3538 = vpop.permute.xlu0 %3537
        %3541 = vst.msk [vmem:[#allocation5] sm:$0xf] %vm2520, %v3536
        %3542 = vst.msk [vmem:[#allocation5 + $0x4] sm:$0xf] %vm2520, %v3538
        %v3543 = vld [vmem:[#allocation4] sm:$0xff]
        %v3544 = vld [vmem:[#allocation4 + $0x8] sm:$0xff]
        %3547 = vrot.lane.b32.xlu0 %v3543, 108
        %v3548 = vpop.permute.xlu0 %3547
        %3549 = vrot.lane.b32.xlu0 %v3544, 108
        %v3550 = vpop.permute.xlu0 %3549
        %v3553 = vadd.f32 %v3529, %v3548
        %v3554 = vadd.f32 %v3530, %v3550
        %s3555 = scalar_lea.vmem %s41, 40
        %v3556 = vld [vmem:[%s3555] sm:$0xf]
        %v3557 = vld [vmem:[%s3555 + $0x4] sm:$0x3]
        %s3558 = scalar_lea.vmem %s35, 5
        %v3559 = vld [vmem:[%s3558] sm:$0x1]
        %s3560 = scalar_lea.vmem %s37, 5
        %v3561 = vld [vmem:[%s3560] sm:$0x1]
        %s3562 = scalar_lea.vmem %s39, 5
        %v3563 = vld [vmem:[%s3562] sm:$0x1]
        %3564 = vst.msk [vmem:[#allocation2 + $0x4] sm:$0xff] %vm1964, %v3553
        %3565 = vst.msk [vmem:[#allocation2 + $0xc] sm:$0xff] %vm1964, %v3554
        %v3566 = vld [vmem:[#allocation2 + $0x1] sm:$0xff]
        %v3567 = vld [vmem:[#allocation2 + $0x9] sm:$0xff]
        %v3568 = vpack.c.bf16 %v3566, %v3566
        %v3569 = vpack.c.bf16 %v3567, %v3567
        %3570 = vst.msk [vmem:[#allocation3] sm:$0xf] %vm1971, %v3568
        %3571 = vst.msk [vmem:[#allocation3 + $0x4] sm:$0xf] %vm1971, %v3569
        %v3572 = vld [vmem:[#allocation2 + $0x4] sm:$0xff]
        %v3573 = vld [vmem:[#allocation2 + $0xc] sm:$0xff]
        %v3574 = vpack.c.bf16 %v3572, %v3572
        %v3575 = vpack.c.bf16 %v3573, %v3573
        %3578 = vrot.lane.b32.xlu0 %v3574, 4
        %v3579 = vpop.permute.xlu0 %3578
        %3580 = vrot.lane.b32.xlu0 %v3575, 4
        %v3581 = vpop.permute.xlu0 %3580
        %3584 = vst.msk [vmem:[#allocation3] sm:$0xf] %vm1986, %v3579
        %3585 = vst.msk [vmem:[#allocation3 + $0x4] sm:$0xf] %vm1986, %v3581
        %v3586 = vld [vmem:[#allocation2 + $0x7] sm:$0xff]
        %v3587 = vld [vmem:[#allocation2 + $0xf] sm:$0xff]
        %v3588 = vpack.c.bf16 %v3586, %v3586
        %v3589 = vpack.c.bf16 %v3587, %v3587
        %3592 = vrot.lane.b32.xlu0 %v3588, 8
        %v3593 = vpop.permute.xlu0 %3592
        %3594 = vrot.lane.b32.xlu0 %v3589, 8
        %v3595 = vpop.permute.xlu0 %3594
        %3598 = vst.msk [vmem:[#allocation3] sm:$0xf] %vm2001, %v3593
        %3599 = vst.msk [vmem:[#allocation3 + $0x4] sm:$0xf] %vm2001, %v3595
        %v3600 = vld [vmem:[#allocation3] sm:$0xf]
        %v3601 = vld [vmem:[#allocation3 + $0x4] sm:$0xf]
        %v3603 = vperm.slane %v3559, 0
        %v3607 = vunpack.c.l.b16 %v3600
        %v3608 = vunpack.c.l.b16 %v3601
        %v3609 = vpack.c.b16 %v3608, %v3607
        %v3612 = vunpack.c.l.b16 %v3556
        %v3613 = vunpack.c.l.b16 %v3557
        %v3614 = vpack.c.b16 %v3613, %v3612
        %v3616 = vsel %vm2019, %v3609, 0
        %v3619 = vsel %vm2023, %v3614, 0
        %3621 = vmatpush.bf16.msra.mxu0 0
        %3622 = vmatpush.bf16.msra.mxu0 0
        %3623 = vmatpush.bf16.msra.mxu0 0
        %3624 = vmatpush.bf16.msra.mxu0 0
        %3625 = vmatpush.bf16.msra.mxu0 0
        %3626 = vmatpush.bf16.msra.mxu0 0
        %3627 = vmatpush.bf16.msra.mxu0 0
        %3628 = vmatpush.bf16.msra.mxu0 %v3619
        %3629 = vmatmul.bf16.gmra.mxu0 %v3616
        %v3630 = vpop.f32.mrf.mxu0
        %v3631 = vadd.f32 %v3603, %v3630
        %v3632 = vpop.f32.mrf.mxu0
        %v3633 = vadd.f32 %v3603, %v3632
        %3634 = vdwg.mxu0
        %v3635 = vmax.f32 %v3631, 0.0
        %v3636 = vmax.f32 %v3633, 0.0
        %v3638 = vperm.slane %v3561, 0
        %v3640 = vmul.f32 %v3635, %v3638
        %v3641 = vmul.f32 %v3636, %v3638
        %v3643 = vperm.slane %v3563, 0
        %v3645 = vadd.f32 %v3640, %v3643
        %v3646 = vadd.f32 %v3641, %v3643
        %v3647 = vpack.c.bf16 %v3645, %v3645
        %v3648 = vpack.c.bf16 %v3646, %v3646
        %3651 = vrot.lane.b32.xlu0 %v3647, 20
        %v3652 = vpop.permute.xlu0 %3651
        %3653 = vrot.lane.b32.xlu0 %v3648, 20
        %v3654 = vpop.permute.xlu0 %3653
        %3657 = vst.msk [vmem:[#allocation5] sm:$0xf] %vm2637, %v3652
        %3658 = vst.msk [vmem:[#allocation5 + $0x4] sm:$0xf] %vm2637, %v3654
        %v3659 = vld [vmem:[#allocation4] sm:$0xff]
        %v3660 = vld [vmem:[#allocation4 + $0x8] sm:$0xff]
        %3663 = vrot.lane.b32.xlu0 %v3659, 104
        %v3664 = vpop.permute.xlu0 %3663
        %3665 = vrot.lane.b32.xlu0 %v3660, 104
        %v3666 = vpop.permute.xlu0 %3665
        %v3669 = vadd.f32 %v3645, %v3664
        %v3670 = vadd.f32 %v3646, %v3666
        %s3671 = scalar_lea.vmem %s41, 48
        %v3672 = vld [vmem:[%s3671] sm:$0xf]
        %v3673 = vld [vmem:[%s3671 + $0x4] sm:$0x3]
        %s3674 = scalar_lea.vmem %s35, 6
        %v3675 = vld [vmem:[%s3674] sm:$0x1]
        %s3676 = scalar_lea.vmem %s37, 6
        %v3677 = vld [vmem:[%s3676] sm:$0x1]
        %s3678 = scalar_lea.vmem %s39, 6
        %v3679 = vld [vmem:[%s3678] sm:$0x1]
        %3680 = vst.msk [vmem:[#allocation2 + $0x4] sm:$0xff] %vm1964, %v3669
        %3681 = vst.msk [vmem:[#allocation2 + $0xc] sm:$0xff] %vm1964, %v3670
        %v3682 = vld [vmem:[#allocation2 + $0x1] sm:$0xff]
        %v3683 = vld [vmem:[#allocation2 + $0x9] sm:$0xff]
        %v3684 = vpack.c.bf16 %v3682, %v3682
        %v3685 = vpack.c.bf16 %v3683, %v3683
        %3686 = vst.msk [vmem:[#allocation3] sm:$0xf] %vm1971, %v3684
        %3687 = vst.msk [vmem:[#allocation3 + $0x4] sm:$0xf] %vm1971, %v3685
        %v3688 = vld [vmem:[#allocation2 + $0x4] sm:$0xff]
        %v3689 = vld [vmem:[#allocation2 + $0xc] sm:$0xff]
        %v3690 = vpack.c.bf16 %v3688, %v3688
        %v3691 = vpack.c.bf16 %v3689, %v3689
        %3694 = vrot.lane.b32.xlu0 %v3690, 4
        %v3695 = vpop.permute.xlu0 %3694
        %3696 = vrot.lane.b32.xlu0 %v3691, 4
        %v3697 = vpop.permute.xlu0 %3696
        %3700 = vst.msk [vmem:[#allocation3] sm:$0xf] %vm1986, %v3695
        %3701 = vst.msk [vmem:[#allocation3 + $0x4] sm:$0xf] %vm1986, %v3697
        %v3702 = vld [vmem:[#allocation2 + $0x7] sm:$0xff]
        %v3703 = vld [vmem:[#allocation2 + $0xf] sm:$0xff]
        %v3704 = vpack.c.bf16 %v3702, %v3702
        %v3705 = vpack.c.bf16 %v3703, %v3703
        %3708 = vrot.lane.b32.xlu0 %v3704, 8
        %v3709 = vpop.permute.xlu0 %3708
        %3710 = vrot.lane.b32.xlu0 %v3705, 8
        %v3711 = vpop.permute.xlu0 %3710
        %3714 = vst.msk [vmem:[#allocation3] sm:$0xf] %vm2001, %v3709
        %3715 = vst.msk [vmem:[#allocation3 + $0x4] sm:$0xf] %vm2001, %v3711
        %v3716 = vld [vmem:[#allocation3] sm:$0xf]
        %v3717 = vld [vmem:[#allocation3 + $0x4] sm:$0xf]
        %v3719 = vperm.slane %v3675, 0
        %v3723 = vunpack.c.l.b16 %v3716
        %v3724 = vunpack.c.l.b16 %v3717
        %v3725 = vpack.c.b16 %v3724, %v3723
        %v3728 = vunpack.c.l.b16 %v3672
        %v3729 = vunpack.c.l.b16 %v3673
        %v3730 = vpack.c.b16 %v3729, %v3728
        %v3732 = vsel %vm2019, %v3725, 0
        %v3735 = vsel %vm2023, %v3730, 0
        %3737 = vmatpush.bf16.msra.mxu0 0
        %3738 = vmatpush.bf16.msra.mxu0 0
        %3739 = vmatpush.bf16.msra.mxu0 0
        %3740 = vmatpush.bf16.msra.mxu0 0
        %3741 = vmatpush.bf16.msra.mxu0 0
        %3742 = vmatpush.bf16.msra.mxu0 0
        %3743 = vmatpush.bf16.msra.mxu0 0
        %3744 = vmatpush.bf16.msra.mxu0 %v3735
        %3745 = vmatmul.bf16.gmra.mxu0 %v3732
        %v3746 = vpop.f32.mrf.mxu0
        %v3747 = vadd.f32 %v3719, %v3746
        %v3748 = vpop.f32.mrf.mxu0
        %v3749 = vadd.f32 %v3719, %v3748
        %3750 = vdwg.mxu0
        %v3751 = vmax.f32 %v3747, 0.0
        %v3752 = vmax.f32 %v3749, 0.0
        %v3754 = vperm.slane %v3677, 0
        %v3756 = vmul.f32 %v3751, %v3754
        %v3757 = vmul.f32 %v3752, %v3754
        %v3759 = vperm.slane %v3679, 0
        %v3761 = vadd.f32 %v3756, %v3759
        %v3762 = vadd.f32 %v3757, %v3759
        %v3763 = vpack.c.bf16 %v3761, %v3761
        %v3764 = vpack.c.bf16 %v3762, %v3762
        %3767 = vrot.lane.b32.xlu0 %v3763, 24
        %v3768 = vpop.permute.xlu0 %3767
        %3769 = vrot.lane.b32.xlu0 %v3764, 24
        %v3770 = vpop.permute.xlu0 %3769
        %3773 = vst.msk [vmem:[#allocation5] sm:$0xf] %vm2754, %v3768
        %3774 = vst.msk [vmem:[#allocation5 + $0x4] sm:$0xf] %vm2754, %v3770
        %v3775 = vld [vmem:[#allocation4] sm:$0xff]
        %v3776 = vld [vmem:[#allocation4 + $0x8] sm:$0xff]
        %v3777 = vpack.c.bf16 %v3775, %v3775
        %v3778 = vpack.c.bf16 %v3776, %v3776
        %3779 = vst.msk [vmem:[#allocation5] sm:$0xf] %vm2761, %v3777
        %3780 = vst.msk [vmem:[#allocation5 + $0x4] sm:$0xf] %vm2761, %v3778
        %v3781 = vld [vmem:[#allocation5] sm:$0xf]
        %v3782 = vld [vmem:[#allocation5 + $0x4] sm:$0xf]
        %v3783 = vld [vmem:[%s65] sm:$0xf]
        %v3784 = vld [vmem:[%s65 + $0x4] sm:$0xf]
        %v3785 = vld [vmem:[%s65 + $0x8] sm:$0xf]
        %v3786 = vld [vmem:[%s65 + $0xc] sm:$0xf]
        %v3787 = vld [vmem:[%s59] sm:$0x1]
        %v3788 = vld [vmem:[%s61] sm:$0x1]
        %v3789 = vld [vmem:[%s63] sm:$0x1]
        %v3791 = vperm.slane %v3787, 0
        %v3795 = vunpack.c.l.b16 %v3781
        %v3796 = vunpack.c.l.b16 %v3782
        %v3797 = vpack.c.b16 %v3796, %v3795
        %v3802 = vunpack.c.l.b16 %v3783
        %v3803 = vunpack.c.l.b16 %v3784
        %v3804 = vunpack.c.l.b16 %v3785
        %v3805 = vunpack.c.l.b16 %v3786
        %v3806 = vpack.c.b16 %v3803, %v3802
        %v3807 = vpack.c.b16 %v3805, %v3804
        %v3811 = vsel %vm1925, %v3797, 0
        %3813 = vmatpush.bf16.msra.mxu0 0
        %3814 = vmatpush.bf16.msra.mxu0 0
        %3815 = vmatpush.bf16.msra.mxu0 0
        %3816 = vmatpush.bf16.msra.mxu0 0
        %3817 = vmatpush.bf16.msra.mxu0 0
        %3818 = vmatpush.bf16.msra.mxu0 0
        %3819 = vmatpush.bf16.msra.mxu0 %v3807
        %3820 = vmatpush.bf16.msra.mxu0 %v3806
        %3821 = vmatmul.bf16.gmra.mxu0 %v3811
        %v3822 = vpop.f32.mrf.mxu0
        %v3823 = vadd.f32 %v3791, %v3822
        %v3824 = vpop.f32.mrf.mxu0
        %v3825 = vadd.f32 %v3791, %v3824
        %3826 = vdwg.mxu0
        %v3827 = vmax.f32 %v3823, 0.0
        %v3828 = vmax.f32 %v3825, 0.0
        %v3830 = vperm.slane %v3788, 0
        %v3832 = vmul.f32 %v3827, %v3830
        %v3833 = vmul.f32 %v3828, %v3830
        %v3835 = vperm.slane %v3789, 0
        %v3837 = vadd.f32 %v3832, %v3835
        %v3838 = vadd.f32 %v3833, %v3835
        %v3839 = vsel %vm1925, %v3837, 0.0
        %v3840 = vsel %vm1925, %v3838, 0.0
        %v3841 = vadd.f32 %v3839, %v3840
        %v3842 = vrot.slane %v3841, 4
        %v3843 = vadd.f32 %v3841, %v3842
        %v3844 = vrot.slane %v3843, 2
        %v3845 = vadd.f32 %v3843, %v3844
        %v3846 = vrot.slane %v3845, 1
        %v3847 = vadd.f32 %v3845, %v3846
        %v3848 = vmul.f32 %v3847, %v2837
        %v3849 = vpack.c.bf16 %v3848, %v3848
        %v3850 = vld [vmem:[%s47] sm:$0xf]
        %v3851 = vld [vmem:[%s47 + $0x4] sm:$0xf]
        %v3852 = vld [vmem:[%s47 + $0x8] sm:$0xf]
        %v3853 = vld [vmem:[%s47 + $0xc] sm:$0xf]
        %v3854 = vld [vmem:[%s43] sm:$0x1]
        %v3859 = vunpack.c.l.b16 %v3850
        %v3860 = vunpack.c.l.b16 %v3851
        %v3861 = vunpack.c.l.b16 %v3852
        %v3862 = vunpack.c.l.b16 %v3853
        %v3863 = vpack.c.b16 %v3860, %v3859
        %v3864 = vpack.c.b16 %v3862, %v3861
        %v3868 = vsel %vm1925, %v3849, 0
        %3870 = vmatpush.bf16.msra.mxu0 0
        %3871 = vmatpush.bf16.msra.mxu0 0
        %3872 = vmatpush.bf16.msra.mxu0 0
        %3873 = vmatpush.bf16.msra.mxu0 0
        %3874 = vmatpush.bf16.msra.mxu0 0
        %3875 = vmatpush.bf16.msra.mxu0 0
        %3876 = vmatpush.bf16.msra.mxu0 %v3864
        %3877 = vmatpush.bf16.msra.mxu0 %v3863
        %3878 = vmatmul.bf16.gmra.mxu0 %v3868
        %v3879 = vpop.f32.mrf.mxu0
        %v3880 = vadd.f32 %v3854, %v3879
        %v3881 = vpop.f32.mrf.mxu0
        %3882 = vdwg.mxu0
        %v3883 = vmax.f32 %v3880, 0.0
        %v3884 = vpack.c.bf16 %v3883, %v3883
        %v3885 = vld [vmem:[%s49] sm:$0xf]
        %v3886 = vld [vmem:[%s49 + $0x4] sm:$0xf]
        %v3887 = vld [vmem:[%s45] sm:$0x1]
        %v3890 = vunpack.c.l.b16 %v3885
        %v3891 = vunpack.c.l.b16 %v3886
        %v3892 = vpack.c.b16 %v3891, %v3890
        %v3895 = vsel %vm1763, %v3884, 0
        %3897 = vmatpush.bf16.msra.mxu0 0
        %3898 = vmatpush.bf16.msra.mxu0 0
        %3899 = vmatpush.bf16.msra.mxu0 0
        %3900 = vmatpush.bf16.msra.mxu0 0
        %3901 = vmatpush.bf16.msra.mxu0 0
        %3902 = vmatpush.bf16.msra.mxu0 0
        %3903 = vmatpush.bf16.msra.mxu0 0
        %3904 = vmatpush.bf16.msra.mxu0 %v3892
        %3905 = vmatmul.bf16.gmra.mxu0 %v3895
        %v3906 = vpop.f32.mrf.mxu0
        %v3907 = vadd.f32 %v3887, %v3906
        %v3908 = vpop.f32.mrf.mxu0
        %3909 = vdwg.mxu0
        %v3910 = vxor.u32 %v3907, 2147483648
        %v3911 = vmul.f32 %v3910, 1.442695
        %v3912 = vpow.pop %v3911
        %v3913 = vadd.f32 %v3912, 1.0
        %v3914 = vrcp.pop %v3913
        %v3915 = vmul.f32 %v3913, %v3914
        %v3916 = vsub.f32 1.0, %v3915
        %v3917 = vmul.f32 %v3914, %v3916
        %v3918 = vadd.f32 %v3914, %v3917
        %vm3919 = vweird.f32 %v3913
        %vm3920 = vweird.f32 %v3914
        %vm3921 = vmor %vm3919, %vm3920
        %v3922 = vsel %vm3921, %v3914, %v3918
        %v3923 = vand.u32 2147483647, %v3913
        %vm3924 = vcmp.eq.f32.partialorder %v3923, 8.507059e+37
        %v3925 = vand.u32 %v3913, 2147483648
        %v3926 = vor.u32 1.1754944e-38, %v3925
        %v3927 = vsel %vm3924, %v3926, %v3922
        %v3928 = vmul.f32 1.0, %v3927
        %v3929 = vperm.slane %v3928, 0
        %v3930 = vmul.f32 %v3837, %v3929
        %v3931 = vmul.f32 %v3838, %v3929
        %v3932 = vadd.f32 %v2929, %v3930
        %v3933 = vadd.f32 %v2930, %v3931
        %v3934 = vpack.c.bf16 %v3932, %v3932
        %v3935 = vpack.c.bf16 %v3933, %v3933
        %3938 = vrot.lane.b32.xlu0 %v3934, 32
        %v3939 = vpop.permute.xlu0 %3938
        %3940 = vrot.lane.b32.xlu0 %v3935, 32
        %v3941 = vpop.permute.xlu0 %3940
        %vm3944 = vcmask 519424
        %3945 = vst.msk [vmem:[#allocation6] sm:$0xf] %vm3944, %v3939
        %3946 = vst.msk [vmem:[#allocation6 + $0x4] sm:$0xf] %vm3944, %v3941
        %v3947 = vadd.f32 %v2929, %v3932
        %v3948 = vadd.f32 %v2930, %v3933
        %v3949 = vld [vmem:[%s89] sm:$0xf]
        %v3950 = vld [vmem:[%s89 + $0x4] sm:$0xf]
        %v3951 = vld [vmem:[%s89 + $0x8] sm:$0xf]
        %v3952 = vld [vmem:[%s89 + $0xc] sm:$0xf]
        %v3953 = vld [vmem:[%s83] sm:$0x1]
        %v3954 = vld [vmem:[%s85] sm:$0x1]
        %v3955 = vld [vmem:[%s87] sm:$0x1]
        %v3956 = vpack.c.bf16 %v3948, %v3947
        %v3958 = vperm.slane %v3953, 0
        %v3964 = vunpack.c.l.b16 %v3949
        %v3965 = vunpack.c.l.b16 %v3950
        %v3966 = vunpack.c.l.b16 %v3951
        %v3967 = vunpack.c.l.b16 %v3952
        %v3968 = vpack.c.b16 %v3965, %v3964
        %v3969 = vpack.c.b16 %v3967, %v3966
        %v3973 = vsel %vm1925, %v3956, 0
        %3975 = vmatpush.bf16.msra.mxu0 0
        %3976 = vmatpush.bf16.msra.mxu0 0
        %3977 = vmatpush.bf16.msra.mxu0 0
        %3978 = vmatpush.bf16.msra.mxu0 0
        %3979 = vmatpush.bf16.msra.mxu0 0
        %3980 = vmatpush.bf16.msra.mxu0 0
        %3981 = vmatpush.bf16.msra.mxu0 %v3969
        %3982 = vmatpush.bf16.msra.mxu0 %v3968
        %3983 = vmatmul.bf16.gmra.mxu0 %v3973
        %v3984 = vpop.f32.mrf.mxu0
        %v3985 = vadd.f32 %v3958, %v3984
        %v3986 = vpop.f32.mrf.mxu0
        %v3987 = vadd.f32 %v3958, %v3986
        %3988 = vdwg.mxu0
        %v3989 = vmax.f32 %v3985, 0.0
        %v3990 = vmax.f32 %v3987, 0.0
        %v3992 = vperm.slane %v3954, 0
        %v3994 = vmul.f32 %v3989, %v3992
        %v3995 = vmul.f32 %v3990, %v3992
        %v3997 = vperm.slane %v3955, 0
        %v3999 = vadd.f32 %v3994, %v3997
        %v4000 = vadd.f32 %v3995, %v3997
        %4001 = vst.msk [vmem:[#allocation4] sm:$0xff] %vm1925, %v3999
        %4002 = vst.msk [vmem:[#allocation4 + $0x8] sm:$0xff] %vm1925, %v4000
        %v4003 = vld [vmem:[#allocation4] sm:$0xff]
        %v4004 = vld [vmem:[#allocation4 + $0x8] sm:$0xff]
        %v4005 = vld [vmem:[%s73] sm:$0xf]
        %v4006 = vld [vmem:[%s73 + $0x4] sm:$0x3]
        %v4007 = vld [vmem:[%s67] sm:$0x1]
        %v4008 = vld [vmem:[%s69] sm:$0x1]
        %v4009 = vld [vmem:[%s71] sm:$0x1]
        %4010 = vst.msk [vmem:[#allocation2 + $0x4] sm:$0xff] %vm1964, %v4003
        %4011 = vst.msk [vmem:[#allocation2 + $0xc] sm:$0xff] %vm1964, %v4004
        %v4012 = vld [vmem:[#allocation2] sm:$0xff]
        %v4013 = vld [vmem:[#allocation2 + $0x8] sm:$0xff]
        %v4014 = vpack.c.bf16 %v4012, %v4012
        %v4015 = vpack.c.bf16 %v4013, %v4013
        %4016 = vst.msk [vmem:[#allocation3] sm:$0xf] %vm1971, %v4014
        %4017 = vst.msk [vmem:[#allocation3 + $0x4] sm:$0xf] %vm1971, %v4015
        %v4018 = vld [vmem:[#allocation2 + $0x4] sm:$0xff]
        %v4019 = vld [vmem:[#allocation2 + $0xc] sm:$0xff]
        %v4020 = vpack.c.bf16 %v4018, %v4018
        %v4021 = vpack.c.bf16 %v4019, %v4019
        %4024 = vrot.lane.b32.xlu0 %v4020, 4
        %v4025 = vpop.permute.xlu0 %4024
        %4026 = vrot.lane.b32.xlu0 %v4021, 4
        %v4027 = vpop.permute.xlu0 %4026
        %4030 = vst.msk [vmem:[#allocation3] sm:$0xf] %vm1986, %v4025
        %4031 = vst.msk [vmem:[#allocation3 + $0x4] sm:$0xf] %vm1986, %v4027
        %v4032 = vld [vmem:[#allocation2 + $0x8] sm:$0xff]
        %v4033 = vld [vmem:[#allocation2 + $0x10] sm:$0xff]
        %v4034 = vpack.c.bf16 %v4032, %v4032
        %v4035 = vpack.c.bf16 %v4033, %v4033
        %4038 = vrot.lane.b32.xlu0 %v4034, 8
        %v4039 = vpop.permute.xlu0 %4038
        %4040 = vrot.lane.b32.xlu0 %v4035, 8
        %v4041 = vpop.permute.xlu0 %4040
        %4044 = vst.msk [vmem:[#allocation3] sm:$0xf] %vm2001, %v4039
        %4045 = vst.msk [vmem:[#allocation3 + $0x4] sm:$0xf] %vm2001, %v4041
        %v4046 = vld [vmem:[#allocation3] sm:$0xf]
        %v4047 = vld [vmem:[#allocation3 + $0x4] sm:$0xf]
        %v4049 = vperm.slane %v4007, 0
        %v4053 = vunpack.c.l.b16 %v4046
        %v4054 = vunpack.c.l.b16 %v4047
        %v4055 = vpack.c.b16 %v4054, %v4053
        %v4058 = vunpack.c.l.b16 %v4005
        %v4059 = vunpack.c.l.b16 %v4006
        %v4060 = vpack.c.b16 %v4059, %v4058
        %v4062 = vsel %vm2019, %v4055, 0
        %v4065 = vsel %vm2023, %v4060, 0
        %4067 = vmatpush.bf16.msra.mxu0 0
        %4068 = vmatpush.bf16.msra.mxu0 0
        %4069 = vmatpush.bf16.msra.mxu0 0
        %4070 = vmatpush.bf16.msra.mxu0 0
        %4071 = vmatpush.bf16.msra.mxu0 0
        %4072 = vmatpush.bf16.msra.mxu0 0
        %4073 = vmatpush.bf16.msra.mxu0 0
        %4074 = vmatpush.bf16.msra.mxu0 %v4065
        %4075 = vmatmul.bf16.gmra.mxu0 %v4062
        %v4076 = vpop.f32.mrf.mxu0
        %v4077 = vadd.f32 %v4049, %v4076
        %v4078 = vpop.f32.mrf.mxu0
        %v4079 = vadd.f32 %v4049, %v4078
        %4080 = vdwg.mxu0
        %v4081 = vmax.f32 %v4077, 0.0
        %v4082 = vmax.f32 %v4079, 0.0
        %v4084 = vperm.slane %v4008, 0
        %v4086 = vmul.f32 %v4081, %v4084
        %v4087 = vmul.f32 %v4082, %v4084
        %v4089 = vperm.slane %v4009, 0
        %v4091 = vadd.f32 %v4086, %v4089
        %v4092 = vadd.f32 %v4087, %v4089
        %v4093 = vpack.c.bf16 %v4091, %v4091
        %v4094 = vpack.c.bf16 %v4092, %v4092
        %4095 = vst.msk [vmem:[#allocation5] sm:$0xf] %vm1971, %v4093
        %4096 = vst.msk [vmem:[#allocation5 + $0x4] sm:$0xf] %vm1971, %v4094
        %v4097 = vld [vmem:[#allocation4] sm:$0xff]
        %v4098 = vld [vmem:[#allocation4 + $0x8] sm:$0xff]
        %4101 = vrot.lane.b32.xlu0 %v4097, 124
        %v4102 = vpop.permute.xlu0 %4101
        %4103 = vrot.lane.b32.xlu0 %v4098, 124
        %v4104 = vpop.permute.xlu0 %4103
        %v4107 = vadd.f32 %v4091, %v4102
        %v4108 = vadd.f32 %v4092, %v4104
        %s4109 = scalar_lea.vmem %s73, 8
        %v4110 = vld [vmem:[%s4109] sm:$0xf]
        %v4111 = vld [vmem:[%s4109 + $0x4] sm:$0x3]
        %s4112 = scalar_lea.vmem %s67, 1
        %v4113 = vld [vmem:[%s4112] sm:$0x1]
        %s4114 = scalar_lea.vmem %s69, 1
        %v4115 = vld [vmem:[%s4114] sm:$0x1]
        %s4116 = scalar_lea.vmem %s71, 1
        %v4117 = vld [vmem:[%s4116] sm:$0x1]
        %4118 = vst.msk [vmem:[#allocation2 + $0x4] sm:$0xff] %vm1964, %v4107
        %4119 = vst.msk [vmem:[#allocation2 + $0xc] sm:$0xff] %vm1964, %v4108
        %v4120 = vld [vmem:[#allocation2] sm:$0xff]
        %v4121 = vld [vmem:[#allocation2 + $0x8] sm:$0xff]
        %v4122 = vpack.c.bf16 %v4120, %v4120
        %v4123 = vpack.c.bf16 %v4121, %v4121
        %4124 = vst.msk [vmem:[#allocation3] sm:$0xf] %vm1971, %v4122
        %4125 = vst.msk [vmem:[#allocation3 + $0x4] sm:$0xf] %vm1971, %v4123
        %v4126 = vld [vmem:[#allocation2 + $0x4] sm:$0xff]
        %v4127 = vld [vmem:[#allocation2 + $0xc] sm:$0xff]
        %v4128 = vpack.c.bf16 %v4126, %v4126
        %v4129 = vpack.c.bf16 %v4127, %v4127
        %4132 = vrot.lane.b32.xlu0 %v4128, 4
        %v4133 = vpop.permute.xlu0 %4132
        %4134 = vrot.lane.b32.xlu0 %v4129, 4
        %v4135 = vpop.permute.xlu0 %4134
        %4138 = vst.msk [vmem:[#allocation3] sm:$0xf] %vm1986, %v4133
        %4139 = vst.msk [vmem:[#allocation3 + $0x4] sm:$0xf] %vm1986, %v4135
        %v4140 = vld [vmem:[#allocation2 + $0x8] sm:$0xff]
        %v4141 = vld [vmem:[#allocation2 + $0x10] sm:$0xff]
        %v4142 = vpack.c.bf16 %v4140, %v4140
        %v4143 = vpack.c.bf16 %v4141, %v4141
        %4146 = vrot.lane.b32.xlu0 %v4142, 8
        %v4147 = vpop.permute.xlu0 %4146
        %4148 = vrot.lane.b32.xlu0 %v4143, 8
        %v4149 = vpop.permute.xlu0 %4148
        %4152 = vst.msk [vmem:[#allocation3] sm:$0xf] %vm2001, %v4147
        %4153 = vst.msk [vmem:[#allocation3 + $0x4] sm:$0xf] %vm2001, %v4149
        %v4154 = vld [vmem:[#allocation3] sm:$0xf]
        %v4155 = vld [vmem:[#allocation3 + $0x4] sm:$0xf]
        %v4157 = vperm.slane %v4113, 0
        %v4161 = vunpack.c.l.b16 %v4154
        %v4162 = vunpack.c.l.b16 %v4155
        %v4163 = vpack.c.b16 %v4162, %v4161
        %v4166 = vunpack.c.l.b16 %v4110
        %v4167 = vunpack.c.l.b16 %v4111
        %v4168 = vpack.c.b16 %v4167, %v4166
        %v4170 = vsel %vm2019, %v4163, 0
        %v4173 = vsel %vm2023, %v4168, 0
        %4175 = vmatpush.bf16.msra.mxu0 0
        %4176 = vmatpush.bf16.msra.mxu0 0
        %4177 = vmatpush.bf16.msra.mxu0 0
        %4178 = vmatpush.bf16.msra.mxu0 0
        %4179 = vmatpush.bf16.msra.mxu0 0
        %4180 = vmatpush.bf16.msra.mxu0 0
        %4181 = vmatpush.bf16.msra.mxu0 0
        %4182 = vmatpush.bf16.msra.mxu0 %v4173
        %4183 = vmatmul.bf16.gmra.mxu0 %v4170
        %v4184 = vpop.f32.mrf.mxu0
        %v4185 = vadd.f32 %v4157, %v4184
        %v4186 = vpop.f32.mrf.mxu0
        %v4187 = vadd.f32 %v4157, %v4186
        %4188 = vdwg.mxu0
        %v4189 = vmax.f32 %v4185, 0.0
        %v4190 = vmax.f32 %v4187, 0.0
        %v4192 = vperm.slane %v4115, 0
        %v4194 = vmul.f32 %v4189, %v4192
        %v4195 = vmul.f32 %v4190, %v4192
        %v4197 = vperm.slane %v4117, 0
        %v4199 = vadd.f32 %v4194, %v4197
        %v4200 = vadd.f32 %v4195, %v4197
        %v4201 = vpack.c.bf16 %v4199, %v4199
        %v4202 = vpack.c.bf16 %v4200, %v4200
        %4205 = vrot.lane.b32.xlu0 %v4201, 4
        %v4206 = vpop.permute.xlu0 %4205
        %4207 = vrot.lane.b32.xlu0 %v4202, 4
        %v4208 = vpop.permute.xlu0 %4207
        %4211 = vst.msk [vmem:[#allocation5] sm:$0xf] %vm1986, %v4206
        %4212 = vst.msk [vmem:[#allocation5 + $0x4] sm:$0xf] %vm1986, %v4208
        %v4213 = vld [vmem:[#allocation4] sm:$0xff]
        %v4214 = vld [vmem:[#allocation4 + $0x8] sm:$0xff]
        %4217 = vrot.lane.b32.xlu0 %v4213, 120
        %v4218 = vpop.permute.xlu0 %4217
        %4219 = vrot.lane.b32.xlu0 %v4214, 120
        %v4220 = vpop.permute.xlu0 %4219
        %v4223 = vadd.f32 %v4199, %v4218
        %v4224 = vadd.f32 %v4200, %v4220
        %s4225 = scalar_lea.vmem %s73, 16
        %v4226 = vld [vmem:[%s4225] sm:$0xf]
        %v4227 = vld [vmem:[%s4225 + $0x4] sm:$0x3]
        %s4228 = scalar_lea.vmem %s67, 2
        %v4229 = vld [vmem:[%s4228] sm:$0x1]
        %s4230 = scalar_lea.vmem %s69, 2
        %v4231 = vld [vmem:[%s4230] sm:$0x1]
        %s4232 = scalar_lea.vmem %s71, 2
        %v4233 = vld [vmem:[%s4232] sm:$0x1]
        %4234 = vst.msk [vmem:[#allocation2 + $0x4] sm:$0xff] %vm1964, %v4223
        %4235 = vst.msk [vmem:[#allocation2 + $0xc] sm:$0xff] %vm1964, %v4224
        %v4236 = vld [vmem:[#allocation2] sm:$0xff]
        %v4237 = vld [vmem:[#allocation2 + $0x8] sm:$0xff]
        %v4238 = vpack.c.bf16 %v4236, %v4236
        %v4239 = vpack.c.bf16 %v4237, %v4237
        %4240 = vst.msk [vmem:[#allocation3] sm:$0xf] %vm1971, %v4238
        %4241 = vst.msk [vmem:[#allocation3 + $0x4] sm:$0xf] %vm1971, %v4239
        %v4242 = vld [vmem:[#allocation2 + $0x4] sm:$0xff]
        %v4243 = vld [vmem:[#allocation2 + $0xc] sm:$0xff]
        %v4244 = vpack.c.bf16 %v4242, %v4242
        %v4245 = vpack.c.bf16 %v4243, %v4243
        %4248 = vrot.lane.b32.xlu0 %v4244, 4
        %v4249 = vpop.permute.xlu0 %4248
        %4250 = vrot.lane.b32.xlu0 %v4245, 4
        %v4251 = vpop.permute.xlu0 %4250
        %4254 = vst.msk [vmem:[#allocation3] sm:$0xf] %vm1986, %v4249
        %4255 = vst.msk [vmem:[#allocation3 + $0x4] sm:$0xf] %vm1986, %v4251
        %v4256 = vld [vmem:[#allocation2 + $0x8] sm:$0xff]
        %v4257 = vld [vmem:[#allocation2 + $0x10] sm:$0xff]
        %v4258 = vpack.c.bf16 %v4256, %v4256
        %v4259 = vpack.c.bf16 %v4257, %v4257
        %4262 = vrot.lane.b32.xlu0 %v4258, 8
        %v4263 = vpop.permute.xlu0 %4262
        %4264 = vrot.lane.b32.xlu0 %v4259, 8
        %v4265 = vpop.permute.xlu0 %4264
        %4268 = vst.msk [vmem:[#allocation3] sm:$0xf] %vm2001, %v4263
        %4269 = vst.msk [vmem:[#allocation3 + $0x4] sm:$0xf] %vm2001, %v4265
        %v4270 = vld [vmem:[#allocation3] sm:$0xf]
        %v4271 = vld [vmem:[#allocation3 + $0x4] sm:$0xf]
        %v4273 = vperm.slane %v4229, 0
        %v4277 = vunpack.c.l.b16 %v4270
        %v4278 = vunpack.c.l.b16 %v4271
        %v4279 = vpack.c.b16 %v4278, %v4277
        %v4282 = vunpack.c.l.b16 %v4226
        %v4283 = vunpack.c.l.b16 %v4227
        %v4284 = vpack.c.b16 %v4283, %v4282
        %v4286 = vsel %vm2019, %v4279, 0
        %v4289 = vsel %vm2023, %v4284, 0
        %4291 = vmatpush.bf16.msra.mxu0 0
        %4292 = vmatpush.bf16.msra.mxu0 0
        %4293 = vmatpush.bf16.msra.mxu0 0
        %4294 = vmatpush.bf16.msra.mxu0 0
        %4295 = vmatpush.bf16.msra.mxu0 0
        %4296 = vmatpush.bf16.msra.mxu0 0
        %4297 = vmatpush.bf16.msra.mxu0 0
        %4298 = vmatpush.bf16.msra.mxu0 %v4289
        %4299 = vmatmul.bf16.gmra.mxu0 %v4286
        %v4300 = vpop.f32.mrf.mxu0
        %v4301 = vadd.f32 %v4273, %v4300
        %v4302 = vpop.f32.mrf.mxu0
        %v4303 = vadd.f32 %v4273, %v4302
        %4304 = vdwg.mxu0
        %v4305 = vmax.f32 %v4301, 0.0
        %v4306 = vmax.f32 %v4303, 0.0
        %v4308 = vperm.slane %v4231, 0
        %v4310 = vmul.f32 %v4305, %v4308
        %v4311 = vmul.f32 %v4306, %v4308
        %v4313 = vperm.slane %v4233, 0
        %v4315 = vadd.f32 %v4310, %v4313
        %v4316 = vadd.f32 %v4311, %v4313
        %v4317 = vpack.c.bf16 %v4315, %v4315
        %v4318 = vpack.c.bf16 %v4316, %v4316
        %4321 = vrot.lane.b32.xlu0 %v4317, 8
        %v4322 = vpop.permute.xlu0 %4321
        %4323 = vrot.lane.b32.xlu0 %v4318, 8
        %v4324 = vpop.permute.xlu0 %4323
        %4327 = vst.msk [vmem:[#allocation5] sm:$0xf] %vm2001, %v4322
        %4328 = vst.msk [vmem:[#allocation5 + $0x4] sm:$0xf] %vm2001, %v4324
        %v4329 = vld [vmem:[#allocation4] sm:$0xff]
        %v4330 = vld [vmem:[#allocation4 + $0x8] sm:$0xff]
        %4333 = vrot.lane.b32.xlu0 %v4329, 116
        %v4334 = vpop.permute.xlu0 %4333
        %4335 = vrot.lane.b32.xlu0 %v4330, 116
        %v4336 = vpop.permute.xlu0 %4335
        %v4339 = vadd.f32 %v4315, %v4334
        %v4340 = vadd.f32 %v4316, %v4336
        %s4341 = scalar_lea.vmem %s73, 24
        %v4342 = vld [vmem:[%s4341] sm:$0xf]
        %v4343 = vld [vmem:[%s4341 + $0x4] sm:$0x3]
        %s4344 = scalar_lea.vmem %s67, 3
        %v4345 = vld [vmem:[%s4344] sm:$0x1]
        %s4346 = scalar_lea.vmem %s69, 3
        %v4347 = vld [vmem:[%s4346] sm:$0x1]
        %s4348 = scalar_lea.vmem %s71, 3
        %v4349 = vld [vmem:[%s4348] sm:$0x1]
        %4350 = vst.msk [vmem:[#allocation2 + $0x4] sm:$0xff] %vm1964, %v4339
        %4351 = vst.msk [vmem:[#allocation2 + $0xc] sm:$0xff] %vm1964, %v4340
        %v4352 = vld [vmem:[#allocation2] sm:$0xff]
        %v4353 = vld [vmem:[#allocation2 + $0x8] sm:$0xff]
        %v4354 = vpack.c.bf16 %v4352, %v4352
        %v4355 = vpack.c.bf16 %v4353, %v4353
        %4356 = vst.msk [vmem:[#allocation3] sm:$0xf] %vm1971, %v4354
        %4357 = vst.msk [vmem:[#allocation3 + $0x4] sm:$0xf] %vm1971, %v4355
        %v4358 = vld [vmem:[#allocation2 + $0x4] sm:$0xff]
        %v4359 = vld [vmem:[#allocation2 + $0xc] sm:$0xff]
        %v4360 = vpack.c.bf16 %v4358, %v4358
        %v4361 = vpack.c.bf16 %v4359, %v4359
        %4364 = vrot.lane.b32.xlu0 %v4360, 4
        %v4365 = vpop.permute.xlu0 %4364
        %4366 = vrot.lane.b32.xlu0 %v4361, 4
        %v4367 = vpop.permute.xlu0 %4366
        %4370 = vst.msk [vmem:[#allocation3] sm:$0xf] %vm1986, %v4365
        %4371 = vst.msk [vmem:[#allocation3 + $0x4] sm:$0xf] %vm1986, %v4367
        %v4372 = vld [vmem:[#allocation2 + $0x8] sm:$0xff]
        %v4373 = vld [vmem:[#allocation2 + $0x10] sm:$0xff]
        %v4374 = vpack.c.bf16 %v4372, %v4372
        %v4375 = vpack.c.bf16 %v4373, %v4373
        %4378 = vrot.lane.b32.xlu0 %v4374, 8
        %v4379 = vpop.permute.xlu0 %4378
        %4380 = vrot.lane.b32.xlu0 %v4375, 8
        %v4381 = vpop.permute.xlu0 %4380
        %4384 = vst.msk [vmem:[#allocation3] sm:$0xf] %vm2001, %v4379
        %4385 = vst.msk [vmem:[#allocation3 + $0x4] sm:$0xf] %vm2001, %v4381
        %v4386 = vld [vmem:[#allocation3] sm:$0xf]
        %v4387 = vld [vmem:[#allocation3 + $0x4] sm:$0xf]
        %v4389 = vperm.slane %v4345, 0
        %v4393 = vunpack.c.l.b16 %v4386
        %v4394 = vunpack.c.l.b16 %v4387
        %v4395 = vpack.c.b16 %v4394, %v4393
        %v4398 = vunpack.c.l.b16 %v4342
        %v4399 = vunpack.c.l.b16 %v4343
        %v4400 = vpack.c.b16 %v4399, %v4398
        %v4402 = vsel %vm2019, %v4395, 0
        %v4405 = vsel %vm2023, %v4400, 0
        %4407 = vmatpush.bf16.msra.mxu0 0
        %4408 = vmatpush.bf16.msra.mxu0 0
        %4409 = vmatpush.bf16.msra.mxu0 0
        %4410 = vmatpush.bf16.msra.mxu0 0
        %4411 = vmatpush.bf16.msra.mxu0 0
        %4412 = vmatpush.bf16.msra.mxu0 0
        %4413 = vmatpush.bf16.msra.mxu0 0
        %4414 = vmatpush.bf16.msra.mxu0 %v4405
        %4415 = vmatmul.bf16.gmra.mxu0 %v4402
        %v4416 = vpop.f32.mrf.mxu0
        %v4417 = vadd.f32 %v4389, %v4416
        %v4418 = vpop.f32.mrf.mxu0
        %v4419 = vadd.f32 %v4389, %v4418
        %4420 = vdwg.mxu0
        %v4421 = vmax.f32 %v4417, 0.0
        %v4422 = vmax.f32 %v4419, 0.0
        %v4424 = vperm.slane %v4347, 0
        %v4426 = vmul.f32 %v4421, %v4424
        %v4427 = vmul.f32 %v4422, %v4424
        %v4429 = vperm.slane %v4349, 0
        %v4431 = vadd.f32 %v4426, %v4429
        %v4432 = vadd.f32 %v4427, %v4429
        %v4433 = vpack.c.bf16 %v4431, %v4431
        %v4434 = vpack.c.bf16 %v4432, %v4432
        %4437 = vrot.lane.b32.xlu0 %v4433, 12
        %v4438 = vpop.permute.xlu0 %4437
        %4439 = vrot.lane.b32.xlu0 %v4434, 12
        %v4440 = vpop.permute.xlu0 %4439
        %4443 = vst.msk [vmem:[#allocation5] sm:$0xf] %vm2403, %v4438
        %4444 = vst.msk [vmem:[#allocation5 + $0x4] sm:$0xf] %vm2403, %v4440
        %v4445 = vld [vmem:[#allocation4] sm:$0xff]
        %v4446 = vld [vmem:[#allocation4 + $0x8] sm:$0xff]
        %4449 = vrot.lane.b32.xlu0 %v4445, 112
        %v4450 = vpop.permute.xlu0 %4449
        %4451 = vrot.lane.b32.xlu0 %v4446, 112
        %v4452 = vpop.permute.xlu0 %4451
        %v4455 = vadd.f32 %v4431, %v4450
        %v4456 = vadd.f32 %v4432, %v4452
        %s4457 = scalar_lea.vmem %s73, 32
        %v4458 = vld [vmem:[%s4457] sm:$0xf]
        %v4459 = vld [vmem:[%s4457 + $0x4] sm:$0x3]
        %s4460 = scalar_lea.vmem %s67, 4
        %v4461 = vld [vmem:[%s4460] sm:$0x1]
        %s4462 = scalar_lea.vmem %s69, 4
        %v4463 = vld [vmem:[%s4462] sm:$0x1]
        %s4464 = scalar_lea.vmem %s71, 4
        %v4465 = vld [vmem:[%s4464] sm:$0x1]
        %4466 = vst.msk [vmem:[#allocation2 + $0x4] sm:$0xff] %vm1964, %v4455
        %4467 = vst.msk [vmem:[#allocation2 + $0xc] sm:$0xff] %vm1964, %v4456
        %v4468 = vld [vmem:[#allocation2] sm:$0xff]
        %v4469 = vld [vmem:[#allocation2 + $0x8] sm:$0xff]
        %v4470 = vpack.c.bf16 %v4468, %v4468
        %v4471 = vpack.c.bf16 %v4469, %v4469
        %4472 = vst.msk [vmem:[#allocation3] sm:$0xf] %vm1971, %v4470
        %4473 = vst.msk [vmem:[#allocation3 + $0x4] sm:$0xf] %vm1971, %v4471
        %v4474 = vld [vmem:[#allocation2 + $0x4] sm:$0xff]
        %v4475 = vld [vmem:[#allocation2 + $0xc] sm:$0xff]
        %v4476 = vpack.c.bf16 %v4474, %v4474
        %v4477 = vpack.c.bf16 %v4475, %v4475
        %4480 = vrot.lane.b32.xlu0 %v4476, 4
        %v4481 = vpop.permute.xlu0 %4480
        %4482 = vrot.lane.b32.xlu0 %v4477, 4
        %v4483 = vpop.permute.xlu0 %4482
        %4486 = vst.msk [vmem:[#allocation3] sm:$0xf] %vm1986, %v4481
        %4487 = vst.msk [vmem:[#allocation3 + $0x4] sm:$0xf] %vm1986, %v4483
        %v4488 = vld [vmem:[#allocation2 + $0x8] sm:$0xff]
        %v4489 = vld [vmem:[#allocation2 + $0x10] sm:$0xff]
        %v4490 = vpack.c.bf16 %v4488, %v4488
        %v4491 = vpack.c.bf16 %v4489, %v4489
        %4494 = vrot.lane.b32.xlu0 %v4490, 8
        %v4495 = vpop.permute.xlu0 %4494
        %4496 = vrot.lane.b32.xlu0 %v4491, 8
        %v4497 = vpop.permute.xlu0 %4496
        %4500 = vst.msk [vmem:[#allocation3] sm:$0xf] %vm2001, %v4495
        %4501 = vst.msk [vmem:[#allocation3 + $0x4] sm:$0xf] %vm2001, %v4497
        %v4502 = vld [vmem:[#allocation3] sm:$0xf]
        %v4503 = vld [vmem:[#allocation3 + $0x4] sm:$0xf]
        %v4505 = vperm.slane %v4461, 0
        %v4509 = vunpack.c.l.b16 %v4502
        %v4510 = vunpack.c.l.b16 %v4503
        %v4511 = vpack.c.b16 %v4510, %v4509
        %v4514 = vunpack.c.l.b16 %v4458
        %v4515 = vunpack.c.l.b16 %v4459
        %v4516 = vpack.c.b16 %v4515, %v4514
        %v4518 = vsel %vm2019, %v4511, 0
        %v4521 = vsel %vm2023, %v4516, 0
        %4523 = vmatpush.bf16.msra.mxu0 0
        %4524 = vmatpush.bf16.msra.mxu0 0
        %4525 = vmatpush.bf16.msra.mxu0 0
        %4526 = vmatpush.bf16.msra.mxu0 0
        %4527 = vmatpush.bf16.msra.mxu0 0
        %4528 = vmatpush.bf16.msra.mxu0 0
        %4529 = vmatpush.bf16.msra.mxu0 0
        %4530 = vmatpush.bf16.msra.mxu0 %v4521
        %4531 = vmatmul.bf16.gmra.mxu0 %v4518
        %v4532 = vpop.f32.mrf.mxu0
        %v4533 = vadd.f32 %v4505, %v4532
        %v4534 = vpop.f32.mrf.mxu0
        %v4535 = vadd.f32 %v4505, %v4534
        %4536 = vdwg.mxu0
        %v4537 = vmax.f32 %v4533, 0.0
        %v4538 = vmax.f32 %v4535, 0.0
        %v4540 = vperm.slane %v4463, 0
        %v4542 = vmul.f32 %v4537, %v4540
        %v4543 = vmul.f32 %v4538, %v4540
        %v4545 = vperm.slane %v4465, 0
        %v4547 = vadd.f32 %v4542, %v4545
        %v4548 = vadd.f32 %v4543, %v4545
        %v4549 = vpack.c.bf16 %v4547, %v4547
        %v4550 = vpack.c.bf16 %v4548, %v4548
        %4553 = vrot.lane.b32.xlu0 %v4549, 16
        %v4554 = vpop.permute.xlu0 %4553
        %4555 = vrot.lane.b32.xlu0 %v4550, 16
        %v4556 = vpop.permute.xlu0 %4555
        %4559 = vst.msk [vmem:[#allocation5] sm:$0xf] %vm2520, %v4554
        %4560 = vst.msk [vmem:[#allocation5 + $0x4] sm:$0xf] %vm2520, %v4556
        %v4561 = vld [vmem:[#allocation4] sm:$0xff]
        %v4562 = vld [vmem:[#allocation4 + $0x8] sm:$0xff]
        %4565 = vrot.lane.b32.xlu0 %v4561, 108
        %v4566 = vpop.permute.xlu0 %4565
        %4567 = vrot.lane.b32.xlu0 %v4562, 108
        %v4568 = vpop.permute.xlu0 %4567
        %v4571 = vadd.f32 %v4547, %v4566
        %v4572 = vadd.f32 %v4548, %v4568
        %s4573 = scalar_lea.vmem %s73, 40
        %v4574 = vld [vmem:[%s4573] sm:$0xf]
        %v4575 = vld [vmem:[%s4573 + $0x4] sm:$0x3]
        %s4576 = scalar_lea.vmem %s67, 5
        %v4577 = vld [vmem:[%s4576] sm:$0x1]
        %s4578 = scalar_lea.vmem %s69, 5
        %v4579 = vld [vmem:[%s4578] sm:$0x1]
        %s4580 = scalar_lea.vmem %s71, 5
        %v4581 = vld [vmem:[%s4580] sm:$0x1]
        %4582 = vst.msk [vmem:[#allocation2 + $0x4] sm:$0xff] %vm1964, %v4571
        %4583 = vst.msk [vmem:[#allocation2 + $0xc] sm:$0xff] %vm1964, %v4572
        %v4584 = vld [vmem:[#allocation2] sm:$0xff]
        %v4585 = vld [vmem:[#allocation2 + $0x8] sm:$0xff]
        %v4586 = vpack.c.bf16 %v4584, %v4584
        %v4587 = vpack.c.bf16 %v4585, %v4585
        %4588 = vst.msk [vmem:[#allocation3] sm:$0xf] %vm1971, %v4586
        %4589 = vst.msk [vmem:[#allocation3 + $0x4] sm:$0xf] %vm1971, %v4587
        %v4590 = vld [vmem:[#allocation2 + $0x4] sm:$0xff]
        %v4591 = vld [vmem:[#allocation2 + $0xc] sm:$0xff]
        %v4592 = vpack.c.bf16 %v4590, %v4590
        %v4593 = vpack.c.bf16 %v4591, %v4591
        %4596 = vrot.lane.b32.xlu0 %v4592, 4
        %v4597 = vpop.permute.xlu0 %4596
        %4598 = vrot.lane.b32.xlu0 %v4593, 4
        %v4599 = vpop.permute.xlu0 %4598
        %4602 = vst.msk [vmem:[#allocation3] sm:$0xf] %vm1986, %v4597
        %4603 = vst.msk [vmem:[#allocation3 + $0x4] sm:$0xf] %vm1986, %v4599
        %v4604 = vld [vmem:[#allocation2 + $0x8] sm:$0xff]
        %v4605 = vld [vmem:[#allocation2 + $0x10] sm:$0xff]
        %v4606 = vpack.c.bf16 %v4604, %v4604
        %v4607 = vpack.c.bf16 %v4605, %v4605
        %4610 = vrot.lane.b32.xlu0 %v4606, 8
        %v4611 = vpop.permute.xlu0 %4610
        %4612 = vrot.lane.b32.xlu0 %v4607, 8
        %v4613 = vpop.permute.xlu0 %4612
        %4616 = vst.msk [vmem:[#allocation3] sm:$0xf] %vm2001, %v4611
        %4617 = vst.msk [vmem:[#allocation3 + $0x4] sm:$0xf] %vm2001, %v4613
        %v4618 = vld [vmem:[#allocation3] sm:$0xf]
        %v4619 = vld [vmem:[#allocation3 + $0x4] sm:$0xf]
        %v4621 = vperm.slane %v4577, 0
        %v4625 = vunpack.c.l.b16 %v4618
        %v4626 = vunpack.c.l.b16 %v4619
        %v4627 = vpack.c.b16 %v4626, %v4625
        %v4630 = vunpack.c.l.b16 %v4574
        %v4631 = vunpack.c.l.b16 %v4575
        %v4632 = vpack.c.b16 %v4631, %v4630
        %v4634 = vsel %vm2019, %v4627, 0
        %v4637 = vsel %vm2023, %v4632, 0
        %4639 = vmatpush.bf16.msra.mxu0 0
        %4640 = vmatpush.bf16.msra.mxu0 0
        %4641 = vmatpush.bf16.msra.mxu0 0
        %4642 = vmatpush.bf16.msra.mxu0 0
        %4643 = vmatpush.bf16.msra.mxu0 0
        %4644 = vmatpush.bf16.msra.mxu0 0
        %4645 = vmatpush.bf16.msra.mxu0 0
        %4646 = vmatpush.bf16.msra.mxu0 %v4637
        %4647 = vmatmul.bf16.gmra.mxu0 %v4634
        %v4648 = vpop.f32.mrf.mxu0
        %v4649 = vadd.f32 %v4621, %v4648
        %v4650 = vpop.f32.mrf.mxu0
        %v4651 = vadd.f32 %v4621, %v4650
        %4652 = vdwg.mxu0
        %v4653 = vmax.f32 %v4649, 0.0
        %v4654 = vmax.f32 %v4651, 0.0
        %v4656 = vperm.slane %v4579, 0
        %v4658 = vmul.f32 %v4653, %v4656
        %v4659 = vmul.f32 %v4654, %v4656
        %v4661 = vperm.slane %v4581, 0
        %v4663 = vadd.f32 %v4658, %v4661
        %v4664 = vadd.f32 %v4659, %v4661
        %v4665 = vpack.c.bf16 %v4663, %v4663
        %v4666 = vpack.c.bf16 %v4664, %v4664
        %4669 = vrot.lane.b32.xlu0 %v4665, 20
        %v4670 = vpop.permute.xlu0 %4669
        %4671 = vrot.lane.b32.xlu0 %v4666, 20
        %v4672 = vpop.permute.xlu0 %4671
        %4675 = vst.msk [vmem:[#allocation5] sm:$0xf] %vm2637, %v4670
        %4676 = vst.msk [vmem:[#allocation5 + $0x4] sm:$0xf] %vm2637, %v4672
        %v4677 = vld [vmem:[#allocation4] sm:$0xff]
        %v4678 = vld [vmem:[#allocation4 + $0x8] sm:$0xff]
        %4681 = vrot.lane.b32.xlu0 %v4677, 104
        %v4682 = vpop.permute.xlu0 %4681
        %4683 = vrot.lane.b32.xlu0 %v4678, 104
        %v4684 = vpop.permute.xlu0 %4683
        %v4687 = vadd.f32 %v4663, %v4682
        %v4688 = vadd.f32 %v4664, %v4684
        %s4689 = scalar_lea.vmem %s73, 48
        %v4690 = vld [vmem:[%s4689] sm:$0xf]
        %v4691 = vld [vmem:[%s4689 + $0x4] sm:$0x3]
        %s4692 = scalar_lea.vmem %s67, 6
        %v4693 = vld [vmem:[%s4692] sm:$0x1]
        %s4694 = scalar_lea.vmem %s69, 6
        %v4695 = vld [vmem:[%s4694] sm:$0x1]
        %s4696 = scalar_lea.vmem %s71, 6
        %v4697 = vld [vmem:[%s4696] sm:$0x1]
        %4698 = vst.msk [vmem:[#allocation2 + $0x4] sm:$0xff] %vm1964, %v4687
        %4699 = vst.msk [vmem:[#allocation2 + $0xc] sm:$0xff] %vm1964, %v4688
        %v4700 = vld [vmem:[#allocation2] sm:$0xff]
        %v4701 = vld [vmem:[#allocation2 + $0x8] sm:$0xff]
        %v4702 = vpack.c.bf16 %v4700, %v4700
        %v4703 = vpack.c.bf16 %v4701, %v4701
        %4704 = vst.msk [vmem:[#allocation3] sm:$0xf] %vm1971, %v4702
        %4705 = vst.msk [vmem:[#allocation3 + $0x4] sm:$0xf] %vm1971, %v4703
        %v4706 = vld [vmem:[#allocation2 + $0x4] sm:$0xff]
        %v4707 = vld [vmem:[#allocation2 + $0xc] sm:$0xff]
        %v4708 = vpack.c.bf16 %v4706, %v4706
        %v4709 = vpack.c.bf16 %v4707, %v4707
        %4712 = vrot.lane.b32.xlu0 %v4708, 4
        %v4713 = vpop.permute.xlu0 %4712
        %4714 = vrot.lane.b32.xlu0 %v4709, 4
        %v4715 = vpop.permute.xlu0 %4714
        %4718 = vst.msk [vmem:[#allocation3] sm:$0xf] %vm1986, %v4713
        %4719 = vst.msk [vmem:[#allocation3 + $0x4] sm:$0xf] %vm1986, %v4715
        %v4720 = vld [vmem:[#allocation2 + $0x8] sm:$0xff]
        %v4721 = vld [vmem:[#allocation2 + $0x10] sm:$0xff]
        %v4722 = vpack.c.bf16 %v4720, %v4720
        %v4723 = vpack.c.bf16 %v4721, %v4721
        %4726 = vrot.lane.b32.xlu0 %v4722, 8
        %v4727 = vpop.permute.xlu0 %4726
        %4728 = vrot.lane.b32.xlu0 %v4723, 8
        %v4729 = vpop.permute.xlu0 %4728
        %4732 = vst.msk [vmem:[#allocation3] sm:$0xf] %vm2001, %v4727
        %4733 = vst.msk [vmem:[#allocation3 + $0x4] sm:$0xf] %vm2001, %v4729
        %v4734 = vld [vmem:[#allocation3] sm:$0xf]
        %v4735 = vld [vmem:[#allocation3 + $0x4] sm:$0xf]
        %v4737 = vperm.slane %v4693, 0
        %v4741 = vunpack.c.l.b16 %v4734
        %v4742 = vunpack.c.l.b16 %v4735
        %v4743 = vpack.c.b16 %v4742, %v4741
        %v4746 = vunpack.c.l.b16 %v4690
        %v4747 = vunpack.c.l.b16 %v4691
        %v4748 = vpack.c.b16 %v4747, %v4746
        %v4750 = vsel %vm2019, %v4743, 0
        %v4753 = vsel %vm2023, %v4748, 0
        %4755 = vmatpush.bf16.msra.mxu0 0
        %4756 = vmatpush.bf16.msra.mxu0 0
        %4757 = vmatpush.bf16.msra.mxu0 0
        %4758 = vmatpush.bf16.msra.mxu0 0
        %4759 = vmatpush.bf16.msra.mxu0 0
        %4760 = vmatpush.bf16.msra.mxu0 0
        %4761 = vmatpush.bf16.msra.mxu0 0
        %4762 = vmatpush.bf16.msra.mxu0 %v4753
        %4763 = vmatmul.bf16.gmra.mxu0 %v4750
        %v4764 = vpop.f32.mrf.mxu0
        %v4765 = vadd.f32 %v4737, %v4764
        %v4766 = vpop.f32.mrf.mxu0
        %v4767 = vadd.f32 %v4737, %v4766
        %4768 = vdwg.mxu0
        %v4769 = vmax.f32 %v4765, 0.0
        %v4770 = vmax.f32 %v4767, 0.0
        %v4772 = vperm.slane %v4695, 0
        %v4774 = vmul.f32 %v4769, %v4772
        %v4775 = vmul.f32 %v4770, %v4772
        %v4777 = vperm.slane %v4697, 0
        %v4779 = vadd.f32 %v4774, %v4777
        %v4780 = vadd.f32 %v4775, %v4777
        %v4781 = vpack.c.bf16 %v4779, %v4779
        %v4782 = vpack.c.bf16 %v4780, %v4780
        %4785 = vrot.lane.b32.xlu0 %v4781, 24
        %v4786 = vpop.permute.xlu0 %4785
        %4787 = vrot.lane.b32.xlu0 %v4782, 24
        %v4788 = vpop.permute.xlu0 %4787
        %4791 = vst.msk [vmem:[#allocation5] sm:$0xf] %vm2754, %v4786
        %4792 = vst.msk [vmem:[#allocation5 + $0x4] sm:$0xf] %vm2754, %v4788
        %v4793 = vld [vmem:[#allocation4] sm:$0xff]
        %v4794 = vld [vmem:[#allocation4 + $0x8] sm:$0xff]
        %v4795 = vpack.c.bf16 %v4793, %v4793
        %v4796 = vpack.c.bf16 %v4794, %v4794
        %4797 = vst.msk [vmem:[#allocation5] sm:$0xf] %vm2761, %v4795
        %4798 = vst.msk [vmem:[#allocation5 + $0x4] sm:$0xf] %vm2761, %v4796
        %v4799 = vld [vmem:[#allocation5] sm:$0xf]
        %v4800 = vld [vmem:[#allocation5 + $0x4] sm:$0xf]
        %v4801 = vld [vmem:[%s97] sm:$0xf]
        %v4802 = vld [vmem:[%s97 + $0x4] sm:$0xf]
        %v4803 = vld [vmem:[%s97 + $0x8] sm:$0xf]
        %v4804 = vld [vmem:[%s97 + $0xc] sm:$0xf]
        %v4805 = vld [vmem:[%s91] sm:$0x1]
        %v4806 = vld [vmem:[%s93] sm:$0x1]
        %v4807 = vld [vmem:[%s95] sm:$0x1]
        %v4809 = vperm.slane %v4805, 0
        %v4813 = vunpack.c.l.b16 %v4799
        %v4814 = vunpack.c.l.b16 %v4800
        %v4815 = vpack.c.b16 %v4814, %v4813
        %v4820 = vunpack.c.l.b16 %v4801
        %v4821 = vunpack.c.l.b16 %v4802
        %v4822 = vunpack.c.l.b16 %v4803
        %v4823 = vunpack.c.l.b16 %v4804
        %v4824 = vpack.c.b16 %v4821, %v4820
        %v4825 = vpack.c.b16 %v4823, %v4822
        %v4829 = vsel %vm1925, %v4815, 0
        %4831 = vmatpush.bf16.msra.mxu0 0
        %4832 = vmatpush.bf16.msra.mxu0 0
        %4833 = vmatpush.bf16.msra.mxu0 0
        %4834 = vmatpush.bf16.msra.mxu0 0
        %4835 = vmatpush.bf16.msra.mxu0 0
        %4836 = vmatpush.bf16.msra.mxu0 0
        %4837 = vmatpush.bf16.msra.mxu0 %v4825
        %4838 = vmatpush.bf16.msra.mxu0 %v4824
        %4839 = vmatmul.bf16.gmra.mxu0 %v4829
        %v4840 = vpop.f32.mrf.mxu0
        %v4841 = vadd.f32 %v4809, %v4840
        %v4842 = vpop.f32.mrf.mxu0
        %v4843 = vadd.f32 %v4809, %v4842
        %4844 = vdwg.mxu0
        %v4845 = vmax.f32 %v4841, 0.0
        %v4846 = vmax.f32 %v4843, 0.0
        %v4848 = vperm.slane %v4806, 0
        %v4850 = vmul.f32 %v4845, %v4848
        %v4851 = vmul.f32 %v4846, %v4848
        %v4853 = vperm.slane %v4807, 0
        %v4855 = vadd.f32 %v4850, %v4853
        %v4856 = vadd.f32 %v4851, %v4853
        %v4857 = vsel %vm1925, %v4855, 0.0
        %v4858 = vsel %vm1925, %v4856, 0.0
        %v4859 = vadd.f32 %v4857, %v4858
        %v4860 = vrot.slane %v4859, 4
        %v4861 = vadd.f32 %v4859, %v4860
        %v4862 = vrot.slane %v4861, 2
        %v4863 = vadd.f32 %v4861, %v4862
        %v4864 = vrot.slane %v4863, 1
        %v4865 = vadd.f32 %v4863, %v4864
        %v4866 = vmul.f32 %v4865, %v2837
        %v4867 = vpack.c.bf16 %v4866, %v4866
        %v4868 = vld [vmem:[%s79] sm:$0xf]
        %v4869 = vld [vmem:[%s79 + $0x4] sm:$0xf]
        %v4870 = vld [vmem:[%s79 + $0x8] sm:$0xf]
        %v4871 = vld [vmem:[%s79 + $0xc] sm:$0xf]
        %v4872 = vld [vmem:[%s75] sm:$0x1]
        %v4877 = vunpack.c.l.b16 %v4868
        %v4878 = vunpack.c.l.b16 %v4869
        %v4879 = vunpack.c.l.b16 %v4870
        %v4880 = vunpack.c.l.b16 %v4871
        %v4881 = vpack.c.b16 %v4878, %v4877
        %v4882 = vpack.c.b16 %v4880, %v4879
        %v4886 = vsel %vm1925, %v4867, 0
        %4888 = vmatpush.bf16.msra.mxu0 0
        %4889 = vmatpush.bf16.msra.mxu0 0
        %4890 = vmatpush.bf16.msra.mxu0 0
        %4891 = vmatpush.bf16.msra.mxu0 0
        %4892 = vmatpush.bf16.msra.mxu0 0
        %4893 = vmatpush.bf16.msra.mxu0 0
        %4894 = vmatpush.bf16.msra.mxu0 %v4882
        %4895 = vmatpush.bf16.msra.mxu0 %v4881
        %4896 = vmatmul.bf16.gmra.mxu0 %v4886
        %v4897 = vpop.f32.mrf.mxu0
        %v4898 = vadd.f32 %v4872, %v4897
        %v4899 = vpop.f32.mrf.mxu0
        %4900 = vdwg.mxu0
        %v4901 = vmax.f32 %v4898, 0.0
        %v4902 = vpack.c.bf16 %v4901, %v4901
        %v4903 = vld [vmem:[%s81] sm:$0xf]
        %v4904 = vld [vmem:[%s81 + $0x4] sm:$0xf]
        %v4905 = vld [vmem:[%s77] sm:$0x1]
        %v4908 = vunpack.c.l.b16 %v4903
        %v4909 = vunpack.c.l.b16 %v4904
        %v4910 = vpack.c.b16 %v4909, %v4908
        %v4913 = vsel %vm1763, %v4902, 0
        %4915 = vmatpush.bf16.msra.mxu0 0
        %4916 = vmatpush.bf16.msra.mxu0 0
        %4917 = vmatpush.bf16.msra.mxu0 0
        %4918 = vmatpush.bf16.msra.mxu0 0
        %4919 = vmatpush.bf16.msra.mxu0 0
        %4920 = vmatpush.bf16.msra.mxu0 0
        %4921 = vmatpush.bf16.msra.mxu0 0
        %4922 = vmatpush.bf16.msra.mxu0 %v4910
        %4923 = vmatmul.bf16.gmra.mxu0 %v4913
        %v4924 = vpop.f32.mrf.mxu0
        %v4925 = vadd.f32 %v4905, %v4924
        %v4926 = vpop.f32.mrf.mxu0
        %4927 = vdwg.mxu0
        %v4928 = vxor.u32 %v4925, 2147483648
        %v4929 = vmul.f32 %v4928, 1.442695
        %v4930 = vpow.pop %v4929
        %v4931 = vadd.f32 %v4930, 1.0
        %v4932 = vrcp.pop %v4931
        %v4933 = vmul.f32 %v4931, %v4932
        %v4934 = vsub.f32 1.0, %v4933
        %v4935 = vmul.f32 %v4932, %v4934
        %v4936 = vadd.f32 %v4932, %v4935
        %vm4937 = vweird.f32 %v4931
        %vm4938 = vweird.f32 %v4932
        %vm4939 = vmor %vm4937, %vm4938
        %v4940 = vsel %vm4939, %v4932, %v4936
        %v4941 = vand.u32 2147483647, %v4931
        %vm4942 = vcmp.eq.f32.partialorder %v4941, 8.507059e+37
        %v4943 = vand.u32 %v4931, 2147483648
        %v4944 = vor.u32 1.1754944e-38, %v4943
        %v4945 = vsel %vm4942, %v4944, %v4940
        %v4946 = vmul.f32 1.0, %v4945
        %v4947 = vperm.slane %v4946, 0
        %v4948 = vmul.f32 %v4855, %v4947
        %v4949 = vmul.f32 %v4856, %v4947
        %v4950 = vadd.f32 %v3947, %v4948
        %v4951 = vadd.f32 %v3948, %v4949
        %v4952 = vpack.c.bf16 %v4950, %v4950
        %v4953 = vpack.c.bf16 %v4951, %v4951
        %4956 = vrot.lane.b32.xlu0 %v4952, 64
        %v4957 = vpop.permute.xlu0 %4956
        %4958 = vrot.lane.b32.xlu0 %v4953, 64
        %v4959 = vpop.permute.xlu0 %4958
        %vm4962 = vcmask 781824
        %4963 = vst.msk [vmem:[#allocation6] sm:$0xf] %vm4962, %v4957
        %4964 = vst.msk [vmem:[#allocation6 + $0x4] sm:$0xf] %vm4962, %v4959
        %v4965 = vld [vmem:[#allocation6] sm:$0xf]
        %v4966 = vld [vmem:[#allocation6 + $0x4] sm:$0xf]
        %v4967 = vld [vmem:[%s105] sm:$0xf]
        %v4968 = vld [vmem:[%s105 + $0x4] sm:$0xf]
        %v4969 = vld [vmem:[%s105 + $0x8] sm:$0xf]
        %v4970 = vld [vmem:[%s105 + $0xc] sm:$0xf]
        %v4971 = vld [vmem:[%s105 + $0x10] sm:$0xf]
        %v4972 = vld [vmem:[%s105 + $0x14] sm:$0xf]
        %v4973 = vld [vmem:[%s105 + $0x18] sm:$0xf]
        %v4974 = vld [vmem:[%s105 + $0x1c] sm:$0xf]
        %v4975 = vld [vmem:[%s105 + $0x20] sm:$0xf]
        %v4976 = vld [vmem:[%s105 + $0x24] sm:$0xf]
        %v4977 = vld [vmem:[%s105 + $0x28] sm:$0xf]
        %v4978 = vld [vmem:[%s105 + $0x2c] sm:$0xf]
        %v4979 = vld [vmem:[%s99] sm:$0x1]
        %v4980 = vld [vmem:[%s101] sm:$0x1]
        %v4981 = vld [vmem:[#allocation7] sm:$0x1]
        %v4983 = vperm.slane %v4979, 0
        %v4987 = vunpack.c.l.b16 %v4965
        %v4988 = vunpack.c.l.b16 %v4966
        %v4989 = vpack.c.b16 %v4988, %v4987
        %v5002 = vunpack.c.l.b16 %v4967
        %v5003 = vunpack.c.l.b16 %v4968
        %v5004 = vunpack.c.l.b16 %v4969
        %v5005 = vunpack.c.l.b16 %v4970
        %v5006 = vunpack.c.l.b16 %v4971
        %v5007 = vunpack.c.l.b16 %v4972
        %v5008 = vunpack.c.l.b16 %v4973
        %v5009 = vunpack.c.l.b16 %v4974
        %v5010 = vunpack.c.l.b16 %v4975
        %v5011 = vunpack.c.l.b16 %v4976
        %v5012 = vunpack.c.l.b16 %v4977
        %v5013 = vunpack.c.l.b16 %v4978
        %v5014 = vpack.c.b16 %v5003, %v5002
        %v5015 = vpack.c.b16 %v5005, %v5004
        %v5016 = vpack.c.b16 %v5007, %v5006
        %v5017 = vpack.c.b16 %v5009, %v5008
        %v5018 = vpack.c.b16 %v5011, %v5010
        %v5019 = vpack.c.b16 %v5013, %v5012
        %vm5026 = vcmask 785408
        %v5028 = vsel %vm5026, %v4989, 0
        %5030 = vmatpush.bf16.msra.mxu0 0
        %5031 = vmatpush.bf16.msra.mxu0 0
        %5032 = vmatpush.bf16.msra.mxu0 %v5019
        %5033 = vmatpush.bf16.msra.mxu0 %v5018
        %5034 = vmatpush.bf16.msra.mxu0 %v5017
        %5035 = vmatpush.bf16.msra.mxu0 %v5016
        %5036 = vmatpush.bf16.msra.mxu0 %v5015
        %5037 = vmatpush.bf16.msra.mxu0 %v5014
        %5038 = vmatmul.bf16.gmra.mxu0 %v5028
        %v5039 = vpop.f32.mrf.mxu0
        %v5040 = vadd.f32 %v4983, %v5039
        %v5041 = vpop.f32.mrf.mxu0
        %v5042 = vadd.f32 %v4983, %v5041
        %5043 = vdwg.mxu0
        %v5044 = vmax.f32 %v5040, 0.0
        %v5045 = vmax.f32 %v5042, 0.0
        %v5047 = vperm.slane %v4980, 0
        %v5049 = vmul.f32 %v5044, %v5047
        %v5050 = vmul.f32 %v5045, %v5047
        %v5052 = vperm.slane %v4981, 0
        %v5054 = vadd.f32 %v5049, %v5052
        %v5055 = vadd.f32 %v5050, %v5052
        %vm5056 = vcmask 392192
        %5057 = vst.msk [vmem:[%s1738] sm:$0xff] %vm5056, %v5054
        %5058 = vst.msk [vmem:[%s1738 + $0x8] sm:$0xff] %vm5056, %v5055
        %s5059 = sand.u32 %s1342, 1
        %s5060 = scalar_lea.sflag [#allocation9], %s5059
        %s5061 = sand.u32 %s1342, 1
        %s5062 = smul.addr %s5061, 16
        %s5063 = scalar_lea.vmem [#allocation15], %s5062
        // Predicated region
        $region265: #{tpu_custom_call.1} parent=247 // pred_check
          %p5064 = pneg %p1352
        $region266: #{tpu_custom_call.1} parent=247 // pred_check_branch
          %5066 = sbr.rel (%p5064) target = $region268
        $region267: #{tpu_custom_call.1} parent=247 // pred_region
          %5068 = vsyncadd %s5060, 0
          %s5069 = smul.addr %s132, 2
          %s5070 = smul.addr %s5069, 8
          %s5071 = scalar_lea.hbm %s115, %s5070
          %s5072 = sshll.u32 %s5063, 4
          %s5073 = int_to_ptr.vmem [resolvable:$true] %s5072
          %s5074 = sshll.u32 %s5071, 4
          %s5075 = int_to_ptr.hbm [resolvable:$true] %s5074
          %5080 = dma.vmem_to_hbm [thread:$0]  %s5073, 256, %s5075, %s5060, 128, 128, 8
        $region268: #{tpu_custom_call.1} parent=247 // pred_fallthru
          _
      $region248: #{tpu_custom_call.1} parent=5 // pred_fallthru
        _
      %p5081 = scmp.le.s32.totalorder 2, %s127
      // Predicated region
      $region269: #{tpu_custom_call.1} parent=5 // pred_check
        %p5082 = pneg %p5081
      $region270: #{tpu_custom_call.1} parent=5 // pred_check_branch
        %5084 = sbr.rel (%p5082) target = $region272
      $region271: #{tpu_custom_call.1} parent=5 // pred_region
        %s5085 = ssub.s32 %s127, 2
        // Predicated region
        $region273: #{tpu_custom_call.1} parent=271 // pred_check
          %p5086 = pneg %p1358
        $region274: #{tpu_custom_call.1} parent=271 // pred_check_branch
          %5088 = sbr.rel (%p5086) target = $region276
        $region275: #{tpu_custom_call.1} parent=271 // pred_region
          %s5089 = sand.u32 %s1343, 1
          %s5090 = scalar_lea.sflag [#allocation9], %s5089
          %s5091 = sand.u32 %s1343, 1
          %s5092 = smul.addr %s5091, 16
          %s5093 = scalar_lea.vmem [#allocation15], %s5092
          %5095 = dma.done %s5090, 256
        $region276: #{tpu_custom_call.1} parent=271 // pred_fallthru
          _
      $region272: #{tpu_custom_call.1} parent=5 // pred_fallthru
        _
    $region6: #{tpu_custom_call.1} parent=1 // loop_footer
      %s131 = sadd.s32 1, %s127
    $region7: #{tpu_custom_call.1} parent=1 // loop_footer_branch
      %126 = sbr.rel target = $region3
    $region8: #{tpu_custom_call.1} parent=1 // loop_exit
      _
    %5096 = vsyncpa [#allocation8], 1
    %s5097 = scalar_lea.sflag [#allocation8], 1
    %5098 = vsyncpa %s5097, 1
    %5099 = vsyncpa [#allocation11], 1
    %5100 = vsyncpa [#allocation14], 1
    %5101 = vsyncpa [#allocation9], 1
    %s5102 = scalar_lea.sflag [#allocation9], 1
    %5103 = vsyncpa %s5102, 1

</llo_original>
